<compile_context>
chip_gen: v7x
topology: tpu7x:2x2x1
jax: 0.10.0
libtpu: 0.0.40
codegen_flags: <defaults>
</compile_context>

<pallas_src>
import functools

import jax
import jax.numpy as jnp
from jax.experimental import pallas as pl
from jax.experimental.pallas import tpu as pltpu


def attention_combine_kernel(x_ref, wih_ref, whh_ref, b_ref, o_ref, *, K):
    # x_ref:   (T, H, BN)   nodes on lanes
    # wih_ref: (8K, H)      [forward ; backward] input->gates weights
    # whh_ref: (2, 4K, K)   per-direction recurrent weights
    # b_ref:   (2, 4K, 1)   per-direction (b_ih + b_hh)
    # o_ref:   (H, BN)
    T, H, BN = x_ref.shape
    G = 4 * K

    wih = wih_ref[...]                         # (2G, H)
    whh = whh_ref[...]                         # (2, G, K)
    b = b_ref[...]                             # (2, G, 1)

    # Hoisted, direction-fused input projection: one MXU matmul per hop,
    # (2G, H) @ (H, BN) -> (2G, BN).  Keeps the serial recurrence MXU-free.
    gx = [jnp.dot(wih, x_ref[t], preferred_element_type=jnp.float32)
          for t in range(T)]

    def run_dir(d, reverse):
        whh_d = whh[d]                         # (G, K)
        b_d = b[d]                             # (G, 1)
        h = jnp.zeros((K, BN), jnp.float32)
        c = jnp.zeros((K, BN), jnp.float32)
        scores = [None] * T
        order = range(T - 1, -1, -1) if reverse else range(T)
        for t in order:
            gates = gx[t][d * G:(d + 1) * G] + b_d          # (G, BN)
            # Recurrent term as K unrolled outer-product FMAs on the VPU.
            for k in range(K):
                gates = gates + whh_d[:, k:k + 1] * h[k:k + 1, :]
            i_g = jax.nn.sigmoid(gates[0 * K:1 * K])
            f_g = jax.nn.sigmoid(gates[1 * K:2 * K])
            g_g = jnp.tanh(gates[2 * K:3 * K])
            o_g = jax.nn.sigmoid(gates[3 * K:4 * K])
            c = f_g * c + i_g * g_g
            h = o_g * jnp.tanh(c)
            scores[t] = jnp.sum(h, axis=0, keepdims=True)   # (1, BN)
        return jnp.concatenate(scores, axis=0)              # (T, BN)

    # score[t, n] = sum over the 2K bi-LSTM output channels at hop t
    score = run_dir(0, reverse=False) + run_dir(1, reverse=True)   # (T, BN)

    # Softmax over the hop axis (dim=1 of the original (N, T, H) layout).
    m = jnp.max(score, axis=0, keepdims=True)
    e = jnp.exp(score - m)
    denom = jnp.sum(e, axis=0, keepdims=True)
    inv = pl.reciprocal(denom, approx=True)      # EUP slot (otherwise idle)
    inv = inv * (2.0 - denom * inv)              # one Newton step -> ~f32 exact
    p = e * inv                                  # (T, BN)

    # Attention-weighted sum over hops.
    out = x_ref[0] * p[0:1, :]
    for t in range(1, T):
        out = out + x_ref[t] * p[t:t + 1, :]
    o_ref[...] = out.astype(o_ref.dtype)         # lane-dense, unmasked store


def attention_combine(x, params, *, block_n=1024):
    """x: (N, T, H) float32; params: LSTM weights in native PyTorch layout."""
    N, T, H = x.shape
    K = params["whh_f"].shape[1]
    G = 4 * K

    # Pack weights: 3 resident inputs instead of 6 (fewer DMA descriptors).
    wih = jnp.concatenate([params["wih_f"], params["wih_b"]], axis=0)    # (2G, H)
    whh = jnp.stack([params["whh_f"], params["whh_b"]], axis=0)          # (2, G, K)
    b = jnp.stack([params["b_f"], params["b_b"]], axis=0)[..., None]     # (2, G, 1)

    # Nodes-on-lanes layout: (N, T, H) -> (T, H, N).
    # TODO(synk): for very large N this wrapper transpose is an extra HBM pass;
    # upstream producers could emit (T, H, N) directly.
    xt = jnp.transpose(x, (1, 2, 0))

    # Node tile: multiple of 128 lanes; don't over-pad tiny inputs.
    bn = min(block_n, ((N + 127) // 128) * 128)
    bn = max(128, (bn // 128) * 128)
    n_pad = pl.cdiv(N, bn) * bn
    if n_pad != N:
        xt = jnp.pad(xt, ((0, 0), (0, 0), (0, n_pad - N)))

    kernel = functools.partial(attention_combine_kernel, K=K)

    out_t = pl.pallas_call(
        kernel,
        out_shape=jax.ShapeDtypeStruct((H, n_pad), jnp.float32),
        grid_spec=pltpu.PrefetchScalarGridSpec(
            num_scalar_prefetch=0,
            grid=(n_pad // bn,),
            in_specs=[
                pl.BlockSpec((T, H, bn), lambda i: (0, 0, i)),
                pl.BlockSpec((2 * G, H), lambda i: (0, 0)),
                pl.BlockSpec((2, G, K), lambda i: (0, 0, 0)),
                pl.BlockSpec((2, G, 1), lambda i: (0, 0, 0)),
            ],
            out_specs=pl.BlockSpec((H, bn), lambda i: (0, i)),
        ),
        compiler_params=pltpu.CompilerParams(
            dimension_semantics=("parallel",)),   # megacore-shardable on v7x
    )(xt, wih, whh, b)

    return out_t[:, :N].T                         # back to (N, H)


def reference(x, params):
    """Pure-JAX reference of the same forward (bi-LSTM + softmax combine)."""
    N, T, H = x.shape
    K = params["whh_f"].shape[1]

    def run_dir(w_ih, w_hh, b, reverse):
        h = jnp.zeros((N, K)); c = jnp.zeros((N, K))
        sums = [None] * T
        order = range(T - 1, -1, -1) if reverse else range(T)
        for t in order:
            gates = x[:, t, :] @ w_ih.T + h @ w_hh.T + b
            i_g = jax.nn.sigmoid(gates[:, :K])
            f_g = jax.nn.sigmoid(gates[:, K:2 * K])
            g_g = jnp.tanh(gates[:, 2 * K:3 * K])
            o_g = jax.nn.sigmoid(gates[:, 3 * K:])
            c = f_g * c + i_g * g_g
            h = o_g * jnp.tanh(c)
            sums[t] = jnp.sum(h, axis=-1)
        return jnp.stack(sums, axis=1)

    score = (run_dir(params["wih_f"], params["whh_f"], params["b_f"], False)
             + run_dir(params["wih_b"], params["whh_b"], params["b_b"], True))
    p = jax.nn.softmax(score, axis=1)[:, :, None]
    return jnp.sum(x * p, axis=1)


def init_params(key, hidden_size, K):
    """Deterministic init mimicking nn.LSTM: U(-1/sqrt(K), 1/sqrt(K)).

    Weights are kept in native PyTorch orientation:
      weight_ih: (4K, H), weight_hh: (4K, K), bias = b_ih + b_hh: (4K,)
    """
    bound = 1.0 / (K ** 0.5)
    keys = jax.random.split(key, 8)
    u = lambda k, shape: jax.random.uniform(k, shape, jnp.float32, -bound, bound)
    wih_f = u(keys[0], (4 * K, hidden_size))
    whh_f = u(keys[1], (4 * K, K))
    b_f = u(keys[2], (4 * K,)) + u(keys[3], (4 * K,))
    wih_b = u(keys[4], (4 * K, hidden_size))
    whh_b = u(keys[5], (4 * K, K))
    b_b = u(keys[6], (4 * K,)) + u(keys[7], (4 * K,))
    return dict(wih_f=wih_f, whh_f=whh_f, b_f=b_f,
                wih_b=wih_b, whh_b=whh_b, b_b=b_b)


if __name__ == "__main__":
    hidden_size = 32   # per-hop hidden representation size
    K = 4              # number of hops == LSTM seq length == LSTM hidden size
    N = 2000           # nodes: not a multiple of block_n -> exercises padding,
                       # and gives 2 grid steps (megacore path on v7x)

    key = jax.random.PRNGKey(0)
    k_x, k_p = jax.random.split(key)
    x = jax.random.normal(k_x, (N, K, hidden_size), jnp.float32)
    params = init_params(k_p, hidden_size, K)

    out = attention_combine(x, params, block_n=1024)
    out = jax.block_until_ready(out)

    ref = reference(x, params)
    assert out.shape == (N, hidden_size)
    assert jnp.allclose(out, ref, rtol=1e-4, atol=1e-4), "mismatch vs reference"
    print("KERNEL_OK")
</pallas_src>

<mosaic_0001>
module attributes {stable_mosaic.version = 11 : i64} {
  func.func @attention_combine_kernel(%arg0: i32, %arg1: memref<4x32x1024xf32, #tpu.memory_space<vmem>>, %arg2: memref<32x32xf32, #tpu.memory_space<vmem>>, %arg3: memref<2x16x4xf32, #tpu.memory_space<vmem>>, %arg4: memref<2x16x1xf32, #tpu.memory_space<vmem>>, %arg5: memref<32x1024xf32, #tpu.memory_space<vmem>>) attributes {dimension_semantics = [#tpu.dimension_semantics<parallel>], iteration_bounds = array<i64: 2>, scalar_prefetch = 0 : i64, scratch_operands = 0 : i64, tpu.core_type = #tpu.core_type<tc>, window_params = [{transform_indices = @transform_0, window_bounds = array<i64: 4, 32, 1024>}, {pipeline_mode = #tpu.pipeline_mode<synchronous>, transform_indices = @transform_1, window_bounds = array<i64: 32, 32>}, {pipeline_mode = #tpu.pipeline_mode<synchronous>, transform_indices = @transform_2, window_bounds = array<i64: 2, 16, 4>}, {pipeline_mode = #tpu.pipeline_mode<synchronous>, transform_indices = @transform_3, window_bounds = array<i64: 2, 16, 1>}, {transform_indices = @transform_4, window_bounds = array<i64: 32, 1024>}]} {
    %c0 = arith.constant 0 : index
    %c0_0 = arith.constant 0 : index
    %0 = vector.load %arg2[%c0, %c0_0] : memref<32x32xf32, #tpu.memory_space<vmem>>, vector<32x32xf32>
    %c0_1 = arith.constant 0 : index
    %c0_2 = arith.constant 0 : index
    %c0_3 = arith.constant 0 : index
    %1 = vector.load %arg3[%c0_1, %c0_2, %c0_3] : memref<2x16x4xf32, #tpu.memory_space<vmem>>, vector<2x16x4xf32>
    %c0_4 = arith.constant 0 : index
    %c0_5 = arith.constant 0 : index
    %c0_6 = arith.constant 0 : index
    %2 = vector.load %arg4[%c0_4, %c0_5, %c0_6] : memref<2x16x1xf32, #tpu.memory_space<vmem>>, vector<2x16x1xf32>
    %c0_7 = arith.constant 0 : index
    %c0_8 = arith.constant 0 : index
    %c0_9 = arith.constant 0 : index
    %3 = vector.load %arg1[%c0_7, %c0_8, %c0_9] : memref<4x32x1024xf32, #tpu.memory_space<vmem>>, vector<1x32x1024xf32>
    %4 = vector.shape_cast %3 : vector<1x32x1024xf32> to vector<32x1024xf32>
    %cst = arith.constant dense<0.000000e+00> : vector<32x1024xf32>
    %5 = tpu.matmul %0, %4, %cst {dimension_numbers = #tpu.dot_dimension_numbers<[1], [0], [0], [1], [0, 0, 1, 1], [], []>} : vector<32x32xf32>, vector<32x1024xf32>, vector<32x1024xf32> -> vector<32x1024xf32>
    %c1 = arith.constant 1 : index
    %c0_10 = arith.constant 0 : index
    %c0_11 = arith.constant 0 : index
    %6 = vector.load %arg1[%c1, %c0_10, %c0_11] : memref<4x32x1024xf32, #tpu.memory_space<vmem>>, vector<1x32x1024xf32>
    %7 = vector.shape_cast %6 : vector<1x32x1024xf32> to vector<32x1024xf32>
    %cst_12 = arith.constant dense<0.000000e+00> : vector<32x1024xf32>
    %8 = tpu.matmul %0, %7, %cst_12 {dimension_numbers = #tpu.dot_dimension_numbers<[1], [0], [0], [1], [0, 0, 1, 1], [], []>} : vector<32x32xf32>, vector<32x1024xf32>, vector<32x1024xf32> -> vector<32x1024xf32>
    %c2 = arith.constant 2 : index
    %c0_13 = arith.constant 0 : index
    %c0_14 = arith.constant 0 : index
    %9 = vector.load %arg1[%c2, %c0_13, %c0_14] : memref<4x32x1024xf32, #tpu.memory_space<vmem>>, vector<1x32x1024xf32>
    %10 = vector.shape_cast %9 : vector<1x32x1024xf32> to vector<32x1024xf32>
    %cst_15 = arith.constant dense<0.000000e+00> : vector<32x1024xf32>
    %11 = tpu.matmul %0, %10, %cst_15 {dimension_numbers = #tpu.dot_dimension_numbers<[1], [0], [0], [1], [0, 0, 1, 1], [], []>} : vector<32x32xf32>, vector<32x1024xf32>, vector<32x1024xf32> -> vector<32x1024xf32>
    %c3 = arith.constant 3 : index
    %c0_16 = arith.constant 0 : index
    %c0_17 = arith.constant 0 : index
    %12 = vector.load %arg1[%c3, %c0_16, %c0_17] : memref<4x32x1024xf32, #tpu.memory_space<vmem>>, vector<1x32x1024xf32>
    %13 = vector.shape_cast %12 : vector<1x32x1024xf32> to vector<32x1024xf32>
    %cst_18 = arith.constant dense<0.000000e+00> : vector<32x1024xf32>
    %14 = tpu.matmul %0, %13, %cst_18 {dimension_numbers = #tpu.dot_dimension_numbers<[1], [0], [0], [1], [0, 0, 1, 1], [], []>} : vector<32x32xf32>, vector<32x1024xf32>, vector<32x1024xf32> -> vector<32x1024xf32>
    %15 = vector.extract_strided_slice %1 {offsets = [0, 0, 0], sizes = [1, 16, 4], strides = [1, 1, 1]} : vector<2x16x4xf32> to vector<1x16x4xf32>
    %16 = vector.shape_cast %15 : vector<1x16x4xf32> to vector<16x4xf32>
    %17 = vector.extract_strided_slice %2 {offsets = [0, 0, 0], sizes = [1, 16, 1], strides = [1, 1, 1]} : vector<2x16x1xf32> to vector<1x16x1xf32>
    %18 = vector.shape_cast %17 : vector<1x16x1xf32> to vector<16x1xf32>
    %cst_19 = arith.constant 0.000000e+00 : f32
    %19 = vector.broadcast %cst_19 : f32 to vector<4x1024xf32>
    %cst_20 = arith.constant 0.000000e+00 : f32
    %20 = vector.broadcast %cst_20 : f32 to vector<4x1024xf32>
    %21 = vector.extract_strided_slice %5 {offsets = [0, 0], sizes = [16, 1024], strides = [1, 1]} : vector<32x1024xf32> to vector<16x1024xf32>
    %22 = vector.broadcast %18 : vector<16x1xf32> to vector<16x1024xf32>
    %23 = arith.addf %21, %22 : vector<16x1024xf32>
    %24 = vector.extract_strided_slice %16 {offsets = [0, 0], sizes = [16, 1], strides = [1, 1]} : vector<16x4xf32> to vector<16x1xf32>
    %25 = vector.extract_strided_slice %19 {offsets = [0, 0], sizes = [1, 1024], strides = [1, 1]} : vector<4x1024xf32> to vector<1x1024xf32>
    %26 = vector.broadcast %24 : vector<16x1xf32> to vector<16x1024xf32>
    %27 = vector.broadcast %25 : vector<1x1024xf32> to vector<16x1024xf32>
    %28 = arith.mulf %26, %27 : vector<16x1024xf32>
    %29 = arith.addf %23, %28 : vector<16x1024xf32>
    %30 = vector.extract_strided_slice %16 {offsets = [0, 1], sizes = [16, 1], strides = [1, 1]} : vector<16x4xf32> to vector<16x1xf32>
    %31 = vector.extract_strided_slice %19 {offsets = [1, 0], sizes = [1, 1024], strides = [1, 1]} : vector<4x1024xf32> to vector<1x1024xf32>
    %32 = vector.broadcast %30 : vector<16x1xf32> to vector<16x1024xf32>
    %33 = vector.broadcast %31 : vector<1x1024xf32> to vector<16x1024xf32>
    %34 = arith.mulf %32, %33 : vector<16x1024xf32>
    %35 = arith.addf %29, %34 : vector<16x1024xf32>
    %36 = vector.extract_strided_slice %16 {offsets = [0, 2], sizes = [16, 1], strides = [1, 1]} : vector<16x4xf32> to vector<16x1xf32>
    %37 = vector.extract_strided_slice %19 {offsets = [2, 0], sizes = [1, 1024], strides = [1, 1]} : vector<4x1024xf32> to vector<1x1024xf32>
    %38 = vector.broadcast %36 : vector<16x1xf32> to vector<16x1024xf32>
    %39 = vector.broadcast %37 : vector<1x1024xf32> to vector<16x1024xf32>
    %40 = arith.mulf %38, %39 : vector<16x1024xf32>
    %41 = arith.addf %35, %40 : vector<16x1024xf32>
    %42 = vector.extract_strided_slice %16 {offsets = [0, 3], sizes = [16, 1], strides = [1, 1]} : vector<16x4xf32> to vector<16x1xf32>
    %43 = vector.extract_strided_slice %19 {offsets = [3, 0], sizes = [1, 1024], strides = [1, 1]} : vector<4x1024xf32> to vector<1x1024xf32>
    %44 = vector.broadcast %42 : vector<16x1xf32> to vector<16x1024xf32>
    %45 = vector.broadcast %43 : vector<1x1024xf32> to vector<16x1024xf32>
    %46 = arith.mulf %44, %45 : vector<16x1024xf32>
    %47 = arith.addf %41, %46 : vector<16x1024xf32>
    %48 = vector.extract_strided_slice %47 {offsets = [0, 0], sizes = [4, 1024], strides = [1, 1]} : vector<16x1024xf32> to vector<4x1024xf32>
    %49 = arith.negf %48 : vector<4x1024xf32>
    %50 = math.exp %49 : vector<4x1024xf32>
    %cst_21 = arith.constant 1.000000e+00 : f32
    %51 = vector.broadcast %cst_21 : f32 to vector<4x1024xf32>
    %52 = arith.addf %51, %50 : vector<4x1024xf32>
    %53 = arith.divf %51, %52 : vector<4x1024xf32>
    %54 = vector.extract_strided_slice %47 {offsets = [4, 0], sizes = [4, 1024], strides = [1, 1]} : vector<16x1024xf32> to vector<4x1024xf32>
    %55 = arith.negf %54 : vector<4x1024xf32>
    %56 = math.exp %55 : vector<4x1024xf32>
    %cst_22 = arith.constant 1.000000e+00 : f32
    %57 = vector.broadcast %cst_22 : f32 to vector<4x1024xf32>
    %58 = arith.addf %57, %56 : vector<4x1024xf32>
    %59 = arith.divf %57, %58 : vector<4x1024xf32>
    %60 = vector.extract_strided_slice %47 {offsets = [8, 0], sizes = [4, 1024], strides = [1, 1]} : vector<16x1024xf32> to vector<4x1024xf32>
    %61 = math.tanh %60 : vector<4x1024xf32>
    %62 = vector.extract_strided_slice %47 {offsets = [12, 0], sizes = [4, 1024], strides = [1, 1]} : vector<16x1024xf32> to vector<4x1024xf32>
    %63 = arith.negf %62 : vector<4x1024xf32>
    %64 = math.exp %63 : vector<4x1024xf32>
    %cst_23 = arith.constant 1.000000e+00 : f32
    %65 = vector.broadcast %cst_23 : f32 to vector<4x1024xf32>
    %66 = arith.addf %65, %64 : vector<4x1024xf32>
    %67 = arith.divf %65, %66 : vector<4x1024xf32>
    %68 = arith.mulf %59, %20 : vector<4x1024xf32>
    %69 = arith.mulf %53, %61 : vector<4x1024xf32>
    %70 = arith.addf %68, %69 : vector<4x1024xf32>
    %71 = math.tanh %70 : vector<4x1024xf32>
    %72 = arith.mulf %67, %71 : vector<4x1024xf32>
    %cst_24 = arith.constant dense<0.000000e+00> : vector<1024xf32>
    %73 = vector.multi_reduction <add>, %72, %cst_24 [0] : vector<4x1024xf32> to vector<1024xf32>
    %74 = vector.shape_cast %73 : vector<1024xf32> to vector<1x1024xf32>
    %75 = vector.extract_strided_slice %8 {offsets = [0, 0], sizes = [16, 1024], strides = [1, 1]} : vector<32x1024xf32> to vector<16x1024xf32>
    %76 = vector.broadcast %18 : vector<16x1xf32> to vector<16x1024xf32>
    %77 = arith.addf %75, %76 : vector<16x1024xf32>
    %78 = vector.extract_strided_slice %16 {offsets = [0, 0], sizes = [16, 1], strides = [1, 1]} : vector<16x4xf32> to vector<16x1xf32>
    %79 = vector.extract_strided_slice %72 {offsets = [0, 0], sizes = [1, 1024], strides = [1, 1]} : vector<4x1024xf32> to vector<1x1024xf32>
    %80 = vector.broadcast %78 : vector<16x1xf32> to vector<16x1024xf32>
    %81 = vector.broadcast %79 : vector<1x1024xf32> to vector<16x1024xf32>
    %82 = arith.mulf %80, %81 : vector<16x1024xf32>
    %83 = arith.addf %77, %82 : vector<16x1024xf32>
    %84 = vector.extract_strided_slice %16 {offsets = [0, 1], sizes = [16, 1], strides = [1, 1]} : vector<16x4xf32> to vector<16x1xf32>
    %85 = vector.extract_strided_slice %72 {offsets = [1, 0], sizes = [1, 1024], strides = [1, 1]} : vector<4x1024xf32> to vector<1x1024xf32>
    %86 = vector.broadcast %84 : vector<16x1xf32> to vector<16x1024xf32>
    %87 = vector.broadcast %85 : vector<1x1024xf32> to vector<16x1024xf32>
    %88 = arith.mulf %86, %87 : vector<16x1024xf32>
    %89 = arith.addf %83, %88 : vector<16x1024xf32>
    %90 = vector.extract_strided_slice %16 {offsets = [0, 2], sizes = [16, 1], strides = [1, 1]} : vector<16x4xf32> to vector<16x1xf32>
    %91 = vector.extract_strided_slice %72 {offsets = [2, 0], sizes = [1, 1024], strides = [1, 1]} : vector<4x1024xf32> to vector<1x1024xf32>
    %92 = vector.broadcast %90 : vector<16x1xf32> to vector<16x1024xf32>
    %93 = vector.broadcast %91 : vector<1x1024xf32> to vector<16x1024xf32>
    %94 = arith.mulf %92, %93 : vector<16x1024xf32>
    %95 = arith.addf %89, %94 : vector<16x1024xf32>
    %96 = vector.extract_strided_slice %16 {offsets = [0, 3], sizes = [16, 1], strides = [1, 1]} : vector<16x4xf32> to vector<16x1xf32>
    %97 = vector.extract_strided_slice %72 {offsets = [3, 0], sizes = [1, 1024], strides = [1, 1]} : vector<4x1024xf32> to vector<1x1024xf32>
    %98 = vector.broadcast %96 : vector<16x1xf32> to vector<16x1024xf32>
    %99 = vector.broadcast %97 : vector<1x1024xf32> to vector<16x1024xf32>
    %100 = arith.mulf %98, %99 : vector<16x1024xf32>
    %101 = arith.addf %95, %100 : vector<16x1024xf32>
    %102 = vector.extract_strided_slice %101 {offsets = [0, 0], sizes = [4, 1024], strides = [1, 1]} : vector<16x1024xf32> to vector<4x1024xf32>
    %103 = arith.negf %102 : vector<4x1024xf32>
    %104 = math.exp %103 : vector<4x1024xf32>
    %cst_25 = arith.constant 1.000000e+00 : f32
    %105 = vector.broadcast %cst_25 : f32 to vector<4x1024xf32>
    %106 = arith.addf %105, %104 : vector<4x1024xf32>
    %107 = arith.divf %105, %106 : vector<4x1024xf32>
    %108 = vector.extract_strided_slice %101 {offsets = [4, 0], sizes = [4, 1024], strides = [1, 1]} : vector<16x1024xf32> to vector<4x1024xf32>
    %109 = arith.negf %108 : vector<4x1024xf32>
    %110 = math.exp %109 : vector<4x1024xf32>
    %cst_26 = arith.constant 1.000000e+00 : f32
    %111 = vector.broadcast %cst_26 : f32 to vector<4x1024xf32>
    %112 = arith.addf %111, %110 : vector<4x1024xf32>
    %113 = arith.divf %111, %112 : vector<4x1024xf32>
    %114 = vector.extract_strided_slice %101 {offsets = [8, 0], sizes = [4, 1024], strides = [1, 1]} : vector<16x1024xf32> to vector<4x1024xf32>
    %115 = math.tanh %114 : vector<4x1024xf32>
    %116 = vector.extract_strided_slice %101 {offsets = [12, 0], sizes = [4, 1024], strides = [1, 1]} : vector<16x1024xf32> to vector<4x1024xf32>
    %117 = arith.negf %116 : vector<4x1024xf32>
    %118 = math.exp %117 : vector<4x1024xf32>
    %cst_27 = arith.constant 1.000000e+00 : f32
    %119 = vector.broadcast %cst_27 : f32 to vector<4x1024xf32>
    %120 = arith.addf %119, %118 : vector<4x1024xf32>
    %121 = arith.divf %119, %120 : vector<4x1024xf32>
    %122 = arith.mulf %113, %70 : vector<4x1024xf32>
    %123 = arith.mulf %107, %115 : vector<4x1024xf32>
    %124 = arith.addf %122, %123 : vector<4x1024xf32>
    %125 = math.tanh %124 : vector<4x1024xf32>
    %126 = arith.mulf %121, %125 : vector<4x1024xf32>
    %cst_28 = arith.constant dense<0.000000e+00> : vector<1024xf32>
    %127 = vector.multi_reduction <add>, %126, %cst_28 [0] : vector<4x1024xf32> to vector<1024xf32>
    %128 = vector.shape_cast %127 : vector<1024xf32> to vector<1x1024xf32>
    %129 = vector.extract_strided_slice %11 {offsets = [0, 0], sizes = [16, 1024], strides = [1, 1]} : vector<32x1024xf32> to vector<16x1024xf32>
    %130 = vector.broadcast %18 : vector<16x1xf32> to vector<16x1024xf32>
    %131 = arith.addf %129, %130 : vector<16x1024xf32>
    %132 = vector.extract_strided_slice %16 {offsets = [0, 0], sizes = [16, 1], strides = [1, 1]} : vector<16x4xf32> to vector<16x1xf32>
    %133 = vector.extract_strided_slice %126 {offsets = [0, 0], sizes = [1, 1024], strides = [1, 1]} : vector<4x1024xf32> to vector<1x1024xf32>
    %134 = vector.broadcast %132 : vector<16x1xf32> to vector<16x1024xf32>
    %135 = vector.broadcast %133 : vector<1x1024xf32> to vector<16x1024xf32>
    %136 = arith.mulf %134, %135 : vector<16x1024xf32>
    %137 = arith.addf %131, %136 : vector<16x1024xf32>
    %138 = vector.extract_strided_slice %16 {offsets = [0, 1], sizes = [16, 1], strides = [1, 1]} : vector<16x4xf32> to vector<16x1xf32>
    %139 = vector.extract_strided_slice %126 {offsets = [1, 0], sizes = [1, 1024], strides = [1, 1]} : vector<4x1024xf32> to vector<1x1024xf32>
    %140 = vector.broadcast %138 : vector<16x1xf32> to vector<16x1024xf32>
    %141 = vector.broadcast %139 : vector<1x1024xf32> to vector<16x1024xf32>
    %142 = arith.mulf %140, %141 : vector<16x1024xf32>
    %143 = arith.addf %137, %142 : vector<16x1024xf32>
    %144 = vector.extract_strided_slice %16 {offsets = [0, 2], sizes = [16, 1], strides = [1, 1]} : vector<16x4xf32> to vector<16x1xf32>
    %145 = vector.extract_strided_slice %126 {offsets = [2, 0], sizes = [1, 1024], strides = [1, 1]} : vector<4x1024xf32> to vector<1x1024xf32>
    %146 = vector.broadcast %144 : vector<16x1xf32> to vector<16x1024xf32>
    %147 = vector.broadcast %145 : vector<1x1024xf32> to vector<16x1024xf32>
    %148 = arith.mulf %146, %147 : vector<16x1024xf32>
    %149 = arith.addf %143, %148 : vector<16x1024xf32>
    %150 = vector.extract_strided_slice %16 {offsets = [0, 3], sizes = [16, 1], strides = [1, 1]} : vector<16x4xf32> to vector<16x1xf32>
    %151 = vector.extract_strided_slice %126 {offsets = [3, 0], sizes = [1, 1024], strides = [1, 1]} : vector<4x1024xf32> to vector<1x1024xf32>
    %152 = vector.broadcast %150 : vector<16x1xf32> to vector<16x1024xf32>
    %153 = vector.broadcast %151 : vector<1x1024xf32> to vector<16x1024xf32>
    %154 = arith.mulf %152, %153 : vector<16x1024xf32>
    %155 = arith.addf %149, %154 : vector<16x1024xf32>
    %156 = vector.extract_strided_slice %155 {offsets = [0, 0], sizes = [4, 1024], strides = [1, 1]} : vector<16x1024xf32> to vector<4x1024xf32>
    %157 = arith.negf %156 : vector<4x1024xf32>
    %158 = math.exp %157 : vector<4x1024xf32>
    %cst_29 = arith.constant 1.000000e+00 : f32
    %159 = vector.broadcast %cst_29 : f32 to vector<4x1024xf32>
    %160 = arith.addf %159, %158 : vector<4x1024xf32>
    %161 = arith.divf %159, %160 : vector<4x1024xf32>
    %162 = vector.extract_strided_slice %155 {offsets = [4, 0], sizes = [4, 1024], strides = [1, 1]} : vector<16x1024xf32> to vector<4x1024xf32>
    %163 = arith.negf %162 : vector<4x1024xf32>
    %164 = math.exp %163 : vector<4x1024xf32>
    %cst_30 = arith.constant 1.000000e+00 : f32
    %165 = vector.broadcast %cst_30 : f32 to vector<4x1024xf32>
    %166 = arith.addf %165, %164 : vector<4x1024xf32>
    %167 = arith.divf %165, %166 : vector<4x1024xf32>
    %168 = vector.extract_strided_slice %155 {offsets = [8, 0], sizes = [4, 1024], strides = [1, 1]} : vector<16x1024xf32> to vector<4x1024xf32>
    %169 = math.tanh %168 : vector<4x1024xf32>
    %170 = vector.extract_strided_slice %155 {offsets = [12, 0], sizes = [4, 1024], strides = [1, 1]} : vector<16x1024xf32> to vector<4x1024xf32>
    %171 = arith.negf %170 : vector<4x1024xf32>
    %172 = math.exp %171 : vector<4x1024xf32>
    %cst_31 = arith.constant 1.000000e+00 : f32
    %173 = vector.broadcast %cst_31 : f32 to vector<4x1024xf32>
    %174 = arith.addf %173, %172 : vector<4x1024xf32>
    %175 = arith.divf %173, %174 : vector<4x1024xf32>
    %176 = arith.mulf %167, %124 : vector<4x1024xf32>
    %177 = arith.mulf %161, %169 : vector<4x1024xf32>
    %178 = arith.addf %176, %177 : vector<4x1024xf32>
    %179 = math.tanh %178 : vector<4x1024xf32>
    %180 = arith.mulf %175, %179 : vector<4x1024xf32>
    %cst_32 = arith.constant dense<0.000000e+00> : vector<1024xf32>
    %181 = vector.multi_reduction <add>, %180, %cst_32 [0] : vector<4x1024xf32> to vector<1024xf32>
    %182 = vector.shape_cast %181 : vector<1024xf32> to vector<1x1024xf32>
    %183 = vector.extract_strided_slice %14 {offsets = [0, 0], sizes = [16, 1024], strides = [1, 1]} : vector<32x1024xf32> to vector<16x1024xf32>
    %184 = vector.broadcast %18 : vector<16x1xf32> to vector<16x1024xf32>
    %185 = arith.addf %183, %184 : vector<16x1024xf32>
    %186 = vector.extract_strided_slice %16 {offsets = [0, 0], sizes = [16, 1], strides = [1, 1]} : vector<16x4xf32> to vector<16x1xf32>
    %187 = vector.extract_strided_slice %180 {offsets = [0, 0], sizes = [1, 1024], strides = [1, 1]} : vector<4x1024xf32> to vector<1x1024xf32>
    %188 = vector.broadcast %186 : vector<16x1xf32> to vector<16x1024xf32>
    %189 = vector.broadcast %187 : vector<1x1024xf32> to vector<16x1024xf32>
    %190 = arith.mulf %188, %189 : vector<16x1024xf32>
    %191 = arith.addf %185, %190 : vector<16x1024xf32>
    %192 = vector.extract_strided_slice %16 {offsets = [0, 1], sizes = [16, 1], strides = [1, 1]} : vector<16x4xf32> to vector<16x1xf32>
    %193 = vector.extract_strided_slice %180 {offsets = [1, 0], sizes = [1, 1024], strides = [1, 1]} : vector<4x1024xf32> to vector<1x1024xf32>
    %194 = vector.broadcast %192 : vector<16x1xf32> to vector<16x1024xf32>
    %195 = vector.broadcast %193 : vector<1x1024xf32> to vector<16x1024xf32>
    %196 = arith.mulf %194, %195 : vector<16x1024xf32>
    %197 = arith.addf %191, %196 : vector<16x1024xf32>
    %198 = vector.extract_strided_slice %16 {offsets = [0, 2], sizes = [16, 1], strides = [1, 1]} : vector<16x4xf32> to vector<16x1xf32>
    %199 = vector.extract_strided_slice %180 {offsets = [2, 0], sizes = [1, 1024], strides = [1, 1]} : vector<4x1024xf32> to vector<1x1024xf32>
    %200 = vector.broadcast %198 : vector<16x1xf32> to vector<16x1024xf32>
    %201 = vector.broadcast %199 : vector<1x1024xf32> to vector<16x1024xf32>
    %202 = arith.mulf %200, %201 : vector<16x1024xf32>
    %203 = arith.addf %197, %202 : vector<16x1024xf32>
    %204 = vector.extract_strided_slice %16 {offsets = [0, 3], sizes = [16, 1], strides = [1, 1]} : vector<16x4xf32> to vector<16x1xf32>
    %205 = vector.extract_strided_slice %180 {offsets = [3, 0], sizes = [1, 1024], strides = [1, 1]} : vector<4x1024xf32> to vector<1x1024xf32>
    %206 = vector.broadcast %204 : vector<16x1xf32> to vector<16x1024xf32>
    %207 = vector.broadcast %205 : vector<1x1024xf32> to vector<16x1024xf32>
    %208 = arith.mulf %206, %207 : vector<16x1024xf32>
    %209 = arith.addf %203, %208 : vector<16x1024xf32>
    %210 = vector.extract_strided_slice %209 {offsets = [0, 0], sizes = [4, 1024], strides = [1, 1]} : vector<16x1024xf32> to vector<4x1024xf32>
    %211 = arith.negf %210 : vector<4x1024xf32>
    %212 = math.exp %211 : vector<4x1024xf32>
    %cst_33 = arith.constant 1.000000e+00 : f32
    %213 = vector.broadcast %cst_33 : f32 to vector<4x1024xf32>
    %214 = arith.addf %213, %212 : vector<4x1024xf32>
    %215 = arith.divf %213, %214 : vector<4x1024xf32>
    %216 = vector.extract_strided_slice %209 {offsets = [4, 0], sizes = [4, 1024], strides = [1, 1]} : vector<16x1024xf32> to vector<4x1024xf32>
    %217 = arith.negf %216 : vector<4x1024xf32>
    %218 = math.exp %217 : vector<4x1024xf32>
    %cst_34 = arith.constant 1.000000e+00 : f32
    %219 = vector.broadcast %cst_34 : f32 to vector<4x1024xf32>
    %220 = arith.addf %219, %218 : vector<4x1024xf32>
    %221 = arith.divf %219, %220 : vector<4x1024xf32>
    %222 = vector.extract_strided_slice %209 {offsets = [8, 0], sizes = [4, 1024], strides = [1, 1]} : vector<16x1024xf32> to vector<4x1024xf32>
    %223 = math.tanh %222 : vector<4x1024xf32>
    %224 = vector.extract_strided_slice %209 {offsets = [12, 0], sizes = [4, 1024], strides = [1, 1]} : vector<16x1024xf32> to vector<4x1024xf32>
    %225 = arith.negf %224 : vector<4x1024xf32>
    %226 = math.exp %225 : vector<4x1024xf32>
    %cst_35 = arith.constant 1.000000e+00 : f32
    %227 = vector.broadcast %cst_35 : f32 to vector<4x1024xf32>
    %228 = arith.addf %227, %226 : vector<4x1024xf32>
    %229 = arith.divf %227, %228 : vector<4x1024xf32>
    %230 = arith.mulf %221, %178 : vector<4x1024xf32>
    %231 = arith.mulf %215, %223 : vector<4x1024xf32>
    %232 = arith.addf %230, %231 : vector<4x1024xf32>
    %233 = math.tanh %232 : vector<4x1024xf32>
    %234 = arith.mulf %229, %233 : vector<4x1024xf32>
    %cst_36 = arith.constant dense<0.000000e+00> : vector<1024xf32>
    %235 = vector.multi_reduction <add>, %234, %cst_36 [0] : vector<4x1024xf32> to vector<1024xf32>
    %236 = vector.shape_cast %235 : vector<1024xf32> to vector<1x1024xf32>
    %237 = tpu.concatenate %74, %128, %182, %236 in 0 : vector<1x1024xf32>, vector<1x1024xf32>, vector<1x1024xf32>, vector<1x1024xf32> -> vector<4x1024xf32>
    %238 = vector.extract_strided_slice %1 {offsets = [1, 0, 0], sizes = [1, 16, 4], strides = [1, 1, 1]} : vector<2x16x4xf32> to vector<1x16x4xf32>
    %239 = vector.shape_cast %238 : vector<1x16x4xf32> to vector<16x4xf32>
    %240 = vector.extract_strided_slice %2 {offsets = [1, 0, 0], sizes = [1, 16, 1], strides = [1, 1, 1]} : vector<2x16x1xf32> to vector<1x16x1xf32>
    %241 = vector.shape_cast %240 : vector<1x16x1xf32> to vector<16x1xf32>
    %cst_37 = arith.constant 0.000000e+00 : f32
    %242 = vector.broadcast %cst_37 : f32 to vector<4x1024xf32>
    %cst_38 = arith.constant 0.000000e+00 : f32
    %243 = vector.broadcast %cst_38 : f32 to vector<4x1024xf32>
    %244 = vector.extract_strided_slice %14 {offsets = [16, 0], sizes = [16, 1024], strides = [1, 1]} : vector<32x1024xf32> to vector<16x1024xf32>
    %245 = vector.broadcast %241 : vector<16x1xf32> to vector<16x1024xf32>
    %246 = arith.addf %244, %245 : vector<16x1024xf32>
    %247 = vector.extract_strided_slice %239 {offsets = [0, 0], sizes = [16, 1], strides = [1, 1]} : vector<16x4xf32> to vector<16x1xf32>
    %248 = vector.extract_strided_slice %242 {offsets = [0, 0], sizes = [1, 1024], strides = [1, 1]} : vector<4x1024xf32> to vector<1x1024xf32>
    %249 = vector.broadcast %247 : vector<16x1xf32> to vector<16x1024xf32>
    %250 = vector.broadcast %248 : vector<1x1024xf32> to vector<16x1024xf32>
    %251 = arith.mulf %249, %250 : vector<16x1024xf32>
    %252 = arith.addf %246, %251 : vector<16x1024xf32>
    %253 = vector.extract_strided_slice %239 {offsets = [0, 1], sizes = [16, 1], strides = [1, 1]} : vector<16x4xf32> to vector<16x1xf32>
    %254 = vector.extract_strided_slice %242 {offsets = [1, 0], sizes = [1, 1024], strides = [1, 1]} : vector<4x1024xf32> to vector<1x1024xf32>
    %255 = vector.broadcast %253 : vector<16x1xf32> to vector<16x1024xf32>
    %256 = vector.broadcast %254 : vector<1x1024xf32> to vector<16x1024xf32>
    %257 = arith.mulf %255, %256 : vector<16x1024xf32>
    %258 = arith.addf %252, %257 : vector<16x1024xf32>
    %259 = vector.extract_strided_slice %239 {offsets = [0, 2], sizes = [16, 1], strides = [1, 1]} : vector<16x4xf32> to vector<16x1xf32>
    %260 = vector.extract_strided_slice %242 {offsets = [2, 0], sizes = [1, 1024], strides = [1, 1]} : vector<4x1024xf32> to vector<1x1024xf32>
    %261 = vector.broadcast %259 : vector<16x1xf32> to vector<16x1024xf32>
    %262 = vector.broadcast %260 : vector<1x1024xf32> to vector<16x1024xf32>
    %263 = arith.mulf %261, %262 : vector<16x1024xf32>
    %264 = arith.addf %258, %263 : vector<16x1024xf32>
    %265 = vector.extract_strided_slice %239 {offsets = [0, 3], sizes = [16, 1], strides = [1, 1]} : vector<16x4xf32> to vector<16x1xf32>
    %266 = vector.extract_strided_slice %242 {offsets = [3, 0], sizes = [1, 1024], strides = [1, 1]} : vector<4x1024xf32> to vector<1x1024xf32>
    %267 = vector.broadcast %265 : vector<16x1xf32> to vector<16x1024xf32>
    %268 = vector.broadcast %266 : vector<1x1024xf32> to vector<16x1024xf32>
    %269 = arith.mulf %267, %268 : vector<16x1024xf32>
    %270 = arith.addf %264, %269 : vector<16x1024xf32>
    %271 = vector.extract_strided_slice %270 {offsets = [0, 0], sizes = [4, 1024], strides = [1, 1]} : vector<16x1024xf32> to vector<4x1024xf32>
    %272 = arith.negf %271 : vector<4x1024xf32>
    %273 = math.exp %272 : vector<4x1024xf32>
    %cst_39 = arith.constant 1.000000e+00 : f32
    %274 = vector.broadcast %cst_39 : f32 to vector<4x1024xf32>
    %275 = arith.addf %274, %273 : vector<4x1024xf32>
    %276 = arith.divf %274, %275 : vector<4x1024xf32>
    %277 = vector.extract_strided_slice %270 {offsets = [4, 0], sizes = [4, 1024], strides = [1, 1]} : vector<16x1024xf32> to vector<4x1024xf32>
    %278 = arith.negf %277 : vector<4x1024xf32>
    %279 = math.exp %278 : vector<4x1024xf32>
    %cst_40 = arith.constant 1.000000e+00 : f32
    %280 = vector.broadcast %cst_40 : f32 to vector<4x1024xf32>
    %281 = arith.addf %280, %279 : vector<4x1024xf32>
    %282 = arith.divf %280, %281 : vector<4x1024xf32>
    %283 = vector.extract_strided_slice %270 {offsets = [8, 0], sizes = [4, 1024], strides = [1, 1]} : vector<16x1024xf32> to vector<4x1024xf32>
    %284 = math.tanh %283 : vector<4x1024xf32>
    %285 = vector.extract_strided_slice %270 {offsets = [12, 0], sizes = [4, 1024], strides = [1, 1]} : vector<16x1024xf32> to vector<4x1024xf32>
    %286 = arith.negf %285 : vector<4x1024xf32>
    %287 = math.exp %286 : vector<4x1024xf32>
    %cst_41 = arith.constant 1.000000e+00 : f32
    %288 = vector.broadcast %cst_41 : f32 to vector<4x1024xf32>
    %289 = arith.addf %288, %287 : vector<4x1024xf32>
    %290 = arith.divf %288, %289 : vector<4x1024xf32>
    %291 = arith.mulf %282, %243 : vector<4x1024xf32>
    %292 = arith.mulf %276, %284 : vector<4x1024xf32>
    %293 = arith.addf %291, %292 : vector<4x1024xf32>
    %294 = math.tanh %293 : vector<4x1024xf32>
    %295 = arith.mulf %290, %294 : vector<4x1024xf32>
    %cst_42 = arith.constant dense<0.000000e+00> : vector<1024xf32>
    %296 = vector.multi_reduction <add>, %295, %cst_42 [0] : vector<4x1024xf32> to vector<1024xf32>
    %297 = vector.shape_cast %296 : vector<1024xf32> to vector<1x1024xf32>
    %298 = vector.extract_strided_slice %11 {offsets = [16, 0], sizes = [16, 1024], strides = [1, 1]} : vector<32x1024xf32> to vector<16x1024xf32>
    %299 = vector.broadcast %241 : vector<16x1xf32> to vector<16x1024xf32>
    %300 = arith.addf %298, %299 : vector<16x1024xf32>
    %301 = vector.extract_strided_slice %239 {offsets = [0, 0], sizes = [16, 1], strides = [1, 1]} : vector<16x4xf32> to vector<16x1xf32>
    %302 = vector.extract_strided_slice %295 {offsets = [0, 0], sizes = [1, 1024], strides = [1, 1]} : vector<4x1024xf32> to vector<1x1024xf32>
    %303 = vector.broadcast %301 : vector<16x1xf32> to vector<16x1024xf32>
    %304 = vector.broadcast %302 : vector<1x1024xf32> to vector<16x1024xf32>
    %305 = arith.mulf %303, %304 : vector<16x1024xf32>
    %306 = arith.addf %300, %305 : vector<16x1024xf32>
    %307 = vector.extract_strided_slice %239 {offsets = [0, 1], sizes = [16, 1], strides = [1, 1]} : vector<16x4xf32> to vector<16x1xf32>
    %308 = vector.extract_strided_slice %295 {offsets = [1, 0], sizes = [1, 1024], strides = [1, 1]} : vector<4x1024xf32> to vector<1x1024xf32>
    %309 = vector.broadcast %307 : vector<16x1xf32> to vector<16x1024xf32>
    %310 = vector.broadcast %308 : vector<1x1024xf32> to vector<16x1024xf32>
    %311 = arith.mulf %309, %310 : vector<16x1024xf32>
    %312 = arith.addf %306, %311 : vector<16x1024xf32>
    %313 = vector.extract_strided_slice %239 {offsets = [0, 2], sizes = [16, 1], strides = [1, 1]} : vector<16x4xf32> to vector<16x1xf32>
    %314 = vector.extract_strided_slice %295 {offsets = [2, 0], sizes = [1, 1024], strides = [1, 1]} : vector<4x1024xf32> to vector<1x1024xf32>
    %315 = vector.broadcast %313 : vector<16x1xf32> to vector<16x1024xf32>
    %316 = vector.broadcast %314 : vector<1x1024xf32> to vector<16x1024xf32>
    %317 = arith.mulf %315, %316 : vector<16x1024xf32>
    %318 = arith.addf %312, %317 : vector<16x1024xf32>
    %319 = vector.extract_strided_slice %239 {offsets = [0, 3], sizes = [16, 1], strides = [1, 1]} : vector<16x4xf32> to vector<16x1xf32>
    %320 = vector.extract_strided_slice %295 {offsets = [3, 0], sizes = [1, 1024], strides = [1, 1]} : vector<4x1024xf32> to vector<1x1024xf32>
    %321 = vector.broadcast %319 : vector<16x1xf32> to vector<16x1024xf32>
    %322 = vector.broadcast %320 : vector<1x1024xf32> to vector<16x1024xf32>
    %323 = arith.mulf %321, %322 : vector<16x1024xf32>
    %324 = arith.addf %318, %323 : vector<16x1024xf32>
    %325 = vector.extract_strided_slice %324 {offsets = [0, 0], sizes = [4, 1024], strides = [1, 1]} : vector<16x1024xf32> to vector<4x1024xf32>
    %326 = arith.negf %325 : vector<4x1024xf32>
    %327 = math.exp %326 : vector<4x1024xf32>
    %cst_43 = arith.constant 1.000000e+00 : f32
    %328 = vector.broadcast %cst_43 : f32 to vector<4x1024xf32>
    %329 = arith.addf %328, %327 : vector<4x1024xf32>
    %330 = arith.divf %328, %329 : vector<4x1024xf32>
    %331 = vector.extract_strided_slice %324 {offsets = [4, 0], sizes = [4, 1024], strides = [1, 1]} : vector<16x1024xf32> to vector<4x1024xf32>
    %332 = arith.negf %331 : vector<4x1024xf32>
    %333 = math.exp %332 : vector<4x1024xf32>
    %cst_44 = arith.constant 1.000000e+00 : f32
    %334 = vector.broadcast %cst_44 : f32 to vector<4x1024xf32>
    %335 = arith.addf %334, %333 : vector<4x1024xf32>
    %336 = arith.divf %334, %335 : vector<4x1024xf32>
    %337 = vector.extract_strided_slice %324 {offsets = [8, 0], sizes = [4, 1024], strides = [1, 1]} : vector<16x1024xf32> to vector<4x1024xf32>
    %338 = math.tanh %337 : vector<4x1024xf32>
    %339 = vector.extract_strided_slice %324 {offsets = [12, 0], sizes = [4, 1024], strides = [1, 1]} : vector<16x1024xf32> to vector<4x1024xf32>
    %340 = arith.negf %339 : vector<4x1024xf32>
    %341 = math.exp %340 : vector<4x1024xf32>
    %cst_45 = arith.constant 1.000000e+00 : f32
    %342 = vector.broadcast %cst_45 : f32 to vector<4x1024xf32>
    %343 = arith.addf %342, %341 : vector<4x1024xf32>
    %344 = arith.divf %342, %343 : vector<4x1024xf32>
    %345 = arith.mulf %336, %293 : vector<4x1024xf32>
    %346 = arith.mulf %330, %338 : vector<4x1024xf32>
    %347 = arith.addf %345, %346 : vector<4x1024xf32>
    %348 = math.tanh %347 : vector<4x1024xf32>
    %349 = arith.mulf %344, %348 : vector<4x1024xf32>
    %cst_46 = arith.constant dense<0.000000e+00> : vector<1024xf32>
    %350 = vector.multi_reduction <add>, %349, %cst_46 [0] : vector<4x1024xf32> to vector<1024xf32>
    %351 = vector.shape_cast %350 : vector<1024xf32> to vector<1x1024xf32>
    %352 = vector.extract_strided_slice %8 {offsets = [16, 0], sizes = [16, 1024], strides = [1, 1]} : vector<32x1024xf32> to vector<16x1024xf32>
    %353 = vector.broadcast %241 : vector<16x1xf32> to vector<16x1024xf32>
    %354 = arith.addf %352, %353 : vector<16x1024xf32>
    %355 = vector.extract_strided_slice %239 {offsets = [0, 0], sizes = [16, 1], strides = [1, 1]} : vector<16x4xf32> to vector<16x1xf32>
    %356 = vector.extract_strided_slice %349 {offsets = [0, 0], sizes = [1, 1024], strides = [1, 1]} : vector<4x1024xf32> to vector<1x1024xf32>
    %357 = vector.broadcast %355 : vector<16x1xf32> to vector<16x1024xf32>
    %358 = vector.broadcast %356 : vector<1x1024xf32> to vector<16x1024xf32>
    %359 = arith.mulf %357, %358 : vector<16x1024xf32>
    %360 = arith.addf %354, %359 : vector<16x1024xf32>
    %361 = vector.extract_strided_slice %239 {offsets = [0, 1], sizes = [16, 1], strides = [1, 1]} : vector<16x4xf32> to vector<16x1xf32>
    %362 = vector.extract_strided_slice %349 {offsets = [1, 0], sizes = [1, 1024], strides = [1, 1]} : vector<4x1024xf32> to vector<1x1024xf32>
    %363 = vector.broadcast %361 : vector<16x1xf32> to vector<16x1024xf32>
    %364 = vector.broadcast %362 : vector<1x1024xf32> to vector<16x1024xf32>
    %365 = arith.mulf %363, %364 : vector<16x1024xf32>
    %366 = arith.addf %360, %365 : vector<16x1024xf32>
    %367 = vector.extract_strided_slice %239 {offsets = [0, 2], sizes = [16, 1], strides = [1, 1]} : vector<16x4xf32> to vector<16x1xf32>
    %368 = vector.extract_strided_slice %349 {offsets = [2, 0], sizes = [1, 1024], strides = [1, 1]} : vector<4x1024xf32> to vector<1x1024xf32>
    %369 = vector.broadcast %367 : vector<16x1xf32> to vector<16x1024xf32>
    %370 = vector.broadcast %368 : vector<1x1024xf32> to vector<16x1024xf32>
    %371 = arith.mulf %369, %370 : vector<16x1024xf32>
    %372 = arith.addf %366, %371 : vector<16x1024xf32>
    %373 = vector.extract_strided_slice %239 {offsets = [0, 3], sizes = [16, 1], strides = [1, 1]} : vector<16x4xf32> to vector<16x1xf32>
    %374 = vector.extract_strided_slice %349 {offsets = [3, 0], sizes = [1, 1024], strides = [1, 1]} : vector<4x1024xf32> to vector<1x1024xf32>
    %375 = vector.broadcast %373 : vector<16x1xf32> to vector<16x1024xf32>
    %376 = vector.broadcast %374 : vector<1x1024xf32> to vector<16x1024xf32>
    %377 = arith.mulf %375, %376 : vector<16x1024xf32>
    %378 = arith.addf %372, %377 : vector<16x1024xf32>
    %379 = vector.extract_strided_slice %378 {offsets = [0, 0], sizes = [4, 1024], strides = [1, 1]} : vector<16x1024xf32> to vector<4x1024xf32>
    %380 = arith.negf %379 : vector<4x1024xf32>
    %381 = math.exp %380 : vector<4x1024xf32>
    %cst_47 = arith.constant 1.000000e+00 : f32
    %382 = vector.broadcast %cst_47 : f32 to vector<4x1024xf32>
    %383 = arith.addf %382, %381 : vector<4x1024xf32>
    %384 = arith.divf %382, %383 : vector<4x1024xf32>
    %385 = vector.extract_strided_slice %378 {offsets = [4, 0], sizes = [4, 1024], strides = [1, 1]} : vector<16x1024xf32> to vector<4x1024xf32>
    %386 = arith.negf %385 : vector<4x1024xf32>
    %387 = math.exp %386 : vector<4x1024xf32>
    %cst_48 = arith.constant 1.000000e+00 : f32
    %388 = vector.broadcast %cst_48 : f32 to vector<4x1024xf32>
    %389 = arith.addf %388, %387 : vector<4x1024xf32>
    %390 = arith.divf %388, %389 : vector<4x1024xf32>
    %391 = vector.extract_strided_slice %378 {offsets = [8, 0], sizes = [4, 1024], strides = [1, 1]} : vector<16x1024xf32> to vector<4x1024xf32>
    %392 = math.tanh %391 : vector<4x1024xf32>
    %393 = vector.extract_strided_slice %378 {offsets = [12, 0], sizes = [4, 1024], strides = [1, 1]} : vector<16x1024xf32> to vector<4x1024xf32>
    %394 = arith.negf %393 : vector<4x1024xf32>
    %395 = math.exp %394 : vector<4x1024xf32>
    %cst_49 = arith.constant 1.000000e+00 : f32
    %396 = vector.broadcast %cst_49 : f32 to vector<4x1024xf32>
    %397 = arith.addf %396, %395 : vector<4x1024xf32>
    %398 = arith.divf %396, %397 : vector<4x1024xf32>
    %399 = arith.mulf %390, %347 : vector<4x1024xf32>
    %400 = arith.mulf %384, %392 : vector<4x1024xf32>
    %401 = arith.addf %399, %400 : vector<4x1024xf32>
    %402 = math.tanh %401 : vector<4x1024xf32>
    %403 = arith.mulf %398, %402 : vector<4x1024xf32>
    %cst_50 = arith.constant dense<0.000000e+00> : vector<1024xf32>
    %404 = vector.multi_reduction <add>, %403, %cst_50 [0] : vector<4x1024xf32> to vector<1024xf32>
    %405 = vector.shape_cast %404 : vector<1024xf32> to vector<1x1024xf32>
    %406 = vector.extract_strided_slice %5 {offsets = [16, 0], sizes = [16, 1024], strides = [1, 1]} : vector<32x1024xf32> to vector<16x1024xf32>
    %407 = vector.broadcast %241 : vector<16x1xf32> to vector<16x1024xf32>
    %408 = arith.addf %406, %407 : vector<16x1024xf32>
    %409 = vector.extract_strided_slice %239 {offsets = [0, 0], sizes = [16, 1], strides = [1, 1]} : vector<16x4xf32> to vector<16x1xf32>
    %410 = vector.extract_strided_slice %403 {offsets = [0, 0], sizes = [1, 1024], strides = [1, 1]} : vector<4x1024xf32> to vector<1x1024xf32>
    %411 = vector.broadcast %409 : vector<16x1xf32> to vector<16x1024xf32>
    %412 = vector.broadcast %410 : vector<1x1024xf32> to vector<16x1024xf32>
    %413 = arith.mulf %411, %412 : vector<16x1024xf32>
    %414 = arith.addf %408, %413 : vector<16x1024xf32>
    %415 = vector.extract_strided_slice %239 {offsets = [0, 1], sizes = [16, 1], strides = [1, 1]} : vector<16x4xf32> to vector<16x1xf32>
    %416 = vector.extract_strided_slice %403 {offsets = [1, 0], sizes = [1, 1024], strides = [1, 1]} : vector<4x1024xf32> to vector<1x1024xf32>
    %417 = vector.broadcast %415 : vector<16x1xf32> to vector<16x1024xf32>
    %418 = vector.broadcast %416 : vector<1x1024xf32> to vector<16x1024xf32>
    %419 = arith.mulf %417, %418 : vector<16x1024xf32>
    %420 = arith.addf %414, %419 : vector<16x1024xf32>
    %421 = vector.extract_strided_slice %239 {offsets = [0, 2], sizes = [16, 1], strides = [1, 1]} : vector<16x4xf32> to vector<16x1xf32>
    %422 = vector.extract_strided_slice %403 {offsets = [2, 0], sizes = [1, 1024], strides = [1, 1]} : vector<4x1024xf32> to vector<1x1024xf32>
    %423 = vector.broadcast %421 : vector<16x1xf32> to vector<16x1024xf32>
    %424 = vector.broadcast %422 : vector<1x1024xf32> to vector<16x1024xf32>
    %425 = arith.mulf %423, %424 : vector<16x1024xf32>
    %426 = arith.addf %420, %425 : vector<16x1024xf32>
    %427 = vector.extract_strided_slice %239 {offsets = [0, 3], sizes = [16, 1], strides = [1, 1]} : vector<16x4xf32> to vector<16x1xf32>
    %428 = vector.extract_strided_slice %403 {offsets = [3, 0], sizes = [1, 1024], strides = [1, 1]} : vector<4x1024xf32> to vector<1x1024xf32>
    %429 = vector.broadcast %427 : vector<16x1xf32> to vector<16x1024xf32>
    %430 = vector.broadcast %428 : vector<1x1024xf32> to vector<16x1024xf32>
    %431 = arith.mulf %429, %430 : vector<16x1024xf32>
    %432 = arith.addf %426, %431 : vector<16x1024xf32>
    %433 = vector.extract_strided_slice %432 {offsets = [0, 0], sizes = [4, 1024], strides = [1, 1]} : vector<16x1024xf32> to vector<4x1024xf32>
    %434 = arith.negf %433 : vector<4x1024xf32>
    %435 = math.exp %434 : vector<4x1024xf32>
    %cst_51 = arith.constant 1.000000e+00 : f32
    %436 = vector.broadcast %cst_51 : f32 to vector<4x1024xf32>
    %437 = arith.addf %436, %435 : vector<4x1024xf32>
    %438 = arith.divf %436, %437 : vector<4x1024xf32>
    %439 = vector.extract_strided_slice %432 {offsets = [4, 0], sizes = [4, 1024], strides = [1, 1]} : vector<16x1024xf32> to vector<4x1024xf32>
    %440 = arith.negf %439 : vector<4x1024xf32>
    %441 = math.exp %440 : vector<4x1024xf32>
    %cst_52 = arith.constant 1.000000e+00 : f32
    %442 = vector.broadcast %cst_52 : f32 to vector<4x1024xf32>
    %443 = arith.addf %442, %441 : vector<4x1024xf32>
    %444 = arith.divf %442, %443 : vector<4x1024xf32>
    %445 = vector.extract_strided_slice %432 {offsets = [8, 0], sizes = [4, 1024], strides = [1, 1]} : vector<16x1024xf32> to vector<4x1024xf32>
    %446 = math.tanh %445 : vector<4x1024xf32>
    %447 = vector.extract_strided_slice %432 {offsets = [12, 0], sizes = [4, 1024], strides = [1, 1]} : vector<16x1024xf32> to vector<4x1024xf32>
    %448 = arith.negf %447 : vector<4x1024xf32>
    %449 = math.exp %448 : vector<4x1024xf32>
    %cst_53 = arith.constant 1.000000e+00 : f32
    %450 = vector.broadcast %cst_53 : f32 to vector<4x1024xf32>
    %451 = arith.addf %450, %449 : vector<4x1024xf32>
    %452 = arith.divf %450, %451 : vector<4x1024xf32>
    %453 = arith.mulf %444, %401 : vector<4x1024xf32>
    %454 = arith.mulf %438, %446 : vector<4x1024xf32>
    %455 = arith.addf %453, %454 : vector<4x1024xf32>
    %456 = math.tanh %455 : vector<4x1024xf32>
    %457 = arith.mulf %452, %456 : vector<4x1024xf32>
    %cst_54 = arith.constant dense<0.000000e+00> : vector<1024xf32>
    %458 = vector.multi_reduction <add>, %457, %cst_54 [0] : vector<4x1024xf32> to vector<1024xf32>
    %459 = vector.shape_cast %458 : vector<1024xf32> to vector<1x1024xf32>
    %460 = tpu.concatenate %459, %405, %351, %297 in 0 : vector<1x1024xf32>, vector<1x1024xf32>, vector<1x1024xf32>, vector<1x1024xf32> -> vector<4x1024xf32>
    %461 = arith.addf %237, %460 : vector<4x1024xf32>
    %cst_55 = arith.constant dense<0xFF800000> : vector<1024xf32>
    %462 = vector.multi_reduction <maximumf>, %461, %cst_55 [0] : vector<4x1024xf32> to vector<1024xf32>
    %463 = vector.shape_cast %462 : vector<1024xf32> to vector<1x1024xf32>
    %464 = vector.broadcast %463 : vector<1x1024xf32> to vector<4x1024xf32>
    %465 = arith.subf %461, %464 : vector<4x1024xf32>
    %466 = math.exp %465 : vector<4x1024xf32>
    %cst_56 = arith.constant dense<0.000000e+00> : vector<1024xf32>
    %467 = vector.multi_reduction <add>, %466, %cst_56 [0] : vector<4x1024xf32> to vector<1024xf32>
    %468 = vector.shape_cast %467 : vector<1024xf32> to vector<1x1024xf32>
    %469 = tpu.reciprocal %468 {approx = true} : vector<1x1024xf32> -> vector<1x1024xf32>
    %470 = arith.mulf %468, %469 : vector<1x1024xf32>
    %cst_57 = arith.constant 2.000000e+00 : f32
    %471 = vector.broadcast %cst_57 : f32 to vector<1x1024xf32>
    %472 = arith.subf %471, %470 : vector<1x1024xf32>
    %473 = arith.mulf %469, %472 : vector<1x1024xf32>
    %474 = vector.broadcast %473 : vector<1x1024xf32> to vector<4x1024xf32>
    %475 = arith.mulf %466, %474 : vector<4x1024xf32>
    %c0_58 = arith.constant 0 : index
    %c0_59 = arith.constant 0 : index
    %c0_60 = arith.constant 0 : index
    %476 = vector.load %arg1[%c0_58, %c0_59, %c0_60] : memref<4x32x1024xf32, #tpu.memory_space<vmem>>, vector<1x32x1024xf32>
    %477 = vector.shape_cast %476 : vector<1x32x1024xf32> to vector<32x1024xf32>
    %478 = vector.extract_strided_slice %475 {offsets = [0, 0], sizes = [1, 1024], strides = [1, 1]} : vector<4x1024xf32> to vector<1x1024xf32>
    %479 = vector.broadcast %478 : vector<1x1024xf32> to vector<32x1024xf32>
    %480 = arith.mulf %477, %479 : vector<32x1024xf32>
    %c1_61 = arith.constant 1 : index
    %c0_62 = arith.constant 0 : index
    %c0_63 = arith.constant 0 : index
    %481 = vector.load %arg1[%c1_61, %c0_62, %c0_63] : memref<4x32x1024xf32, #tpu.memory_space<vmem>>, vector<1x32x1024xf32>
    %482 = vector.shape_cast %481 : vector<1x32x1024xf32> to vector<32x1024xf32>
    %483 = vector.extract_strided_slice %475 {offsets = [1, 0], sizes = [1, 1024], strides = [1, 1]} : vector<4x1024xf32> to vector<1x1024xf32>
    %484 = vector.broadcast %483 : vector<1x1024xf32> to vector<32x1024xf32>
    %485 = arith.mulf %482, %484 : vector<32x1024xf32>
    %486 = arith.addf %480, %485 : vector<32x1024xf32>
    %c2_64 = arith.constant 2 : index
    %c0_65 = arith.constant 0 : index
    %c0_66 = arith.constant 0 : index
    %487 = vector.load %arg1[%c2_64, %c0_65, %c0_66] : memref<4x32x1024xf32, #tpu.memory_space<vmem>>, vector<1x32x1024xf32>
    %488 = vector.shape_cast %487 : vector<1x32x1024xf32> to vector<32x1024xf32>
    %489 = vector.extract_strided_slice %475 {offsets = [2, 0], sizes = [1, 1024], strides = [1, 1]} : vector<4x1024xf32> to vector<1x1024xf32>
    %490 = vector.broadcast %489 : vector<1x1024xf32> to vector<32x1024xf32>
    %491 = arith.mulf %488, %490 : vector<32x1024xf32>
    %492 = arith.addf %486, %491 : vector<32x1024xf32>
    %c3_67 = arith.constant 3 : index
    %c0_68 = arith.constant 0 : index
    %c0_69 = arith.constant 0 : index
    %493 = vector.load %arg1[%c3_67, %c0_68, %c0_69] : memref<4x32x1024xf32, #tpu.memory_space<vmem>>, vector<1x32x1024xf32>
    %494 = vector.shape_cast %493 : vector<1x32x1024xf32> to vector<32x1024xf32>
    %495 = vector.extract_strided_slice %475 {offsets = [3, 0], sizes = [1, 1024], strides = [1, 1]} : vector<4x1024xf32> to vector<1x1024xf32>
    %496 = vector.broadcast %495 : vector<1x1024xf32> to vector<32x1024xf32>
    %497 = arith.mulf %494, %496 : vector<32x1024xf32>
    %498 = arith.addf %492, %497 : vector<32x1024xf32>
    %c0_70 = arith.constant 0 : index
    %c0_71 = arith.constant 0 : index
    %499 = vector.load %arg5[%c0_70, %c0_71] : memref<32x1024xf32, #tpu.memory_space<vmem>>, vector<32x1024xf32>
    tpu.vector_store %arg5[%c0_70, %c0_71], %498 {strides = array<i32>} : memref<32x1024xf32, #tpu.memory_space<vmem>>, vector<32x1024xf32>,
    return
  }
  func.func @transform_0(%arg0: i32) -> (i32, i32, i32) {
    %c0_i32 = arith.constant 0 : i32
    %c0_i32_0 = arith.constant 0 : i32
    %c0_i32_1 = arith.constant 0 : i32
    return %c0_i32, %c0_i32_0, %arg0 : i32, i32, i32
  }
  func.func @transform_1(%arg0: i32) -> (i32, i32) {
    %c0_i32 = arith.constant 0 : i32
    %c0_i32_0 = arith.constant 0 : i32
    %c0_i32_1 = arith.constant 0 : i32
    return %c0_i32, %c0_i32_0 : i32, i32
  }
  func.func @transform_2(%arg0: i32) -> (i32, i32, i32) {
    %c0_i32 = arith.constant 0 : i32
    %c0_i32_0 = arith.constant 0 : i32
    %c0_i32_1 = arith.constant 0 : i32
    %c0_i32_2 = arith.constant 0 : i32
    return %c0_i32, %c0_i32_0, %c0_i32_1 : i32, i32, i32
  }
  func.func @transform_3(%arg0: i32) -> (i32, i32, i32) {
    %c0_i32 = arith.constant 0 : i32
    %c0_i32_0 = arith.constant 0 : i32
    %c0_i32_1 = arith.constant 0 : i32
    %c0_i32_2 = arith.constant 0 : i32
    return %c0_i32, %c0_i32_0, %c0_i32_1 : i32, i32, i32
  }
  func.func @transform_4(%arg0: i32) -> (i32, i32) {
    %c0_i32 = arith.constant 0 : i32
    %c0_i32_0 = arith.constant 0 : i32
    return %c0_i32, %arg0 : i32, i32
  }
}

</mosaic_0001>

<llo_original>
// kernel: tpu_custom_call.1
$region0: #{tpu_custom_call.1}
  #allocation0 [shape = 'u32[]', space=smem, size = 0x4, offset = 0x4, fixed_abs, tag = 'smem constant byte address 0x4 - core index']
  #allocation1 [shape = 'u32[144,128]{1,0:T(1,128)}', space=vmem, size = 0x12000, scoped, tag = 'internal scratch']
  %s0 = inlined_call_operand.hbm [shape: f32[4,32,2048], index: 0, kind: input, shape index: {}]
  %s1 = inlined_call_operand.vmem [shape: f32[32,32], index: 1, kind: input, shape index: {}]
  %s2 = inlined_call_operand.vmem [shape: f32[2,16,4], index: 2, kind: input, shape index: {}]
  %s3 = inlined_call_operand.vmem [shape: f32[2,16,1], index: 3, kind: input, shape index: {}]
  %s4 = inlined_call_operand.hbm [shape: f32[32,2048], index: 4, kind: output, shape index: {}]
  %s5 = sld [smem:[#allocation0]]
  $region53: #{tpu_custom_call.1} parent=0
    _
  %s7 = ssub.s32 1, %s5
  %s8 = scalar_select 0, %s7, %s5
  $region1: #{tpu_custom_call.1} parent=0
    #allocation2 [shape = 'u8[1048576]{0}', space=vmem, size = 0x100000, scoped, tag = 'input window, operand 0']
    #allocation3 [shape = 's32[2]{0}', space=sflag, size = 0x8, scoped, tag = 'scoped memory for tpu_custom_call.1']
    #allocation4 [shape = 's32[2]{0}', space=sflag, size = 0x8, scoped, tag = 'scoped memory for tpu_custom_call.1']
    #allocation5 [shape = 'u8[262144]{0}', space=vmem, size = 0x40000, scoped, tag = 'output window, operand 0']
    %9 = vsyncpa [#allocation3], 0
    %s10 = scalar_lea.sflag [#allocation3], 1
    %11 = vsyncpa %s10, 0
    %12 = vsyncpa [#allocation4], 0
    %s13 = scalar_lea.sflag [#allocation4], 1
    %14 = vsyncpa %s13, 0
    loop: start=0, step=1, limit=4
    $region2: #{tpu_custom_call.1} parent=1 // loop_pre_header
      _
    $region3: #{tpu_custom_call.1} parent=1 // loop_header
      %s16 = sphi 0, %s20
      %p17 = scmp.ge.s32.totalorder %s16, 4
      %s26 = sphi 0, %s28
      %s29 = sphi 0, %s26
      %s30 = sphi 0, %s29
      %s46 = sphi 0, %s30
      %s50 = sphi 0, %s50
      %s52 = sphi 0, %s50
      %s53 = sphi 0, %s52
      %s67 = sphi 0, %s53
      %s71 = sphi 0, %s71
      %s73 = sphi 0, %s71
      %s74 = sphi 0, %s73
      %s88 = sphi 0, %s74
      %s92 = sphi 0, %s92
      %s94 = sphi 0, %s92
      %s95 = sphi 0, %s94
      %s109 = sphi 0, %s95
      %s115 = sphi 0, %s117
      %s118 = sphi 0, %s115
      %s119 = sphi 0, %s118
      %s135 = sphi 0, %s119
    $region4: #{tpu_custom_call.1} parent=1 // loop_header_branch
      %19 = sbr.rel (%p17) target = $region8
    $region5: #{tpu_custom_call.1} parent=1 // loop_body
      %s21 = ssub.s32 %s16, 1
      %s22 = ssub.s32 %s16, 2
      %s23 = sadd.s32 %s16, 1
      %s24 = ssub.s32 %s16, %s23
      %p25 = scmp.eq.s32.totalorder %s24, 0
      %s27 = sadd.s32 %s26, 1
      %s28 = scalar_select %p25, %s26, %s27
      %p31 = pneg %p25
      %p32 = scmp.eq.s32.totalorder %s16, 1
      %p33 = por %p31, %p32
      %p34 = scmp.ne.s32.totalorder %s26, %s29
      %p35 = scmp.eq.s32.totalorder %s16, 0
      %p36 = por %p34, %p35
      %p37 = scmp.ne.s32.totalorder %s26, %s29
      %p38 = scmp.eq.s32.totalorder %s21, 1
      %p39 = por %p37, %p38
      %p40 = scmp.ne.s32.totalorder %s29, %s30
      %p41 = scmp.eq.s32.totalorder %s21, 0
      %p42 = por %p40, %p41
      %p43 = scmp.ne.s32.totalorder %s29, %s30
      %p44 = scmp.eq.s32.totalorder %s22, 1
      %p45 = por %p43, %p44
      %p47 = scmp.ne.s32.totalorder %s30, %s46
      %p48 = scmp.eq.s32.totalorder %s22, 0
      %p49 = por %p47, %p48
      %s51 = sadd.s32 %s50, 1
      %p54 = scmp.eq.s32.totalorder %s16, 1
      %p55 = scmp.ne.s32.totalorder %s50, %s52
      %p56 = scmp.eq.s32.totalorder %s16, 0
      %p57 = por %p55, %p56
      %p58 = scmp.ne.s32.totalorder %s50, %s52
      %p59 = scmp.eq.s32.totalorder %s21, 1
      %p60 = por %p58, %p59
      %p61 = scmp.ne.s32.totalorder %s52, %s53
      %p62 = scmp.eq.s32.totalorder %s21, 0
      %p63 = por %p61, %p62
      %p64 = scmp.ne.s32.totalorder %s52, %s53
      %p65 = scmp.eq.s32.totalorder %s22, 1
      %p66 = por %p64, %p65
      %p68 = scmp.ne.s32.totalorder %s53, %s67
      %p69 = scmp.eq.s32.totalorder %s22, 0
      %p70 = por %p68, %p69
      %s72 = sadd.s32 %s71, 1
      %p75 = scmp.eq.s32.totalorder %s16, 1
      %p76 = scmp.ne.s32.totalorder %s71, %s73
      %p77 = scmp.eq.s32.totalorder %s16, 0
      %p78 = por %p76, %p77
      %p79 = scmp.ne.s32.totalorder %s71, %s73
      %p80 = scmp.eq.s32.totalorder %s21, 1
      %p81 = por %p79, %p80
      %p82 = scmp.ne.s32.totalorder %s73, %s74
      %p83 = scmp.eq.s32.totalorder %s21, 0
      %p84 = por %p82, %p83
      %p85 = scmp.ne.s32.totalorder %s73, %s74
      %p86 = scmp.eq.s32.totalorder %s22, 1
      %p87 = por %p85, %p86
      %p89 = scmp.ne.s32.totalorder %s74, %s88
      %p90 = scmp.eq.s32.totalorder %s22, 0
      %p91 = por %p89, %p90
      %s93 = sadd.s32 %s92, 1
      %p96 = scmp.eq.s32.totalorder %s16, 1
      %p97 = scmp.ne.s32.totalorder %s92, %s94
      %p98 = scmp.eq.s32.totalorder %s16, 0
      %p99 = por %p97, %p98
      %p100 = scmp.ne.s32.totalorder %s92, %s94
      %p101 = scmp.eq.s32.totalorder %s21, 1
      %p102 = por %p100, %p101
      %p103 = scmp.ne.s32.totalorder %s94, %s95
      %p104 = scmp.eq.s32.totalorder %s21, 0
      %p105 = por %p103, %p104
      %p106 = scmp.ne.s32.totalorder %s94, %s95
      %p107 = scmp.eq.s32.totalorder %s22, 1
      %p108 = por %p106, %p107
      %p110 = scmp.ne.s32.totalorder %s95, %s109
      %p111 = scmp.eq.s32.totalorder %s22, 0
      %p112 = por %p110, %p111
      %s113 = ssub.s32 %s16, %s23
      %p114 = scmp.eq.s32.totalorder %s113, 0
      %s116 = sadd.s32 %s115, 1
      %s117 = scalar_select %p114, %s115, %s116
      %p120 = pneg %p114
      %p121 = scmp.eq.s32.totalorder %s16, 1
      %p122 = por %p120, %p121
      %p123 = scmp.ne.s32.totalorder %s115, %s118
      %p124 = scmp.eq.s32.totalorder %s16, 0
      %p125 = por %p123, %p124
      %p126 = scmp.ne.s32.totalorder %s115, %s118
      %p127 = scmp.eq.s32.totalorder %s21, 1
      %p128 = por %p126, %p127
      %p129 = scmp.ne.s32.totalorder %s118, %s119
      %p130 = scmp.eq.s32.totalorder %s21, 0
      %p131 = por %p129, %p130
      %p132 = scmp.ne.s32.totalorder %s118, %s119
      %p133 = scmp.eq.s32.totalorder %s22, 1
      %p134 = por %p132, %p133
      %p136 = scmp.ne.s32.totalorder %s119, %s135
      %p137 = scmp.eq.s32.totalorder %s22, 0
      %p138 = por %p136, %p137
      %p139 = scmp.le.s32.totalorder 1, %s16
      %p140 = scmp.lt.s32.totalorder %s16, 3
      %p141 = pnand %p139, %p140
      %p142 = pneg %p141
      // Predicated region
      $region9: #{tpu_custom_call.1} parent=5 // pred_check
        _
      $region10: #{tpu_custom_call.1} parent=5 // pred_check_branch
        %144 = sbr.rel (%p141) target = $region12
      $region11: #{tpu_custom_call.1} parent=5 // pred_region
        %s145 = ssub.s32 %s16, 1
        // Predicated region
        $region13: #{tpu_custom_call.1} parent=11 // pred_check
          %p146 = pneg %p63
        $region14: #{tpu_custom_call.1} parent=11 // pred_check_branch
          %148 = sbr.rel (%p146) target = $region16
        $region15: #{tpu_custom_call.1} parent=11 // pred_region
          _
        $region16: #{tpu_custom_call.1} parent=11 // pred_fallthru
          _
        // Predicated region
        $region17: #{tpu_custom_call.1} parent=11 // pred_check
          %p149 = pneg %p84
        $region18: #{tpu_custom_call.1} parent=11 // pred_check_branch
          %151 = sbr.rel (%p149) target = $region20
        $region19: #{tpu_custom_call.1} parent=11 // pred_region
          _
        $region20: #{tpu_custom_call.1} parent=11 // pred_fallthru
          _
        // Predicated region
        $region21: #{tpu_custom_call.1} parent=11 // pred_check
          %p152 = pneg %p105
        $region22: #{tpu_custom_call.1} parent=11 // pred_check_branch
          %154 = sbr.rel (%p152) target = $region24
        $region23: #{tpu_custom_call.1} parent=11 // pred_region
          _
        $region24: #{tpu_custom_call.1} parent=11 // pred_fallthru
          _
      $region12: #{tpu_custom_call.1} parent=5 // pred_fallthru
        _
      %p155 = scmp.lt.s32.totalorder %s16, 2
      // Predicated region
      $region25: #{tpu_custom_call.1} parent=5 // pred_check
        %p156 = pneg %p155
      $region26: #{tpu_custom_call.1} parent=5 // pred_check_branch
        %158 = sbr.rel (%p156) target = $region28
      $region27: #{tpu_custom_call.1} parent=5 // pred_region
        // Predicated region
        $region29: #{tpu_custom_call.1} parent=27 // pred_check
          %p159 = pneg %p36
        $region30: #{tpu_custom_call.1} parent=27 // pred_check_branch
          %161 = sbr.rel (%p159) target = $region32
        $region31: #{tpu_custom_call.1} parent=27 // pred_region
          %s162 = sand.u32 %s26, 1
          %s163 = scalar_lea.sflag [#allocation3], %s162
          %s164 = sand.u32 %s26, 1
          %s165 = smul.addr %s164, 1024
          %s166 = scalar_lea.vmem [#allocation2], %s165
          %s167 = smul.u32 8, %s16
          %s169 = ssub.s32 16384, 16384
          %170 = vsyncadd %s163, %s169
          %s171 = smul.addr %s167, 128
          %s172 = scalar_lea.hbm %s0, %s171
          %s173 = sshll.u32 %s166, 4
          %s174 = int_to_ptr.vmem [resolvable:$true] %s173
          %179 = dma.hbm_to_vmem [thread:$0]  %s172, 16384, %s174, %s163, 2048, 1024, 64
        $region32: #{tpu_custom_call.1} parent=27 // pred_fallthru
          _
      $region28: #{tpu_custom_call.1} parent=5 // pred_fallthru
        _
      %p180 = scmp.le.s32.totalorder 1, %s16
      %p181 = scmp.lt.s32.totalorder %s16, 3
      %p182 = pnand %p180, %p181
      %p183 = pneg %p182
      // Predicated region
      $region33: #{tpu_custom_call.1} parent=5 // pred_check
        _
      $region34: #{tpu_custom_call.1} parent=5 // pred_check_branch
        %185 = sbr.rel (%p182) target = $region36
      $region35: #{tpu_custom_call.1} parent=5 // pred_region
        %s186 = ssub.s32 %s16, 1
        %s187 = sand.u32 %s29, 1
        %s188 = scalar_lea.sflag [#allocation3], %s187
        %s189 = sand.u32 %s29, 1
        %s190 = smul.addr %s189, 1024
        %s191 = scalar_lea.vmem [#allocation2], %s190
        // Predicated region
        $region37: #{tpu_custom_call.1} parent=35 // pred_check
          %p192 = pneg %p42
        $region38: #{tpu_custom_call.1} parent=35 // pred_check_branch
          %194 = sbr.rel (%p192) target = $region40
        $region39: #{tpu_custom_call.1} parent=35 // pred_region
          %195 = dma.done %s188, 16384
        $region40: #{tpu_custom_call.1} parent=35 // pred_fallthru
          _
        %s196 = sand.u32 %s29, 1
        %s197 = scalar_lea.sflag [#allocation3], %s196
        %s198 = sand.u32 %s29, 1
        %s199 = smul.addr %s198, 1024
        %s200 = scalar_lea.vmem [#allocation2], %s199
        %p201 = pneg %p42
        %p202 = pneg %p39
        %p203 = pneg %p63
        %p204 = pneg %p60
        %p205 = pneg %p84
        %p206 = pneg %p81
        %p207 = pneg %p105
        %p208 = pneg %p102
        %p209 = pneg %p131
        %p210 = pneg %p128
        %s211 = sand.u32 %s118, 1
        %s212 = scalar_lea.sflag [#allocation4], %s211
        %s213 = sand.u32 %s118, 1
        %s214 = smul.addr %s213, 256
        %s215 = scalar_lea.vmem [#allocation5], %s214
        %s216 = smul.u32 8, %s21
        %s217 = smul.u32 8, %s21
        %v218 = vld [vmem:[%s1] sm:$0xff]
        %v219 = vld [vmem:[%s1 + $0x8] sm:$0xff]
        %v220 = vld [vmem:[%s1 + $0x10] sm:$0xff]
        %v221 = vld [vmem:[%s1 + $0x18] sm:$0xff]
        %v222 = vld [vmem:[%s2] sm:$0xff]
        %v223 = vld [vmem:[%s2 + $0x8] sm:$0xff]
        %v224 = vld [vmem:[%s2 + $0x10] sm:$0xff]
        %v225 = vld [vmem:[%s2 + $0x18] sm:$0xff]
        %v226 = vld [vmem:[%s3] sm:$0xff]
        %v227 = vld [vmem:[%s3 + $0x8] sm:$0xff]
        %v228 = vld [vmem:[%s3 + $0x10] sm:$0xff]
        %v229 = vld [vmem:[%s3 + $0x18] sm:$0xff]
        %v230 = vld [vmem:[%s191] sm:$0xff]
        %v231 = vld [vmem:[%s191 + $0x8] sm:$0xff]
        %v232 = vld [vmem:[%s191 + $0x10] sm:$0xff]
        %v233 = vld [vmem:[%s191 + $0x18] sm:$0xff]
        %v234 = vld [vmem:[%s191 + $0x20] sm:$0xff]
        %v235 = vld [vmem:[%s191 + $0x28] sm:$0xff]
        %v236 = vld [vmem:[%s191 + $0x30] sm:$0xff]
        %v237 = vld [vmem:[%s191 + $0x38] sm:$0xff]
        %v238 = vld [vmem:[%s191 + $0x40] sm:$0xff]
        %v239 = vld [vmem:[%s191 + $0x48] sm:$0xff]
        %v240 = vld [vmem:[%s191 + $0x50] sm:$0xff]
        %v241 = vld [vmem:[%s191 + $0x58] sm:$0xff]
        %v242 = vld [vmem:[%s191 + $0x60] sm:$0xff]
        %v243 = vld [vmem:[%s191 + $0x68] sm:$0xff]
        %v244 = vld [vmem:[%s191 + $0x70] sm:$0xff]
        %v245 = vld [vmem:[%s191 + $0x78] sm:$0xff]
        %v246 = vld [vmem:[%s191 + $0x80] sm:$0xff]
        %v247 = vld [vmem:[%s191 + $0x88] sm:$0xff]
        %v248 = vld [vmem:[%s191 + $0x90] sm:$0xff]
        %v249 = vld [vmem:[%s191 + $0x98] sm:$0xff]
        %v250 = vld [vmem:[%s191 + $0xa0] sm:$0xff]
        %v251 = vld [vmem:[%s191 + $0xa8] sm:$0xff]
        %v252 = vld [vmem:[%s191 + $0xb0] sm:$0xff]
        %v253 = vld [vmem:[%s191 + $0xb8] sm:$0xff]
        %v254 = vld [vmem:[%s191 + $0xc0] sm:$0xff]
        %v255 = vld [vmem:[%s191 + $0xc8] sm:$0xff]
        %v256 = vld [vmem:[%s191 + $0xd0] sm:$0xff]
        %v257 = vld [vmem:[%s191 + $0xd8] sm:$0xff]
        %v258 = vld [vmem:[%s191 + $0xe0] sm:$0xff]
        %v259 = vld [vmem:[%s191 + $0xe8] sm:$0xff]
        %v260 = vld [vmem:[%s191 + $0xf0] sm:$0xff]
        %v261 = vld [vmem:[%s191 + $0xf8] sm:$0xff]
        %vm262 = vcmask 261120
        %v264 = vsel %vm262, %v218, 0
        %v267 = vsel %vm262, %v219, 0
        %v270 = vsel %vm262, %v220, 0
        %v273 = vsel %vm262, %v221, 0
        %275 = vmatprep.subr.mxu0 %v231
        %276 = vmatpush1.msra.mxu0 %v230
        %277 = vmatprep.subr.mxu0 %v239
        %278 = vmatpush1.msra.mxu0 %v238
        %279 = vmatprep.subr.mxu0 %v247
        %280 = vmatpush1.msra.mxu0 %v246
        %281 = vmatprep.subr.mxu0 %v255
        %282 = vmatpush1.msra.mxu0 %v254
        %283 = vmatprep.subr.mxu0 0.0
        %284 = vmatpush1.msra.mxu0 0.0
        %285 = vmatprep.subr.mxu0 0.0
        %286 = vmatpush1.msra.mxu0 0.0
        %287 = vmatprep.subr.mxu0 0.0
        %288 = vmatpush1.msra.mxu0 0.0
        %289 = vmatprep.subr.mxu0 0.0
        %290 = vmatpush1.msra.mxu0 0.0
        %291 = vmatprep.subr.mxu0 0.0
        %292 = vmatpush1.msra.mxu0 0.0
        %293 = vmatprep.subr.mxu0 0.0
        %294 = vmatpush1.msra.mxu0 0.0
        %295 = vmatprep.subr.mxu0 0.0
        %296 = vmatpush1.msra.mxu0 0.0
        %297 = vmatprep.subr.mxu0 0.0
        %298 = vmatpush1.msra.mxu0 0.0
        %299 = vmatprep.subr.mxu0 0.0
        %300 = vmatpush1.msra.mxu0 0.0
        %301 = vmatprep.subr.mxu0 0.0
        %302 = vmatpush1.msra.mxu0 0.0
        %303 = vmatprep.subr.mxu0 0.0
        %304 = vmatpush1.msra.mxu0 0.0
        %305 = vmatprep.subr.mxu0 0.0
        %306 = vmatpush1.msra.mxu0 0.0
        %307 = vmatprep.subr.mxu0 0.0
        %308 = vmatpush1.msra.mxu0 0.0
        %309 = vmatprep.subr.mxu0 0.0
        %310 = vmatpush1.msra.mxu0 0.0
        %311 = vmatprep.subr.mxu0 0.0
        %312 = vmatpush1.msra.mxu0 0.0
        %313 = vmatprep.subr.mxu0 0.0
        %314 = vmatpush1.msra.mxu0 0.0
        %315 = vmatprep.subr.mxu0 0.0
        %316 = vmatpush1.msra.mxu0 0.0
        %317 = vmatprep.subr.mxu0 0.0
        %318 = vmatpush1.msra.mxu0 0.0
        %319 = vmatprep.subr.mxu0 0.0
        %320 = vmatpush1.msra.mxu0 0.0
        %321 = vmatprep.subr.mxu0 0.0
        %322 = vmatpush1.msra.mxu0 0.0
        %323 = vmatprep.subr.mxu0 0.0
        %324 = vmatpush1.msra.mxu0 0.0
        %325 = vmatprep.subr.mxu0 0.0
        %326 = vmatpush1.msra.mxu0 0.0
        %327 = vmatprep.subr.mxu0 0.0
        %328 = vmatpush1.msra.mxu0 0.0
        %329 = vmatprep.subr.mxu0 0.0
        %330 = vmatpush1.msra.mxu0 0.0
        %331 = vmatprep.subr.mxu0 0.0
        %332 = vmatpush1.msra.mxu0 0.0
        %333 = vmatprep.subr.mxu0 0.0
        %334 = vmatpush1.msra.mxu0 0.0
        %335 = vmatprep.subr.mxu0 0.0
        %336 = vmatpush1.msra.mxu0 0.0
        %337 = vmatprep.subr.mxu0 0.0
        %338 = vmatpush1.msra.mxu0 0.0
        %339 = vmatprep.mubr.f32.mxu0 0.0
        %340 = vmatmul.mubr.f32.gmra.mrb[0].mxu0 %v264
        %v341 = vpop.f32.mrb[0].mxu0
        %v342 = vadd.f32 0.0, %v341
        %v343 = vpop.f32.mrb[0].mxu0
        %v344 = vadd.f32 0.0, %v343
        %345 = vmatprep.mubr.f32.mxu0 0.0
        %346 = vmatmul.mubr.f32.gmra.mrb[0].mxu0 %v267
        %v347 = vpop.f32.mrb[0].mxu0
        %v348 = vadd.f32 0.0, %v347
        %v349 = vpop.f32.mrb[0].mxu0
        %v350 = vadd.f32 0.0, %v349
        %351 = vmatprep.mubr.f32.mxu0 0.0
        %352 = vmatmul.mubr.f32.gmra.mrb[0].mxu0 %v270
        %v353 = vpop.f32.mrb[0].mxu0
        %v354 = vadd.f32 0.0, %v353
        %v355 = vpop.f32.mrb[0].mxu0
        %v356 = vadd.f32 0.0, %v355
        %357 = vmatprep.mubr.f32.mxu0 0.0
        %358 = vmatmul.mubr.f32.gmra.mrb[0].mxu0 %v273
        %v359 = vpop.f32.mrb[0].mxu0
        %v360 = vadd.f32 0.0, %v359
        %v361 = vpop.f32.mrb[0].mxu0
        %v362 = vadd.f32 0.0, %v361
        %363 = vdwg.mxu0
        %364 = vmatprep.subr.mxu0 %v233
        %365 = vmatpush1.msra.mxu0 %v232
        %366 = vmatprep.subr.mxu0 %v241
        %367 = vmatpush1.msra.mxu0 %v240
        %368 = vmatprep.subr.mxu0 %v249
        %369 = vmatpush1.msra.mxu0 %v248
        %370 = vmatprep.subr.mxu0 %v257
        %371 = vmatpush1.msra.mxu0 %v256
        %372 = vmatprep.subr.mxu0 0.0
        %373 = vmatpush1.msra.mxu0 0.0
        %374 = vmatprep.subr.mxu0 0.0
        %375 = vmatpush1.msra.mxu0 0.0
        %376 = vmatprep.subr.mxu0 0.0
        %377 = vmatpush1.msra.mxu0 0.0
        %378 = vmatprep.subr.mxu0 0.0
        %379 = vmatpush1.msra.mxu0 0.0
        %380 = vmatprep.subr.mxu0 0.0
        %381 = vmatpush1.msra.mxu0 0.0
        %382 = vmatprep.subr.mxu0 0.0
        %383 = vmatpush1.msra.mxu0 0.0
        %384 = vmatprep.subr.mxu0 0.0
        %385 = vmatpush1.msra.mxu0 0.0
        %386 = vmatprep.subr.mxu0 0.0
        %387 = vmatpush1.msra.mxu0 0.0
        %388 = vmatprep.subr.mxu0 0.0
        %389 = vmatpush1.msra.mxu0 0.0
        %390 = vmatprep.subr.mxu0 0.0
        %391 = vmatpush1.msra.mxu0 0.0
        %392 = vmatprep.subr.mxu0 0.0
        %393 = vmatpush1.msra.mxu0 0.0
        %394 = vmatprep.subr.mxu0 0.0
        %395 = vmatpush1.msra.mxu0 0.0
        %396 = vmatprep.subr.mxu0 0.0
        %397 = vmatpush1.msra.mxu0 0.0
        %398 = vmatprep.subr.mxu0 0.0
        %399 = vmatpush1.msra.mxu0 0.0
        %400 = vmatprep.subr.mxu0 0.0
        %401 = vmatpush1.msra.mxu0 0.0
        %402 = vmatprep.subr.mxu0 0.0
        %403 = vmatpush1.msra.mxu0 0.0
        %404 = vmatprep.subr.mxu0 0.0
        %405 = vmatpush1.msra.mxu0 0.0
        %406 = vmatprep.subr.mxu0 0.0
        %407 = vmatpush1.msra.mxu0 0.0
        %408 = vmatprep.subr.mxu0 0.0
        %409 = vmatpush1.msra.mxu0 0.0
        %410 = vmatprep.subr.mxu0 0.0
        %411 = vmatpush1.msra.mxu0 0.0
        %412 = vmatprep.subr.mxu0 0.0
        %413 = vmatpush1.msra.mxu0 0.0
        %414 = vmatprep.subr.mxu0 0.0
        %415 = vmatpush1.msra.mxu0 0.0
        %416 = vmatprep.subr.mxu0 0.0
        %417 = vmatpush1.msra.mxu0 0.0
        %418 = vmatprep.subr.mxu0 0.0
        %419 = vmatpush1.msra.mxu0 0.0
        %420 = vmatprep.subr.mxu0 0.0
        %421 = vmatpush1.msra.mxu0 0.0
        %422 = vmatprep.subr.mxu0 0.0
        %423 = vmatpush1.msra.mxu0 0.0
        %424 = vmatprep.subr.mxu0 0.0
        %425 = vmatpush1.msra.mxu0 0.0
        %426 = vmatprep.subr.mxu0 0.0
        %427 = vmatpush1.msra.mxu0 0.0
        %428 = vmatprep.mubr.f32.mxu0 0.0
        %429 = vmatmul.mubr.f32.gmra.mrb[0].mxu0 %v264
        %v430 = vpop.f32.mrb[0].mxu0
        %v431 = vadd.f32 0.0, %v430
        %v432 = vpop.f32.mrb[0].mxu0
        %v433 = vadd.f32 0.0, %v432
        %434 = vmatprep.mubr.f32.mxu0 0.0
        %435 = vmatmul.mubr.f32.gmra.mrb[0].mxu0 %v267
        %v436 = vpop.f32.mrb[0].mxu0
        %v437 = vadd.f32 0.0, %v436
        %v438 = vpop.f32.mrb[0].mxu0
        %v439 = vadd.f32 0.0, %v438
        %440 = vmatprep.mubr.f32.mxu0 0.0
        %441 = vmatmul.mubr.f32.gmra.mrb[0].mxu0 %v270
        %v442 = vpop.f32.mrb[0].mxu0
        %v443 = vadd.f32 0.0, %v442
        %v444 = vpop.f32.mrb[0].mxu0
        %v445 = vadd.f32 0.0, %v444
        %446 = vmatprep.mubr.f32.mxu0 0.0
        %447 = vmatmul.mubr.f32.gmra.mrb[0].mxu0 %v273
        %v448 = vpop.f32.mrb[0].mxu0
        %v449 = vadd.f32 0.0, %v448
        %v450 = vpop.f32.mrb[0].mxu0
        %v451 = vadd.f32 0.0, %v450
        %452 = vdwg.mxu0
        %453 = vmatprep.subr.mxu0 %v235
        %454 = vmatpush1.msra.mxu0 %v234
        %455 = vmatprep.subr.mxu0 %v243
        %456 = vmatpush1.msra.mxu0 %v242
        %457 = vmatprep.subr.mxu0 %v251
        %458 = vmatpush1.msra.mxu0 %v250
        %459 = vmatprep.subr.mxu0 %v259
        %460 = vmatpush1.msra.mxu0 %v258
        %461 = vmatprep.subr.mxu0 0.0
        %462 = vmatpush1.msra.mxu0 0.0
        %463 = vmatprep.subr.mxu0 0.0
        %464 = vmatpush1.msra.mxu0 0.0
        %465 = vmatprep.subr.mxu0 0.0
        %466 = vmatpush1.msra.mxu0 0.0
        %467 = vmatprep.subr.mxu0 0.0
        %468 = vmatpush1.msra.mxu0 0.0
        %469 = vmatprep.subr.mxu0 0.0
        %470 = vmatpush1.msra.mxu0 0.0
        %471 = vmatprep.subr.mxu0 0.0
        %472 = vmatpush1.msra.mxu0 0.0
        %473 = vmatprep.subr.mxu0 0.0
        %474 = vmatpush1.msra.mxu0 0.0
        %475 = vmatprep.subr.mxu0 0.0
        %476 = vmatpush1.msra.mxu0 0.0
        %477 = vmatprep.subr.mxu0 0.0
        %478 = vmatpush1.msra.mxu0 0.0
        %479 = vmatprep.subr.mxu0 0.0
        %480 = vmatpush1.msra.mxu0 0.0
        %481 = vmatprep.subr.mxu0 0.0
        %482 = vmatpush1.msra.mxu0 0.0
        %483 = vmatprep.subr.mxu0 0.0
        %484 = vmatpush1.msra.mxu0 0.0
        %485 = vmatprep.subr.mxu0 0.0
        %486 = vmatpush1.msra.mxu0 0.0
        %487 = vmatprep.subr.mxu0 0.0
        %488 = vmatpush1.msra.mxu0 0.0
        %489 = vmatprep.subr.mxu0 0.0
        %490 = vmatpush1.msra.mxu0 0.0
        %491 = vmatprep.subr.mxu0 0.0
        %492 = vmatpush1.msra.mxu0 0.0
        %493 = vmatprep.subr.mxu0 0.0
        %494 = vmatpush1.msra.mxu0 0.0
        %495 = vmatprep.subr.mxu0 0.0
        %496 = vmatpush1.msra.mxu0 0.0
        %497 = vmatprep.subr.mxu0 0.0
        %498 = vmatpush1.msra.mxu0 0.0
        %499 = vmatprep.subr.mxu0 0.0
        %500 = vmatpush1.msra.mxu0 0.0
        %501 = vmatprep.subr.mxu0 0.0
        %502 = vmatpush1.msra.mxu0 0.0
        %503 = vmatprep.subr.mxu0 0.0
        %504 = vmatpush1.msra.mxu0 0.0
        %505 = vmatprep.subr.mxu0 0.0
        %506 = vmatpush1.msra.mxu0 0.0
        %507 = vmatprep.subr.mxu0 0.0
        %508 = vmatpush1.msra.mxu0 0.0
        %509 = vmatprep.subr.mxu0 0.0
        %510 = vmatpush1.msra.mxu0 0.0
        %511 = vmatprep.subr.mxu0 0.0
        %512 = vmatpush1.msra.mxu0 0.0
        %513 = vmatprep.subr.mxu0 0.0
        %514 = vmatpush1.msra.mxu0 0.0
        %515 = vmatprep.subr.mxu0 0.0
        %516 = vmatpush1.msra.mxu0 0.0
        %517 = vmatprep.mubr.f32.mxu0 0.0
        %518 = vmatmul.mubr.f32.gmra.mrb[0].mxu0 %v264
        %v519 = vpop.f32.mrb[0].mxu0
        %v520 = vadd.f32 0.0, %v519
        %v521 = vpop.f32.mrb[0].mxu0
        %v522 = vadd.f32 0.0, %v521
        %523 = vmatprep.mubr.f32.mxu0 0.0
        %524 = vmatmul.mubr.f32.gmra.mrb[0].mxu0 %v267
        %v525 = vpop.f32.mrb[0].mxu0
        %v526 = vadd.f32 0.0, %v525
        %v527 = vpop.f32.mrb[0].mxu0
        %v528 = vadd.f32 0.0, %v527
        %529 = vmatprep.mubr.f32.mxu0 0.0
        %530 = vmatmul.mubr.f32.gmra.mrb[0].mxu0 %v270
        %v531 = vpop.f32.mrb[0].mxu0
        %v532 = vadd.f32 0.0, %v531
        %v533 = vpop.f32.mrb[0].mxu0
        %v534 = vadd.f32 0.0, %v533
        %535 = vmatprep.mubr.f32.mxu0 0.0
        %536 = vmatmul.mubr.f32.gmra.mrb[0].mxu0 %v273
        %v537 = vpop.f32.mrb[0].mxu0
        %v538 = vadd.f32 0.0, %v537
        %v539 = vpop.f32.mrb[0].mxu0
        %v540 = vadd.f32 0.0, %v539
        %541 = vdwg.mxu0
        %542 = vmatprep.subr.mxu0 %v237
        %543 = vmatpush1.msra.mxu0 %v236
        %544 = vmatprep.subr.mxu0 %v245
        %545 = vmatpush1.msra.mxu0 %v244
        %546 = vmatprep.subr.mxu0 %v253
        %547 = vmatpush1.msra.mxu0 %v252
        %548 = vmatprep.subr.mxu0 %v261
        %549 = vmatpush1.msra.mxu0 %v260
        %550 = vmatprep.subr.mxu0 0.0
        %551 = vmatpush1.msra.mxu0 0.0
        %552 = vmatprep.subr.mxu0 0.0
        %553 = vmatpush1.msra.mxu0 0.0
        %554 = vmatprep.subr.mxu0 0.0
        %555 = vmatpush1.msra.mxu0 0.0
        %556 = vmatprep.subr.mxu0 0.0
        %557 = vmatpush1.msra.mxu0 0.0
        %558 = vmatprep.subr.mxu0 0.0
        %559 = vmatpush1.msra.mxu0 0.0
        %560 = vmatprep.subr.mxu0 0.0
        %561 = vmatpush1.msra.mxu0 0.0
        %562 = vmatprep.subr.mxu0 0.0
        %563 = vmatpush1.msra.mxu0 0.0
        %564 = vmatprep.subr.mxu0 0.0
        %565 = vmatpush1.msra.mxu0 0.0
        %566 = vmatprep.subr.mxu0 0.0
        %567 = vmatpush1.msra.mxu0 0.0
        %568 = vmatprep.subr.mxu0 0.0
        %569 = vmatpush1.msra.mxu0 0.0
        %570 = vmatprep.subr.mxu0 0.0
        %571 = vmatpush1.msra.mxu0 0.0
        %572 = vmatprep.subr.mxu0 0.0
        %573 = vmatpush1.msra.mxu0 0.0
        %574 = vmatprep.subr.mxu0 0.0
        %575 = vmatpush1.msra.mxu0 0.0
        %576 = vmatprep.subr.mxu0 0.0
        %577 = vmatpush1.msra.mxu0 0.0
        %578 = vmatprep.subr.mxu0 0.0
        %579 = vmatpush1.msra.mxu0 0.0
        %580 = vmatprep.subr.mxu0 0.0
        %581 = vmatpush1.msra.mxu0 0.0
        %582 = vmatprep.subr.mxu0 0.0
        %583 = vmatpush1.msra.mxu0 0.0
        %584 = vmatprep.subr.mxu0 0.0
        %585 = vmatpush1.msra.mxu0 0.0
        %586 = vmatprep.subr.mxu0 0.0
        %587 = vmatpush1.msra.mxu0 0.0
        %588 = vmatprep.subr.mxu0 0.0
        %589 = vmatpush1.msra.mxu0 0.0
        %590 = vmatprep.subr.mxu0 0.0
        %591 = vmatpush1.msra.mxu0 0.0
        %592 = vmatprep.subr.mxu0 0.0
        %593 = vmatpush1.msra.mxu0 0.0
        %594 = vmatprep.subr.mxu0 0.0
        %595 = vmatpush1.msra.mxu0 0.0
        %596 = vmatprep.subr.mxu0 0.0
        %597 = vmatpush1.msra.mxu0 0.0
        %598 = vmatprep.subr.mxu0 0.0
        %599 = vmatpush1.msra.mxu0 0.0
        %600 = vmatprep.subr.mxu0 0.0
        %601 = vmatpush1.msra.mxu0 0.0
        %602 = vmatprep.subr.mxu0 0.0
        %603 = vmatpush1.msra.mxu0 0.0
        %604 = vmatprep.subr.mxu0 0.0
        %605 = vmatpush1.msra.mxu0 0.0
        %606 = vmatprep.mubr.f32.mxu0 0.0
        %607 = vmatmul.mubr.f32.gmra.mrb[0].mxu0 %v264
        %v608 = vpop.f32.mrb[0].mxu0
        %v609 = vadd.f32 0.0, %v608
        %v610 = vpop.f32.mrb[0].mxu0
        %v611 = vadd.f32 0.0, %v610
        %612 = vmatprep.mubr.f32.mxu0 0.0
        %613 = vmatmul.mubr.f32.gmra.mrb[0].mxu0 %v267
        %v614 = vpop.f32.mrb[0].mxu0
        %v615 = vadd.f32 0.0, %v614
        %v616 = vpop.f32.mrb[0].mxu0
        %v617 = vadd.f32 0.0, %v616
        %618 = vmatprep.mubr.f32.mxu0 0.0
        %619 = vmatmul.mubr.f32.gmra.mrb[0].mxu0 %v270
        %v620 = vpop.f32.mrb[0].mxu0
        %v621 = vadd.f32 0.0, %v620
        %v622 = vpop.f32.mrb[0].mxu0
        %v623 = vadd.f32 0.0, %v622
        %624 = vmatprep.mubr.f32.mxu0 0.0
        %625 = vmatmul.mubr.f32.gmra.mrb[0].mxu0 %v273
        %v626 = vpop.f32.mrb[0].mxu0
        %v627 = vadd.f32 0.0, %v626
        %v628 = vpop.f32.mrb[0].mxu0
        %v629 = vadd.f32 0.0, %v628
        %630 = vdwg.mxu0
        %s631 = scalar_lea.vmem %s191, 256 [#allocation2]
        %v632 = vld [vmem:[%s631] sm:$0xff]
        %v633 = vld [vmem:[%s631 + $0x8] sm:$0xff]
        %v634 = vld [vmem:[%s631 + $0x10] sm:$0xff]
        %v635 = vld [vmem:[%s631 + $0x18] sm:$0xff]
        %v636 = vld [vmem:[%s631 + $0x20] sm:$0xff]
        %v637 = vld [vmem:[%s631 + $0x28] sm:$0xff]
        %v638 = vld [vmem:[%s631 + $0x30] sm:$0xff]
        %v639 = vld [vmem:[%s631 + $0x38] sm:$0xff]
        %v640 = vld [vmem:[%s631 + $0x40] sm:$0xff]
        %v641 = vld [vmem:[%s631 + $0x48] sm:$0xff]
        %v642 = vld [vmem:[%s631 + $0x50] sm:$0xff]
        %v643 = vld [vmem:[%s631 + $0x58] sm:$0xff]
        %v644 = vld [vmem:[%s631 + $0x60] sm:$0xff]
        %v645 = vld [vmem:[%s631 + $0x68] sm:$0xff]
        %v646 = vld [vmem:[%s631 + $0x70] sm:$0xff]
        %v647 = vld [vmem:[%s631 + $0x78] sm:$0xff]
        %v648 = vld [vmem:[%s631 + $0x80] sm:$0xff]
        %v649 = vld [vmem:[%s631 + $0x88] sm:$0xff]
        %v650 = vld [vmem:[%s631 + $0x90] sm:$0xff]
        %v651 = vld [vmem:[%s631 + $0x98] sm:$0xff]
        %v652 = vld [vmem:[%s631 + $0xa0] sm:$0xff]
        %v653 = vld [vmem:[%s631 + $0xa8] sm:$0xff]
        %v654 = vld [vmem:[%s631 + $0xb0] sm:$0xff]
        %v655 = vld [vmem:[%s631 + $0xb8] sm:$0xff]
        %v656 = vld [vmem:[%s631 + $0xc0] sm:$0xff]
        %v657 = vld [vmem:[%s631 + $0xc8] sm:$0xff]
        %v658 = vld [vmem:[%s631 + $0xd0] sm:$0xff]
        %v659 = vld [vmem:[%s631 + $0xd8] sm:$0xff]
        %v660 = vld [vmem:[%s631 + $0xe0] sm:$0xff]
        %v661 = vld [vmem:[%s631 + $0xe8] sm:$0xff]
        %v662 = vld [vmem:[%s631 + $0xf0] sm:$0xff]
        %v663 = vld [vmem:[%s631 + $0xf8] sm:$0xff]
        %664 = vmatprep.subr.mxu0 %v633
        %665 = vmatpush1.msra.mxu0 %v632
        %666 = vmatprep.subr.mxu0 %v641
        %667 = vmatpush1.msra.mxu0 %v640
        %668 = vmatprep.subr.mxu0 %v649
        %669 = vmatpush1.msra.mxu0 %v648
        %670 = vmatprep.subr.mxu0 %v657
        %671 = vmatpush1.msra.mxu0 %v656
        %672 = vmatprep.subr.mxu0 0.0
        %673 = vmatpush1.msra.mxu0 0.0
        %674 = vmatprep.subr.mxu0 0.0
        %675 = vmatpush1.msra.mxu0 0.0
        %676 = vmatprep.subr.mxu0 0.0
        %677 = vmatpush1.msra.mxu0 0.0
        %678 = vmatprep.subr.mxu0 0.0
        %679 = vmatpush1.msra.mxu0 0.0
        %680 = vmatprep.subr.mxu0 0.0
        %681 = vmatpush1.msra.mxu0 0.0
        %682 = vmatprep.subr.mxu0 0.0
        %683 = vmatpush1.msra.mxu0 0.0
        %684 = vmatprep.subr.mxu0 0.0
        %685 = vmatpush1.msra.mxu0 0.0
        %686 = vmatprep.subr.mxu0 0.0
        %687 = vmatpush1.msra.mxu0 0.0
        %688 = vmatprep.subr.mxu0 0.0
        %689 = vmatpush1.msra.mxu0 0.0
        %690 = vmatprep.subr.mxu0 0.0
        %691 = vmatpush1.msra.mxu0 0.0
        %692 = vmatprep.subr.mxu0 0.0
        %693 = vmatpush1.msra.mxu0 0.0
        %694 = vmatprep.subr.mxu0 0.0
        %695 = vmatpush1.msra.mxu0 0.0
        %696 = vmatprep.subr.mxu0 0.0
        %697 = vmatpush1.msra.mxu0 0.0
        %698 = vmatprep.subr.mxu0 0.0
        %699 = vmatpush1.msra.mxu0 0.0
        %700 = vmatprep.subr.mxu0 0.0
        %701 = vmatpush1.msra.mxu0 0.0
        %702 = vmatprep.subr.mxu0 0.0
        %703 = vmatpush1.msra.mxu0 0.0
        %704 = vmatprep.subr.mxu0 0.0
        %705 = vmatpush1.msra.mxu0 0.0
        %706 = vmatprep.subr.mxu0 0.0
        %707 = vmatpush1.msra.mxu0 0.0
        %708 = vmatprep.subr.mxu0 0.0
        %709 = vmatpush1.msra.mxu0 0.0
        %710 = vmatprep.subr.mxu0 0.0
        %711 = vmatpush1.msra.mxu0 0.0
        %712 = vmatprep.subr.mxu0 0.0
        %713 = vmatpush1.msra.mxu0 0.0
        %714 = vmatprep.subr.mxu0 0.0
        %715 = vmatpush1.msra.mxu0 0.0
        %716 = vmatprep.subr.mxu0 0.0
        %717 = vmatpush1.msra.mxu0 0.0
        %718 = vmatprep.subr.mxu0 0.0
        %719 = vmatpush1.msra.mxu0 0.0
        %720 = vmatprep.subr.mxu0 0.0
        %721 = vmatpush1.msra.mxu0 0.0
        %722 = vmatprep.subr.mxu0 0.0
        %723 = vmatpush1.msra.mxu0 0.0
        %724 = vmatprep.subr.mxu0 0.0
        %725 = vmatpush1.msra.mxu0 0.0
        %726 = vmatprep.subr.mxu0 0.0
        %727 = vmatpush1.msra.mxu0 0.0
        %728 = vmatprep.mubr.f32.mxu0 0.0
        %729 = vmatmul.mubr.f32.gmra.mrb[0].mxu0 %v264
        %v730 = vpop.f32.mrb[0].mxu0
        %v731 = vadd.f32 0.0, %v730
        %v732 = vpop.f32.mrb[0].mxu0
        %v733 = vadd.f32 0.0, %v732
        %734 = vmatprep.mubr.f32.mxu0 0.0
        %735 = vmatmul.mubr.f32.gmra.mrb[0].mxu0 %v267
        %v736 = vpop.f32.mrb[0].mxu0
        %v737 = vadd.f32 0.0, %v736
        %v738 = vpop.f32.mrb[0].mxu0
        %v739 = vadd.f32 0.0, %v738
        %740 = vmatprep.mubr.f32.mxu0 0.0
        %741 = vmatmul.mubr.f32.gmra.mrb[0].mxu0 %v270
        %v742 = vpop.f32.mrb[0].mxu0
        %v743 = vadd.f32 0.0, %v742
        %v744 = vpop.f32.mrb[0].mxu0
        %v745 = vadd.f32 0.0, %v744
        %746 = vmatprep.mubr.f32.mxu0 0.0
        %747 = vmatmul.mubr.f32.gmra.mrb[0].mxu0 %v273
        %v748 = vpop.f32.mrb[0].mxu0
        %v749 = vadd.f32 0.0, %v748
        %v750 = vpop.f32.mrb[0].mxu0
        %v751 = vadd.f32 0.0, %v750
        %752 = vdwg.mxu0
        %753 = vmatprep.subr.mxu0 %v635
        %754 = vmatpush1.msra.mxu0 %v634
        %755 = vmatprep.subr.mxu0 %v643
        %756 = vmatpush1.msra.mxu0 %v642
        %757 = vmatprep.subr.mxu0 %v651
        %758 = vmatpush1.msra.mxu0 %v650
        %759 = vmatprep.subr.mxu0 %v659
        %760 = vmatpush1.msra.mxu0 %v658
        %761 = vmatprep.subr.mxu0 0.0
        %762 = vmatpush1.msra.mxu0 0.0
        %763 = vmatprep.subr.mxu0 0.0
        %764 = vmatpush1.msra.mxu0 0.0
        %765 = vmatprep.subr.mxu0 0.0
        %766 = vmatpush1.msra.mxu0 0.0
        %767 = vmatprep.subr.mxu0 0.0
        %768 = vmatpush1.msra.mxu0 0.0
        %769 = vmatprep.subr.mxu0 0.0
        %770 = vmatpush1.msra.mxu0 0.0
        %771 = vmatprep.subr.mxu0 0.0
        %772 = vmatpush1.msra.mxu0 0.0
        %773 = vmatprep.subr.mxu0 0.0
        %774 = vmatpush1.msra.mxu0 0.0
        %775 = vmatprep.subr.mxu0 0.0
        %776 = vmatpush1.msra.mxu0 0.0
        %777 = vmatprep.subr.mxu0 0.0
        %778 = vmatpush1.msra.mxu0 0.0
        %779 = vmatprep.subr.mxu0 0.0
        %780 = vmatpush1.msra.mxu0 0.0
        %781 = vmatprep.subr.mxu0 0.0
        %782 = vmatpush1.msra.mxu0 0.0
        %783 = vmatprep.subr.mxu0 0.0
        %784 = vmatpush1.msra.mxu0 0.0
        %785 = vmatprep.subr.mxu0 0.0
        %786 = vmatpush1.msra.mxu0 0.0
        %787 = vmatprep.subr.mxu0 0.0
        %788 = vmatpush1.msra.mxu0 0.0
        %789 = vmatprep.subr.mxu0 0.0
        %790 = vmatpush1.msra.mxu0 0.0
        %791 = vmatprep.subr.mxu0 0.0
        %792 = vmatpush1.msra.mxu0 0.0
        %793 = vmatprep.subr.mxu0 0.0
        %794 = vmatpush1.msra.mxu0 0.0
        %795 = vmatprep.subr.mxu0 0.0
        %796 = vmatpush1.msra.mxu0 0.0
        %797 = vmatprep.subr.mxu0 0.0
        %798 = vmatpush1.msra.mxu0 0.0
        %799 = vmatprep.subr.mxu0 0.0
        %800 = vmatpush1.msra.mxu0 0.0
        %801 = vmatprep.subr.mxu0 0.0
        %802 = vmatpush1.msra.mxu0 0.0
        %803 = vmatprep.subr.mxu0 0.0
        %804 = vmatpush1.msra.mxu0 0.0
        %805 = vmatprep.subr.mxu0 0.0
        %806 = vmatpush1.msra.mxu0 0.0
        %807 = vmatprep.subr.mxu0 0.0
        %808 = vmatpush1.msra.mxu0 0.0
        %809 = vmatprep.subr.mxu0 0.0
        %810 = vmatpush1.msra.mxu0 0.0
        %811 = vmatprep.subr.mxu0 0.0
        %812 = vmatpush1.msra.mxu0 0.0
        %813 = vmatprep.subr.mxu0 0.0
        %814 = vmatpush1.msra.mxu0 0.0
        %815 = vmatprep.subr.mxu0 0.0
        %816 = vmatpush1.msra.mxu0 0.0
        %817 = vmatprep.mubr.f32.mxu0 0.0
        %818 = vmatmul.mubr.f32.gmra.mrb[0].mxu0 %v264
        %v819 = vpop.f32.mrb[0].mxu0
        %v820 = vadd.f32 0.0, %v819
        %v821 = vpop.f32.mrb[0].mxu0
        %v822 = vadd.f32 0.0, %v821
        %823 = vmatprep.mubr.f32.mxu0 0.0
        %824 = vmatmul.mubr.f32.gmra.mrb[0].mxu0 %v267
        %v825 = vpop.f32.mrb[0].mxu0
        %v826 = vadd.f32 0.0, %v825
        %v827 = vpop.f32.mrb[0].mxu0
        %v828 = vadd.f32 0.0, %v827
        %829 = vmatprep.mubr.f32.mxu0 0.0
        %830 = vmatmul.mubr.f32.gmra.mrb[0].mxu0 %v270
        %v831 = vpop.f32.mrb[0].mxu0
        %v832 = vadd.f32 0.0, %v831
        %v833 = vpop.f32.mrb[0].mxu0
        %v834 = vadd.f32 0.0, %v833
        %835 = vmatprep.mubr.f32.mxu0 0.0
        %836 = vmatmul.mubr.f32.gmra.mrb[0].mxu0 %v273
        %v837 = vpop.f32.mrb[0].mxu0
        %v838 = vadd.f32 0.0, %v837
        %v839 = vpop.f32.mrb[0].mxu0
        %v840 = vadd.f32 0.0, %v839
        %841 = vdwg.mxu0
        %842 = vmatprep.subr.mxu0 %v637
        %843 = vmatpush1.msra.mxu0 %v636
        %844 = vmatprep.subr.mxu0 %v645
        %845 = vmatpush1.msra.mxu0 %v644
        %846 = vmatprep.subr.mxu0 %v653
        %847 = vmatpush1.msra.mxu0 %v652
        %848 = vmatprep.subr.mxu0 %v661
        %849 = vmatpush1.msra.mxu0 %v660
        %850 = vmatprep.subr.mxu0 0.0
        %851 = vmatpush1.msra.mxu0 0.0
        %852 = vmatprep.subr.mxu0 0.0
        %853 = vmatpush1.msra.mxu0 0.0
        %854 = vmatprep.subr.mxu0 0.0
        %855 = vmatpush1.msra.mxu0 0.0
        %856 = vmatprep.subr.mxu0 0.0
        %857 = vmatpush1.msra.mxu0 0.0
        %858 = vmatprep.subr.mxu0 0.0
        %859 = vmatpush1.msra.mxu0 0.0
        %860 = vmatprep.subr.mxu0 0.0
        %861 = vmatpush1.msra.mxu0 0.0
        %862 = vmatprep.subr.mxu0 0.0
        %863 = vmatpush1.msra.mxu0 0.0
        %864 = vmatprep.subr.mxu0 0.0
        %865 = vmatpush1.msra.mxu0 0.0
        %866 = vmatprep.subr.mxu0 0.0
        %867 = vmatpush1.msra.mxu0 0.0
        %868 = vmatprep.subr.mxu0 0.0
        %869 = vmatpush1.msra.mxu0 0.0
        %870 = vmatprep.subr.mxu0 0.0
        %871 = vmatpush1.msra.mxu0 0.0
        %872 = vmatprep.subr.mxu0 0.0
        %873 = vmatpush1.msra.mxu0 0.0
        %874 = vmatprep.subr.mxu0 0.0
        %875 = vmatpush1.msra.mxu0 0.0
        %876 = vmatprep.subr.mxu0 0.0
        %877 = vmatpush1.msra.mxu0 0.0
        %878 = vmatprep.subr.mxu0 0.0
        %879 = vmatpush1.msra.mxu0 0.0
        %880 = vmatprep.subr.mxu0 0.0
        %881 = vmatpush1.msra.mxu0 0.0
        %882 = vmatprep.subr.mxu0 0.0
        %883 = vmatpush1.msra.mxu0 0.0
        %884 = vmatprep.subr.mxu0 0.0
        %885 = vmatpush1.msra.mxu0 0.0
        %886 = vmatprep.subr.mxu0 0.0
        %887 = vmatpush1.msra.mxu0 0.0
        %888 = vmatprep.subr.mxu0 0.0
        %889 = vmatpush1.msra.mxu0 0.0
        %890 = vmatprep.subr.mxu0 0.0
        %891 = vmatpush1.msra.mxu0 0.0
        %892 = vmatprep.subr.mxu0 0.0
        %893 = vmatpush1.msra.mxu0 0.0
        %894 = vmatprep.subr.mxu0 0.0
        %895 = vmatpush1.msra.mxu0 0.0
        %896 = vmatprep.subr.mxu0 0.0
        %897 = vmatpush1.msra.mxu0 0.0
        %898 = vmatprep.subr.mxu0 0.0
        %899 = vmatpush1.msra.mxu0 0.0
        %900 = vmatprep.subr.mxu0 0.0
        %901 = vmatpush1.msra.mxu0 0.0
        %902 = vmatprep.subr.mxu0 0.0
        %903 = vmatpush1.msra.mxu0 0.0
        %904 = vmatprep.subr.mxu0 0.0
        %905 = vmatpush1.msra.mxu0 0.0
        %906 = vmatprep.mubr.f32.mxu0 0.0
        %907 = vmatmul.mubr.f32.gmra.mrb[0].mxu0 %v264
        %v908 = vpop.f32.mrb[0].mxu0
        %v909 = vadd.f32 0.0, %v908
        %v910 = vpop.f32.mrb[0].mxu0
        %v911 = vadd.f32 0.0, %v910
        %912 = vmatprep.mubr.f32.mxu0 0.0
        %913 = vmatmul.mubr.f32.gmra.mrb[0].mxu0 %v267
        %v914 = vpop.f32.mrb[0].mxu0
        %v915 = vadd.f32 0.0, %v914
        %v916 = vpop.f32.mrb[0].mxu0
        %v917 = vadd.f32 0.0, %v916
        %918 = vmatprep.mubr.f32.mxu0 0.0
        %919 = vmatmul.mubr.f32.gmra.mrb[0].mxu0 %v270
        %v920 = vpop.f32.mrb[0].mxu0
        %v921 = vadd.f32 0.0, %v920
        %v922 = vpop.f32.mrb[0].mxu0
        %v923 = vadd.f32 0.0, %v922
        %924 = vmatprep.mubr.f32.mxu0 0.0
        %925 = vmatmul.mubr.f32.gmra.mrb[0].mxu0 %v273
        %v926 = vpop.f32.mrb[0].mxu0
        %v927 = vadd.f32 0.0, %v926
        %v928 = vpop.f32.mrb[0].mxu0
        %v929 = vadd.f32 0.0, %v928
        %930 = vdwg.mxu0
        %931 = vmatprep.subr.mxu0 %v639
        %932 = vmatpush1.msra.mxu0 %v638
        %933 = vmatprep.subr.mxu0 %v647
        %934 = vmatpush1.msra.mxu0 %v646
        %935 = vmatprep.subr.mxu0 %v655
        %936 = vmatpush1.msra.mxu0 %v654
        %937 = vmatprep.subr.mxu0 %v663
        %938 = vmatpush1.msra.mxu0 %v662
        %939 = vmatprep.subr.mxu0 0.0
        %940 = vmatpush1.msra.mxu0 0.0
        %941 = vmatprep.subr.mxu0 0.0
        %942 = vmatpush1.msra.mxu0 0.0
        %943 = vmatprep.subr.mxu0 0.0
        %944 = vmatpush1.msra.mxu0 0.0
        %945 = vmatprep.subr.mxu0 0.0
        %946 = vmatpush1.msra.mxu0 0.0
        %947 = vmatprep.subr.mxu0 0.0
        %948 = vmatpush1.msra.mxu0 0.0
        %949 = vmatprep.subr.mxu0 0.0
        %950 = vmatpush1.msra.mxu0 0.0
        %951 = vmatprep.subr.mxu0 0.0
        %952 = vmatpush1.msra.mxu0 0.0
        %953 = vmatprep.subr.mxu0 0.0
        %954 = vmatpush1.msra.mxu0 0.0
        %955 = vmatprep.subr.mxu0 0.0
        %956 = vmatpush1.msra.mxu0 0.0
        %957 = vmatprep.subr.mxu0 0.0
        %958 = vmatpush1.msra.mxu0 0.0
        %959 = vmatprep.subr.mxu0 0.0
        %960 = vmatpush1.msra.mxu0 0.0
        %961 = vmatprep.subr.mxu0 0.0
        %962 = vmatpush1.msra.mxu0 0.0
        %963 = vmatprep.subr.mxu0 0.0
        %964 = vmatpush1.msra.mxu0 0.0
        %965 = vmatprep.subr.mxu0 0.0
        %966 = vmatpush1.msra.mxu0 0.0
        %967 = vmatprep.subr.mxu0 0.0
        %968 = vmatpush1.msra.mxu0 0.0
        %969 = vmatprep.subr.mxu0 0.0
        %970 = vmatpush1.msra.mxu0 0.0
        %971 = vmatprep.subr.mxu0 0.0
        %972 = vmatpush1.msra.mxu0 0.0
        %973 = vmatprep.subr.mxu0 0.0
        %974 = vmatpush1.msra.mxu0 0.0
        %975 = vmatprep.subr.mxu0 0.0
        %976 = vmatpush1.msra.mxu0 0.0
        %977 = vmatprep.subr.mxu0 0.0
        %978 = vmatpush1.msra.mxu0 0.0
        %979 = vmatprep.subr.mxu0 0.0
        %980 = vmatpush1.msra.mxu0 0.0
        %981 = vmatprep.subr.mxu0 0.0
        %982 = vmatpush1.msra.mxu0 0.0
        %983 = vmatprep.subr.mxu0 0.0
        %984 = vmatpush1.msra.mxu0 0.0
        %985 = vmatprep.subr.mxu0 0.0
        %986 = vmatpush1.msra.mxu0 0.0
        %987 = vmatprep.subr.mxu0 0.0
        %988 = vmatpush1.msra.mxu0 0.0
        %989 = vmatprep.subr.mxu0 0.0
        %990 = vmatpush1.msra.mxu0 0.0
        %991 = vmatprep.subr.mxu0 0.0
        %992 = vmatpush1.msra.mxu0 0.0
        %993 = vmatprep.subr.mxu0 0.0
        %994 = vmatpush1.msra.mxu0 0.0
        %995 = vmatprep.mubr.f32.mxu0 0.0
        %996 = vmatmul.mubr.f32.gmra.mrb[0].mxu0 %v264
        %v997 = vpop.f32.mrb[0].mxu0
        %v998 = vadd.f32 0.0, %v997
        %v999 = vpop.f32.mrb[0].mxu0
        %v1000 = vadd.f32 0.0, %v999
        %1001 = vmatprep.mubr.f32.mxu0 0.0
        %1002 = vmatmul.mubr.f32.gmra.mrb[0].mxu0 %v267
        %v1003 = vpop.f32.mrb[0].mxu0
        %v1004 = vadd.f32 0.0, %v1003
        %v1005 = vpop.f32.mrb[0].mxu0
        %v1006 = vadd.f32 0.0, %v1005
        %1007 = vmatprep.mubr.f32.mxu0 0.0
        %1008 = vmatmul.mubr.f32.gmra.mrb[0].mxu0 %v270
        %v1009 = vpop.f32.mrb[0].mxu0
        %v1010 = vadd.f32 0.0, %v1009
        %v1011 = vpop.f32.mrb[0].mxu0
        %v1012 = vadd.f32 0.0, %v1011
        %1013 = vmatprep.mubr.f32.mxu0 0.0
        %1014 = vmatmul.mubr.f32.gmra.mrb[0].mxu0 %v273
        %v1015 = vpop.f32.mrb[0].mxu0
        %v1016 = vadd.f32 0.0, %v1015
        %v1017 = vpop.f32.mrb[0].mxu0
        %v1018 = vadd.f32 0.0, %v1017
        %1019 = vdwg.mxu0
        %s1020 = scalar_lea.vmem %s191, 512 [#allocation2]
        %v1021 = vld [vmem:[%s1020] sm:$0xff]
        %v1022 = vld [vmem:[%s1020 + $0x8] sm:$0xff]
        %v1023 = vld [vmem:[%s1020 + $0x10] sm:$0xff]
        %v1024 = vld [vmem:[%s1020 + $0x18] sm:$0xff]
        %v1025 = vld [vmem:[%s1020 + $0x20] sm:$0xff]
        %v1026 = vld [vmem:[%s1020 + $0x28] sm:$0xff]
        %v1027 = vld [vmem:[%s1020 + $0x30] sm:$0xff]
        %v1028 = vld [vmem:[%s1020 + $0x38] sm:$0xff]
        %v1029 = vld [vmem:[%s1020 + $0x40] sm:$0xff]
        %v1030 = vld [vmem:[%s1020 + $0x48] sm:$0xff]
        %v1031 = vld [vmem:[%s1020 + $0x50] sm:$0xff]
        %v1032 = vld [vmem:[%s1020 + $0x58] sm:$0xff]
        %v1033 = vld [vmem:[%s1020 + $0x60] sm:$0xff]
        %v1034 = vld [vmem:[%s1020 + $0x68] sm:$0xff]
        %v1035 = vld [vmem:[%s1020 + $0x70] sm:$0xff]
        %v1036 = vld [vmem:[%s1020 + $0x78] sm:$0xff]
        %v1037 = vld [vmem:[%s1020 + $0x80] sm:$0xff]
        %v1038 = vld [vmem:[%s1020 + $0x88] sm:$0xff]
        %v1039 = vld [vmem:[%s1020 + $0x90] sm:$0xff]
        %v1040 = vld [vmem:[%s1020 + $0x98] sm:$0xff]
        %v1041 = vld [vmem:[%s1020 + $0xa0] sm:$0xff]
        %v1042 = vld [vmem:[%s1020 + $0xa8] sm:$0xff]
        %v1043 = vld [vmem:[%s1020 + $0xb0] sm:$0xff]
        %v1044 = vld [vmem:[%s1020 + $0xb8] sm:$0xff]
        %v1045 = vld [vmem:[%s1020 + $0xc0] sm:$0xff]
        %v1046 = vld [vmem:[%s1020 + $0xc8] sm:$0xff]
        %v1047 = vld [vmem:[%s1020 + $0xd0] sm:$0xff]
        %v1048 = vld [vmem:[%s1020 + $0xd8] sm:$0xff]
        %v1049 = vld [vmem:[%s1020 + $0xe0] sm:$0xff]
        %v1050 = vld [vmem:[%s1020 + $0xe8] sm:$0xff]
        %v1051 = vld [vmem:[%s1020 + $0xf0] sm:$0xff]
        %v1052 = vld [vmem:[%s1020 + $0xf8] sm:$0xff]
        %1053 = vmatprep.subr.mxu0 %v1022
        %1054 = vmatpush1.msra.mxu0 %v1021
        %1055 = vmatprep.subr.mxu0 %v1030
        %1056 = vmatpush1.msra.mxu0 %v1029
        %1057 = vmatprep.subr.mxu0 %v1038
        %1058 = vmatpush1.msra.mxu0 %v1037
        %1059 = vmatprep.subr.mxu0 %v1046
        %1060 = vmatpush1.msra.mxu0 %v1045
        %1061 = vmatprep.subr.mxu0 0.0
        %1062 = vmatpush1.msra.mxu0 0.0
        %1063 = vmatprep.subr.mxu0 0.0
        %1064 = vmatpush1.msra.mxu0 0.0
        %1065 = vmatprep.subr.mxu0 0.0
        %1066 = vmatpush1.msra.mxu0 0.0
        %1067 = vmatprep.subr.mxu0 0.0
        %1068 = vmatpush1.msra.mxu0 0.0
        %1069 = vmatprep.subr.mxu0 0.0
        %1070 = vmatpush1.msra.mxu0 0.0
        %1071 = vmatprep.subr.mxu0 0.0
        %1072 = vmatpush1.msra.mxu0 0.0
        %1073 = vmatprep.subr.mxu0 0.0
        %1074 = vmatpush1.msra.mxu0 0.0
        %1075 = vmatprep.subr.mxu0 0.0
        %1076 = vmatpush1.msra.mxu0 0.0
        %1077 = vmatprep.subr.mxu0 0.0
        %1078 = vmatpush1.msra.mxu0 0.0
        %1079 = vmatprep.subr.mxu0 0.0
        %1080 = vmatpush1.msra.mxu0 0.0
        %1081 = vmatprep.subr.mxu0 0.0
        %1082 = vmatpush1.msra.mxu0 0.0
        %1083 = vmatprep.subr.mxu0 0.0
        %1084 = vmatpush1.msra.mxu0 0.0
        %1085 = vmatprep.subr.mxu0 0.0
        %1086 = vmatpush1.msra.mxu0 0.0
        %1087 = vmatprep.subr.mxu0 0.0
        %1088 = vmatpush1.msra.mxu0 0.0
        %1089 = vmatprep.subr.mxu0 0.0
        %1090 = vmatpush1.msra.mxu0 0.0
        %1091 = vmatprep.subr.mxu0 0.0
        %1092 = vmatpush1.msra.mxu0 0.0
        %1093 = vmatprep.subr.mxu0 0.0
        %1094 = vmatpush1.msra.mxu0 0.0
        %1095 = vmatprep.subr.mxu0 0.0
        %1096 = vmatpush1.msra.mxu0 0.0
        %1097 = vmatprep.subr.mxu0 0.0
        %1098 = vmatpush1.msra.mxu0 0.0
        %1099 = vmatprep.subr.mxu0 0.0
        %1100 = vmatpush1.msra.mxu0 0.0
        %1101 = vmatprep.subr.mxu0 0.0
        %1102 = vmatpush1.msra.mxu0 0.0
        %1103 = vmatprep.subr.mxu0 0.0
        %1104 = vmatpush1.msra.mxu0 0.0
        %1105 = vmatprep.subr.mxu0 0.0
        %1106 = vmatpush1.msra.mxu0 0.0
        %1107 = vmatprep.subr.mxu0 0.0
        %1108 = vmatpush1.msra.mxu0 0.0
        %1109 = vmatprep.subr.mxu0 0.0
        %1110 = vmatpush1.msra.mxu0 0.0
        %1111 = vmatprep.subr.mxu0 0.0
        %1112 = vmatpush1.msra.mxu0 0.0
        %1113 = vmatprep.subr.mxu0 0.0
        %1114 = vmatpush1.msra.mxu0 0.0
        %1115 = vmatprep.subr.mxu0 0.0
        %1116 = vmatpush1.msra.mxu0 0.0
        %1117 = vmatprep.mubr.f32.mxu0 0.0
        %1118 = vmatmul.mubr.f32.gmra.mrb[0].mxu0 %v264
        %v1119 = vpop.f32.mrb[0].mxu0
        %v1120 = vadd.f32 0.0, %v1119
        %v1121 = vpop.f32.mrb[0].mxu0
        %v1122 = vadd.f32 0.0, %v1121
        %1123 = vmatprep.mubr.f32.mxu0 0.0
        %1124 = vmatmul.mubr.f32.gmra.mrb[0].mxu0 %v267
        %v1125 = vpop.f32.mrb[0].mxu0
        %v1126 = vadd.f32 0.0, %v1125
        %v1127 = vpop.f32.mrb[0].mxu0
        %v1128 = vadd.f32 0.0, %v1127
        %1129 = vmatprep.mubr.f32.mxu0 0.0
        %1130 = vmatmul.mubr.f32.gmra.mrb[0].mxu0 %v270
        %v1131 = vpop.f32.mrb[0].mxu0
        %v1132 = vadd.f32 0.0, %v1131
        %v1133 = vpop.f32.mrb[0].mxu0
        %v1134 = vadd.f32 0.0, %v1133
        %1135 = vmatprep.mubr.f32.mxu0 0.0
        %1136 = vmatmul.mubr.f32.gmra.mrb[0].mxu0 %v273
        %v1137 = vpop.f32.mrb[0].mxu0
        %v1138 = vadd.f32 0.0, %v1137
        %v1139 = vpop.f32.mrb[0].mxu0
        %v1140 = vadd.f32 0.0, %v1139
        %1141 = vdwg.mxu0
        %1142 = vmatprep.subr.mxu0 %v1024
        %1143 = vmatpush1.msra.mxu0 %v1023
        %1144 = vmatprep.subr.mxu0 %v1032
        %1145 = vmatpush1.msra.mxu0 %v1031
        %1146 = vmatprep.subr.mxu0 %v1040
        %1147 = vmatpush1.msra.mxu0 %v1039
        %1148 = vmatprep.subr.mxu0 %v1048
        %1149 = vmatpush1.msra.mxu0 %v1047
        %1150 = vmatprep.subr.mxu0 0.0
        %1151 = vmatpush1.msra.mxu0 0.0
        %1152 = vmatprep.subr.mxu0 0.0
        %1153 = vmatpush1.msra.mxu0 0.0
        %1154 = vmatprep.subr.mxu0 0.0
        %1155 = vmatpush1.msra.mxu0 0.0
        %1156 = vmatprep.subr.mxu0 0.0
        %1157 = vmatpush1.msra.mxu0 0.0
        %1158 = vmatprep.subr.mxu0 0.0
        %1159 = vmatpush1.msra.mxu0 0.0
        %1160 = vmatprep.subr.mxu0 0.0
        %1161 = vmatpush1.msra.mxu0 0.0
        %1162 = vmatprep.subr.mxu0 0.0
        %1163 = vmatpush1.msra.mxu0 0.0
        %1164 = vmatprep.subr.mxu0 0.0
        %1165 = vmatpush1.msra.mxu0 0.0
        %1166 = vmatprep.subr.mxu0 0.0
        %1167 = vmatpush1.msra.mxu0 0.0
        %1168 = vmatprep.subr.mxu0 0.0
        %1169 = vmatpush1.msra.mxu0 0.0
        %1170 = vmatprep.subr.mxu0 0.0
        %1171 = vmatpush1.msra.mxu0 0.0
        %1172 = vmatprep.subr.mxu0 0.0
        %1173 = vmatpush1.msra.mxu0 0.0
        %1174 = vmatprep.subr.mxu0 0.0
        %1175 = vmatpush1.msra.mxu0 0.0
        %1176 = vmatprep.subr.mxu0 0.0
        %1177 = vmatpush1.msra.mxu0 0.0
        %1178 = vmatprep.subr.mxu0 0.0
        %1179 = vmatpush1.msra.mxu0 0.0
        %1180 = vmatprep.subr.mxu0 0.0
        %1181 = vmatpush1.msra.mxu0 0.0
        %1182 = vmatprep.subr.mxu0 0.0
        %1183 = vmatpush1.msra.mxu0 0.0
        %1184 = vmatprep.subr.mxu0 0.0
        %1185 = vmatpush1.msra.mxu0 0.0
        %1186 = vmatprep.subr.mxu0 0.0
        %1187 = vmatpush1.msra.mxu0 0.0
        %1188 = vmatprep.subr.mxu0 0.0
        %1189 = vmatpush1.msra.mxu0 0.0
        %1190 = vmatprep.subr.mxu0 0.0
        %1191 = vmatpush1.msra.mxu0 0.0
        %1192 = vmatprep.subr.mxu0 0.0
        %1193 = vmatpush1.msra.mxu0 0.0
        %1194 = vmatprep.subr.mxu0 0.0
        %1195 = vmatpush1.msra.mxu0 0.0
        %1196 = vmatprep.subr.mxu0 0.0
        %1197 = vmatpush1.msra.mxu0 0.0
        %1198 = vmatprep.subr.mxu0 0.0
        %1199 = vmatpush1.msra.mxu0 0.0
        %1200 = vmatprep.subr.mxu0 0.0
        %1201 = vmatpush1.msra.mxu0 0.0
        %1202 = vmatprep.subr.mxu0 0.0
        %1203 = vmatpush1.msra.mxu0 0.0
        %1204 = vmatprep.subr.mxu0 0.0
        %1205 = vmatpush1.msra.mxu0 0.0
        %1206 = vmatprep.mubr.f32.mxu0 0.0
        %1207 = vmatmul.mubr.f32.gmra.mrb[0].mxu0 %v264
        %v1208 = vpop.f32.mrb[0].mxu0
        %v1209 = vadd.f32 0.0, %v1208
        %v1210 = vpop.f32.mrb[0].mxu0
        %v1211 = vadd.f32 0.0, %v1210
        %1212 = vmatprep.mubr.f32.mxu0 0.0
        %1213 = vmatmul.mubr.f32.gmra.mrb[0].mxu0 %v267
        %v1214 = vpop.f32.mrb[0].mxu0
        %v1215 = vadd.f32 0.0, %v1214
        %v1216 = vpop.f32.mrb[0].mxu0
        %v1217 = vadd.f32 0.0, %v1216
        %1218 = vmatprep.mubr.f32.mxu0 0.0
        %1219 = vmatmul.mubr.f32.gmra.mrb[0].mxu0 %v270
        %v1220 = vpop.f32.mrb[0].mxu0
        %v1221 = vadd.f32 0.0, %v1220
        %v1222 = vpop.f32.mrb[0].mxu0
        %v1223 = vadd.f32 0.0, %v1222
        %1224 = vmatprep.mubr.f32.mxu0 0.0
        %1225 = vmatmul.mubr.f32.gmra.mrb[0].mxu0 %v273
        %v1226 = vpop.f32.mrb[0].mxu0
        %v1227 = vadd.f32 0.0, %v1226
        %v1228 = vpop.f32.mrb[0].mxu0
        %v1229 = vadd.f32 0.0, %v1228
        %1230 = vdwg.mxu0
        %1231 = vmatprep.subr.mxu0 %v1026
        %1232 = vmatpush1.msra.mxu0 %v1025
        %1233 = vmatprep.subr.mxu0 %v1034
        %1234 = vmatpush1.msra.mxu0 %v1033
        %1235 = vmatprep.subr.mxu0 %v1042
        %1236 = vmatpush1.msra.mxu0 %v1041
        %1237 = vmatprep.subr.mxu0 %v1050
        %1238 = vmatpush1.msra.mxu0 %v1049
        %1239 = vmatprep.subr.mxu0 0.0
        %1240 = vmatpush1.msra.mxu0 0.0
        %1241 = vmatprep.subr.mxu0 0.0
        %1242 = vmatpush1.msra.mxu0 0.0
        %1243 = vmatprep.subr.mxu0 0.0
        %1244 = vmatpush1.msra.mxu0 0.0
        %1245 = vmatprep.subr.mxu0 0.0
        %1246 = vmatpush1.msra.mxu0 0.0
        %1247 = vmatprep.subr.mxu0 0.0
        %1248 = vmatpush1.msra.mxu0 0.0
        %1249 = vmatprep.subr.mxu0 0.0
        %1250 = vmatpush1.msra.mxu0 0.0
        %1251 = vmatprep.subr.mxu0 0.0
        %1252 = vmatpush1.msra.mxu0 0.0
        %1253 = vmatprep.subr.mxu0 0.0
        %1254 = vmatpush1.msra.mxu0 0.0
        %1255 = vmatprep.subr.mxu0 0.0
        %1256 = vmatpush1.msra.mxu0 0.0
        %1257 = vmatprep.subr.mxu0 0.0
        %1258 = vmatpush1.msra.mxu0 0.0
        %1259 = vmatprep.subr.mxu0 0.0
        %1260 = vmatpush1.msra.mxu0 0.0
        %1261 = vmatprep.subr.mxu0 0.0
        %1262 = vmatpush1.msra.mxu0 0.0
        %1263 = vmatprep.subr.mxu0 0.0
        %1264 = vmatpush1.msra.mxu0 0.0
        %1265 = vmatprep.subr.mxu0 0.0
        %1266 = vmatpush1.msra.mxu0 0.0
        %1267 = vmatprep.subr.mxu0 0.0
        %1268 = vmatpush1.msra.mxu0 0.0
        %1269 = vmatprep.subr.mxu0 0.0
        %1270 = vmatpush1.msra.mxu0 0.0
        %1271 = vmatprep.subr.mxu0 0.0
        %1272 = vmatpush1.msra.mxu0 0.0
        %1273 = vmatprep.subr.mxu0 0.0
        %1274 = vmatpush1.msra.mxu0 0.0
        %1275 = vmatprep.subr.mxu0 0.0
        %1276 = vmatpush1.msra.mxu0 0.0
        %1277 = vmatprep.subr.mxu0 0.0
        %1278 = vmatpush1.msra.mxu0 0.0
        %1279 = vmatprep.subr.mxu0 0.0
        %1280 = vmatpush1.msra.mxu0 0.0
        %1281 = vmatprep.subr.mxu0 0.0
        %1282 = vmatpush1.msra.mxu0 0.0
        %1283 = vmatprep.subr.mxu0 0.0
        %1284 = vmatpush1.msra.mxu0 0.0
        %1285 = vmatprep.subr.mxu0 0.0
        %1286 = vmatpush1.msra.mxu0 0.0
        %1287 = vmatprep.subr.mxu0 0.0
        %1288 = vmatpush1.msra.mxu0 0.0
        %1289 = vmatprep.subr.mxu0 0.0
        %1290 = vmatpush1.msra.mxu0 0.0
        %1291 = vmatprep.subr.mxu0 0.0
        %1292 = vmatpush1.msra.mxu0 0.0
        %1293 = vmatprep.subr.mxu0 0.0
        %1294 = vmatpush1.msra.mxu0 0.0
        %1295 = vmatprep.mubr.f32.mxu0 0.0
        %1296 = vmatmul.mubr.f32.gmra.mrb[0].mxu0 %v264
        %v1297 = vpop.f32.mrb[0].mxu0
        %v1298 = vadd.f32 0.0, %v1297
        %v1299 = vpop.f32.mrb[0].mxu0
        %v1300 = vadd.f32 0.0, %v1299
        %1301 = vmatprep.mubr.f32.mxu0 0.0
        %1302 = vmatmul.mubr.f32.gmra.mrb[0].mxu0 %v267
        %v1303 = vpop.f32.mrb[0].mxu0
        %v1304 = vadd.f32 0.0, %v1303
        %v1305 = vpop.f32.mrb[0].mxu0
        %v1306 = vadd.f32 0.0, %v1305
        %1307 = vmatprep.mubr.f32.mxu0 0.0
        %1308 = vmatmul.mubr.f32.gmra.mrb[0].mxu0 %v270
        %v1309 = vpop.f32.mrb[0].mxu0
        %v1310 = vadd.f32 0.0, %v1309
        %v1311 = vpop.f32.mrb[0].mxu0
        %v1312 = vadd.f32 0.0, %v1311
        %1313 = vmatprep.mubr.f32.mxu0 0.0
        %1314 = vmatmul.mubr.f32.gmra.mrb[0].mxu0 %v273
        %v1315 = vpop.f32.mrb[0].mxu0
        %v1316 = vadd.f32 0.0, %v1315
        %v1317 = vpop.f32.mrb[0].mxu0
        %v1318 = vadd.f32 0.0, %v1317
        %1319 = vdwg.mxu0
        %1320 = vmatprep.subr.mxu0 %v1028
        %1321 = vmatpush1.msra.mxu0 %v1027
        %1322 = vmatprep.subr.mxu0 %v1036
        %1323 = vmatpush1.msra.mxu0 %v1035
        %1324 = vmatprep.subr.mxu0 %v1044
        %1325 = vmatpush1.msra.mxu0 %v1043
        %1326 = vmatprep.subr.mxu0 %v1052
        %1327 = vmatpush1.msra.mxu0 %v1051
        %1328 = vmatprep.subr.mxu0 0.0
        %1329 = vmatpush1.msra.mxu0 0.0
        %1330 = vmatprep.subr.mxu0 0.0
        %1331 = vmatpush1.msra.mxu0 0.0
        %1332 = vmatprep.subr.mxu0 0.0
        %1333 = vmatpush1.msra.mxu0 0.0
        %1334 = vmatprep.subr.mxu0 0.0
        %1335 = vmatpush1.msra.mxu0 0.0
        %1336 = vmatprep.subr.mxu0 0.0
        %1337 = vmatpush1.msra.mxu0 0.0
        %1338 = vmatprep.subr.mxu0 0.0
        %1339 = vmatpush1.msra.mxu0 0.0
        %1340 = vmatprep.subr.mxu0 0.0
        %1341 = vmatpush1.msra.mxu0 0.0
        %1342 = vmatprep.subr.mxu0 0.0
        %1343 = vmatpush1.msra.mxu0 0.0
        %1344 = vmatprep.subr.mxu0 0.0
        %1345 = vmatpush1.msra.mxu0 0.0
        %1346 = vmatprep.subr.mxu0 0.0
        %1347 = vmatpush1.msra.mxu0 0.0
        %1348 = vmatprep.subr.mxu0 0.0
        %1349 = vmatpush1.msra.mxu0 0.0
        %1350 = vmatprep.subr.mxu0 0.0
        %1351 = vmatpush1.msra.mxu0 0.0
        %1352 = vmatprep.subr.mxu0 0.0
        %1353 = vmatpush1.msra.mxu0 0.0
        %1354 = vmatprep.subr.mxu0 0.0
        %1355 = vmatpush1.msra.mxu0 0.0
        %1356 = vmatprep.subr.mxu0 0.0
        %1357 = vmatpush1.msra.mxu0 0.0
        %1358 = vmatprep.subr.mxu0 0.0
        %1359 = vmatpush1.msra.mxu0 0.0
        %1360 = vmatprep.subr.mxu0 0.0
        %1361 = vmatpush1.msra.mxu0 0.0
        %1362 = vmatprep.subr.mxu0 0.0
        %1363 = vmatpush1.msra.mxu0 0.0
        %1364 = vmatprep.subr.mxu0 0.0
        %1365 = vmatpush1.msra.mxu0 0.0
        %1366 = vmatprep.subr.mxu0 0.0
        %1367 = vmatpush1.msra.mxu0 0.0
        %1368 = vmatprep.subr.mxu0 0.0
        %1369 = vmatpush1.msra.mxu0 0.0
        %1370 = vmatprep.subr.mxu0 0.0
        %1371 = vmatpush1.msra.mxu0 0.0
        %1372 = vmatprep.subr.mxu0 0.0
        %1373 = vmatpush1.msra.mxu0 0.0
        %1374 = vmatprep.subr.mxu0 0.0
        %1375 = vmatpush1.msra.mxu0 0.0
        %1376 = vmatprep.subr.mxu0 0.0
        %1377 = vmatpush1.msra.mxu0 0.0
        %1378 = vmatprep.subr.mxu0 0.0
        %1379 = vmatpush1.msra.mxu0 0.0
        %1380 = vmatprep.subr.mxu0 0.0
        %1381 = vmatpush1.msra.mxu0 0.0
        %1382 = vmatprep.subr.mxu0 0.0
        %1383 = vmatpush1.msra.mxu0 0.0
        %1384 = vmatprep.mubr.f32.mxu0 0.0
        %1385 = vmatmul.mubr.f32.gmra.mrb[0].mxu0 %v264
        %v1386 = vpop.f32.mrb[0].mxu0
        %v1387 = vadd.f32 0.0, %v1386
        %v1388 = vpop.f32.mrb[0].mxu0
        %v1389 = vadd.f32 0.0, %v1388
        %1390 = vmatprep.mubr.f32.mxu0 0.0
        %1391 = vmatmul.mubr.f32.gmra.mrb[0].mxu0 %v267
        %v1392 = vpop.f32.mrb[0].mxu0
        %v1393 = vadd.f32 0.0, %v1392
        %v1394 = vpop.f32.mrb[0].mxu0
        %v1395 = vadd.f32 0.0, %v1394
        %1396 = vmatprep.mubr.f32.mxu0 0.0
        %1397 = vmatmul.mubr.f32.gmra.mrb[0].mxu0 %v270
        %v1398 = vpop.f32.mrb[0].mxu0
        %v1399 = vadd.f32 0.0, %v1398
        %v1400 = vpop.f32.mrb[0].mxu0
        %v1401 = vadd.f32 0.0, %v1400
        %1402 = vmatprep.mubr.f32.mxu0 0.0
        %1403 = vmatmul.mubr.f32.gmra.mrb[0].mxu0 %v273
        %v1404 = vpop.f32.mrb[0].mxu0
        %v1405 = vadd.f32 0.0, %v1404
        %v1406 = vpop.f32.mrb[0].mxu0
        %v1407 = vadd.f32 0.0, %v1406
        %1408 = vdwg.mxu0
        %s1409 = scalar_lea.vmem %s191, 768 [#allocation2]
        %v1410 = vld [vmem:[%s1409] sm:$0xff]
        %v1411 = vld [vmem:[%s1409 + $0x8] sm:$0xff]
        %v1412 = vld [vmem:[%s1409 + $0x10] sm:$0xff]
        %v1413 = vld [vmem:[%s1409 + $0x18] sm:$0xff]
        %v1414 = vld [vmem:[%s1409 + $0x20] sm:$0xff]
        %v1415 = vld [vmem:[%s1409 + $0x28] sm:$0xff]
        %v1416 = vld [vmem:[%s1409 + $0x30] sm:$0xff]
        %v1417 = vld [vmem:[%s1409 + $0x38] sm:$0xff]
        %v1418 = vld [vmem:[%s1409 + $0x40] sm:$0xff]
        %v1419 = vld [vmem:[%s1409 + $0x48] sm:$0xff]
        %v1420 = vld [vmem:[%s1409 + $0x50] sm:$0xff]
        %v1421 = vld [vmem:[%s1409 + $0x58] sm:$0xff]
        %v1422 = vld [vmem:[%s1409 + $0x60] sm:$0xff]
        %v1423 = vld [vmem:[%s1409 + $0x68] sm:$0xff]
        %v1424 = vld [vmem:[%s1409 + $0x70] sm:$0xff]
        %v1425 = vld [vmem:[%s1409 + $0x78] sm:$0xff]
        %v1426 = vld [vmem:[%s1409 + $0x80] sm:$0xff]
        %v1427 = vld [vmem:[%s1409 + $0x88] sm:$0xff]
        %v1428 = vld [vmem:[%s1409 + $0x90] sm:$0xff]
        %v1429 = vld [vmem:[%s1409 + $0x98] sm:$0xff]
        %v1430 = vld [vmem:[%s1409 + $0xa0] sm:$0xff]
        %v1431 = vld [vmem:[%s1409 + $0xa8] sm:$0xff]
        %v1432 = vld [vmem:[%s1409 + $0xb0] sm:$0xff]
        %v1433 = vld [vmem:[%s1409 + $0xb8] sm:$0xff]
        %v1434 = vld [vmem:[%s1409 + $0xc0] sm:$0xff]
        %v1435 = vld [vmem:[%s1409 + $0xc8] sm:$0xff]
        %v1436 = vld [vmem:[%s1409 + $0xd0] sm:$0xff]
        %v1437 = vld [vmem:[%s1409 + $0xd8] sm:$0xff]
        %v1438 = vld [vmem:[%s1409 + $0xe0] sm:$0xff]
        %v1439 = vld [vmem:[%s1409 + $0xe8] sm:$0xff]
        %v1440 = vld [vmem:[%s1409 + $0xf0] sm:$0xff]
        %v1441 = vld [vmem:[%s1409 + $0xf8] sm:$0xff]
        %1442 = vmatprep.subr.mxu0 %v1411
        %1443 = vmatpush1.msra.mxu0 %v1410
        %1444 = vmatprep.subr.mxu0 %v1419
        %1445 = vmatpush1.msra.mxu0 %v1418
        %1446 = vmatprep.subr.mxu0 %v1427
        %1447 = vmatpush1.msra.mxu0 %v1426
        %1448 = vmatprep.subr.mxu0 %v1435
        %1449 = vmatpush1.msra.mxu0 %v1434
        %1450 = vmatprep.subr.mxu0 0.0
        %1451 = vmatpush1.msra.mxu0 0.0
        %1452 = vmatprep.subr.mxu0 0.0
        %1453 = vmatpush1.msra.mxu0 0.0
        %1454 = vmatprep.subr.mxu0 0.0
        %1455 = vmatpush1.msra.mxu0 0.0
        %1456 = vmatprep.subr.mxu0 0.0
        %1457 = vmatpush1.msra.mxu0 0.0
        %1458 = vmatprep.subr.mxu0 0.0
        %1459 = vmatpush1.msra.mxu0 0.0
        %1460 = vmatprep.subr.mxu0 0.0
        %1461 = vmatpush1.msra.mxu0 0.0
        %1462 = vmatprep.subr.mxu0 0.0
        %1463 = vmatpush1.msra.mxu0 0.0
        %1464 = vmatprep.subr.mxu0 0.0
        %1465 = vmatpush1.msra.mxu0 0.0
        %1466 = vmatprep.subr.mxu0 0.0
        %1467 = vmatpush1.msra.mxu0 0.0
        %1468 = vmatprep.subr.mxu0 0.0
        %1469 = vmatpush1.msra.mxu0 0.0
        %1470 = vmatprep.subr.mxu0 0.0
        %1471 = vmatpush1.msra.mxu0 0.0
        %1472 = vmatprep.subr.mxu0 0.0
        %1473 = vmatpush1.msra.mxu0 0.0
        %1474 = vmatprep.subr.mxu0 0.0
        %1475 = vmatpush1.msra.mxu0 0.0
        %1476 = vmatprep.subr.mxu0 0.0
        %1477 = vmatpush1.msra.mxu0 0.0
        %1478 = vmatprep.subr.mxu0 0.0
        %1479 = vmatpush1.msra.mxu0 0.0
        %1480 = vmatprep.subr.mxu0 0.0
        %1481 = vmatpush1.msra.mxu0 0.0
        %1482 = vmatprep.subr.mxu0 0.0
        %1483 = vmatpush1.msra.mxu0 0.0
        %1484 = vmatprep.subr.mxu0 0.0
        %1485 = vmatpush1.msra.mxu0 0.0
        %1486 = vmatprep.subr.mxu0 0.0
        %1487 = vmatpush1.msra.mxu0 0.0
        %1488 = vmatprep.subr.mxu0 0.0
        %1489 = vmatpush1.msra.mxu0 0.0
        %1490 = vmatprep.subr.mxu0 0.0
        %1491 = vmatpush1.msra.mxu0 0.0
        %1492 = vmatprep.subr.mxu0 0.0
        %1493 = vmatpush1.msra.mxu0 0.0
        %1494 = vmatprep.subr.mxu0 0.0
        %1495 = vmatpush1.msra.mxu0 0.0
        %1496 = vmatprep.subr.mxu0 0.0
        %1497 = vmatpush1.msra.mxu0 0.0
        %1498 = vmatprep.subr.mxu0 0.0
        %1499 = vmatpush1.msra.mxu0 0.0
        %1500 = vmatprep.subr.mxu0 0.0
        %1501 = vmatpush1.msra.mxu0 0.0
        %1502 = vmatprep.subr.mxu0 0.0
        %1503 = vmatpush1.msra.mxu0 0.0
        %1504 = vmatprep.subr.mxu0 0.0
        %1505 = vmatpush1.msra.mxu0 0.0
        %1506 = vmatprep.mubr.f32.mxu0 0.0
        %1507 = vmatmul.mubr.f32.gmra.mrb[0].mxu0 %v264
        %v1508 = vpop.f32.mrb[0].mxu0
        %v1509 = vadd.f32 0.0, %v1508
        %v1510 = vpop.f32.mrb[0].mxu0
        %v1511 = vadd.f32 0.0, %v1510
        %1512 = vmatprep.mubr.f32.mxu0 0.0
        %1513 = vmatmul.mubr.f32.gmra.mrb[0].mxu0 %v267
        %v1514 = vpop.f32.mrb[0].mxu0
        %v1515 = vadd.f32 0.0, %v1514
        %v1516 = vpop.f32.mrb[0].mxu0
        %v1517 = vadd.f32 0.0, %v1516
        %1518 = vmatprep.mubr.f32.mxu0 0.0
        %1519 = vmatmul.mubr.f32.gmra.mrb[0].mxu0 %v270
        %v1520 = vpop.f32.mrb[0].mxu0
        %v1521 = vadd.f32 0.0, %v1520
        %v1522 = vpop.f32.mrb[0].mxu0
        %v1523 = vadd.f32 0.0, %v1522
        %1524 = vmatprep.mubr.f32.mxu0 0.0
        %1525 = vmatmul.mubr.f32.gmra.mrb[0].mxu0 %v273
        %v1526 = vpop.f32.mrb[0].mxu0
        %v1527 = vadd.f32 0.0, %v1526
        %v1528 = vpop.f32.mrb[0].mxu0
        %v1529 = vadd.f32 0.0, %v1528
        %1530 = vdwg.mxu0
        %1531 = vmatprep.subr.mxu0 %v1413
        %1532 = vmatpush1.msra.mxu0 %v1412
        %1533 = vmatprep.subr.mxu0 %v1421
        %1534 = vmatpush1.msra.mxu0 %v1420
        %1535 = vmatprep.subr.mxu0 %v1429
        %1536 = vmatpush1.msra.mxu0 %v1428
        %1537 = vmatprep.subr.mxu0 %v1437
        %1538 = vmatpush1.msra.mxu0 %v1436
        %1539 = vmatprep.subr.mxu0 0.0
        %1540 = vmatpush1.msra.mxu0 0.0
        %1541 = vmatprep.subr.mxu0 0.0
        %1542 = vmatpush1.msra.mxu0 0.0
        %1543 = vmatprep.subr.mxu0 0.0
        %1544 = vmatpush1.msra.mxu0 0.0
        %1545 = vmatprep.subr.mxu0 0.0
        %1546 = vmatpush1.msra.mxu0 0.0
        %1547 = vmatprep.subr.mxu0 0.0
        %1548 = vmatpush1.msra.mxu0 0.0
        %1549 = vmatprep.subr.mxu0 0.0
        %1550 = vmatpush1.msra.mxu0 0.0
        %1551 = vmatprep.subr.mxu0 0.0
        %1552 = vmatpush1.msra.mxu0 0.0
        %1553 = vmatprep.subr.mxu0 0.0
        %1554 = vmatpush1.msra.mxu0 0.0
        %1555 = vmatprep.subr.mxu0 0.0
        %1556 = vmatpush1.msra.mxu0 0.0
        %1557 = vmatprep.subr.mxu0 0.0
        %1558 = vmatpush1.msra.mxu0 0.0
        %1559 = vmatprep.subr.mxu0 0.0
        %1560 = vmatpush1.msra.mxu0 0.0
        %1561 = vmatprep.subr.mxu0 0.0
        %1562 = vmatpush1.msra.mxu0 0.0
        %1563 = vmatprep.subr.mxu0 0.0
        %1564 = vmatpush1.msra.mxu0 0.0
        %1565 = vmatprep.subr.mxu0 0.0
        %1566 = vmatpush1.msra.mxu0 0.0
        %1567 = vmatprep.subr.mxu0 0.0
        %1568 = vmatpush1.msra.mxu0 0.0
        %1569 = vmatprep.subr.mxu0 0.0
        %1570 = vmatpush1.msra.mxu0 0.0
        %1571 = vmatprep.subr.mxu0 0.0
        %1572 = vmatpush1.msra.mxu0 0.0
        %1573 = vmatprep.subr.mxu0 0.0
        %1574 = vmatpush1.msra.mxu0 0.0
        %1575 = vmatprep.subr.mxu0 0.0
        %1576 = vmatpush1.msra.mxu0 0.0
        %1577 = vmatprep.subr.mxu0 0.0
        %1578 = vmatpush1.msra.mxu0 0.0
        %1579 = vmatprep.subr.mxu0 0.0
        %1580 = vmatpush1.msra.mxu0 0.0
        %1581 = vmatprep.subr.mxu0 0.0
        %1582 = vmatpush1.msra.mxu0 0.0
        %1583 = vmatprep.subr.mxu0 0.0
        %1584 = vmatpush1.msra.mxu0 0.0
        %1585 = vmatprep.subr.mxu0 0.0
        %1586 = vmatpush1.msra.mxu0 0.0
        %1587 = vmatprep.subr.mxu0 0.0
        %1588 = vmatpush1.msra.mxu0 0.0
        %1589 = vmatprep.subr.mxu0 0.0
        %1590 = vmatpush1.msra.mxu0 0.0
        %1591 = vmatprep.subr.mxu0 0.0
        %1592 = vmatpush1.msra.mxu0 0.0
        %1593 = vmatprep.subr.mxu0 0.0
        %1594 = vmatpush1.msra.mxu0 0.0
        %1595 = vmatprep.mubr.f32.mxu0 0.0
        %1596 = vmatmul.mubr.f32.gmra.mrb[0].mxu0 %v264
        %v1597 = vpop.f32.mrb[0].mxu0
        %v1598 = vadd.f32 0.0, %v1597
        %v1599 = vpop.f32.mrb[0].mxu0
        %v1600 = vadd.f32 0.0, %v1599
        %1601 = vmatprep.mubr.f32.mxu0 0.0
        %1602 = vmatmul.mubr.f32.gmra.mrb[0].mxu0 %v267
        %v1603 = vpop.f32.mrb[0].mxu0
        %v1604 = vadd.f32 0.0, %v1603
        %v1605 = vpop.f32.mrb[0].mxu0
        %v1606 = vadd.f32 0.0, %v1605
        %1607 = vmatprep.mubr.f32.mxu0 0.0
        %1608 = vmatmul.mubr.f32.gmra.mrb[0].mxu0 %v270
        %v1609 = vpop.f32.mrb[0].mxu0
        %v1610 = vadd.f32 0.0, %v1609
        %v1611 = vpop.f32.mrb[0].mxu0
        %v1612 = vadd.f32 0.0, %v1611
        %1613 = vmatprep.mubr.f32.mxu0 0.0
        %1614 = vmatmul.mubr.f32.gmra.mrb[0].mxu0 %v273
        %v1615 = vpop.f32.mrb[0].mxu0
        %v1616 = vadd.f32 0.0, %v1615
        %v1617 = vpop.f32.mrb[0].mxu0
        %v1618 = vadd.f32 0.0, %v1617
        %1619 = vdwg.mxu0
        %1620 = vmatprep.subr.mxu0 %v1415
        %1621 = vmatpush1.msra.mxu0 %v1414
        %1622 = vmatprep.subr.mxu0 %v1423
        %1623 = vmatpush1.msra.mxu0 %v1422
        %1624 = vmatprep.subr.mxu0 %v1431
        %1625 = vmatpush1.msra.mxu0 %v1430
        %1626 = vmatprep.subr.mxu0 %v1439
        %1627 = vmatpush1.msra.mxu0 %v1438
        %1628 = vmatprep.subr.mxu0 0.0
        %1629 = vmatpush1.msra.mxu0 0.0
        %1630 = vmatprep.subr.mxu0 0.0
        %1631 = vmatpush1.msra.mxu0 0.0
        %1632 = vmatprep.subr.mxu0 0.0
        %1633 = vmatpush1.msra.mxu0 0.0
        %1634 = vmatprep.subr.mxu0 0.0
        %1635 = vmatpush1.msra.mxu0 0.0
        %1636 = vmatprep.subr.mxu0 0.0
        %1637 = vmatpush1.msra.mxu0 0.0
        %1638 = vmatprep.subr.mxu0 0.0
        %1639 = vmatpush1.msra.mxu0 0.0
        %1640 = vmatprep.subr.mxu0 0.0
        %1641 = vmatpush1.msra.mxu0 0.0
        %1642 = vmatprep.subr.mxu0 0.0
        %1643 = vmatpush1.msra.mxu0 0.0
        %1644 = vmatprep.subr.mxu0 0.0
        %1645 = vmatpush1.msra.mxu0 0.0
        %1646 = vmatprep.subr.mxu0 0.0
        %1647 = vmatpush1.msra.mxu0 0.0
        %1648 = vmatprep.subr.mxu0 0.0
        %1649 = vmatpush1.msra.mxu0 0.0
        %1650 = vmatprep.subr.mxu0 0.0
        %1651 = vmatpush1.msra.mxu0 0.0
        %1652 = vmatprep.subr.mxu0 0.0
        %1653 = vmatpush1.msra.mxu0 0.0
        %1654 = vmatprep.subr.mxu0 0.0
        %1655 = vmatpush1.msra.mxu0 0.0
        %1656 = vmatprep.subr.mxu0 0.0
        %1657 = vmatpush1.msra.mxu0 0.0
        %1658 = vmatprep.subr.mxu0 0.0
        %1659 = vmatpush1.msra.mxu0 0.0
        %1660 = vmatprep.subr.mxu0 0.0
        %1661 = vmatpush1.msra.mxu0 0.0
        %1662 = vmatprep.subr.mxu0 0.0
        %1663 = vmatpush1.msra.mxu0 0.0
        %1664 = vmatprep.subr.mxu0 0.0
        %1665 = vmatpush1.msra.mxu0 0.0
        %1666 = vmatprep.subr.mxu0 0.0
        %1667 = vmatpush1.msra.mxu0 0.0
        %1668 = vmatprep.subr.mxu0 0.0
        %1669 = vmatpush1.msra.mxu0 0.0
        %1670 = vmatprep.subr.mxu0 0.0
        %1671 = vmatpush1.msra.mxu0 0.0
        %1672 = vmatprep.subr.mxu0 0.0
        %1673 = vmatpush1.msra.mxu0 0.0
        %1674 = vmatprep.subr.mxu0 0.0
        %1675 = vmatpush1.msra.mxu0 0.0
        %1676 = vmatprep.subr.mxu0 0.0
        %1677 = vmatpush1.msra.mxu0 0.0
        %1678 = vmatprep.subr.mxu0 0.0
        %1679 = vmatpush1.msra.mxu0 0.0
        %1680 = vmatprep.subr.mxu0 0.0
        %1681 = vmatpush1.msra.mxu0 0.0
        %1682 = vmatprep.subr.mxu0 0.0
        %1683 = vmatpush1.msra.mxu0 0.0
        %1684 = vmatprep.mubr.f32.mxu0 0.0
        %1685 = vmatmul.mubr.f32.gmra.mrb[0].mxu0 %v264
        %v1686 = vpop.f32.mrb[0].mxu0
        %v1687 = vadd.f32 0.0, %v1686
        %v1688 = vpop.f32.mrb[0].mxu0
        %v1689 = vadd.f32 0.0, %v1688
        %1690 = vmatprep.mubr.f32.mxu0 0.0
        %1691 = vmatmul.mubr.f32.gmra.mrb[0].mxu0 %v267
        %v1692 = vpop.f32.mrb[0].mxu0
        %v1693 = vadd.f32 0.0, %v1692
        %v1694 = vpop.f32.mrb[0].mxu0
        %v1695 = vadd.f32 0.0, %v1694
        %1696 = vmatprep.mubr.f32.mxu0 0.0
        %1697 = vmatmul.mubr.f32.gmra.mrb[0].mxu0 %v270
        %v1698 = vpop.f32.mrb[0].mxu0
        %v1699 = vadd.f32 0.0, %v1698
        %v1700 = vpop.f32.mrb[0].mxu0
        %v1701 = vadd.f32 0.0, %v1700
        %1702 = vmatprep.mubr.f32.mxu0 0.0
        %1703 = vmatmul.mubr.f32.gmra.mrb[0].mxu0 %v273
        %v1704 = vpop.f32.mrb[0].mxu0
        %v1705 = vadd.f32 0.0, %v1704
        %v1706 = vpop.f32.mrb[0].mxu0
        %v1707 = vadd.f32 0.0, %v1706
        %1708 = vdwg.mxu0
        %1709 = vmatprep.subr.mxu0 %v1417
        %1710 = vmatpush1.msra.mxu0 %v1416
        %1711 = vmatprep.subr.mxu0 %v1425
        %1712 = vmatpush1.msra.mxu0 %v1424
        %1713 = vmatprep.subr.mxu0 %v1433
        %1714 = vmatpush1.msra.mxu0 %v1432
        %1715 = vmatprep.subr.mxu0 %v1441
        %1716 = vmatpush1.msra.mxu0 %v1440
        %1717 = vmatprep.subr.mxu0 0.0
        %1718 = vmatpush1.msra.mxu0 0.0
        %1719 = vmatprep.subr.mxu0 0.0
        %1720 = vmatpush1.msra.mxu0 0.0
        %1721 = vmatprep.subr.mxu0 0.0
        %1722 = vmatpush1.msra.mxu0 0.0
        %1723 = vmatprep.subr.mxu0 0.0
        %1724 = vmatpush1.msra.mxu0 0.0
        %1725 = vmatprep.subr.mxu0 0.0
        %1726 = vmatpush1.msra.mxu0 0.0
        %1727 = vmatprep.subr.mxu0 0.0
        %1728 = vmatpush1.msra.mxu0 0.0
        %1729 = vmatprep.subr.mxu0 0.0
        %1730 = vmatpush1.msra.mxu0 0.0
        %1731 = vmatprep.subr.mxu0 0.0
        %1732 = vmatpush1.msra.mxu0 0.0
        %1733 = vmatprep.subr.mxu0 0.0
        %1734 = vmatpush1.msra.mxu0 0.0
        %1735 = vmatprep.subr.mxu0 0.0
        %1736 = vmatpush1.msra.mxu0 0.0
        %1737 = vmatprep.subr.mxu0 0.0
        %1738 = vmatpush1.msra.mxu0 0.0
        %1739 = vmatprep.subr.mxu0 0.0
        %1740 = vmatpush1.msra.mxu0 0.0
        %1741 = vmatprep.subr.mxu0 0.0
        %1742 = vmatpush1.msra.mxu0 0.0
        %1743 = vmatprep.subr.mxu0 0.0
        %1744 = vmatpush1.msra.mxu0 0.0
        %1745 = vmatprep.subr.mxu0 0.0
        %1746 = vmatpush1.msra.mxu0 0.0
        %1747 = vmatprep.subr.mxu0 0.0
        %1748 = vmatpush1.msra.mxu0 0.0
        %1749 = vmatprep.subr.mxu0 0.0
        %1750 = vmatpush1.msra.mxu0 0.0
        %1751 = vmatprep.subr.mxu0 0.0
        %1752 = vmatpush1.msra.mxu0 0.0
        %1753 = vmatprep.subr.mxu0 0.0
        %1754 = vmatpush1.msra.mxu0 0.0
        %1755 = vmatprep.subr.mxu0 0.0
        %1756 = vmatpush1.msra.mxu0 0.0
        %1757 = vmatprep.subr.mxu0 0.0
        %1758 = vmatpush1.msra.mxu0 0.0
        %1759 = vmatprep.subr.mxu0 0.0
        %1760 = vmatpush1.msra.mxu0 0.0
        %1761 = vmatprep.subr.mxu0 0.0
        %1762 = vmatpush1.msra.mxu0 0.0
        %1763 = vmatprep.subr.mxu0 0.0
        %1764 = vmatpush1.msra.mxu0 0.0
        %1765 = vmatprep.subr.mxu0 0.0
        %1766 = vmatpush1.msra.mxu0 0.0
        %1767 = vmatprep.subr.mxu0 0.0
        %1768 = vmatpush1.msra.mxu0 0.0
        %1769 = vmatprep.subr.mxu0 0.0
        %1770 = vmatpush1.msra.mxu0 0.0
        %1771 = vmatprep.subr.mxu0 0.0
        %1772 = vmatpush1.msra.mxu0 0.0
        %1773 = vmatprep.mubr.f32.mxu0 0.0
        %1774 = vmatmul.mubr.f32.gmra.mrb[0].mxu0 %v264
        %v1775 = vpop.f32.mrb[0].mxu0
        %v1776 = vadd.f32 0.0, %v1775
        %v1777 = vpop.f32.mrb[0].mxu0
        %v1778 = vadd.f32 0.0, %v1777
        %1779 = vmatprep.mubr.f32.mxu0 0.0
        %1780 = vmatmul.mubr.f32.gmra.mrb[0].mxu0 %v267
        %v1781 = vpop.f32.mrb[0].mxu0
        %v1782 = vadd.f32 0.0, %v1781
        %v1783 = vpop.f32.mrb[0].mxu0
        %v1784 = vadd.f32 0.0, %v1783
        %1785 = vmatprep.mubr.f32.mxu0 0.0
        %1786 = vmatmul.mubr.f32.gmra.mrb[0].mxu0 %v270
        %v1787 = vpop.f32.mrb[0].mxu0
        %v1788 = vadd.f32 0.0, %v1787
        %v1789 = vpop.f32.mrb[0].mxu0
        %v1790 = vadd.f32 0.0, %v1789
        %1791 = vmatprep.mubr.f32.mxu0 0.0
        %1792 = vmatmul.mubr.f32.gmra.mrb[0].mxu0 %v273
        %v1793 = vpop.f32.mrb[0].mxu0
        %v1794 = vadd.f32 0.0, %v1793
        %v1795 = vpop.f32.mrb[0].mxu0
        %v1796 = vadd.f32 0.0, %v1795
        %1797 = vdwg.mxu0
        %1799 = vset.pattern.permute.xlu0 0
        %1800 = vperm.xlu0 %1799, %v226
        %v1801 = vpop.permute.xlu0 %1800
        %1804 = vset.pattern.permute.xlu0 0
        %1805 = vperm.xlu0 %1804, %v227
        %v1806 = vpop.permute.xlu0 %1805
        %v1808 = vadd.f32 %v342, %v1801
        %v1809 = vadd.f32 %v344, %v1801
        %v1810 = vadd.f32 %v431, %v1801
        %v1811 = vadd.f32 %v433, %v1801
        %v1812 = vadd.f32 %v520, %v1801
        %v1813 = vadd.f32 %v522, %v1801
        %v1814 = vadd.f32 %v609, %v1801
        %v1815 = vadd.f32 %v611, %v1801
        %v1816 = vadd.f32 %v348, %v1806
        %v1817 = vadd.f32 %v350, %v1806
        %v1818 = vadd.f32 %v437, %v1806
        %v1819 = vadd.f32 %v439, %v1806
        %v1820 = vadd.f32 %v526, %v1806
        %v1821 = vadd.f32 %v528, %v1806
        %v1822 = vadd.f32 %v615, %v1806
        %v1823 = vadd.f32 %v617, %v1806
        %1825 = vset.pattern.permute.xlu0 0
        %1826 = vperm.xlu0 %1825, %v222
        %v1827 = vpop.permute.xlu0 %1826
        %1830 = vset.pattern.permute.xlu0 0
        %1831 = vperm.xlu0 %1830, %v223
        %v1832 = vpop.permute.xlu0 %1831
        %v1834 = vmul.f32 %v1827, 0.0
        %v1835 = vmul.f32 %v1832, 0.0
        %v1836 = vadd.f32 %v1808, %v1834
        %v1837 = vadd.f32 %v1809, %v1834
        %v1838 = vadd.f32 %v1810, %v1834
        %v1839 = vadd.f32 %v1811, %v1834
        %v1840 = vadd.f32 %v1812, %v1834
        %v1841 = vadd.f32 %v1813, %v1834
        %v1842 = vadd.f32 %v1814, %v1834
        %v1843 = vadd.f32 %v1815, %v1834
        %v1844 = vadd.f32 %v1816, %v1835
        %v1845 = vadd.f32 %v1817, %v1835
        %v1846 = vadd.f32 %v1818, %v1835
        %v1847 = vadd.f32 %v1819, %v1835
        %v1848 = vadd.f32 %v1820, %v1835
        %v1849 = vadd.f32 %v1821, %v1835
        %v1850 = vadd.f32 %v1822, %v1835
        %v1851 = vadd.f32 %v1823, %v1835
        %1852 = vset.pattern.permute.xlu0 1
        %1853 = vperm.xlu0 %1852, %v222
        %v1854 = vpop.permute.xlu0 %1853
        %1856 = vset.pattern.permute.xlu0 1
        %1857 = vperm.xlu0 %1856, %v223
        %v1858 = vpop.permute.xlu0 %1857
        %v1860 = vmul.f32 %v1854, 0.0
        %v1861 = vmul.f32 %v1858, 0.0
        %v1862 = vadd.f32 %v1836, %v1860
        %v1863 = vadd.f32 %v1837, %v1860
        %v1864 = vadd.f32 %v1838, %v1860
        %v1865 = vadd.f32 %v1839, %v1860
        %v1866 = vadd.f32 %v1840, %v1860
        %v1867 = vadd.f32 %v1841, %v1860
        %v1868 = vadd.f32 %v1842, %v1860
        %v1869 = vadd.f32 %v1843, %v1860
        %v1870 = vadd.f32 %v1844, %v1861
        %v1871 = vadd.f32 %v1845, %v1861
        %v1872 = vadd.f32 %v1846, %v1861
        %v1873 = vadd.f32 %v1847, %v1861
        %v1874 = vadd.f32 %v1848, %v1861
        %v1875 = vadd.f32 %v1849, %v1861
        %v1876 = vadd.f32 %v1850, %v1861
        %v1877 = vadd.f32 %v1851, %v1861
        %1878 = vset.pattern.permute.xlu0 2
        %1879 = vperm.xlu0 %1878, %v222
        %v1880 = vpop.permute.xlu0 %1879
        %1882 = vset.pattern.permute.xlu0 2
        %1883 = vperm.xlu0 %1882, %v223
        %v1884 = vpop.permute.xlu0 %1883
        %v1886 = vmul.f32 %v1880, 0.0
        %v1887 = vmul.f32 %v1884, 0.0
        %v1888 = vadd.f32 %v1862, %v1886
        %v1889 = vadd.f32 %v1863, %v1886
        %v1890 = vadd.f32 %v1864, %v1886
        %v1891 = vadd.f32 %v1865, %v1886
        %v1892 = vadd.f32 %v1866, %v1886
        %v1893 = vadd.f32 %v1867, %v1886
        %v1894 = vadd.f32 %v1868, %v1886
        %v1895 = vadd.f32 %v1869, %v1886
        %v1896 = vadd.f32 %v1870, %v1887
        %v1897 = vadd.f32 %v1871, %v1887
        %v1898 = vadd.f32 %v1872, %v1887
        %v1899 = vadd.f32 %v1873, %v1887
        %v1900 = vadd.f32 %v1874, %v1887
        %v1901 = vadd.f32 %v1875, %v1887
        %v1902 = vadd.f32 %v1876, %v1887
        %v1903 = vadd.f32 %v1877, %v1887
        %1904 = vset.pattern.permute.xlu0 3
        %1905 = vperm.xlu0 %1904, %v222
        %v1906 = vpop.permute.xlu0 %1905
        %1908 = vset.pattern.permute.xlu0 3
        %1909 = vperm.xlu0 %1908, %v223
        %v1910 = vpop.permute.xlu0 %1909
        %v1912 = vmul.f32 %v1906, 0.0
        %v1913 = vmul.f32 %v1910, 0.0
        %v1914 = vadd.f32 %v1888, %v1912
        %v1915 = vadd.f32 %v1889, %v1912
        %v1916 = vadd.f32 %v1890, %v1912
        %v1917 = vadd.f32 %v1891, %v1912
        %v1918 = vadd.f32 %v1892, %v1912
        %v1919 = vadd.f32 %v1893, %v1912
        %v1920 = vadd.f32 %v1894, %v1912
        %v1921 = vadd.f32 %v1895, %v1912
        %v1922 = vadd.f32 %v1896, %v1913
        %v1923 = vadd.f32 %v1897, %v1913
        %v1924 = vadd.f32 %v1898, %v1913
        %v1925 = vadd.f32 %v1899, %v1913
        %v1926 = vadd.f32 %v1900, %v1913
        %v1927 = vadd.f32 %v1901, %v1913
        %v1928 = vadd.f32 %v1902, %v1913
        %v1929 = vadd.f32 %v1903, %v1913
        %v1930 = vxor.u32 %v1914, 2147483648
        %v1931 = vxor.u32 %v1915, 2147483648
        %v1932 = vxor.u32 %v1916, 2147483648
        %v1933 = vxor.u32 %v1917, 2147483648
        %v1934 = vxor.u32 %v1918, 2147483648
        %v1935 = vxor.u32 %v1919, 2147483648
        %v1936 = vxor.u32 %v1920, 2147483648
        %v1937 = vxor.u32 %v1921, 2147483648
        %v1938 = vmul.f32 %v1930, 1.442695
        %v1939 = vpow.pop %v1938
        %v1940 = vmul.f32 %v1931, 1.442695
        %v1941 = vpow.pop %v1940
        %v1942 = vmul.f32 %v1932, 1.442695
        %v1943 = vpow.pop %v1942
        %v1944 = vmul.f32 %v1933, 1.442695
        %v1945 = vpow.pop %v1944
        %v1946 = vmul.f32 %v1934, 1.442695
        %v1947 = vpow.pop %v1946
        %v1948 = vmul.f32 %v1935, 1.442695
        %v1949 = vpow.pop %v1948
        %v1950 = vmul.f32 %v1936, 1.442695
        %v1951 = vpow.pop %v1950
        %v1952 = vmul.f32 %v1937, 1.442695
        %v1953 = vpow.pop %v1952
        %v1954 = vadd.f32 %v1939, 1.0
        %v1955 = vadd.f32 %v1941, 1.0
        %v1956 = vadd.f32 %v1943, 1.0
        %v1957 = vadd.f32 %v1945, 1.0
        %v1958 = vadd.f32 %v1947, 1.0
        %v1959 = vadd.f32 %v1949, 1.0
        %v1960 = vadd.f32 %v1951, 1.0
        %v1961 = vadd.f32 %v1953, 1.0
        %v1962 = vrcp.pop %v1954
        %v1963 = vmul.f32 1.0, %v1962
        %v1964 = vrcp.pop %v1955
        %v1965 = vmul.f32 1.0, %v1964
        %v1966 = vrcp.pop %v1956
        %v1967 = vmul.f32 1.0, %v1966
        %v1968 = vrcp.pop %v1957
        %v1969 = vmul.f32 1.0, %v1968
        %v1970 = vrcp.pop %v1958
        %v1971 = vmul.f32 1.0, %v1970
        %v1972 = vrcp.pop %v1959
        %v1973 = vmul.f32 1.0, %v1972
        %v1974 = vrcp.pop %v1960
        %v1975 = vmul.f32 1.0, %v1974
        %v1976 = vrcp.pop %v1961
        %v1977 = vmul.f32 1.0, %v1976
        %v1978 = vtanh.pop %v1922
        %v1979 = vtanh.pop %v1923
        %v1980 = vtanh.pop %v1924
        %v1981 = vtanh.pop %v1925
        %v1982 = vtanh.pop %v1926
        %v1983 = vtanh.pop %v1927
        %v1984 = vtanh.pop %v1928
        %v1985 = vtanh.pop %v1929
        %v1986 = vxor.u32 %v1922, 2147483648
        %v1987 = vxor.u32 %v1923, 2147483648
        %v1988 = vxor.u32 %v1924, 2147483648
        %v1989 = vxor.u32 %v1925, 2147483648
        %v1990 = vxor.u32 %v1926, 2147483648
        %v1991 = vxor.u32 %v1927, 2147483648
        %v1992 = vxor.u32 %v1928, 2147483648
        %v1993 = vxor.u32 %v1929, 2147483648
        %v1994 = vmul.f32 %v1986, 1.442695
        %v1995 = vpow.pop %v1994
        %v1996 = vmul.f32 %v1987, 1.442695
        %v1997 = vpow.pop %v1996
        %v1998 = vmul.f32 %v1988, 1.442695
        %v1999 = vpow.pop %v1998
        %v2000 = vmul.f32 %v1989, 1.442695
        %v2001 = vpow.pop %v2000
        %v2002 = vmul.f32 %v1990, 1.442695
        %v2003 = vpow.pop %v2002
        %v2004 = vmul.f32 %v1991, 1.442695
        %v2005 = vpow.pop %v2004
        %v2006 = vmul.f32 %v1992, 1.442695
        %v2007 = vpow.pop %v2006
        %v2008 = vmul.f32 %v1993, 1.442695
        %v2009 = vpow.pop %v2008
        %v2010 = vadd.f32 %v1995, 1.0
        %v2011 = vadd.f32 %v1997, 1.0
        %v2012 = vadd.f32 %v1999, 1.0
        %v2013 = vadd.f32 %v2001, 1.0
        %v2014 = vadd.f32 %v2003, 1.0
        %v2015 = vadd.f32 %v2005, 1.0
        %v2016 = vadd.f32 %v2007, 1.0
        %v2017 = vadd.f32 %v2009, 1.0
        %v2018 = vrcp.pop %v2010
        %v2019 = vmul.f32 1.0, %v2018
        %v2020 = vrcp.pop %v2011
        %v2021 = vmul.f32 1.0, %v2020
        %v2022 = vrcp.pop %v2012
        %v2023 = vmul.f32 1.0, %v2022
        %v2024 = vrcp.pop %v2013
        %v2025 = vmul.f32 1.0, %v2024
        %v2026 = vrcp.pop %v2014
        %v2027 = vmul.f32 1.0, %v2026
        %v2028 = vrcp.pop %v2015
        %v2029 = vmul.f32 1.0, %v2028
        %v2030 = vrcp.pop %v2016
        %v2031 = vmul.f32 1.0, %v2030
        %v2032 = vrcp.pop %v2017
        %v2033 = vmul.f32 1.0, %v2032
        %v2034 = vmul.f32 %v1963, 0.0
        %v2035 = vmul.f32 %v1965, 0.0
        %v2036 = vmul.f32 %v1967, 0.0
        %v2037 = vmul.f32 %v1969, 0.0
        %v2038 = vmul.f32 %v1971, 0.0
        %v2039 = vmul.f32 %v1973, 0.0
        %v2040 = vmul.f32 %v1975, 0.0
        %v2041 = vmul.f32 %v1977, 0.0
        %v2042 = vmul.f32 %v1963, %v1978
        %v2043 = vmul.f32 %v1965, %v1979
        %v2044 = vmul.f32 %v1967, %v1980
        %v2045 = vmul.f32 %v1969, %v1981
        %v2046 = vmul.f32 %v1971, %v1982
        %v2047 = vmul.f32 %v1973, %v1983
        %v2048 = vmul.f32 %v1975, %v1984
        %v2049 = vmul.f32 %v1977, %v1985
        %v2058 = vrot.slane %v2042, 4
        %v2059 = vrot.slane %v2043, 4
        %v2060 = vrot.slane %v2044, 4
        %v2061 = vrot.slane %v2045, 4
        %v2062 = vrot.slane %v2046, 4
        %v2063 = vrot.slane %v2047, 4
        %v2064 = vrot.slane %v2048, 4
        %v2065 = vrot.slane %v2049, 4
        %v2074 = vadd.f32 %v2034, %v2058
        %v2075 = vadd.f32 %v2035, %v2059
        %v2076 = vadd.f32 %v2036, %v2060
        %v2077 = vadd.f32 %v2037, %v2061
        %v2078 = vadd.f32 %v2038, %v2062
        %v2079 = vadd.f32 %v2039, %v2063
        %v2080 = vadd.f32 %v2040, %v2064
        %v2081 = vadd.f32 %v2041, %v2065
        %v2082 = vtanh.pop %v2074
        %v2083 = vtanh.pop %v2075
        %v2084 = vtanh.pop %v2076
        %v2085 = vtanh.pop %v2077
        %v2086 = vtanh.pop %v2078
        %v2087 = vtanh.pop %v2079
        %v2088 = vtanh.pop %v2080
        %v2089 = vtanh.pop %v2081
        %v2090 = vmul.f32 %v2019, %v2082
        %v2091 = vmul.f32 %v2021, %v2083
        %v2092 = vmul.f32 %v2023, %v2084
        %v2093 = vmul.f32 %v2025, %v2085
        %v2094 = vmul.f32 %v2027, %v2086
        %v2095 = vmul.f32 %v2029, %v2087
        %v2096 = vmul.f32 %v2031, %v2088
        %v2097 = vmul.f32 %v2033, %v2089
        %v2106 = vrot.slane %v2090, 4
        %v2107 = vrot.slane %v2091, 4
        %v2108 = vrot.slane %v2092, 4
        %v2109 = vrot.slane %v2093, 4
        %v2110 = vrot.slane %v2094, 4
        %v2111 = vrot.slane %v2095, 4
        %v2112 = vrot.slane %v2096, 4
        %v2113 = vrot.slane %v2097, 4
        %vm2122 = vcmask 1043456
        %v2123 = vsel %vm2122, %v2106, 0.0
        %v2124 = vrot.slane %v2123, 4
        %v2125 = vadd.f32 %v2123, %v2124
        %v2126 = vrot.slane %v2125, 2
        %v2127 = vadd.f32 %v2125, %v2126
        %v2128 = vrot.slane %v2127, 1
        %v2129 = vadd.f32 %v2127, %v2128
        %v2130 = vsel %vm2122, %v2107, 0.0
        %v2131 = vrot.slane %v2130, 4
        %v2132 = vadd.f32 %v2130, %v2131
        %v2133 = vrot.slane %v2132, 2
        %v2134 = vadd.f32 %v2132, %v2133
        %v2135 = vrot.slane %v2134, 1
        %v2136 = vadd.f32 %v2134, %v2135
        %v2137 = vsel %vm2122, %v2108, 0.0
        %v2138 = vrot.slane %v2137, 4
        %v2139 = vadd.f32 %v2137, %v2138
        %v2140 = vrot.slane %v2139, 2
        %v2141 = vadd.f32 %v2139, %v2140
        %v2142 = vrot.slane %v2141, 1
        %v2143 = vadd.f32 %v2141, %v2142
        %v2144 = vsel %vm2122, %v2109, 0.0
        %v2145 = vrot.slane %v2144, 4
        %v2146 = vadd.f32 %v2144, %v2145
        %v2147 = vrot.slane %v2146, 2
        %v2148 = vadd.f32 %v2146, %v2147
        %v2149 = vrot.slane %v2148, 1
        %v2150 = vadd.f32 %v2148, %v2149
        %v2151 = vsel %vm2122, %v2110, 0.0
        %v2152 = vrot.slane %v2151, 4
        %v2153 = vadd.f32 %v2151, %v2152
        %v2154 = vrot.slane %v2153, 2
        %v2155 = vadd.f32 %v2153, %v2154
        %v2156 = vrot.slane %v2155, 1
        %v2157 = vadd.f32 %v2155, %v2156
        %v2158 = vsel %vm2122, %v2111, 0.0
        %v2159 = vrot.slane %v2158, 4
        %v2160 = vadd.f32 %v2158, %v2159
        %v2161 = vrot.slane %v2160, 2
        %v2162 = vadd.f32 %v2160, %v2161
        %v2163 = vrot.slane %v2162, 1
        %v2164 = vadd.f32 %v2162, %v2163
        %v2165 = vsel %vm2122, %v2112, 0.0
        %v2166 = vrot.slane %v2165, 4
        %v2167 = vadd.f32 %v2165, %v2166
        %v2168 = vrot.slane %v2167, 2
        %v2169 = vadd.f32 %v2167, %v2168
        %v2170 = vrot.slane %v2169, 1
        %v2171 = vadd.f32 %v2169, %v2170
        %v2172 = vsel %vm2122, %v2113, 0.0
        %v2173 = vrot.slane %v2172, 4
        %v2174 = vadd.f32 %v2172, %v2173
        %v2175 = vrot.slane %v2174, 2
        %v2176 = vadd.f32 %v2174, %v2175
        %v2177 = vrot.slane %v2176, 1
        %v2178 = vadd.f32 %v2176, %v2177
        %v2179 = vadd.f32 %v731, %v1801
        %v2180 = vadd.f32 %v733, %v1801
        %v2181 = vadd.f32 %v820, %v1801
        %v2182 = vadd.f32 %v822, %v1801
        %v2183 = vadd.f32 %v909, %v1801
        %v2184 = vadd.f32 %v911, %v1801
        %v2185 = vadd.f32 %v998, %v1801
        %v2186 = vadd.f32 %v1000, %v1801
        %v2187 = vadd.f32 %v737, %v1806
        %v2188 = vadd.f32 %v739, %v1806
        %v2189 = vadd.f32 %v826, %v1806
        %v2190 = vadd.f32 %v828, %v1806
        %v2191 = vadd.f32 %v915, %v1806
        %v2192 = vadd.f32 %v917, %v1806
        %v2193 = vadd.f32 %v1004, %v1806
        %v2194 = vadd.f32 %v1006, %v1806
        %v2195 = vlaneseq
        %v2196 = vshrl.u32 %v2195, 7
        %v2197 = vsub.s32 4, %v2196
        %v2198 = vrot.slane %v2090, %v2197
        %v2199 = vlaneseq
        %v2200 = vshrl.u32 %v2199, 7
        %v2201 = vsub.s32 4, %v2200
        %v2202 = vrot.slane %v2091, %v2201
        %v2203 = vlaneseq
        %v2204 = vshrl.u32 %v2203, 7
        %v2205 = vsub.s32 4, %v2204
        %v2206 = vrot.slane %v2092, %v2205
        %v2207 = vlaneseq
        %v2208 = vshrl.u32 %v2207, 7
        %v2209 = vsub.s32 4, %v2208
        %v2210 = vrot.slane %v2093, %v2209
        %v2211 = vlaneseq
        %v2212 = vshrl.u32 %v2211, 7
        %v2213 = vsub.s32 4, %v2212
        %v2214 = vrot.slane %v2094, %v2213
        %v2215 = vlaneseq
        %v2216 = vshrl.u32 %v2215, 7
        %v2217 = vsub.s32 4, %v2216
        %v2218 = vrot.slane %v2095, %v2217
        %v2219 = vlaneseq
        %v2220 = vshrl.u32 %v2219, 7
        %v2221 = vsub.s32 4, %v2220
        %v2222 = vrot.slane %v2096, %v2221
        %v2223 = vlaneseq
        %v2224 = vshrl.u32 %v2223, 7
        %v2225 = vsub.s32 4, %v2224
        %v2226 = vrot.slane %v2097, %v2225
        %v2227 = vmul.f32 %v1827, %v2198
        %v2228 = vmul.f32 %v1827, %v2202
        %v2229 = vmul.f32 %v1827, %v2206
        %v2230 = vmul.f32 %v1827, %v2210
        %v2231 = vmul.f32 %v1827, %v2214
        %v2232 = vmul.f32 %v1827, %v2218
        %v2233 = vmul.f32 %v1827, %v2222
        %v2234 = vmul.f32 %v1827, %v2226
        %v2235 = vmul.f32 %v1832, %v2198
        %v2236 = vmul.f32 %v1832, %v2202
        %v2237 = vmul.f32 %v1832, %v2206
        %v2238 = vmul.f32 %v1832, %v2210
        %v2239 = vmul.f32 %v1832, %v2214
        %v2240 = vmul.f32 %v1832, %v2218
        %v2241 = vmul.f32 %v1832, %v2222
        %v2242 = vmul.f32 %v1832, %v2226
        %v2243 = vadd.f32 %v2179, %v2227
        %v2244 = vadd.f32 %v2180, %v2228
        %v2245 = vadd.f32 %v2181, %v2229
        %v2246 = vadd.f32 %v2182, %v2230
        %v2247 = vadd.f32 %v2183, %v2231
        %v2248 = vadd.f32 %v2184, %v2232
        %v2249 = vadd.f32 %v2185, %v2233
        %v2250 = vadd.f32 %v2186, %v2234
        %v2251 = vadd.f32 %v2187, %v2235
        %v2252 = vadd.f32 %v2188, %v2236
        %v2253 = vadd.f32 %v2189, %v2237
        %v2254 = vadd.f32 %v2190, %v2238
        %v2255 = vadd.f32 %v2191, %v2239
        %v2256 = vadd.f32 %v2192, %v2240
        %v2257 = vadd.f32 %v2193, %v2241
        %v2258 = vadd.f32 %v2194, %v2242
        %v2259 = vlaneseq
        %v2260 = vshrl.u32 %v2259, 7
        %v2261 = vsub.s32 5, %v2260
        %v2262 = vrot.slane %v2090, %v2261
        %v2263 = vlaneseq
        %v2264 = vshrl.u32 %v2263, 7
        %v2265 = vsub.s32 5, %v2264
        %v2266 = vrot.slane %v2091, %v2265
        %v2267 = vlaneseq
        %v2268 = vshrl.u32 %v2267, 7
        %v2269 = vsub.s32 5, %v2268
        %v2270 = vrot.slane %v2092, %v2269
        %v2271 = vlaneseq
        %v2272 = vshrl.u32 %v2271, 7
        %v2273 = vsub.s32 5, %v2272
        %v2274 = vrot.slane %v2093, %v2273
        %v2275 = vlaneseq
        %v2276 = vshrl.u32 %v2275, 7
        %v2277 = vsub.s32 5, %v2276
        %v2278 = vrot.slane %v2094, %v2277
        %v2279 = vlaneseq
        %v2280 = vshrl.u32 %v2279, 7
        %v2281 = vsub.s32 5, %v2280
        %v2282 = vrot.slane %v2095, %v2281
        %v2283 = vlaneseq
        %v2284 = vshrl.u32 %v2283, 7
        %v2285 = vsub.s32 5, %v2284
        %v2286 = vrot.slane %v2096, %v2285
        %v2287 = vlaneseq
        %v2288 = vshrl.u32 %v2287, 7
        %v2289 = vsub.s32 5, %v2288
        %v2290 = vrot.slane %v2097, %v2289
        %v2291 = vmul.f32 %v1854, %v2262
        %v2292 = vmul.f32 %v1854, %v2266
        %v2293 = vmul.f32 %v1854, %v2270
        %v2294 = vmul.f32 %v1854, %v2274
        %v2295 = vmul.f32 %v1854, %v2278
        %v2296 = vmul.f32 %v1854, %v2282
        %v2297 = vmul.f32 %v1854, %v2286
        %v2298 = vmul.f32 %v1854, %v2290
        %v2299 = vmul.f32 %v1858, %v2262
        %v2300 = vmul.f32 %v1858, %v2266
        %v2301 = vmul.f32 %v1858, %v2270
        %v2302 = vmul.f32 %v1858, %v2274
        %v2303 = vmul.f32 %v1858, %v2278
        %v2304 = vmul.f32 %v1858, %v2282
        %v2305 = vmul.f32 %v1858, %v2286
        %v2306 = vmul.f32 %v1858, %v2290
        %v2307 = vadd.f32 %v2243, %v2291
        %v2308 = vadd.f32 %v2244, %v2292
        %v2309 = vadd.f32 %v2245, %v2293
        %v2310 = vadd.f32 %v2246, %v2294
        %v2311 = vadd.f32 %v2247, %v2295
        %v2312 = vadd.f32 %v2248, %v2296
        %v2313 = vadd.f32 %v2249, %v2297
        %v2314 = vadd.f32 %v2250, %v2298
        %v2315 = vadd.f32 %v2251, %v2299
        %v2316 = vadd.f32 %v2252, %v2300
        %v2317 = vadd.f32 %v2253, %v2301
        %v2318 = vadd.f32 %v2254, %v2302
        %v2319 = vadd.f32 %v2255, %v2303
        %v2320 = vadd.f32 %v2256, %v2304
        %v2321 = vadd.f32 %v2257, %v2305
        %v2322 = vadd.f32 %v2258, %v2306
        %v2323 = vlaneseq
        %v2324 = vshrl.u32 %v2323, 7
        %v2325 = vsub.s32 6, %v2324
        %v2326 = vrot.slane %v2090, %v2325
        %v2327 = vlaneseq
        %v2328 = vshrl.u32 %v2327, 7
        %v2329 = vsub.s32 6, %v2328
        %v2330 = vrot.slane %v2091, %v2329
        %v2331 = vlaneseq
        %v2332 = vshrl.u32 %v2331, 7
        %v2333 = vsub.s32 6, %v2332
        %v2334 = vrot.slane %v2092, %v2333
        %v2335 = vlaneseq
        %v2336 = vshrl.u32 %v2335, 7
        %v2337 = vsub.s32 6, %v2336
        %v2338 = vrot.slane %v2093, %v2337
        %v2339 = vlaneseq
        %v2340 = vshrl.u32 %v2339, 7
        %v2341 = vsub.s32 6, %v2340
        %v2342 = vrot.slane %v2094, %v2341
        %v2343 = vlaneseq
        %v2344 = vshrl.u32 %v2343, 7
        %v2345 = vsub.s32 6, %v2344
        %v2346 = vrot.slane %v2095, %v2345
        %v2347 = vlaneseq
        %v2348 = vshrl.u32 %v2347, 7
        %v2349 = vsub.s32 6, %v2348
        %v2350 = vrot.slane %v2096, %v2349
        %v2351 = vlaneseq
        %v2352 = vshrl.u32 %v2351, 7
        %v2353 = vsub.s32 6, %v2352
        %v2354 = vrot.slane %v2097, %v2353
        %v2355 = vmul.f32 %v1880, %v2326
        %v2356 = vmul.f32 %v1880, %v2330
        %v2357 = vmul.f32 %v1880, %v2334
        %v2358 = vmul.f32 %v1880, %v2338
        %v2359 = vmul.f32 %v1880, %v2342
        %v2360 = vmul.f32 %v1880, %v2346
        %v2361 = vmul.f32 %v1880, %v2350
        %v2362 = vmul.f32 %v1880, %v2354
        %v2363 = vmul.f32 %v1884, %v2326
        %v2364 = vmul.f32 %v1884, %v2330
        %v2365 = vmul.f32 %v1884, %v2334
        %v2366 = vmul.f32 %v1884, %v2338
        %v2367 = vmul.f32 %v1884, %v2342
        %v2368 = vmul.f32 %v1884, %v2346
        %v2369 = vmul.f32 %v1884, %v2350
        %v2370 = vmul.f32 %v1884, %v2354
        %v2371 = vadd.f32 %v2307, %v2355
        %v2372 = vadd.f32 %v2308, %v2356
        %v2373 = vadd.f32 %v2309, %v2357
        %v2374 = vadd.f32 %v2310, %v2358
        %v2375 = vadd.f32 %v2311, %v2359
        %v2376 = vadd.f32 %v2312, %v2360
        %v2377 = vadd.f32 %v2313, %v2361
        %v2378 = vadd.f32 %v2314, %v2362
        %v2379 = vadd.f32 %v2315, %v2363
        %v2380 = vadd.f32 %v2316, %v2364
        %v2381 = vadd.f32 %v2317, %v2365
        %v2382 = vadd.f32 %v2318, %v2366
        %v2383 = vadd.f32 %v2319, %v2367
        %v2384 = vadd.f32 %v2320, %v2368
        %v2385 = vadd.f32 %v2321, %v2369
        %v2386 = vadd.f32 %v2322, %v2370
        %v2387 = vlaneseq
        %v2388 = vshrl.u32 %v2387, 7
        %v2389 = vsub.s32 7, %v2388
        %v2390 = vrot.slane %v2090, %v2389
        %v2391 = vlaneseq
        %v2392 = vshrl.u32 %v2391, 7
        %v2393 = vsub.s32 7, %v2392
        %v2394 = vrot.slane %v2091, %v2393
        %v2395 = vlaneseq
        %v2396 = vshrl.u32 %v2395, 7
        %v2397 = vsub.s32 7, %v2396
        %v2398 = vrot.slane %v2092, %v2397
        %v2399 = vlaneseq
        %v2400 = vshrl.u32 %v2399, 7
        %v2401 = vsub.s32 7, %v2400
        %v2402 = vrot.slane %v2093, %v2401
        %v2403 = vlaneseq
        %v2404 = vshrl.u32 %v2403, 7
        %v2405 = vsub.s32 7, %v2404
        %v2406 = vrot.slane %v2094, %v2405
        %v2407 = vlaneseq
        %v2408 = vshrl.u32 %v2407, 7
        %v2409 = vsub.s32 7, %v2408
        %v2410 = vrot.slane %v2095, %v2409
        %v2411 = vlaneseq
        %v2412 = vshrl.u32 %v2411, 7
        %v2413 = vsub.s32 7, %v2412
        %v2414 = vrot.slane %v2096, %v2413
        %v2415 = vlaneseq
        %v2416 = vshrl.u32 %v2415, 7
        %v2417 = vsub.s32 7, %v2416
        %v2418 = vrot.slane %v2097, %v2417
        %v2419 = vmul.f32 %v1906, %v2390
        %v2420 = vmul.f32 %v1906, %v2394
        %v2421 = vmul.f32 %v1906, %v2398
        %v2422 = vmul.f32 %v1906, %v2402
        %v2423 = vmul.f32 %v1906, %v2406
        %v2424 = vmul.f32 %v1906, %v2410
        %v2425 = vmul.f32 %v1906, %v2414
        %v2426 = vmul.f32 %v1906, %v2418
        %v2427 = vmul.f32 %v1910, %v2390
        %v2428 = vmul.f32 %v1910, %v2394
        %v2429 = vmul.f32 %v1910, %v2398
        %v2430 = vmul.f32 %v1910, %v2402
        %v2431 = vmul.f32 %v1910, %v2406
        %v2432 = vmul.f32 %v1910, %v2410
        %v2433 = vmul.f32 %v1910, %v2414
        %v2434 = vmul.f32 %v1910, %v2418
        %v2435 = vadd.f32 %v2371, %v2419
        %v2436 = vadd.f32 %v2372, %v2420
        %v2437 = vadd.f32 %v2373, %v2421
        %v2438 = vadd.f32 %v2374, %v2422
        %v2439 = vadd.f32 %v2375, %v2423
        %v2440 = vadd.f32 %v2376, %v2424
        %v2441 = vadd.f32 %v2377, %v2425
        %v2442 = vadd.f32 %v2378, %v2426
        %v2443 = vadd.f32 %v2379, %v2427
        %v2444 = vadd.f32 %v2380, %v2428
        %v2445 = vadd.f32 %v2381, %v2429
        %v2446 = vadd.f32 %v2382, %v2430
        %v2447 = vadd.f32 %v2383, %v2431
        %v2448 = vadd.f32 %v2384, %v2432
        %v2449 = vadd.f32 %v2385, %v2433
        %v2450 = vadd.f32 %v2386, %v2434
        %v2451 = vxor.u32 %v2435, 2147483648
        %v2452 = vxor.u32 %v2436, 2147483648
        %v2453 = vxor.u32 %v2437, 2147483648
        %v2454 = vxor.u32 %v2438, 2147483648
        %v2455 = vxor.u32 %v2439, 2147483648
        %v2456 = vxor.u32 %v2440, 2147483648
        %v2457 = vxor.u32 %v2441, 2147483648
        %v2458 = vxor.u32 %v2442, 2147483648
        %v2459 = vmul.f32 %v2451, 1.442695
        %v2460 = vpow.pop %v2459
        %v2461 = vmul.f32 %v2452, 1.442695
        %v2462 = vpow.pop %v2461
        %v2463 = vmul.f32 %v2453, 1.442695
        %v2464 = vpow.pop %v2463
        %v2465 = vmul.f32 %v2454, 1.442695
        %v2466 = vpow.pop %v2465
        %v2467 = vmul.f32 %v2455, 1.442695
        %v2468 = vpow.pop %v2467
        %v2469 = vmul.f32 %v2456, 1.442695
        %v2470 = vpow.pop %v2469
        %v2471 = vmul.f32 %v2457, 1.442695
        %v2472 = vpow.pop %v2471
        %v2473 = vmul.f32 %v2458, 1.442695
        %v2474 = vpow.pop %v2473
        %v2475 = vadd.f32 %v2460, 1.0
        %v2476 = vadd.f32 %v2462, 1.0
        %v2477 = vadd.f32 %v2464, 1.0
        %v2478 = vadd.f32 %v2466, 1.0
        %v2479 = vadd.f32 %v2468, 1.0
        %v2480 = vadd.f32 %v2470, 1.0
        %v2481 = vadd.f32 %v2472, 1.0
        %v2482 = vadd.f32 %v2474, 1.0
        %v2483 = vrcp.pop %v2475
        %v2484 = vmul.f32 1.0, %v2483
        %v2485 = vrcp.pop %v2476
        %v2486 = vmul.f32 1.0, %v2485
        %v2487 = vrcp.pop %v2477
        %v2488 = vmul.f32 1.0, %v2487
        %v2489 = vrcp.pop %v2478
        %v2490 = vmul.f32 1.0, %v2489
        %v2491 = vrcp.pop %v2479
        %v2492 = vmul.f32 1.0, %v2491
        %v2493 = vrcp.pop %v2480
        %v2494 = vmul.f32 1.0, %v2493
        %v2495 = vrcp.pop %v2481
        %v2496 = vmul.f32 1.0, %v2495
        %v2497 = vrcp.pop %v2482
        %v2498 = vmul.f32 1.0, %v2497
        %v2499 = vtanh.pop %v2443
        %v2500 = vtanh.pop %v2444
        %v2501 = vtanh.pop %v2445
        %v2502 = vtanh.pop %v2446
        %v2503 = vtanh.pop %v2447
        %v2504 = vtanh.pop %v2448
        %v2505 = vtanh.pop %v2449
        %v2506 = vtanh.pop %v2450
        %v2507 = vxor.u32 %v2443, 2147483648
        %v2508 = vxor.u32 %v2444, 2147483648
        %v2509 = vxor.u32 %v2445, 2147483648
        %v2510 = vxor.u32 %v2446, 2147483648
        %v2511 = vxor.u32 %v2447, 2147483648
        %v2512 = vxor.u32 %v2448, 2147483648
        %v2513 = vxor.u32 %v2449, 2147483648
        %v2514 = vxor.u32 %v2450, 2147483648
        %v2515 = vmul.f32 %v2507, 1.442695
        %v2516 = vpow.pop %v2515
        %v2517 = vmul.f32 %v2508, 1.442695
        %v2518 = vpow.pop %v2517
        %v2519 = vmul.f32 %v2509, 1.442695
        %v2520 = vpow.pop %v2519
        %v2521 = vmul.f32 %v2510, 1.442695
        %v2522 = vpow.pop %v2521
        %v2523 = vmul.f32 %v2511, 1.442695
        %v2524 = vpow.pop %v2523
        %v2525 = vmul.f32 %v2512, 1.442695
        %v2526 = vpow.pop %v2525
        %v2527 = vmul.f32 %v2513, 1.442695
        %v2528 = vpow.pop %v2527
        %v2529 = vmul.f32 %v2514, 1.442695
        %v2530 = vpow.pop %v2529
        %v2531 = vadd.f32 %v2516, 1.0
        %v2532 = vadd.f32 %v2518, 1.0
        %v2533 = vadd.f32 %v2520, 1.0
        %v2534 = vadd.f32 %v2522, 1.0
        %v2535 = vadd.f32 %v2524, 1.0
        %v2536 = vadd.f32 %v2526, 1.0
        %v2537 = vadd.f32 %v2528, 1.0
        %v2538 = vadd.f32 %v2530, 1.0
        %v2539 = vrcp.pop %v2531
        %v2540 = vmul.f32 1.0, %v2539
        %v2541 = vrcp.pop %v2532
        %v2542 = vmul.f32 1.0, %v2541
        %v2543 = vrcp.pop %v2533
        %v2544 = vmul.f32 1.0, %v2543
        %v2545 = vrcp.pop %v2534
        %v2546 = vmul.f32 1.0, %v2545
        %v2547 = vrcp.pop %v2535
        %v2548 = vmul.f32 1.0, %v2547
        %v2549 = vrcp.pop %v2536
        %v2550 = vmul.f32 1.0, %v2549
        %v2551 = vrcp.pop %v2537
        %v2552 = vmul.f32 1.0, %v2551
        %v2553 = vrcp.pop %v2538
        %v2554 = vmul.f32 1.0, %v2553
        %v2555 = vmul.f32 %v2484, %v2074
        %v2556 = vmul.f32 %v2486, %v2075
        %v2557 = vmul.f32 %v2488, %v2076
        %v2558 = vmul.f32 %v2490, %v2077
        %v2559 = vmul.f32 %v2492, %v2078
        %v2560 = vmul.f32 %v2494, %v2079
        %v2561 = vmul.f32 %v2496, %v2080
        %v2562 = vmul.f32 %v2498, %v2081
        %v2563 = vmul.f32 %v2484, %v2499
        %v2564 = vmul.f32 %v2486, %v2500
        %v2565 = vmul.f32 %v2488, %v2501
        %v2566 = vmul.f32 %v2490, %v2502
        %v2567 = vmul.f32 %v2492, %v2503
        %v2568 = vmul.f32 %v2494, %v2504
        %v2569 = vmul.f32 %v2496, %v2505
        %v2570 = vmul.f32 %v2498, %v2506
        %v2579 = vrot.slane %v2563, 4
        %v2580 = vrot.slane %v2564, 4
        %v2581 = vrot.slane %v2565, 4
        %v2582 = vrot.slane %v2566, 4
        %v2583 = vrot.slane %v2567, 4
        %v2584 = vrot.slane %v2568, 4
        %v2585 = vrot.slane %v2569, 4
        %v2586 = vrot.slane %v2570, 4
        %v2595 = vadd.f32 %v2555, %v2579
        %v2596 = vadd.f32 %v2556, %v2580
        %v2597 = vadd.f32 %v2557, %v2581
        %v2598 = vadd.f32 %v2558, %v2582
        %v2599 = vadd.f32 %v2559, %v2583
        %v2600 = vadd.f32 %v2560, %v2584
        %v2601 = vadd.f32 %v2561, %v2585
        %v2602 = vadd.f32 %v2562, %v2586
        %v2603 = vtanh.pop %v2595
        %v2604 = vtanh.pop %v2596
        %v2605 = vtanh.pop %v2597
        %v2606 = vtanh.pop %v2598
        %v2607 = vtanh.pop %v2599
        %v2608 = vtanh.pop %v2600
        %v2609 = vtanh.pop %v2601
        %v2610 = vtanh.pop %v2602
        %v2611 = vmul.f32 %v2540, %v2603
        %v2612 = vmul.f32 %v2542, %v2604
        %v2613 = vmul.f32 %v2544, %v2605
        %v2614 = vmul.f32 %v2546, %v2606
        %v2615 = vmul.f32 %v2548, %v2607
        %v2616 = vmul.f32 %v2550, %v2608
        %v2617 = vmul.f32 %v2552, %v2609
        %v2618 = vmul.f32 %v2554, %v2610
        %v2627 = vrot.slane %v2611, 4
        %v2628 = vrot.slane %v2612, 4
        %v2629 = vrot.slane %v2613, 4
        %v2630 = vrot.slane %v2614, 4
        %v2631 = vrot.slane %v2615, 4
        %v2632 = vrot.slane %v2616, 4
        %v2633 = vrot.slane %v2617, 4
        %v2634 = vrot.slane %v2618, 4
        %v2643 = vsel %vm2122, %v2627, 0.0
        %v2644 = vrot.slane %v2643, 4
        %v2645 = vadd.f32 %v2643, %v2644
        %v2646 = vrot.slane %v2645, 2
        %v2647 = vadd.f32 %v2645, %v2646
        %v2648 = vrot.slane %v2647, 1
        %v2649 = vadd.f32 %v2647, %v2648
        %v2650 = vsel %vm2122, %v2628, 0.0
        %v2651 = vrot.slane %v2650, 4
        %v2652 = vadd.f32 %v2650, %v2651
        %v2653 = vrot.slane %v2652, 2
        %v2654 = vadd.f32 %v2652, %v2653
        %v2655 = vrot.slane %v2654, 1
        %v2656 = vadd.f32 %v2654, %v2655
        %v2657 = vsel %vm2122, %v2629, 0.0
        %v2658 = vrot.slane %v2657, 4
        %v2659 = vadd.f32 %v2657, %v2658
        %v2660 = vrot.slane %v2659, 2
        %v2661 = vadd.f32 %v2659, %v2660
        %v2662 = vrot.slane %v2661, 1
        %v2663 = vadd.f32 %v2661, %v2662
        %v2664 = vsel %vm2122, %v2630, 0.0
        %v2665 = vrot.slane %v2664, 4
        %v2666 = vadd.f32 %v2664, %v2665
        %v2667 = vrot.slane %v2666, 2
        %v2668 = vadd.f32 %v2666, %v2667
        %v2669 = vrot.slane %v2668, 1
        %v2670 = vadd.f32 %v2668, %v2669
        %v2671 = vsel %vm2122, %v2631, 0.0
        %v2672 = vrot.slane %v2671, 4
        %v2673 = vadd.f32 %v2671, %v2672
        %v2674 = vrot.slane %v2673, 2
        %v2675 = vadd.f32 %v2673, %v2674
        %v2676 = vrot.slane %v2675, 1
        %v2677 = vadd.f32 %v2675, %v2676
        %v2678 = vsel %vm2122, %v2632, 0.0
        %v2679 = vrot.slane %v2678, 4
        %v2680 = vadd.f32 %v2678, %v2679
        %v2681 = vrot.slane %v2680, 2
        %v2682 = vadd.f32 %v2680, %v2681
        %v2683 = vrot.slane %v2682, 1
        %v2684 = vadd.f32 %v2682, %v2683
        %v2685 = vsel %vm2122, %v2633, 0.0
        %v2686 = vrot.slane %v2685, 4
        %v2687 = vadd.f32 %v2685, %v2686
        %v2688 = vrot.slane %v2687, 2
        %v2689 = vadd.f32 %v2687, %v2688
        %v2690 = vrot.slane %v2689, 1
        %v2691 = vadd.f32 %v2689, %v2690
        %v2692 = vsel %vm2122, %v2634, 0.0
        %v2693 = vrot.slane %v2692, 4
        %v2694 = vadd.f32 %v2692, %v2693
        %v2695 = vrot.slane %v2694, 2
        %v2696 = vadd.f32 %v2694, %v2695
        %v2697 = vrot.slane %v2696, 1
        %v2698 = vadd.f32 %v2696, %v2697
        %v2699 = vadd.f32 %v1120, %v1801
        %v2700 = vadd.f32 %v1122, %v1801
        %v2701 = vadd.f32 %v1209, %v1801
        %v2702 = vadd.f32 %v1211, %v1801
        %v2703 = vadd.f32 %v1298, %v1801
        %v2704 = vadd.f32 %v1300, %v1801
        %v2705 = vadd.f32 %v1387, %v1801
        %v2706 = vadd.f32 %v1389, %v1801
        %v2707 = vadd.f32 %v1126, %v1806
        %v2708 = vadd.f32 %v1128, %v1806
        %v2709 = vadd.f32 %v1215, %v1806
        %v2710 = vadd.f32 %v1217, %v1806
        %v2711 = vadd.f32 %v1304, %v1806
        %v2712 = vadd.f32 %v1306, %v1806
        %v2713 = vadd.f32 %v1393, %v1806
        %v2714 = vadd.f32 %v1395, %v1806
        %v2715 = vlaneseq
        %v2716 = vshrl.u32 %v2715, 7
        %v2717 = vsub.s32 4, %v2716
        %v2718 = vrot.slane %v2611, %v2717
        %v2719 = vlaneseq
        %v2720 = vshrl.u32 %v2719, 7
        %v2721 = vsub.s32 4, %v2720
        %v2722 = vrot.slane %v2612, %v2721
        %v2723 = vlaneseq
        %v2724 = vshrl.u32 %v2723, 7
        %v2725 = vsub.s32 4, %v2724
        %v2726 = vrot.slane %v2613, %v2725
        %v2727 = vlaneseq
        %v2728 = vshrl.u32 %v2727, 7
        %v2729 = vsub.s32 4, %v2728
        %v2730 = vrot.slane %v2614, %v2729
        %v2731 = vlaneseq
        %v2732 = vshrl.u32 %v2731, 7
        %v2733 = vsub.s32 4, %v2732
        %v2734 = vrot.slane %v2615, %v2733
        %v2735 = vlaneseq
        %v2736 = vshrl.u32 %v2735, 7
        %v2737 = vsub.s32 4, %v2736
        %v2738 = vrot.slane %v2616, %v2737
        %v2739 = vlaneseq
        %v2740 = vshrl.u32 %v2739, 7
        %v2741 = vsub.s32 4, %v2740
        %v2742 = vrot.slane %v2617, %v2741
        %v2743 = vlaneseq
        %v2744 = vshrl.u32 %v2743, 7
        %v2745 = vsub.s32 4, %v2744
        %v2746 = vrot.slane %v2618, %v2745
        %v2747 = vmul.f32 %v1827, %v2718
        %v2748 = vmul.f32 %v1827, %v2722
        %v2749 = vmul.f32 %v1827, %v2726
        %v2750 = vmul.f32 %v1827, %v2730
        %v2751 = vmul.f32 %v1827, %v2734
        %v2752 = vmul.f32 %v1827, %v2738
        %v2753 = vmul.f32 %v1827, %v2742
        %v2754 = vmul.f32 %v1827, %v2746
        %v2755 = vmul.f32 %v1832, %v2718
        %v2756 = vmul.f32 %v1832, %v2722
        %v2757 = vmul.f32 %v1832, %v2726
        %v2758 = vmul.f32 %v1832, %v2730
        %v2759 = vmul.f32 %v1832, %v2734
        %v2760 = vmul.f32 %v1832, %v2738
        %v2761 = vmul.f32 %v1832, %v2742
        %v2762 = vmul.f32 %v1832, %v2746
        %v2763 = vadd.f32 %v2699, %v2747
        %v2764 = vadd.f32 %v2700, %v2748
        %v2765 = vadd.f32 %v2701, %v2749
        %v2766 = vadd.f32 %v2702, %v2750
        %v2767 = vadd.f32 %v2703, %v2751
        %v2768 = vadd.f32 %v2704, %v2752
        %v2769 = vadd.f32 %v2705, %v2753
        %v2770 = vadd.f32 %v2706, %v2754
        %v2771 = vadd.f32 %v2707, %v2755
        %v2772 = vadd.f32 %v2708, %v2756
        %v2773 = vadd.f32 %v2709, %v2757
        %v2774 = vadd.f32 %v2710, %v2758
        %v2775 = vadd.f32 %v2711, %v2759
        %v2776 = vadd.f32 %v2712, %v2760
        %v2777 = vadd.f32 %v2713, %v2761
        %v2778 = vadd.f32 %v2714, %v2762
        %v2779 = vlaneseq
        %v2780 = vshrl.u32 %v2779, 7
        %v2781 = vsub.s32 5, %v2780
        %v2782 = vrot.slane %v2611, %v2781
        %v2783 = vlaneseq
        %v2784 = vshrl.u32 %v2783, 7
        %v2785 = vsub.s32 5, %v2784
        %v2786 = vrot.slane %v2612, %v2785
        %v2787 = vlaneseq
        %v2788 = vshrl.u32 %v2787, 7
        %v2789 = vsub.s32 5, %v2788
        %v2790 = vrot.slane %v2613, %v2789
        %v2791 = vlaneseq
        %v2792 = vshrl.u32 %v2791, 7
        %v2793 = vsub.s32 5, %v2792
        %v2794 = vrot.slane %v2614, %v2793
        %v2795 = vlaneseq
        %v2796 = vshrl.u32 %v2795, 7
        %v2797 = vsub.s32 5, %v2796
        %v2798 = vrot.slane %v2615, %v2797
        %v2799 = vlaneseq
        %v2800 = vshrl.u32 %v2799, 7
        %v2801 = vsub.s32 5, %v2800
        %v2802 = vrot.slane %v2616, %v2801
        %v2803 = vlaneseq
        %v2804 = vshrl.u32 %v2803, 7
        %v2805 = vsub.s32 5, %v2804
        %v2806 = vrot.slane %v2617, %v2805
        %v2807 = vlaneseq
        %v2808 = vshrl.u32 %v2807, 7
        %v2809 = vsub.s32 5, %v2808
        %v2810 = vrot.slane %v2618, %v2809
        %v2811 = vmul.f32 %v1854, %v2782
        %v2812 = vmul.f32 %v1854, %v2786
        %v2813 = vmul.f32 %v1854, %v2790
        %v2814 = vmul.f32 %v1854, %v2794
        %v2815 = vmul.f32 %v1854, %v2798
        %v2816 = vmul.f32 %v1854, %v2802
        %v2817 = vmul.f32 %v1854, %v2806
        %v2818 = vmul.f32 %v1854, %v2810
        %v2819 = vmul.f32 %v1858, %v2782
        %v2820 = vmul.f32 %v1858, %v2786
        %v2821 = vmul.f32 %v1858, %v2790
        %v2822 = vmul.f32 %v1858, %v2794
        %v2823 = vmul.f32 %v1858, %v2798
        %v2824 = vmul.f32 %v1858, %v2802
        %v2825 = vmul.f32 %v1858, %v2806
        %v2826 = vmul.f32 %v1858, %v2810
        %v2827 = vadd.f32 %v2763, %v2811
        %v2828 = vadd.f32 %v2764, %v2812
        %v2829 = vadd.f32 %v2765, %v2813
        %v2830 = vadd.f32 %v2766, %v2814
        %v2831 = vadd.f32 %v2767, %v2815
        %v2832 = vadd.f32 %v2768, %v2816
        %v2833 = vadd.f32 %v2769, %v2817
        %v2834 = vadd.f32 %v2770, %v2818
        %v2835 = vadd.f32 %v2771, %v2819
        %v2836 = vadd.f32 %v2772, %v2820
        %v2837 = vadd.f32 %v2773, %v2821
        %v2838 = vadd.f32 %v2774, %v2822
        %v2839 = vadd.f32 %v2775, %v2823
        %v2840 = vadd.f32 %v2776, %v2824
        %v2841 = vadd.f32 %v2777, %v2825
        %v2842 = vadd.f32 %v2778, %v2826
        %v2843 = vlaneseq
        %v2844 = vshrl.u32 %v2843, 7
        %v2845 = vsub.s32 6, %v2844
        %v2846 = vrot.slane %v2611, %v2845
        %v2847 = vlaneseq
        %v2848 = vshrl.u32 %v2847, 7
        %v2849 = vsub.s32 6, %v2848
        %v2850 = vrot.slane %v2612, %v2849
        %v2851 = vlaneseq
        %v2852 = vshrl.u32 %v2851, 7
        %v2853 = vsub.s32 6, %v2852
        %v2854 = vrot.slane %v2613, %v2853
        %v2855 = vlaneseq
        %v2856 = vshrl.u32 %v2855, 7
        %v2857 = vsub.s32 6, %v2856
        %v2858 = vrot.slane %v2614, %v2857
        %v2859 = vlaneseq
        %v2860 = vshrl.u32 %v2859, 7
        %v2861 = vsub.s32 6, %v2860
        %v2862 = vrot.slane %v2615, %v2861
        %v2863 = vlaneseq
        %v2864 = vshrl.u32 %v2863, 7
        %v2865 = vsub.s32 6, %v2864
        %v2866 = vrot.slane %v2616, %v2865
        %v2867 = vlaneseq
        %v2868 = vshrl.u32 %v2867, 7
        %v2869 = vsub.s32 6, %v2868
        %v2870 = vrot.slane %v2617, %v2869
        %v2871 = vlaneseq
        %v2872 = vshrl.u32 %v2871, 7
        %v2873 = vsub.s32 6, %v2872
        %v2874 = vrot.slane %v2618, %v2873
        %v2875 = vmul.f32 %v1880, %v2846
        %v2876 = vmul.f32 %v1880, %v2850
        %v2877 = vmul.f32 %v1880, %v2854
        %v2878 = vmul.f32 %v1880, %v2858
        %v2879 = vmul.f32 %v1880, %v2862
        %v2880 = vmul.f32 %v1880, %v2866
        %v2881 = vmul.f32 %v1880, %v2870
        %v2882 = vmul.f32 %v1880, %v2874
        %v2883 = vmul.f32 %v1884, %v2846
        %v2884 = vmul.f32 %v1884, %v2850
        %v2885 = vmul.f32 %v1884, %v2854
        %v2886 = vmul.f32 %v1884, %v2858
        %v2887 = vmul.f32 %v1884, %v2862
        %v2888 = vmul.f32 %v1884, %v2866
        %v2889 = vmul.f32 %v1884, %v2870
        %v2890 = vmul.f32 %v1884, %v2874
        %v2891 = vadd.f32 %v2827, %v2875
        %v2892 = vadd.f32 %v2828, %v2876
        %v2893 = vadd.f32 %v2829, %v2877
        %v2894 = vadd.f32 %v2830, %v2878
        %v2895 = vadd.f32 %v2831, %v2879
        %v2896 = vadd.f32 %v2832, %v2880
        %v2897 = vadd.f32 %v2833, %v2881
        %v2898 = vadd.f32 %v2834, %v2882
        %v2899 = vadd.f32 %v2835, %v2883
        %v2900 = vadd.f32 %v2836, %v2884
        %v2901 = vadd.f32 %v2837, %v2885
        %v2902 = vadd.f32 %v2838, %v2886
        %v2903 = vadd.f32 %v2839, %v2887
        %v2904 = vadd.f32 %v2840, %v2888
        %v2905 = vadd.f32 %v2841, %v2889
        %v2906 = vadd.f32 %v2842, %v2890
        %v2907 = vlaneseq
        %v2908 = vshrl.u32 %v2907, 7
        %v2909 = vsub.s32 7, %v2908
        %v2910 = vrot.slane %v2611, %v2909
        %v2911 = vlaneseq
        %v2912 = vshrl.u32 %v2911, 7
        %v2913 = vsub.s32 7, %v2912
        %v2914 = vrot.slane %v2612, %v2913
        %v2915 = vlaneseq
        %v2916 = vshrl.u32 %v2915, 7
        %v2917 = vsub.s32 7, %v2916
        %v2918 = vrot.slane %v2613, %v2917
        %v2919 = vlaneseq
        %v2920 = vshrl.u32 %v2919, 7
        %v2921 = vsub.s32 7, %v2920
        %v2922 = vrot.slane %v2614, %v2921
        %v2923 = vlaneseq
        %v2924 = vshrl.u32 %v2923, 7
        %v2925 = vsub.s32 7, %v2924
        %v2926 = vrot.slane %v2615, %v2925
        %v2927 = vlaneseq
        %v2928 = vshrl.u32 %v2927, 7
        %v2929 = vsub.s32 7, %v2928
        %v2930 = vrot.slane %v2616, %v2929
        %v2931 = vlaneseq
        %v2932 = vshrl.u32 %v2931, 7
        %v2933 = vsub.s32 7, %v2932
        %v2934 = vrot.slane %v2617, %v2933
        %v2935 = vlaneseq
        %v2936 = vshrl.u32 %v2935, 7
        %v2937 = vsub.s32 7, %v2936
        %v2938 = vrot.slane %v2618, %v2937
        %v2939 = vmul.f32 %v1906, %v2910
        %v2940 = vmul.f32 %v1906, %v2914
        %v2941 = vmul.f32 %v1906, %v2918
        %v2942 = vmul.f32 %v1906, %v2922
        %v2943 = vmul.f32 %v1906, %v2926
        %v2944 = vmul.f32 %v1906, %v2930
        %v2945 = vmul.f32 %v1906, %v2934
        %v2946 = vmul.f32 %v1906, %v2938
        %v2947 = vmul.f32 %v1910, %v2910
        %v2948 = vmul.f32 %v1910, %v2914
        %v2949 = vmul.f32 %v1910, %v2918
        %v2950 = vmul.f32 %v1910, %v2922
        %v2951 = vmul.f32 %v1910, %v2926
        %v2952 = vmul.f32 %v1910, %v2930
        %v2953 = vmul.f32 %v1910, %v2934
        %v2954 = vmul.f32 %v1910, %v2938
        %v2955 = vadd.f32 %v2891, %v2939
        %v2956 = vadd.f32 %v2892, %v2940
        %v2957 = vadd.f32 %v2893, %v2941
        %v2958 = vadd.f32 %v2894, %v2942
        %v2959 = vadd.f32 %v2895, %v2943
        %v2960 = vadd.f32 %v2896, %v2944
        %v2961 = vadd.f32 %v2897, %v2945
        %v2962 = vadd.f32 %v2898, %v2946
        %v2963 = vadd.f32 %v2899, %v2947
        %v2964 = vadd.f32 %v2900, %v2948
        %v2965 = vadd.f32 %v2901, %v2949
        %v2966 = vadd.f32 %v2902, %v2950
        %v2967 = vadd.f32 %v2903, %v2951
        %v2968 = vadd.f32 %v2904, %v2952
        %v2969 = vadd.f32 %v2905, %v2953
        %v2970 = vadd.f32 %v2906, %v2954
        %v2971 = vxor.u32 %v2955, 2147483648
        %v2972 = vxor.u32 %v2956, 2147483648
        %v2973 = vxor.u32 %v2957, 2147483648
        %v2974 = vxor.u32 %v2958, 2147483648
        %v2975 = vxor.u32 %v2959, 2147483648
        %v2976 = vxor.u32 %v2960, 2147483648
        %v2977 = vxor.u32 %v2961, 2147483648
        %v2978 = vxor.u32 %v2962, 2147483648
        %v2979 = vmul.f32 %v2971, 1.442695
        %v2980 = vpow.pop %v2979
        %v2981 = vmul.f32 %v2972, 1.442695
        %v2982 = vpow.pop %v2981
        %v2983 = vmul.f32 %v2973, 1.442695
        %v2984 = vpow.pop %v2983
        %v2985 = vmul.f32 %v2974, 1.442695
        %v2986 = vpow.pop %v2985
        %v2987 = vmul.f32 %v2975, 1.442695
        %v2988 = vpow.pop %v2987
        %v2989 = vmul.f32 %v2976, 1.442695
        %v2990 = vpow.pop %v2989
        %v2991 = vmul.f32 %v2977, 1.442695
        %v2992 = vpow.pop %v2991
        %v2993 = vmul.f32 %v2978, 1.442695
        %v2994 = vpow.pop %v2993
        %v2995 = vadd.f32 %v2980, 1.0
        %v2996 = vadd.f32 %v2982, 1.0
        %v2997 = vadd.f32 %v2984, 1.0
        %v2998 = vadd.f32 %v2986, 1.0
        %v2999 = vadd.f32 %v2988, 1.0
        %v3000 = vadd.f32 %v2990, 1.0
        %v3001 = vadd.f32 %v2992, 1.0
        %v3002 = vadd.f32 %v2994, 1.0
        %v3003 = vrcp.pop %v2995
        %v3004 = vmul.f32 1.0, %v3003
        %v3005 = vrcp.pop %v2996
        %v3006 = vmul.f32 1.0, %v3005
        %v3007 = vrcp.pop %v2997
        %v3008 = vmul.f32 1.0, %v3007
        %v3009 = vrcp.pop %v2998
        %v3010 = vmul.f32 1.0, %v3009
        %v3011 = vrcp.pop %v2999
        %v3012 = vmul.f32 1.0, %v3011
        %v3013 = vrcp.pop %v3000
        %v3014 = vmul.f32 1.0, %v3013
        %v3015 = vrcp.pop %v3001
        %v3016 = vmul.f32 1.0, %v3015
        %v3017 = vrcp.pop %v3002
        %v3018 = vmul.f32 1.0, %v3017
        %v3019 = vtanh.pop %v2963
        %v3020 = vtanh.pop %v2964
        %v3021 = vtanh.pop %v2965
        %v3022 = vtanh.pop %v2966
        %v3023 = vtanh.pop %v2967
        %v3024 = vtanh.pop %v2968
        %v3025 = vtanh.pop %v2969
        %v3026 = vtanh.pop %v2970
        %v3027 = vxor.u32 %v2963, 2147483648
        %v3028 = vxor.u32 %v2964, 2147483648
        %v3029 = vxor.u32 %v2965, 2147483648
        %v3030 = vxor.u32 %v2966, 2147483648
        %v3031 = vxor.u32 %v2967, 2147483648
        %v3032 = vxor.u32 %v2968, 2147483648
        %v3033 = vxor.u32 %v2969, 2147483648
        %v3034 = vxor.u32 %v2970, 2147483648
        %v3035 = vmul.f32 %v3027, 1.442695
        %v3036 = vpow.pop %v3035
        %v3037 = vmul.f32 %v3028, 1.442695
        %v3038 = vpow.pop %v3037
        %v3039 = vmul.f32 %v3029, 1.442695
        %v3040 = vpow.pop %v3039
        %v3041 = vmul.f32 %v3030, 1.442695
        %v3042 = vpow.pop %v3041
        %v3043 = vmul.f32 %v3031, 1.442695
        %v3044 = vpow.pop %v3043
        %v3045 = vmul.f32 %v3032, 1.442695
        %v3046 = vpow.pop %v3045
        %v3047 = vmul.f32 %v3033, 1.442695
        %v3048 = vpow.pop %v3047
        %v3049 = vmul.f32 %v3034, 1.442695
        %v3050 = vpow.pop %v3049
        %v3051 = vadd.f32 %v3036, 1.0
        %v3052 = vadd.f32 %v3038, 1.0
        %v3053 = vadd.f32 %v3040, 1.0
        %v3054 = vadd.f32 %v3042, 1.0
        %v3055 = vadd.f32 %v3044, 1.0
        %v3056 = vadd.f32 %v3046, 1.0
        %v3057 = vadd.f32 %v3048, 1.0
        %v3058 = vadd.f32 %v3050, 1.0
        %v3059 = vrcp.pop %v3051
        %v3060 = vmul.f32 1.0, %v3059
        %v3061 = vrcp.pop %v3052
        %v3062 = vmul.f32 1.0, %v3061
        %v3063 = vrcp.pop %v3053
        %v3064 = vmul.f32 1.0, %v3063
        %v3065 = vrcp.pop %v3054
        %v3066 = vmul.f32 1.0, %v3065
        %v3067 = vrcp.pop %v3055
        %v3068 = vmul.f32 1.0, %v3067
        %v3069 = vrcp.pop %v3056
        %v3070 = vmul.f32 1.0, %v3069
        %v3071 = vrcp.pop %v3057
        %v3072 = vmul.f32 1.0, %v3071
        %v3073 = vrcp.pop %v3058
        %v3074 = vmul.f32 1.0, %v3073
        %v3075 = vmul.f32 %v3004, %v2595
        %v3076 = vmul.f32 %v3006, %v2596
        %v3077 = vmul.f32 %v3008, %v2597
        %v3078 = vmul.f32 %v3010, %v2598
        %v3079 = vmul.f32 %v3012, %v2599
        %v3080 = vmul.f32 %v3014, %v2600
        %v3081 = vmul.f32 %v3016, %v2601
        %v3082 = vmul.f32 %v3018, %v2602
        %v3083 = vmul.f32 %v3004, %v3019
        %v3084 = vmul.f32 %v3006, %v3020
        %v3085 = vmul.f32 %v3008, %v3021
        %v3086 = vmul.f32 %v3010, %v3022
        %v3087 = vmul.f32 %v3012, %v3023
        %v3088 = vmul.f32 %v3014, %v3024
        %v3089 = vmul.f32 %v3016, %v3025
        %v3090 = vmul.f32 %v3018, %v3026
        %v3099 = vrot.slane %v3083, 4
        %v3100 = vrot.slane %v3084, 4
        %v3101 = vrot.slane %v3085, 4
        %v3102 = vrot.slane %v3086, 4
        %v3103 = vrot.slane %v3087, 4
        %v3104 = vrot.slane %v3088, 4
        %v3105 = vrot.slane %v3089, 4
        %v3106 = vrot.slane %v3090, 4
        %v3115 = vadd.f32 %v3075, %v3099
        %v3116 = vadd.f32 %v3076, %v3100
        %v3117 = vadd.f32 %v3077, %v3101
        %v3118 = vadd.f32 %v3078, %v3102
        %v3119 = vadd.f32 %v3079, %v3103
        %v3120 = vadd.f32 %v3080, %v3104
        %v3121 = vadd.f32 %v3081, %v3105
        %v3122 = vadd.f32 %v3082, %v3106
        %v3123 = vtanh.pop %v3115
        %v3124 = vtanh.pop %v3116
        %v3125 = vtanh.pop %v3117
        %v3126 = vtanh.pop %v3118
        %v3127 = vtanh.pop %v3119
        %v3128 = vtanh.pop %v3120
        %v3129 = vtanh.pop %v3121
        %v3130 = vtanh.pop %v3122
        %v3131 = vmul.f32 %v3060, %v3123
        %v3132 = vmul.f32 %v3062, %v3124
        %v3133 = vmul.f32 %v3064, %v3125
        %v3134 = vmul.f32 %v3066, %v3126
        %v3135 = vmul.f32 %v3068, %v3127
        %v3136 = vmul.f32 %v3070, %v3128
        %v3137 = vmul.f32 %v3072, %v3129
        %v3138 = vmul.f32 %v3074, %v3130
        %v3147 = vrot.slane %v3131, 4
        %v3148 = vrot.slane %v3132, 4
        %v3149 = vrot.slane %v3133, 4
        %v3150 = vrot.slane %v3134, 4
        %v3151 = vrot.slane %v3135, 4
        %v3152 = vrot.slane %v3136, 4
        %v3153 = vrot.slane %v3137, 4
        %v3154 = vrot.slane %v3138, 4
        %v3163 = vsel %vm2122, %v3147, 0.0
        %v3164 = vrot.slane %v3163, 4
        %v3165 = vadd.f32 %v3163, %v3164
        %v3166 = vrot.slane %v3165, 2
        %v3167 = vadd.f32 %v3165, %v3166
        %v3168 = vrot.slane %v3167, 1
        %v3169 = vadd.f32 %v3167, %v3168
        %v3170 = vsel %vm2122, %v3148, 0.0
        %v3171 = vrot.slane %v3170, 4
        %v3172 = vadd.f32 %v3170, %v3171
        %v3173 = vrot.slane %v3172, 2
        %v3174 = vadd.f32 %v3172, %v3173
        %v3175 = vrot.slane %v3174, 1
        %v3176 = vadd.f32 %v3174, %v3175
        %v3177 = vsel %vm2122, %v3149, 0.0
        %v3178 = vrot.slane %v3177, 4
        %v3179 = vadd.f32 %v3177, %v3178
        %v3180 = vrot.slane %v3179, 2
        %v3181 = vadd.f32 %v3179, %v3180
        %v3182 = vrot.slane %v3181, 1
        %v3183 = vadd.f32 %v3181, %v3182
        %v3184 = vsel %vm2122, %v3150, 0.0
        %v3185 = vrot.slane %v3184, 4
        %v3186 = vadd.f32 %v3184, %v3185
        %v3187 = vrot.slane %v3186, 2
        %v3188 = vadd.f32 %v3186, %v3187
        %v3189 = vrot.slane %v3188, 1
        %v3190 = vadd.f32 %v3188, %v3189
        %v3191 = vsel %vm2122, %v3151, 0.0
        %v3192 = vrot.slane %v3191, 4
        %v3193 = vadd.f32 %v3191, %v3192
        %v3194 = vrot.slane %v3193, 2
        %v3195 = vadd.f32 %v3193, %v3194
        %v3196 = vrot.slane %v3195, 1
        %v3197 = vadd.f32 %v3195, %v3196
        %v3198 = vsel %vm2122, %v3152, 0.0
        %v3199 = vrot.slane %v3198, 4
        %v3200 = vadd.f32 %v3198, %v3199
        %v3201 = vrot.slane %v3200, 2
        %v3202 = vadd.f32 %v3200, %v3201
        %v3203 = vrot.slane %v3202, 1
        %v3204 = vadd.f32 %v3202, %v3203
        %v3205 = vsel %vm2122, %v3153, 0.0
        %v3206 = vrot.slane %v3205, 4
        %v3207 = vadd.f32 %v3205, %v3206
        %v3208 = vrot.slane %v3207, 2
        %v3209 = vadd.f32 %v3207, %v3208
        %v3210 = vrot.slane %v3209, 1
        %v3211 = vadd.f32 %v3209, %v3210
        %v3212 = vsel %vm2122, %v3154, 0.0
        %v3213 = vrot.slane %v3212, 4
        %v3214 = vadd.f32 %v3212, %v3213
        %v3215 = vrot.slane %v3214, 2
        %v3216 = vadd.f32 %v3214, %v3215
        %v3217 = vrot.slane %v3216, 1
        %v3218 = vadd.f32 %v3216, %v3217
        %v3219 = vadd.f32 %v1509, %v1801
        %v3220 = vadd.f32 %v1511, %v1801
        %v3221 = vadd.f32 %v1598, %v1801
        %v3222 = vadd.f32 %v1600, %v1801
        %v3223 = vadd.f32 %v1687, %v1801
        %v3224 = vadd.f32 %v1689, %v1801
        %v3225 = vadd.f32 %v1776, %v1801
        %v3226 = vadd.f32 %v1778, %v1801
        %v3227 = vadd.f32 %v1515, %v1806
        %v3228 = vadd.f32 %v1517, %v1806
        %v3229 = vadd.f32 %v1604, %v1806
        %v3230 = vadd.f32 %v1606, %v1806
        %v3231 = vadd.f32 %v1693, %v1806
        %v3232 = vadd.f32 %v1695, %v1806
        %v3233 = vadd.f32 %v1782, %v1806
        %v3234 = vadd.f32 %v1784, %v1806
        %v3235 = vlaneseq
        %v3236 = vshrl.u32 %v3235, 7
        %v3237 = vsub.s32 4, %v3236
        %v3238 = vrot.slane %v3131, %v3237
        %v3239 = vlaneseq
        %v3240 = vshrl.u32 %v3239, 7
        %v3241 = vsub.s32 4, %v3240
        %v3242 = vrot.slane %v3132, %v3241
        %v3243 = vlaneseq
        %v3244 = vshrl.u32 %v3243, 7
        %v3245 = vsub.s32 4, %v3244
        %v3246 = vrot.slane %v3133, %v3245
        %v3247 = vlaneseq
        %v3248 = vshrl.u32 %v3247, 7
        %v3249 = vsub.s32 4, %v3248
        %v3250 = vrot.slane %v3134, %v3249
        %v3251 = vlaneseq
        %v3252 = vshrl.u32 %v3251, 7
        %v3253 = vsub.s32 4, %v3252
        %v3254 = vrot.slane %v3135, %v3253
        %v3255 = vlaneseq
        %v3256 = vshrl.u32 %v3255, 7
        %v3257 = vsub.s32 4, %v3256
        %v3258 = vrot.slane %v3136, %v3257
        %v3259 = vlaneseq
        %v3260 = vshrl.u32 %v3259, 7
        %v3261 = vsub.s32 4, %v3260
        %v3262 = vrot.slane %v3137, %v3261
        %v3263 = vlaneseq
        %v3264 = vshrl.u32 %v3263, 7
        %v3265 = vsub.s32 4, %v3264
        %v3266 = vrot.slane %v3138, %v3265
        %v3267 = vmul.f32 %v1827, %v3238
        %v3268 = vmul.f32 %v1827, %v3242
        %v3269 = vmul.f32 %v1827, %v3246
        %v3270 = vmul.f32 %v1827, %v3250
        %v3271 = vmul.f32 %v1827, %v3254
        %v3272 = vmul.f32 %v1827, %v3258
        %v3273 = vmul.f32 %v1827, %v3262
        %v3274 = vmul.f32 %v1827, %v3266
        %v3275 = vmul.f32 %v1832, %v3238
        %v3276 = vmul.f32 %v1832, %v3242
        %v3277 = vmul.f32 %v1832, %v3246
        %v3278 = vmul.f32 %v1832, %v3250
        %v3279 = vmul.f32 %v1832, %v3254
        %v3280 = vmul.f32 %v1832, %v3258
        %v3281 = vmul.f32 %v1832, %v3262
        %v3282 = vmul.f32 %v1832, %v3266
        %v3283 = vadd.f32 %v3219, %v3267
        %v3284 = vadd.f32 %v3220, %v3268
        %v3285 = vadd.f32 %v3221, %v3269
        %v3286 = vadd.f32 %v3222, %v3270
        %v3287 = vadd.f32 %v3223, %v3271
        %v3288 = vadd.f32 %v3224, %v3272
        %v3289 = vadd.f32 %v3225, %v3273
        %v3290 = vadd.f32 %v3226, %v3274
        %v3291 = vadd.f32 %v3227, %v3275
        %v3292 = vadd.f32 %v3228, %v3276
        %v3293 = vadd.f32 %v3229, %v3277
        %v3294 = vadd.f32 %v3230, %v3278
        %v3295 = vadd.f32 %v3231, %v3279
        %v3296 = vadd.f32 %v3232, %v3280
        %v3297 = vadd.f32 %v3233, %v3281
        %v3298 = vadd.f32 %v3234, %v3282
        %v3299 = vlaneseq
        %v3300 = vshrl.u32 %v3299, 7
        %v3301 = vsub.s32 5, %v3300
        %v3302 = vrot.slane %v3131, %v3301
        %v3303 = vlaneseq
        %v3304 = vshrl.u32 %v3303, 7
        %v3305 = vsub.s32 5, %v3304
        %v3306 = vrot.slane %v3132, %v3305
        %v3307 = vlaneseq
        %v3308 = vshrl.u32 %v3307, 7
        %v3309 = vsub.s32 5, %v3308
        %v3310 = vrot.slane %v3133, %v3309
        %v3311 = vlaneseq
        %v3312 = vshrl.u32 %v3311, 7
        %v3313 = vsub.s32 5, %v3312
        %v3314 = vrot.slane %v3134, %v3313
        %v3315 = vlaneseq
        %v3316 = vshrl.u32 %v3315, 7
        %v3317 = vsub.s32 5, %v3316
        %v3318 = vrot.slane %v3135, %v3317
        %v3319 = vlaneseq
        %v3320 = vshrl.u32 %v3319, 7
        %v3321 = vsub.s32 5, %v3320
        %v3322 = vrot.slane %v3136, %v3321
        %v3323 = vlaneseq
        %v3324 = vshrl.u32 %v3323, 7
        %v3325 = vsub.s32 5, %v3324
        %v3326 = vrot.slane %v3137, %v3325
        %v3327 = vlaneseq
        %v3328 = vshrl.u32 %v3327, 7
        %v3329 = vsub.s32 5, %v3328
        %v3330 = vrot.slane %v3138, %v3329
        %v3331 = vmul.f32 %v1854, %v3302
        %v3332 = vmul.f32 %v1854, %v3306
        %v3333 = vmul.f32 %v1854, %v3310
        %v3334 = vmul.f32 %v1854, %v3314
        %v3335 = vmul.f32 %v1854, %v3318
        %v3336 = vmul.f32 %v1854, %v3322
        %v3337 = vmul.f32 %v1854, %v3326
        %v3338 = vmul.f32 %v1854, %v3330
        %v3339 = vmul.f32 %v1858, %v3302
        %v3340 = vmul.f32 %v1858, %v3306
        %v3341 = vmul.f32 %v1858, %v3310
        %v3342 = vmul.f32 %v1858, %v3314
        %v3343 = vmul.f32 %v1858, %v3318
        %v3344 = vmul.f32 %v1858, %v3322
        %v3345 = vmul.f32 %v1858, %v3326
        %v3346 = vmul.f32 %v1858, %v3330
        %v3347 = vadd.f32 %v3283, %v3331
        %v3348 = vadd.f32 %v3284, %v3332
        %v3349 = vadd.f32 %v3285, %v3333
        %v3350 = vadd.f32 %v3286, %v3334
        %v3351 = vadd.f32 %v3287, %v3335
        %v3352 = vadd.f32 %v3288, %v3336
        %v3353 = vadd.f32 %v3289, %v3337
        %v3354 = vadd.f32 %v3290, %v3338
        %v3355 = vadd.f32 %v3291, %v3339
        %v3356 = vadd.f32 %v3292, %v3340
        %v3357 = vadd.f32 %v3293, %v3341
        %v3358 = vadd.f32 %v3294, %v3342
        %v3359 = vadd.f32 %v3295, %v3343
        %v3360 = vadd.f32 %v3296, %v3344
        %v3361 = vadd.f32 %v3297, %v3345
        %v3362 = vadd.f32 %v3298, %v3346
        %v3363 = vlaneseq
        %v3364 = vshrl.u32 %v3363, 7
        %v3365 = vsub.s32 6, %v3364
        %v3366 = vrot.slane %v3131, %v3365
        %v3367 = vlaneseq
        %v3368 = vshrl.u32 %v3367, 7
        %v3369 = vsub.s32 6, %v3368
        %v3370 = vrot.slane %v3132, %v3369
        %v3371 = vlaneseq
        %v3372 = vshrl.u32 %v3371, 7
        %v3373 = vsub.s32 6, %v3372
        %v3374 = vrot.slane %v3133, %v3373
        %v3375 = vlaneseq
        %v3376 = vshrl.u32 %v3375, 7
        %v3377 = vsub.s32 6, %v3376
        %v3378 = vrot.slane %v3134, %v3377
        %v3379 = vlaneseq
        %v3380 = vshrl.u32 %v3379, 7
        %v3381 = vsub.s32 6, %v3380
        %v3382 = vrot.slane %v3135, %v3381
        %v3383 = vlaneseq
        %v3384 = vshrl.u32 %v3383, 7
        %v3385 = vsub.s32 6, %v3384
        %v3386 = vrot.slane %v3136, %v3385
        %v3387 = vlaneseq
        %v3388 = vshrl.u32 %v3387, 7
        %v3389 = vsub.s32 6, %v3388
        %v3390 = vrot.slane %v3137, %v3389
        %v3391 = vlaneseq
        %v3392 = vshrl.u32 %v3391, 7
        %v3393 = vsub.s32 6, %v3392
        %v3394 = vrot.slane %v3138, %v3393
        %v3395 = vmul.f32 %v1880, %v3366
        %v3396 = vmul.f32 %v1880, %v3370
        %v3397 = vmul.f32 %v1880, %v3374
        %v3398 = vmul.f32 %v1880, %v3378
        %v3399 = vmul.f32 %v1880, %v3382
        %v3400 = vmul.f32 %v1880, %v3386
        %v3401 = vmul.f32 %v1880, %v3390
        %v3402 = vmul.f32 %v1880, %v3394
        %v3403 = vmul.f32 %v1884, %v3366
        %v3404 = vmul.f32 %v1884, %v3370
        %v3405 = vmul.f32 %v1884, %v3374
        %v3406 = vmul.f32 %v1884, %v3378
        %v3407 = vmul.f32 %v1884, %v3382
        %v3408 = vmul.f32 %v1884, %v3386
        %v3409 = vmul.f32 %v1884, %v3390
        %v3410 = vmul.f32 %v1884, %v3394
        %v3411 = vadd.f32 %v3347, %v3395
        %v3412 = vadd.f32 %v3348, %v3396
        %v3413 = vadd.f32 %v3349, %v3397
        %v3414 = vadd.f32 %v3350, %v3398
        %v3415 = vadd.f32 %v3351, %v3399
        %v3416 = vadd.f32 %v3352, %v3400
        %v3417 = vadd.f32 %v3353, %v3401
        %v3418 = vadd.f32 %v3354, %v3402
        %v3419 = vadd.f32 %v3355, %v3403
        %v3420 = vadd.f32 %v3356, %v3404
        %v3421 = vadd.f32 %v3357, %v3405
        %v3422 = vadd.f32 %v3358, %v3406
        %v3423 = vadd.f32 %v3359, %v3407
        %v3424 = vadd.f32 %v3360, %v3408
        %v3425 = vadd.f32 %v3361, %v3409
        %v3426 = vadd.f32 %v3362, %v3410
        %v3427 = vlaneseq
        %v3428 = vshrl.u32 %v3427, 7
        %v3429 = vsub.s32 7, %v3428
        %v3430 = vrot.slane %v3131, %v3429
        %v3431 = vlaneseq
        %v3432 = vshrl.u32 %v3431, 7
        %v3433 = vsub.s32 7, %v3432
        %v3434 = vrot.slane %v3132, %v3433
        %v3435 = vlaneseq
        %v3436 = vshrl.u32 %v3435, 7
        %v3437 = vsub.s32 7, %v3436
        %v3438 = vrot.slane %v3133, %v3437
        %v3439 = vlaneseq
        %v3440 = vshrl.u32 %v3439, 7
        %v3441 = vsub.s32 7, %v3440
        %v3442 = vrot.slane %v3134, %v3441
        %v3443 = vlaneseq
        %v3444 = vshrl.u32 %v3443, 7
        %v3445 = vsub.s32 7, %v3444
        %v3446 = vrot.slane %v3135, %v3445
        %v3447 = vlaneseq
        %v3448 = vshrl.u32 %v3447, 7
        %v3449 = vsub.s32 7, %v3448
        %v3450 = vrot.slane %v3136, %v3449
        %v3451 = vlaneseq
        %v3452 = vshrl.u32 %v3451, 7
        %v3453 = vsub.s32 7, %v3452
        %v3454 = vrot.slane %v3137, %v3453
        %v3455 = vlaneseq
        %v3456 = vshrl.u32 %v3455, 7
        %v3457 = vsub.s32 7, %v3456
        %v3458 = vrot.slane %v3138, %v3457
        %v3459 = vmul.f32 %v1906, %v3430
        %v3460 = vmul.f32 %v1906, %v3434
        %v3461 = vmul.f32 %v1906, %v3438
        %v3462 = vmul.f32 %v1906, %v3442
        %v3463 = vmul.f32 %v1906, %v3446
        %v3464 = vmul.f32 %v1906, %v3450
        %v3465 = vmul.f32 %v1906, %v3454
        %v3466 = vmul.f32 %v1906, %v3458
        %v3467 = vmul.f32 %v1910, %v3430
        %v3468 = vmul.f32 %v1910, %v3434
        %v3469 = vmul.f32 %v1910, %v3438
        %v3470 = vmul.f32 %v1910, %v3442
        %v3471 = vmul.f32 %v1910, %v3446
        %v3472 = vmul.f32 %v1910, %v3450
        %v3473 = vmul.f32 %v1910, %v3454
        %v3474 = vmul.f32 %v1910, %v3458
        %v3475 = vadd.f32 %v3411, %v3459
        %v3476 = vadd.f32 %v3412, %v3460
        %v3477 = vadd.f32 %v3413, %v3461
        %v3478 = vadd.f32 %v3414, %v3462
        %v3479 = vadd.f32 %v3415, %v3463
        %v3480 = vadd.f32 %v3416, %v3464
        %v3481 = vadd.f32 %v3417, %v3465
        %v3482 = vadd.f32 %v3418, %v3466
        %v3483 = vadd.f32 %v3419, %v3467
        %v3484 = vadd.f32 %v3420, %v3468
        %v3485 = vadd.f32 %v3421, %v3469
        %v3486 = vadd.f32 %v3422, %v3470
        %v3487 = vadd.f32 %v3423, %v3471
        %v3488 = vadd.f32 %v3424, %v3472
        %v3489 = vadd.f32 %v3425, %v3473
        %v3490 = vadd.f32 %v3426, %v3474
        %v3491 = vxor.u32 %v3475, 2147483648
        %v3492 = vxor.u32 %v3476, 2147483648
        %v3493 = vxor.u32 %v3477, 2147483648
        %v3494 = vxor.u32 %v3478, 2147483648
        %v3495 = vxor.u32 %v3479, 2147483648
        %v3496 = vxor.u32 %v3480, 2147483648
        %v3497 = vxor.u32 %v3481, 2147483648
        %v3498 = vxor.u32 %v3482, 2147483648
        %v3499 = vmul.f32 %v3491, 1.442695
        %v3500 = vpow.pop %v3499
        %v3501 = vmul.f32 %v3492, 1.442695
        %v3502 = vpow.pop %v3501
        %v3503 = vmul.f32 %v3493, 1.442695
        %v3504 = vpow.pop %v3503
        %v3505 = vmul.f32 %v3494, 1.442695
        %v3506 = vpow.pop %v3505
        %v3507 = vmul.f32 %v3495, 1.442695
        %v3508 = vpow.pop %v3507
        %v3509 = vmul.f32 %v3496, 1.442695
        %v3510 = vpow.pop %v3509
        %v3511 = vmul.f32 %v3497, 1.442695
        %v3512 = vpow.pop %v3511
        %v3513 = vmul.f32 %v3498, 1.442695
        %v3514 = vpow.pop %v3513
        %v3515 = vadd.f32 %v3500, 1.0
        %v3516 = vadd.f32 %v3502, 1.0
        %v3517 = vadd.f32 %v3504, 1.0
        %v3518 = vadd.f32 %v3506, 1.0
        %v3519 = vadd.f32 %v3508, 1.0
        %v3520 = vadd.f32 %v3510, 1.0
        %v3521 = vadd.f32 %v3512, 1.0
        %v3522 = vadd.f32 %v3514, 1.0
        %v3523 = vrcp.pop %v3515
        %v3524 = vmul.f32 1.0, %v3523
        %v3525 = vrcp.pop %v3516
        %v3526 = vmul.f32 1.0, %v3525
        %v3527 = vrcp.pop %v3517
        %v3528 = vmul.f32 1.0, %v3527
        %v3529 = vrcp.pop %v3518
        %v3530 = vmul.f32 1.0, %v3529
        %v3531 = vrcp.pop %v3519
        %v3532 = vmul.f32 1.0, %v3531
        %v3533 = vrcp.pop %v3520
        %v3534 = vmul.f32 1.0, %v3533
        %v3535 = vrcp.pop %v3521
        %v3536 = vmul.f32 1.0, %v3535
        %v3537 = vrcp.pop %v3522
        %v3538 = vmul.f32 1.0, %v3537
        %v3539 = vtanh.pop %v3483
        %v3540 = vtanh.pop %v3484
        %v3541 = vtanh.pop %v3485
        %v3542 = vtanh.pop %v3486
        %v3543 = vtanh.pop %v3487
        %v3544 = vtanh.pop %v3488
        %v3545 = vtanh.pop %v3489
        %v3546 = vtanh.pop %v3490
        %v3547 = vxor.u32 %v3483, 2147483648
        %v3548 = vxor.u32 %v3484, 2147483648
        %v3549 = vxor.u32 %v3485, 2147483648
        %v3550 = vxor.u32 %v3486, 2147483648
        %v3551 = vxor.u32 %v3487, 2147483648
        %v3552 = vxor.u32 %v3488, 2147483648
        %v3553 = vxor.u32 %v3489, 2147483648
        %v3554 = vxor.u32 %v3490, 2147483648
        %v3555 = vmul.f32 %v3547, 1.442695
        %v3556 = vpow.pop %v3555
        %v3557 = vmul.f32 %v3548, 1.442695
        %v3558 = vpow.pop %v3557
        %v3559 = vmul.f32 %v3549, 1.442695
        %v3560 = vpow.pop %v3559
        %v3561 = vmul.f32 %v3550, 1.442695
        %v3562 = vpow.pop %v3561
        %v3563 = vmul.f32 %v3551, 1.442695
        %v3564 = vpow.pop %v3563
        %v3565 = vmul.f32 %v3552, 1.442695
        %v3566 = vpow.pop %v3565
        %v3567 = vmul.f32 %v3553, 1.442695
        %v3568 = vpow.pop %v3567
        %v3569 = vmul.f32 %v3554, 1.442695
        %v3570 = vpow.pop %v3569
        %v3571 = vadd.f32 %v3556, 1.0
        %v3572 = vadd.f32 %v3558, 1.0
        %v3573 = vadd.f32 %v3560, 1.0
        %v3574 = vadd.f32 %v3562, 1.0
        %v3575 = vadd.f32 %v3564, 1.0
        %v3576 = vadd.f32 %v3566, 1.0
        %v3577 = vadd.f32 %v3568, 1.0
        %v3578 = vadd.f32 %v3570, 1.0
        %v3579 = vrcp.pop %v3571
        %v3580 = vmul.f32 1.0, %v3579
        %v3581 = vrcp.pop %v3572
        %v3582 = vmul.f32 1.0, %v3581
        %v3583 = vrcp.pop %v3573
        %v3584 = vmul.f32 1.0, %v3583
        %v3585 = vrcp.pop %v3574
        %v3586 = vmul.f32 1.0, %v3585
        %v3587 = vrcp.pop %v3575
        %v3588 = vmul.f32 1.0, %v3587
        %v3589 = vrcp.pop %v3576
        %v3590 = vmul.f32 1.0, %v3589
        %v3591 = vrcp.pop %v3577
        %v3592 = vmul.f32 1.0, %v3591
        %v3593 = vrcp.pop %v3578
        %v3594 = vmul.f32 1.0, %v3593
        %v3595 = vmul.f32 %v3524, %v3115
        %v3596 = vmul.f32 %v3526, %v3116
        %v3597 = vmul.f32 %v3528, %v3117
        %v3598 = vmul.f32 %v3530, %v3118
        %v3599 = vmul.f32 %v3532, %v3119
        %v3600 = vmul.f32 %v3534, %v3120
        %v3601 = vmul.f32 %v3536, %v3121
        %v3602 = vmul.f32 %v3538, %v3122
        %v3603 = vmul.f32 %v3524, %v3539
        %v3604 = vmul.f32 %v3526, %v3540
        %v3605 = vmul.f32 %v3528, %v3541
        %v3606 = vmul.f32 %v3530, %v3542
        %v3607 = vmul.f32 %v3532, %v3543
        %v3608 = vmul.f32 %v3534, %v3544
        %v3609 = vmul.f32 %v3536, %v3545
        %v3610 = vmul.f32 %v3538, %v3546
        %v3619 = vrot.slane %v3603, 4
        %v3620 = vrot.slane %v3604, 4
        %v3621 = vrot.slane %v3605, 4
        %v3622 = vrot.slane %v3606, 4
        %v3623 = vrot.slane %v3607, 4
        %v3624 = vrot.slane %v3608, 4
        %v3625 = vrot.slane %v3609, 4
        %v3626 = vrot.slane %v3610, 4
        %v3635 = vadd.f32 %v3595, %v3619
        %v3636 = vadd.f32 %v3596, %v3620
        %v3637 = vadd.f32 %v3597, %v3621
        %v3638 = vadd.f32 %v3598, %v3622
        %v3639 = vadd.f32 %v3599, %v3623
        %v3640 = vadd.f32 %v3600, %v3624
        %v3641 = vadd.f32 %v3601, %v3625
        %v3642 = vadd.f32 %v3602, %v3626
        %v3643 = vtanh.pop %v3635
        %v3644 = vtanh.pop %v3636
        %v3645 = vtanh.pop %v3637
        %v3646 = vtanh.pop %v3638
        %v3647 = vtanh.pop %v3639
        %v3648 = vtanh.pop %v3640
        %v3649 = vtanh.pop %v3641
        %v3650 = vtanh.pop %v3642
        %v3651 = vmul.f32 %v3580, %v3643
        %v3652 = vmul.f32 %v3582, %v3644
        %v3653 = vmul.f32 %v3584, %v3645
        %v3654 = vmul.f32 %v3586, %v3646
        %v3655 = vmul.f32 %v3588, %v3647
        %v3656 = vmul.f32 %v3590, %v3648
        %v3657 = vmul.f32 %v3592, %v3649
        %v3658 = vmul.f32 %v3594, %v3650
        %v3667 = vrot.slane %v3651, 4
        %v3668 = vrot.slane %v3652, 4
        %v3669 = vrot.slane %v3653, 4
        %v3670 = vrot.slane %v3654, 4
        %v3671 = vrot.slane %v3655, 4
        %v3672 = vrot.slane %v3656, 4
        %v3673 = vrot.slane %v3657, 4
        %v3674 = vrot.slane %v3658, 4
        %v3683 = vsel %vm2122, %v3667, 0.0
        %v3684 = vrot.slane %v3683, 4
        %v3685 = vadd.f32 %v3683, %v3684
        %v3686 = vrot.slane %v3685, 2
        %v3687 = vadd.f32 %v3685, %v3686
        %v3688 = vrot.slane %v3687, 1
        %v3689 = vadd.f32 %v3687, %v3688
        %v3690 = vsel %vm2122, %v3668, 0.0
        %v3691 = vrot.slane %v3690, 4
        %v3692 = vadd.f32 %v3690, %v3691
        %v3693 = vrot.slane %v3692, 2
        %v3694 = vadd.f32 %v3692, %v3693
        %v3695 = vrot.slane %v3694, 1
        %v3696 = vadd.f32 %v3694, %v3695
        %v3697 = vsel %vm2122, %v3669, 0.0
        %v3698 = vrot.slane %v3697, 4
        %v3699 = vadd.f32 %v3697, %v3698
        %v3700 = vrot.slane %v3699, 2
        %v3701 = vadd.f32 %v3699, %v3700
        %v3702 = vrot.slane %v3701, 1
        %v3703 = vadd.f32 %v3701, %v3702
        %v3704 = vsel %vm2122, %v3670, 0.0
        %v3705 = vrot.slane %v3704, 4
        %v3706 = vadd.f32 %v3704, %v3705
        %v3707 = vrot.slane %v3706, 2
        %v3708 = vadd.f32 %v3706, %v3707
        %v3709 = vrot.slane %v3708, 1
        %v3710 = vadd.f32 %v3708, %v3709
        %v3711 = vsel %vm2122, %v3671, 0.0
        %v3712 = vrot.slane %v3711, 4
        %v3713 = vadd.f32 %v3711, %v3712
        %v3714 = vrot.slane %v3713, 2
        %v3715 = vadd.f32 %v3713, %v3714
        %v3716 = vrot.slane %v3715, 1
        %v3717 = vadd.f32 %v3715, %v3716
        %v3718 = vsel %vm2122, %v3672, 0.0
        %v3719 = vrot.slane %v3718, 4
        %v3720 = vadd.f32 %v3718, %v3719
        %v3721 = vrot.slane %v3720, 2
        %v3722 = vadd.f32 %v3720, %v3721
        %v3723 = vrot.slane %v3722, 1
        %v3724 = vadd.f32 %v3722, %v3723
        %v3725 = vsel %vm2122, %v3673, 0.0
        %v3726 = vrot.slane %v3725, 4
        %v3727 = vadd.f32 %v3725, %v3726
        %v3728 = vrot.slane %v3727, 2
        %v3729 = vadd.f32 %v3727, %v3728
        %v3730 = vrot.slane %v3729, 1
        %v3731 = vadd.f32 %v3729, %v3730
        %v3732 = vsel %vm2122, %v3674, 0.0
        %v3733 = vrot.slane %v3732, 4
        %v3734 = vadd.f32 %v3732, %v3733
        %v3735 = vrot.slane %v3734, 2
        %v3736 = vadd.f32 %v3734, %v3735
        %v3737 = vrot.slane %v3736, 1
        %v3738 = vadd.f32 %v3736, %v3737
        %vm3739 = vcmask 1040384
        %v3740 = vsel %vm3739, %v2129, %v2649
        %v3741 = vsel %vm3739, %v2136, %v2656
        %v3742 = vsel %vm3739, %v2143, %v2663
        %v3743 = vsel %vm3739, %v2150, %v2670
        %v3744 = vsel %vm3739, %v2157, %v2677
        %v3745 = vsel %vm3739, %v2164, %v2684
        %v3746 = vsel %vm3739, %v2171, %v2691
        %v3747 = vsel %vm3739, %v2178, %v2698
        %vm3748 = vcmask 1041408
        %v3749 = vsel %vm3748, %v3740, %v3169
        %v3750 = vsel %vm3748, %v3741, %v3176
        %v3751 = vsel %vm3748, %v3742, %v3183
        %v3752 = vsel %vm3748, %v3743, %v3190
        %v3753 = vsel %vm3748, %v3744, %v3197
        %v3754 = vsel %vm3748, %v3745, %v3204
        %v3755 = vsel %vm3748, %v3746, %v3211
        %v3756 = vsel %vm3748, %v3747, %v3218
        %vm3757 = vcmask 1042432
        %v3758 = vsel %vm3757, %v3749, %v3689
        %v3759 = vsel %vm3757, %v3750, %v3696
        %v3760 = vsel %vm3757, %v3751, %v3703
        %v3761 = vsel %vm3757, %v3752, %v3710
        %v3762 = vsel %vm3757, %v3753, %v3717
        %v3763 = vsel %vm3757, %v3754, %v3724
        %v3764 = vsel %vm3757, %v3755, %v3731
        %v3765 = vsel %vm3757, %v3756, %v3738
        %3767 = vset.pattern.permute.xlu0 0
        %3768 = vperm.xlu0 %3767, %v228
        %v3769 = vpop.permute.xlu0 %3768
        %3772 = vset.pattern.permute.xlu0 0
        %3773 = vperm.xlu0 %3772, %v229
        %v3774 = vpop.permute.xlu0 %3773
        %v3776 = vadd.f32 %v1521, %v3769
        %v3777 = vadd.f32 %v1523, %v3769
        %v3778 = vadd.f32 %v1610, %v3769
        %v3779 = vadd.f32 %v1612, %v3769
        %v3780 = vadd.f32 %v1699, %v3769
        %v3781 = vadd.f32 %v1701, %v3769
        %v3782 = vadd.f32 %v1788, %v3769
        %v3783 = vadd.f32 %v1790, %v3769
        %v3784 = vadd.f32 %v1527, %v3774
        %v3785 = vadd.f32 %v1529, %v3774
        %v3786 = vadd.f32 %v1616, %v3774
        %v3787 = vadd.f32 %v1618, %v3774
        %v3788 = vadd.f32 %v1705, %v3774
        %v3789 = vadd.f32 %v1707, %v3774
        %v3790 = vadd.f32 %v1794, %v3774
        %v3791 = vadd.f32 %v1796, %v3774
        %3793 = vset.pattern.permute.xlu0 0
        %3794 = vperm.xlu0 %3793, %v224
        %v3795 = vpop.permute.xlu0 %3794
        %3798 = vset.pattern.permute.xlu0 0
        %3799 = vperm.xlu0 %3798, %v225
        %v3800 = vpop.permute.xlu0 %3799
        %v3802 = vmul.f32 %v3795, 0.0
        %v3803 = vmul.f32 %v3800, 0.0
        %v3804 = vadd.f32 %v3776, %v3802
        %v3805 = vadd.f32 %v3777, %v3802
        %v3806 = vadd.f32 %v3778, %v3802
        %v3807 = vadd.f32 %v3779, %v3802
        %v3808 = vadd.f32 %v3780, %v3802
        %v3809 = vadd.f32 %v3781, %v3802
        %v3810 = vadd.f32 %v3782, %v3802
        %v3811 = vadd.f32 %v3783, %v3802
        %v3812 = vadd.f32 %v3784, %v3803
        %v3813 = vadd.f32 %v3785, %v3803
        %v3814 = vadd.f32 %v3786, %v3803
        %v3815 = vadd.f32 %v3787, %v3803
        %v3816 = vadd.f32 %v3788, %v3803
        %v3817 = vadd.f32 %v3789, %v3803
        %v3818 = vadd.f32 %v3790, %v3803
        %v3819 = vadd.f32 %v3791, %v3803
        %3820 = vset.pattern.permute.xlu0 1
        %3821 = vperm.xlu0 %3820, %v224
        %v3822 = vpop.permute.xlu0 %3821
        %3824 = vset.pattern.permute.xlu0 1
        %3825 = vperm.xlu0 %3824, %v225
        %v3826 = vpop.permute.xlu0 %3825
        %v3828 = vmul.f32 %v3822, 0.0
        %v3829 = vmul.f32 %v3826, 0.0
        %v3830 = vadd.f32 %v3804, %v3828
        %v3831 = vadd.f32 %v3805, %v3828
        %v3832 = vadd.f32 %v3806, %v3828
        %v3833 = vadd.f32 %v3807, %v3828
        %v3834 = vadd.f32 %v3808, %v3828
        %v3835 = vadd.f32 %v3809, %v3828
        %v3836 = vadd.f32 %v3810, %v3828
        %v3837 = vadd.f32 %v3811, %v3828
        %v3838 = vadd.f32 %v3812, %v3829
        %v3839 = vadd.f32 %v3813, %v3829
        %v3840 = vadd.f32 %v3814, %v3829
        %v3841 = vadd.f32 %v3815, %v3829
        %v3842 = vadd.f32 %v3816, %v3829
        %v3843 = vadd.f32 %v3817, %v3829
        %v3844 = vadd.f32 %v3818, %v3829
        %v3845 = vadd.f32 %v3819, %v3829
        %3846 = vset.pattern.permute.xlu0 2
        %3847 = vperm.xlu0 %3846, %v224
        %v3848 = vpop.permute.xlu0 %3847
        %3850 = vset.pattern.permute.xlu0 2
        %3851 = vperm.xlu0 %3850, %v225
        %v3852 = vpop.permute.xlu0 %3851
        %v3854 = vmul.f32 %v3848, 0.0
        %v3855 = vmul.f32 %v3852, 0.0
        %v3856 = vadd.f32 %v3830, %v3854
        %v3857 = vadd.f32 %v3831, %v3854
        %v3858 = vadd.f32 %v3832, %v3854
        %v3859 = vadd.f32 %v3833, %v3854
        %v3860 = vadd.f32 %v3834, %v3854
        %v3861 = vadd.f32 %v3835, %v3854
        %v3862 = vadd.f32 %v3836, %v3854
        %v3863 = vadd.f32 %v3837, %v3854
        %v3864 = vadd.f32 %v3838, %v3855
        %v3865 = vadd.f32 %v3839, %v3855
        %v3866 = vadd.f32 %v3840, %v3855
        %v3867 = vadd.f32 %v3841, %v3855
        %v3868 = vadd.f32 %v3842, %v3855
        %v3869 = vadd.f32 %v3843, %v3855
        %v3870 = vadd.f32 %v3844, %v3855
        %v3871 = vadd.f32 %v3845, %v3855
        %3872 = vset.pattern.permute.xlu0 3
        %3873 = vperm.xlu0 %3872, %v224
        %v3874 = vpop.permute.xlu0 %3873
        %3876 = vset.pattern.permute.xlu0 3
        %3877 = vperm.xlu0 %3876, %v225
        %v3878 = vpop.permute.xlu0 %3877
        %v3880 = vmul.f32 %v3874, 0.0
        %v3881 = vmul.f32 %v3878, 0.0
        %v3882 = vadd.f32 %v3856, %v3880
        %v3883 = vadd.f32 %v3857, %v3880
        %v3884 = vadd.f32 %v3858, %v3880
        %v3885 = vadd.f32 %v3859, %v3880
        %v3886 = vadd.f32 %v3860, %v3880
        %v3887 = vadd.f32 %v3861, %v3880
        %v3888 = vadd.f32 %v3862, %v3880
        %v3889 = vadd.f32 %v3863, %v3880
        %v3890 = vadd.f32 %v3864, %v3881
        %v3891 = vadd.f32 %v3865, %v3881
        %v3892 = vadd.f32 %v3866, %v3881
        %v3893 = vadd.f32 %v3867, %v3881
        %v3894 = vadd.f32 %v3868, %v3881
        %v3895 = vadd.f32 %v3869, %v3881
        %v3896 = vadd.f32 %v3870, %v3881
        %v3897 = vadd.f32 %v3871, %v3881
        %v3898 = vxor.u32 %v3882, 2147483648
        %v3899 = vxor.u32 %v3883, 2147483648
        %v3900 = vxor.u32 %v3884, 2147483648
        %v3901 = vxor.u32 %v3885, 2147483648
        %v3902 = vxor.u32 %v3886, 2147483648
        %v3903 = vxor.u32 %v3887, 2147483648
        %v3904 = vxor.u32 %v3888, 2147483648
        %v3905 = vxor.u32 %v3889, 2147483648
        %v3906 = vmul.f32 %v3898, 1.442695
        %v3907 = vpow.pop %v3906
        %v3908 = vmul.f32 %v3899, 1.442695
        %v3909 = vpow.pop %v3908
        %v3910 = vmul.f32 %v3900, 1.442695
        %v3911 = vpow.pop %v3910
        %v3912 = vmul.f32 %v3901, 1.442695
        %v3913 = vpow.pop %v3912
        %v3914 = vmul.f32 %v3902, 1.442695
        %v3915 = vpow.pop %v3914
        %v3916 = vmul.f32 %v3903, 1.442695
        %v3917 = vpow.pop %v3916
        %v3918 = vmul.f32 %v3904, 1.442695
        %v3919 = vpow.pop %v3918
        %v3920 = vmul.f32 %v3905, 1.442695
        %v3921 = vpow.pop %v3920
        %v3922 = vadd.f32 %v3907, 1.0
        %v3923 = vadd.f32 %v3909, 1.0
        %v3924 = vadd.f32 %v3911, 1.0
        %v3925 = vadd.f32 %v3913, 1.0
        %v3926 = vadd.f32 %v3915, 1.0
        %v3927 = vadd.f32 %v3917, 1.0
        %v3928 = vadd.f32 %v3919, 1.0
        %v3929 = vadd.f32 %v3921, 1.0
        %v3930 = vrcp.pop %v3922
        %v3931 = vmul.f32 1.0, %v3930
        %v3932 = vrcp.pop %v3923
        %v3933 = vmul.f32 1.0, %v3932
        %v3934 = vrcp.pop %v3924
        %v3935 = vmul.f32 1.0, %v3934
        %v3936 = vrcp.pop %v3925
        %v3937 = vmul.f32 1.0, %v3936
        %v3938 = vrcp.pop %v3926
        %v3939 = vmul.f32 1.0, %v3938
        %v3940 = vrcp.pop %v3927
        %v3941 = vmul.f32 1.0, %v3940
        %v3942 = vrcp.pop %v3928
        %v3943 = vmul.f32 1.0, %v3942
        %v3944 = vrcp.pop %v3929
        %v3945 = vmul.f32 1.0, %v3944
        %v3946 = vtanh.pop %v3890
        %v3947 = vtanh.pop %v3891
        %v3948 = vtanh.pop %v3892
        %v3949 = vtanh.pop %v3893
        %v3950 = vtanh.pop %v3894
        %v3951 = vtanh.pop %v3895
        %v3952 = vtanh.pop %v3896
        %v3953 = vtanh.pop %v3897
        %v3954 = vxor.u32 %v3890, 2147483648
        %v3955 = vxor.u32 %v3891, 2147483648
        %v3956 = vxor.u32 %v3892, 2147483648
        %v3957 = vxor.u32 %v3893, 2147483648
        %v3958 = vxor.u32 %v3894, 2147483648
        %v3959 = vxor.u32 %v3895, 2147483648
        %v3960 = vxor.u32 %v3896, 2147483648
        %v3961 = vxor.u32 %v3897, 2147483648
        %v3962 = vmul.f32 %v3954, 1.442695
        %v3963 = vpow.pop %v3962
        %v3964 = vmul.f32 %v3955, 1.442695
        %v3965 = vpow.pop %v3964
        %v3966 = vmul.f32 %v3956, 1.442695
        %v3967 = vpow.pop %v3966
        %v3968 = vmul.f32 %v3957, 1.442695
        %v3969 = vpow.pop %v3968
        %v3970 = vmul.f32 %v3958, 1.442695
        %v3971 = vpow.pop %v3970
        %v3972 = vmul.f32 %v3959, 1.442695
        %v3973 = vpow.pop %v3972
        %v3974 = vmul.f32 %v3960, 1.442695
        %v3975 = vpow.pop %v3974
        %v3976 = vmul.f32 %v3961, 1.442695
        %v3977 = vpow.pop %v3976
        %v3978 = vadd.f32 %v3963, 1.0
        %v3979 = vadd.f32 %v3965, 1.0
        %v3980 = vadd.f32 %v3967, 1.0
        %v3981 = vadd.f32 %v3969, 1.0
        %v3982 = vadd.f32 %v3971, 1.0
        %v3983 = vadd.f32 %v3973, 1.0
        %v3984 = vadd.f32 %v3975, 1.0
        %v3985 = vadd.f32 %v3977, 1.0
        %v3986 = vrcp.pop %v3978
        %v3987 = vmul.f32 1.0, %v3986
        %v3988 = vrcp.pop %v3979
        %v3989 = vmul.f32 1.0, %v3988
        %v3990 = vrcp.pop %v3980
        %v3991 = vmul.f32 1.0, %v3990
        %v3992 = vrcp.pop %v3981
        %v3993 = vmul.f32 1.0, %v3992
        %v3994 = vrcp.pop %v3982
        %v3995 = vmul.f32 1.0, %v3994
        %v3996 = vrcp.pop %v3983
        %v3997 = vmul.f32 1.0, %v3996
        %v3998 = vrcp.pop %v3984
        %v3999 = vmul.f32 1.0, %v3998
        %v4000 = vrcp.pop %v3985
        %v4001 = vmul.f32 1.0, %v4000
        %v4002 = vmul.f32 %v3931, 0.0
        %v4003 = vmul.f32 %v3933, 0.0
        %v4004 = vmul.f32 %v3935, 0.0
        %v4005 = vmul.f32 %v3937, 0.0
        %v4006 = vmul.f32 %v3939, 0.0
        %v4007 = vmul.f32 %v3941, 0.0
        %v4008 = vmul.f32 %v3943, 0.0
        %v4009 = vmul.f32 %v3945, 0.0
        %v4010 = vmul.f32 %v3931, %v3946
        %v4011 = vmul.f32 %v3933, %v3947
        %v4012 = vmul.f32 %v3935, %v3948
        %v4013 = vmul.f32 %v3937, %v3949
        %v4014 = vmul.f32 %v3939, %v3950
        %v4015 = vmul.f32 %v3941, %v3951
        %v4016 = vmul.f32 %v3943, %v3952
        %v4017 = vmul.f32 %v3945, %v3953
        %v4026 = vrot.slane %v4010, 4
        %v4027 = vrot.slane %v4011, 4
        %v4028 = vrot.slane %v4012, 4
        %v4029 = vrot.slane %v4013, 4
        %v4030 = vrot.slane %v4014, 4
        %v4031 = vrot.slane %v4015, 4
        %v4032 = vrot.slane %v4016, 4
        %v4033 = vrot.slane %v4017, 4
        %v4042 = vadd.f32 %v4002, %v4026
        %v4043 = vadd.f32 %v4003, %v4027
        %v4044 = vadd.f32 %v4004, %v4028
        %v4045 = vadd.f32 %v4005, %v4029
        %v4046 = vadd.f32 %v4006, %v4030
        %v4047 = vadd.f32 %v4007, %v4031
        %v4048 = vadd.f32 %v4008, %v4032
        %v4049 = vadd.f32 %v4009, %v4033
        %v4050 = vtanh.pop %v4042
        %v4051 = vtanh.pop %v4043
        %v4052 = vtanh.pop %v4044
        %v4053 = vtanh.pop %v4045
        %v4054 = vtanh.pop %v4046
        %v4055 = vtanh.pop %v4047
        %v4056 = vtanh.pop %v4048
        %v4057 = vtanh.pop %v4049
        %v4058 = vmul.f32 %v3987, %v4050
        %v4059 = vmul.f32 %v3989, %v4051
        %v4060 = vmul.f32 %v3991, %v4052
        %v4061 = vmul.f32 %v3993, %v4053
        %v4062 = vmul.f32 %v3995, %v4054
        %v4063 = vmul.f32 %v3997, %v4055
        %v4064 = vmul.f32 %v3999, %v4056
        %v4065 = vmul.f32 %v4001, %v4057
        %v4074 = vrot.slane %v4058, 4
        %v4075 = vrot.slane %v4059, 4
        %v4076 = vrot.slane %v4060, 4
        %v4077 = vrot.slane %v4061, 4
        %v4078 = vrot.slane %v4062, 4
        %v4079 = vrot.slane %v4063, 4
        %v4080 = vrot.slane %v4064, 4
        %v4081 = vrot.slane %v4065, 4
        %v4090 = vsel %vm2122, %v4074, 0.0
        %v4091 = vrot.slane %v4090, 4
        %v4092 = vadd.f32 %v4090, %v4091
        %v4093 = vrot.slane %v4092, 2
        %v4094 = vadd.f32 %v4092, %v4093
        %v4095 = vrot.slane %v4094, 1
        %v4096 = vadd.f32 %v4094, %v4095
        %v4097 = vsel %vm2122, %v4075, 0.0
        %v4098 = vrot.slane %v4097, 4
        %v4099 = vadd.f32 %v4097, %v4098
        %v4100 = vrot.slane %v4099, 2
        %v4101 = vadd.f32 %v4099, %v4100
        %v4102 = vrot.slane %v4101, 1
        %v4103 = vadd.f32 %v4101, %v4102
        %v4104 = vsel %vm2122, %v4076, 0.0
        %v4105 = vrot.slane %v4104, 4
        %v4106 = vadd.f32 %v4104, %v4105
        %v4107 = vrot.slane %v4106, 2
        %v4108 = vadd.f32 %v4106, %v4107
        %v4109 = vrot.slane %v4108, 1
        %v4110 = vadd.f32 %v4108, %v4109
        %v4111 = vsel %vm2122, %v4077, 0.0
        %v4112 = vrot.slane %v4111, 4
        %v4113 = vadd.f32 %v4111, %v4112
        %v4114 = vrot.slane %v4113, 2
        %v4115 = vadd.f32 %v4113, %v4114
        %v4116 = vrot.slane %v4115, 1
        %v4117 = vadd.f32 %v4115, %v4116
        %v4118 = vsel %vm2122, %v4078, 0.0
        %v4119 = vrot.slane %v4118, 4
        %v4120 = vadd.f32 %v4118, %v4119
        %v4121 = vrot.slane %v4120, 2
        %v4122 = vadd.f32 %v4120, %v4121
        %v4123 = vrot.slane %v4122, 1
        %v4124 = vadd.f32 %v4122, %v4123
        %v4125 = vsel %vm2122, %v4079, 0.0
        %v4126 = vrot.slane %v4125, 4
        %v4127 = vadd.f32 %v4125, %v4126
        %v4128 = vrot.slane %v4127, 2
        %v4129 = vadd.f32 %v4127, %v4128
        %v4130 = vrot.slane %v4129, 1
        %v4131 = vadd.f32 %v4129, %v4130
        %v4132 = vsel %vm2122, %v4080, 0.0
        %v4133 = vrot.slane %v4132, 4
        %v4134 = vadd.f32 %v4132, %v4133
        %v4135 = vrot.slane %v4134, 2
        %v4136 = vadd.f32 %v4134, %v4135
        %v4137 = vrot.slane %v4136, 1
        %v4138 = vadd.f32 %v4136, %v4137
        %v4139 = vsel %vm2122, %v4081, 0.0
        %v4140 = vrot.slane %v4139, 4
        %v4141 = vadd.f32 %v4139, %v4140
        %v4142 = vrot.slane %v4141, 2
        %v4143 = vadd.f32 %v4141, %v4142
        %v4144 = vrot.slane %v4143, 1
        %v4145 = vadd.f32 %v4143, %v4144
        %v4146 = vadd.f32 %v1132, %v3769
        %v4147 = vadd.f32 %v1134, %v3769
        %v4148 = vadd.f32 %v1221, %v3769
        %v4149 = vadd.f32 %v1223, %v3769
        %v4150 = vadd.f32 %v1310, %v3769
        %v4151 = vadd.f32 %v1312, %v3769
        %v4152 = vadd.f32 %v1399, %v3769
        %v4153 = vadd.f32 %v1401, %v3769
        %v4154 = vadd.f32 %v1138, %v3774
        %v4155 = vadd.f32 %v1140, %v3774
        %v4156 = vadd.f32 %v1227, %v3774
        %v4157 = vadd.f32 %v1229, %v3774
        %v4158 = vadd.f32 %v1316, %v3774
        %v4159 = vadd.f32 %v1318, %v3774
        %v4160 = vadd.f32 %v1405, %v3774
        %v4161 = vadd.f32 %v1407, %v3774
        %v4162 = vlaneseq
        %v4163 = vshrl.u32 %v4162, 7
        %v4164 = vsub.s32 4, %v4163
        %v4165 = vrot.slane %v4058, %v4164
        %v4166 = vlaneseq
        %v4167 = vshrl.u32 %v4166, 7
        %v4168 = vsub.s32 4, %v4167
        %v4169 = vrot.slane %v4059, %v4168
        %v4170 = vlaneseq
        %v4171 = vshrl.u32 %v4170, 7
        %v4172 = vsub.s32 4, %v4171
        %v4173 = vrot.slane %v4060, %v4172
        %v4174 = vlaneseq
        %v4175 = vshrl.u32 %v4174, 7
        %v4176 = vsub.s32 4, %v4175
        %v4177 = vrot.slane %v4061, %v4176
        %v4178 = vlaneseq
        %v4179 = vshrl.u32 %v4178, 7
        %v4180 = vsub.s32 4, %v4179
        %v4181 = vrot.slane %v4062, %v4180
        %v4182 = vlaneseq
        %v4183 = vshrl.u32 %v4182, 7
        %v4184 = vsub.s32 4, %v4183
        %v4185 = vrot.slane %v4063, %v4184
        %v4186 = vlaneseq
        %v4187 = vshrl.u32 %v4186, 7
        %v4188 = vsub.s32 4, %v4187
        %v4189 = vrot.slane %v4064, %v4188
        %v4190 = vlaneseq
        %v4191 = vshrl.u32 %v4190, 7
        %v4192 = vsub.s32 4, %v4191
        %v4193 = vrot.slane %v4065, %v4192
        %v4194 = vmul.f32 %v3795, %v4165
        %v4195 = vmul.f32 %v3795, %v4169
        %v4196 = vmul.f32 %v3795, %v4173
        %v4197 = vmul.f32 %v3795, %v4177
        %v4198 = vmul.f32 %v3795, %v4181
        %v4199 = vmul.f32 %v3795, %v4185
        %v4200 = vmul.f32 %v3795, %v4189
        %v4201 = vmul.f32 %v3795, %v4193
        %v4202 = vmul.f32 %v3800, %v4165
        %v4203 = vmul.f32 %v3800, %v4169
        %v4204 = vmul.f32 %v3800, %v4173
        %v4205 = vmul.f32 %v3800, %v4177
        %v4206 = vmul.f32 %v3800, %v4181
        %v4207 = vmul.f32 %v3800, %v4185
        %v4208 = vmul.f32 %v3800, %v4189
        %v4209 = vmul.f32 %v3800, %v4193
        %v4210 = vadd.f32 %v4146, %v4194
        %v4211 = vadd.f32 %v4147, %v4195
        %v4212 = vadd.f32 %v4148, %v4196
        %v4213 = vadd.f32 %v4149, %v4197
        %v4214 = vadd.f32 %v4150, %v4198
        %v4215 = vadd.f32 %v4151, %v4199
        %v4216 = vadd.f32 %v4152, %v4200
        %v4217 = vadd.f32 %v4153, %v4201
        %v4218 = vadd.f32 %v4154, %v4202
        %v4219 = vadd.f32 %v4155, %v4203
        %v4220 = vadd.f32 %v4156, %v4204
        %v4221 = vadd.f32 %v4157, %v4205
        %v4222 = vadd.f32 %v4158, %v4206
        %v4223 = vadd.f32 %v4159, %v4207
        %v4224 = vadd.f32 %v4160, %v4208
        %v4225 = vadd.f32 %v4161, %v4209
        %v4226 = vlaneseq
        %v4227 = vshrl.u32 %v4226, 7
        %v4228 = vsub.s32 5, %v4227
        %v4229 = vrot.slane %v4058, %v4228
        %v4230 = vlaneseq
        %v4231 = vshrl.u32 %v4230, 7
        %v4232 = vsub.s32 5, %v4231
        %v4233 = vrot.slane %v4059, %v4232
        %v4234 = vlaneseq
        %v4235 = vshrl.u32 %v4234, 7
        %v4236 = vsub.s32 5, %v4235
        %v4237 = vrot.slane %v4060, %v4236
        %v4238 = vlaneseq
        %v4239 = vshrl.u32 %v4238, 7
        %v4240 = vsub.s32 5, %v4239
        %v4241 = vrot.slane %v4061, %v4240
        %v4242 = vlaneseq
        %v4243 = vshrl.u32 %v4242, 7
        %v4244 = vsub.s32 5, %v4243
        %v4245 = vrot.slane %v4062, %v4244
        %v4246 = vlaneseq
        %v4247 = vshrl.u32 %v4246, 7
        %v4248 = vsub.s32 5, %v4247
        %v4249 = vrot.slane %v4063, %v4248
        %v4250 = vlaneseq
        %v4251 = vshrl.u32 %v4250, 7
        %v4252 = vsub.s32 5, %v4251
        %v4253 = vrot.slane %v4064, %v4252
        %v4254 = vlaneseq
        %v4255 = vshrl.u32 %v4254, 7
        %v4256 = vsub.s32 5, %v4255
        %v4257 = vrot.slane %v4065, %v4256
        %v4258 = vmul.f32 %v3822, %v4229
        %v4259 = vmul.f32 %v3822, %v4233
        %v4260 = vmul.f32 %v3822, %v4237
        %v4261 = vmul.f32 %v3822, %v4241
        %v4262 = vmul.f32 %v3822, %v4245
        %v4263 = vmul.f32 %v3822, %v4249
        %v4264 = vmul.f32 %v3822, %v4253
        %v4265 = vmul.f32 %v3822, %v4257
        %v4266 = vmul.f32 %v3826, %v4229
        %v4267 = vmul.f32 %v3826, %v4233
        %v4268 = vmul.f32 %v3826, %v4237
        %v4269 = vmul.f32 %v3826, %v4241
        %v4270 = vmul.f32 %v3826, %v4245
        %v4271 = vmul.f32 %v3826, %v4249
        %v4272 = vmul.f32 %v3826, %v4253
        %v4273 = vmul.f32 %v3826, %v4257
        %v4274 = vadd.f32 %v4210, %v4258
        %v4275 = vadd.f32 %v4211, %v4259
        %v4276 = vadd.f32 %v4212, %v4260
        %v4277 = vadd.f32 %v4213, %v4261
        %v4278 = vadd.f32 %v4214, %v4262
        %v4279 = vadd.f32 %v4215, %v4263
        %v4280 = vadd.f32 %v4216, %v4264
        %v4281 = vadd.f32 %v4217, %v4265
        %v4282 = vadd.f32 %v4218, %v4266
        %v4283 = vadd.f32 %v4219, %v4267
        %v4284 = vadd.f32 %v4220, %v4268
        %v4285 = vadd.f32 %v4221, %v4269
        %v4286 = vadd.f32 %v4222, %v4270
        %v4287 = vadd.f32 %v4223, %v4271
        %v4288 = vadd.f32 %v4224, %v4272
        %v4289 = vadd.f32 %v4225, %v4273
        %v4290 = vlaneseq
        %v4291 = vshrl.u32 %v4290, 7
        %v4292 = vsub.s32 6, %v4291
        %v4293 = vrot.slane %v4058, %v4292
        %v4294 = vlaneseq
        %v4295 = vshrl.u32 %v4294, 7
        %v4296 = vsub.s32 6, %v4295
        %v4297 = vrot.slane %v4059, %v4296
        %v4298 = vlaneseq
        %v4299 = vshrl.u32 %v4298, 7
        %v4300 = vsub.s32 6, %v4299
        %v4301 = vrot.slane %v4060, %v4300
        %v4302 = vlaneseq
        %v4303 = vshrl.u32 %v4302, 7
        %v4304 = vsub.s32 6, %v4303
        %v4305 = vrot.slane %v4061, %v4304
        %v4306 = vlaneseq
        %v4307 = vshrl.u32 %v4306, 7
        %v4308 = vsub.s32 6, %v4307
        %v4309 = vrot.slane %v4062, %v4308
        %v4310 = vlaneseq
        %v4311 = vshrl.u32 %v4310, 7
        %v4312 = vsub.s32 6, %v4311
        %v4313 = vrot.slane %v4063, %v4312
        %v4314 = vlaneseq
        %v4315 = vshrl.u32 %v4314, 7
        %v4316 = vsub.s32 6, %v4315
        %v4317 = vrot.slane %v4064, %v4316
        %v4318 = vlaneseq
        %v4319 = vshrl.u32 %v4318, 7
        %v4320 = vsub.s32 6, %v4319
        %v4321 = vrot.slane %v4065, %v4320
        %v4322 = vmul.f32 %v3848, %v4293
        %v4323 = vmul.f32 %v3848, %v4297
        %v4324 = vmul.f32 %v3848, %v4301
        %v4325 = vmul.f32 %v3848, %v4305
        %v4326 = vmul.f32 %v3848, %v4309
        %v4327 = vmul.f32 %v3848, %v4313
        %v4328 = vmul.f32 %v3848, %v4317
        %v4329 = vmul.f32 %v3848, %v4321
        %v4330 = vmul.f32 %v3852, %v4293
        %v4331 = vmul.f32 %v3852, %v4297
        %v4332 = vmul.f32 %v3852, %v4301
        %v4333 = vmul.f32 %v3852, %v4305
        %v4334 = vmul.f32 %v3852, %v4309
        %v4335 = vmul.f32 %v3852, %v4313
        %v4336 = vmul.f32 %v3852, %v4317
        %v4337 = vmul.f32 %v3852, %v4321
        %v4338 = vadd.f32 %v4274, %v4322
        %v4339 = vadd.f32 %v4275, %v4323
        %v4340 = vadd.f32 %v4276, %v4324
        %v4341 = vadd.f32 %v4277, %v4325
        %v4342 = vadd.f32 %v4278, %v4326
        %v4343 = vadd.f32 %v4279, %v4327
        %v4344 = vadd.f32 %v4280, %v4328
        %v4345 = vadd.f32 %v4281, %v4329
        %v4346 = vadd.f32 %v4282, %v4330
        %v4347 = vadd.f32 %v4283, %v4331
        %v4348 = vadd.f32 %v4284, %v4332
        %v4349 = vadd.f32 %v4285, %v4333
        %v4350 = vadd.f32 %v4286, %v4334
        %v4351 = vadd.f32 %v4287, %v4335
        %v4352 = vadd.f32 %v4288, %v4336
        %v4353 = vadd.f32 %v4289, %v4337
        %v4354 = vlaneseq
        %v4355 = vshrl.u32 %v4354, 7
        %v4356 = vsub.s32 7, %v4355
        %v4357 = vrot.slane %v4058, %v4356
        %v4358 = vlaneseq
        %v4359 = vshrl.u32 %v4358, 7
        %v4360 = vsub.s32 7, %v4359
        %v4361 = vrot.slane %v4059, %v4360
        %v4362 = vlaneseq
        %v4363 = vshrl.u32 %v4362, 7
        %v4364 = vsub.s32 7, %v4363
        %v4365 = vrot.slane %v4060, %v4364
        %v4366 = vlaneseq
        %v4367 = vshrl.u32 %v4366, 7
        %v4368 = vsub.s32 7, %v4367
        %v4369 = vrot.slane %v4061, %v4368
        %v4370 = vlaneseq
        %v4371 = vshrl.u32 %v4370, 7
        %v4372 = vsub.s32 7, %v4371
        %v4373 = vrot.slane %v4062, %v4372
        %v4374 = vlaneseq
        %v4375 = vshrl.u32 %v4374, 7
        %v4376 = vsub.s32 7, %v4375
        %v4377 = vrot.slane %v4063, %v4376
        %v4378 = vlaneseq
        %v4379 = vshrl.u32 %v4378, 7
        %v4380 = vsub.s32 7, %v4379
        %v4381 = vrot.slane %v4064, %v4380
        %v4382 = vlaneseq
        %v4383 = vshrl.u32 %v4382, 7
        %v4384 = vsub.s32 7, %v4383
        %v4385 = vrot.slane %v4065, %v4384
        %v4386 = vmul.f32 %v3874, %v4357
        %v4387 = vmul.f32 %v3874, %v4361
        %v4388 = vmul.f32 %v3874, %v4365
        %v4389 = vmul.f32 %v3874, %v4369
        %v4390 = vmul.f32 %v3874, %v4373
        %v4391 = vmul.f32 %v3874, %v4377
        %v4392 = vmul.f32 %v3874, %v4381
        %v4393 = vmul.f32 %v3874, %v4385
        %v4394 = vmul.f32 %v3878, %v4357
        %v4395 = vmul.f32 %v3878, %v4361
        %v4396 = vmul.f32 %v3878, %v4365
        %v4397 = vmul.f32 %v3878, %v4369
        %v4398 = vmul.f32 %v3878, %v4373
        %v4399 = vmul.f32 %v3878, %v4377
        %v4400 = vmul.f32 %v3878, %v4381
        %v4401 = vmul.f32 %v3878, %v4385
        %v4402 = vadd.f32 %v4338, %v4386
        %v4403 = vadd.f32 %v4339, %v4387
        %v4404 = vadd.f32 %v4340, %v4388
        %v4405 = vadd.f32 %v4341, %v4389
        %v4406 = vadd.f32 %v4342, %v4390
        %v4407 = vadd.f32 %v4343, %v4391
        %v4408 = vadd.f32 %v4344, %v4392
        %v4409 = vadd.f32 %v4345, %v4393
        %v4410 = vadd.f32 %v4346, %v4394
        %v4411 = vadd.f32 %v4347, %v4395
        %v4412 = vadd.f32 %v4348, %v4396
        %v4413 = vadd.f32 %v4349, %v4397
        %v4414 = vadd.f32 %v4350, %v4398
        %v4415 = vadd.f32 %v4351, %v4399
        %v4416 = vadd.f32 %v4352, %v4400
        %v4417 = vadd.f32 %v4353, %v4401
        %v4418 = vxor.u32 %v4402, 2147483648
        %v4419 = vxor.u32 %v4403, 2147483648
        %v4420 = vxor.u32 %v4404, 2147483648
        %v4421 = vxor.u32 %v4405, 2147483648
        %v4422 = vxor.u32 %v4406, 2147483648
        %v4423 = vxor.u32 %v4407, 2147483648
        %v4424 = vxor.u32 %v4408, 2147483648
        %v4425 = vxor.u32 %v4409, 2147483648
        %v4426 = vmul.f32 %v4418, 1.442695
        %v4427 = vpow.pop %v4426
        %v4428 = vmul.f32 %v4419, 1.442695
        %v4429 = vpow.pop %v4428
        %v4430 = vmul.f32 %v4420, 1.442695
        %v4431 = vpow.pop %v4430
        %v4432 = vmul.f32 %v4421, 1.442695
        %v4433 = vpow.pop %v4432
        %v4434 = vmul.f32 %v4422, 1.442695
        %v4435 = vpow.pop %v4434
        %v4436 = vmul.f32 %v4423, 1.442695
        %v4437 = vpow.pop %v4436
        %v4438 = vmul.f32 %v4424, 1.442695
        %v4439 = vpow.pop %v4438
        %v4440 = vmul.f32 %v4425, 1.442695
        %v4441 = vpow.pop %v4440
        %v4442 = vadd.f32 %v4427, 1.0
        %v4443 = vadd.f32 %v4429, 1.0
        %v4444 = vadd.f32 %v4431, 1.0
        %v4445 = vadd.f32 %v4433, 1.0
        %v4446 = vadd.f32 %v4435, 1.0
        %v4447 = vadd.f32 %v4437, 1.0
        %v4448 = vadd.f32 %v4439, 1.0
        %v4449 = vadd.f32 %v4441, 1.0
        %v4450 = vrcp.pop %v4442
        %v4451 = vmul.f32 1.0, %v4450
        %v4452 = vrcp.pop %v4443
        %v4453 = vmul.f32 1.0, %v4452
        %v4454 = vrcp.pop %v4444
        %v4455 = vmul.f32 1.0, %v4454
        %v4456 = vrcp.pop %v4445
        %v4457 = vmul.f32 1.0, %v4456
        %v4458 = vrcp.pop %v4446
        %v4459 = vmul.f32 1.0, %v4458
        %v4460 = vrcp.pop %v4447
        %v4461 = vmul.f32 1.0, %v4460
        %v4462 = vrcp.pop %v4448
        %v4463 = vmul.f32 1.0, %v4462
        %v4464 = vrcp.pop %v4449
        %v4465 = vmul.f32 1.0, %v4464
        %v4466 = vtanh.pop %v4410
        %v4467 = vtanh.pop %v4411
        %v4468 = vtanh.pop %v4412
        %v4469 = vtanh.pop %v4413
        %v4470 = vtanh.pop %v4414
        %v4471 = vtanh.pop %v4415
        %v4472 = vtanh.pop %v4416
        %v4473 = vtanh.pop %v4417
        %v4474 = vxor.u32 %v4410, 2147483648
        %v4475 = vxor.u32 %v4411, 2147483648
        %v4476 = vxor.u32 %v4412, 2147483648
        %v4477 = vxor.u32 %v4413, 2147483648
        %v4478 = vxor.u32 %v4414, 2147483648
        %v4479 = vxor.u32 %v4415, 2147483648
        %v4480 = vxor.u32 %v4416, 2147483648
        %v4481 = vxor.u32 %v4417, 2147483648
        %v4482 = vmul.f32 %v4474, 1.442695
        %v4483 = vpow.pop %v4482
        %v4484 = vmul.f32 %v4475, 1.442695
        %v4485 = vpow.pop %v4484
        %v4486 = vmul.f32 %v4476, 1.442695
        %v4487 = vpow.pop %v4486
        %v4488 = vmul.f32 %v4477, 1.442695
        %v4489 = vpow.pop %v4488
        %v4490 = vmul.f32 %v4478, 1.442695
        %v4491 = vpow.pop %v4490
        %v4492 = vmul.f32 %v4479, 1.442695
        %v4493 = vpow.pop %v4492
        %v4494 = vmul.f32 %v4480, 1.442695
        %v4495 = vpow.pop %v4494
        %v4496 = vmul.f32 %v4481, 1.442695
        %v4497 = vpow.pop %v4496
        %v4498 = vadd.f32 %v4483, 1.0
        %v4499 = vadd.f32 %v4485, 1.0
        %v4500 = vadd.f32 %v4487, 1.0
        %v4501 = vadd.f32 %v4489, 1.0
        %v4502 = vadd.f32 %v4491, 1.0
        %v4503 = vadd.f32 %v4493, 1.0
        %v4504 = vadd.f32 %v4495, 1.0
        %v4505 = vadd.f32 %v4497, 1.0
        %v4506 = vrcp.pop %v4498
        %v4507 = vmul.f32 1.0, %v4506
        %v4508 = vrcp.pop %v4499
        %v4509 = vmul.f32 1.0, %v4508
        %v4510 = vrcp.pop %v4500
        %v4511 = vmul.f32 1.0, %v4510
        %v4512 = vrcp.pop %v4501
        %v4513 = vmul.f32 1.0, %v4512
        %v4514 = vrcp.pop %v4502
        %v4515 = vmul.f32 1.0, %v4514
        %v4516 = vrcp.pop %v4503
        %v4517 = vmul.f32 1.0, %v4516
        %v4518 = vrcp.pop %v4504
        %v4519 = vmul.f32 1.0, %v4518
        %v4520 = vrcp.pop %v4505
        %v4521 = vmul.f32 1.0, %v4520
        %v4522 = vmul.f32 %v4451, %v4042
        %v4523 = vmul.f32 %v4453, %v4043
        %v4524 = vmul.f32 %v4455, %v4044
        %v4525 = vmul.f32 %v4457, %v4045
        %v4526 = vmul.f32 %v4459, %v4046
        %v4527 = vmul.f32 %v4461, %v4047
        %v4528 = vmul.f32 %v4463, %v4048
        %v4529 = vmul.f32 %v4465, %v4049
        %v4530 = vmul.f32 %v4451, %v4466
        %v4531 = vmul.f32 %v4453, %v4467
        %v4532 = vmul.f32 %v4455, %v4468
        %v4533 = vmul.f32 %v4457, %v4469
        %v4534 = vmul.f32 %v4459, %v4470
        %v4535 = vmul.f32 %v4461, %v4471
        %v4536 = vmul.f32 %v4463, %v4472
        %v4537 = vmul.f32 %v4465, %v4473
        %v4546 = vrot.slane %v4530, 4
        %v4547 = vrot.slane %v4531, 4
        %v4548 = vrot.slane %v4532, 4
        %v4549 = vrot.slane %v4533, 4
        %v4550 = vrot.slane %v4534, 4
        %v4551 = vrot.slane %v4535, 4
        %v4552 = vrot.slane %v4536, 4
        %v4553 = vrot.slane %v4537, 4
        %v4562 = vadd.f32 %v4522, %v4546
        %v4563 = vadd.f32 %v4523, %v4547
        %v4564 = vadd.f32 %v4524, %v4548
        %v4565 = vadd.f32 %v4525, %v4549
        %v4566 = vadd.f32 %v4526, %v4550
        %v4567 = vadd.f32 %v4527, %v4551
        %v4568 = vadd.f32 %v4528, %v4552
        %v4569 = vadd.f32 %v4529, %v4553
        %v4570 = vtanh.pop %v4562
        %v4571 = vtanh.pop %v4563
        %v4572 = vtanh.pop %v4564
        %v4573 = vtanh.pop %v4565
        %v4574 = vtanh.pop %v4566
        %v4575 = vtanh.pop %v4567
        %v4576 = vtanh.pop %v4568
        %v4577 = vtanh.pop %v4569
        %v4578 = vmul.f32 %v4507, %v4570
        %v4579 = vmul.f32 %v4509, %v4571
        %v4580 = vmul.f32 %v4511, %v4572
        %v4581 = vmul.f32 %v4513, %v4573
        %v4582 = vmul.f32 %v4515, %v4574
        %v4583 = vmul.f32 %v4517, %v4575
        %v4584 = vmul.f32 %v4519, %v4576
        %v4585 = vmul.f32 %v4521, %v4577
        %v4594 = vrot.slane %v4578, 4
        %v4595 = vrot.slane %v4579, 4
        %v4596 = vrot.slane %v4580, 4
        %v4597 = vrot.slane %v4581, 4
        %v4598 = vrot.slane %v4582, 4
        %v4599 = vrot.slane %v4583, 4
        %v4600 = vrot.slane %v4584, 4
        %v4601 = vrot.slane %v4585, 4
        %v4610 = vsel %vm2122, %v4594, 0.0
        %v4611 = vrot.slane %v4610, 4
        %v4612 = vadd.f32 %v4610, %v4611
        %v4613 = vrot.slane %v4612, 2
        %v4614 = vadd.f32 %v4612, %v4613
        %v4615 = vrot.slane %v4614, 1
        %v4616 = vadd.f32 %v4614, %v4615
        %v4617 = vsel %vm2122, %v4595, 0.0
        %v4618 = vrot.slane %v4617, 4
        %v4619 = vadd.f32 %v4617, %v4618
        %v4620 = vrot.slane %v4619, 2
        %v4621 = vadd.f32 %v4619, %v4620
        %v4622 = vrot.slane %v4621, 1
        %v4623 = vadd.f32 %v4621, %v4622
        %v4624 = vsel %vm2122, %v4596, 0.0
        %v4625 = vrot.slane %v4624, 4
        %v4626 = vadd.f32 %v4624, %v4625
        %v4627 = vrot.slane %v4626, 2
        %v4628 = vadd.f32 %v4626, %v4627
        %v4629 = vrot.slane %v4628, 1
        %v4630 = vadd.f32 %v4628, %v4629
        %v4631 = vsel %vm2122, %v4597, 0.0
        %v4632 = vrot.slane %v4631, 4
        %v4633 = vadd.f32 %v4631, %v4632
        %v4634 = vrot.slane %v4633, 2
        %v4635 = vadd.f32 %v4633, %v4634
        %v4636 = vrot.slane %v4635, 1
        %v4637 = vadd.f32 %v4635, %v4636
        %v4638 = vsel %vm2122, %v4598, 0.0
        %v4639 = vrot.slane %v4638, 4
        %v4640 = vadd.f32 %v4638, %v4639
        %v4641 = vrot.slane %v4640, 2
        %v4642 = vadd.f32 %v4640, %v4641
        %v4643 = vrot.slane %v4642, 1
        %v4644 = vadd.f32 %v4642, %v4643
        %v4645 = vsel %vm2122, %v4599, 0.0
        %v4646 = vrot.slane %v4645, 4
        %v4647 = vadd.f32 %v4645, %v4646
        %v4648 = vrot.slane %v4647, 2
        %v4649 = vadd.f32 %v4647, %v4648
        %v4650 = vrot.slane %v4649, 1
        %v4651 = vadd.f32 %v4649, %v4650
        %v4652 = vsel %vm2122, %v4600, 0.0
        %v4653 = vrot.slane %v4652, 4
        %v4654 = vadd.f32 %v4652, %v4653
        %v4655 = vrot.slane %v4654, 2
        %v4656 = vadd.f32 %v4654, %v4655
        %v4657 = vrot.slane %v4656, 1
        %v4658 = vadd.f32 %v4656, %v4657
        %v4659 = vsel %vm2122, %v4601, 0.0
        %v4660 = vrot.slane %v4659, 4
        %v4661 = vadd.f32 %v4659, %v4660
        %v4662 = vrot.slane %v4661, 2
        %v4663 = vadd.f32 %v4661, %v4662
        %v4664 = vrot.slane %v4663, 1
        %v4665 = vadd.f32 %v4663, %v4664
        %v4666 = vadd.f32 %v743, %v3769
        %v4667 = vadd.f32 %v745, %v3769
        %v4668 = vadd.f32 %v832, %v3769
        %v4669 = vadd.f32 %v834, %v3769
        %v4670 = vadd.f32 %v921, %v3769
        %v4671 = vadd.f32 %v923, %v3769
        %v4672 = vadd.f32 %v1010, %v3769
        %v4673 = vadd.f32 %v1012, %v3769
        %v4674 = vadd.f32 %v749, %v3774
        %v4675 = vadd.f32 %v751, %v3774
        %v4676 = vadd.f32 %v838, %v3774
        %v4677 = vadd.f32 %v840, %v3774
        %v4678 = vadd.f32 %v927, %v3774
        %v4679 = vadd.f32 %v929, %v3774
        %v4680 = vadd.f32 %v1016, %v3774
        %v4681 = vadd.f32 %v1018, %v3774
        %v4682 = vlaneseq
        %v4683 = vshrl.u32 %v4682, 7
        %v4684 = vsub.s32 4, %v4683
        %v4685 = vrot.slane %v4578, %v4684
        %v4686 = vlaneseq
        %v4687 = vshrl.u32 %v4686, 7
        %v4688 = vsub.s32 4, %v4687
        %v4689 = vrot.slane %v4579, %v4688
        %v4690 = vlaneseq
        %v4691 = vshrl.u32 %v4690, 7
        %v4692 = vsub.s32 4, %v4691
        %v4693 = vrot.slane %v4580, %v4692
        %v4694 = vlaneseq
        %v4695 = vshrl.u32 %v4694, 7
        %v4696 = vsub.s32 4, %v4695
        %v4697 = vrot.slane %v4581, %v4696
        %v4698 = vlaneseq
        %v4699 = vshrl.u32 %v4698, 7
        %v4700 = vsub.s32 4, %v4699
        %v4701 = vrot.slane %v4582, %v4700
        %v4702 = vlaneseq
        %v4703 = vshrl.u32 %v4702, 7
        %v4704 = vsub.s32 4, %v4703
        %v4705 = vrot.slane %v4583, %v4704
        %v4706 = vlaneseq
        %v4707 = vshrl.u32 %v4706, 7
        %v4708 = vsub.s32 4, %v4707
        %v4709 = vrot.slane %v4584, %v4708
        %v4710 = vlaneseq
        %v4711 = vshrl.u32 %v4710, 7
        %v4712 = vsub.s32 4, %v4711
        %v4713 = vrot.slane %v4585, %v4712
        %v4714 = vmul.f32 %v3795, %v4685
        %v4715 = vmul.f32 %v3795, %v4689
        %v4716 = vmul.f32 %v3795, %v4693
        %v4717 = vmul.f32 %v3795, %v4697
        %v4718 = vmul.f32 %v3795, %v4701
        %v4719 = vmul.f32 %v3795, %v4705
        %v4720 = vmul.f32 %v3795, %v4709
        %v4721 = vmul.f32 %v3795, %v4713
        %v4722 = vmul.f32 %v3800, %v4685
        %v4723 = vmul.f32 %v3800, %v4689
        %v4724 = vmul.f32 %v3800, %v4693
        %v4725 = vmul.f32 %v3800, %v4697
        %v4726 = vmul.f32 %v3800, %v4701
        %v4727 = vmul.f32 %v3800, %v4705
        %v4728 = vmul.f32 %v3800, %v4709
        %v4729 = vmul.f32 %v3800, %v4713
        %v4730 = vadd.f32 %v4666, %v4714
        %v4731 = vadd.f32 %v4667, %v4715
        %v4732 = vadd.f32 %v4668, %v4716
        %v4733 = vadd.f32 %v4669, %v4717
        %v4734 = vadd.f32 %v4670, %v4718
        %v4735 = vadd.f32 %v4671, %v4719
        %v4736 = vadd.f32 %v4672, %v4720
        %v4737 = vadd.f32 %v4673, %v4721
        %v4738 = vadd.f32 %v4674, %v4722
        %v4739 = vadd.f32 %v4675, %v4723
        %v4740 = vadd.f32 %v4676, %v4724
        %v4741 = vadd.f32 %v4677, %v4725
        %v4742 = vadd.f32 %v4678, %v4726
        %v4743 = vadd.f32 %v4679, %v4727
        %v4744 = vadd.f32 %v4680, %v4728
        %v4745 = vadd.f32 %v4681, %v4729
        %v4746 = vlaneseq
        %v4747 = vshrl.u32 %v4746, 7
        %v4748 = vsub.s32 5, %v4747
        %v4749 = vrot.slane %v4578, %v4748
        %v4750 = vlaneseq
        %v4751 = vshrl.u32 %v4750, 7
        %v4752 = vsub.s32 5, %v4751
        %v4753 = vrot.slane %v4579, %v4752
        %v4754 = vlaneseq
        %v4755 = vshrl.u32 %v4754, 7
        %v4756 = vsub.s32 5, %v4755
        %v4757 = vrot.slane %v4580, %v4756
        %v4758 = vlaneseq
        %v4759 = vshrl.u32 %v4758, 7
        %v4760 = vsub.s32 5, %v4759
        %v4761 = vrot.slane %v4581, %v4760
        %v4762 = vlaneseq
        %v4763 = vshrl.u32 %v4762, 7
        %v4764 = vsub.s32 5, %v4763
        %v4765 = vrot.slane %v4582, %v4764
        %v4766 = vlaneseq
        %v4767 = vshrl.u32 %v4766, 7
        %v4768 = vsub.s32 5, %v4767
        %v4769 = vrot.slane %v4583, %v4768
        %v4770 = vlaneseq
        %v4771 = vshrl.u32 %v4770, 7
        %v4772 = vsub.s32 5, %v4771
        %v4773 = vrot.slane %v4584, %v4772
        %v4774 = vlaneseq
        %v4775 = vshrl.u32 %v4774, 7
        %v4776 = vsub.s32 5, %v4775
        %v4777 = vrot.slane %v4585, %v4776
        %v4778 = vmul.f32 %v3822, %v4749
        %v4779 = vmul.f32 %v3822, %v4753
        %v4780 = vmul.f32 %v3822, %v4757
        %v4781 = vmul.f32 %v3822, %v4761
        %v4782 = vmul.f32 %v3822, %v4765
        %v4783 = vmul.f32 %v3822, %v4769
        %v4784 = vmul.f32 %v3822, %v4773
        %v4785 = vmul.f32 %v3822, %v4777
        %v4786 = vmul.f32 %v3826, %v4749
        %v4787 = vmul.f32 %v3826, %v4753
        %v4788 = vmul.f32 %v3826, %v4757
        %v4789 = vmul.f32 %v3826, %v4761
        %v4790 = vmul.f32 %v3826, %v4765
        %v4791 = vmul.f32 %v3826, %v4769
        %v4792 = vmul.f32 %v3826, %v4773
        %v4793 = vmul.f32 %v3826, %v4777
        %v4794 = vadd.f32 %v4730, %v4778
        %v4795 = vadd.f32 %v4731, %v4779
        %v4796 = vadd.f32 %v4732, %v4780
        %v4797 = vadd.f32 %v4733, %v4781
        %v4798 = vadd.f32 %v4734, %v4782
        %v4799 = vadd.f32 %v4735, %v4783
        %v4800 = vadd.f32 %v4736, %v4784
        %v4801 = vadd.f32 %v4737, %v4785
        %v4802 = vadd.f32 %v4738, %v4786
        %v4803 = vadd.f32 %v4739, %v4787
        %v4804 = vadd.f32 %v4740, %v4788
        %v4805 = vadd.f32 %v4741, %v4789
        %v4806 = vadd.f32 %v4742, %v4790
        %v4807 = vadd.f32 %v4743, %v4791
        %v4808 = vadd.f32 %v4744, %v4792
        %v4809 = vadd.f32 %v4745, %v4793
        %v4810 = vlaneseq
        %v4811 = vshrl.u32 %v4810, 7
        %v4812 = vsub.s32 6, %v4811
        %v4813 = vrot.slane %v4578, %v4812
        %v4814 = vlaneseq
        %v4815 = vshrl.u32 %v4814, 7
        %v4816 = vsub.s32 6, %v4815
        %v4817 = vrot.slane %v4579, %v4816
        %v4818 = vlaneseq
        %v4819 = vshrl.u32 %v4818, 7
        %v4820 = vsub.s32 6, %v4819
        %v4821 = vrot.slane %v4580, %v4820
        %v4822 = vlaneseq
        %v4823 = vshrl.u32 %v4822, 7
        %v4824 = vsub.s32 6, %v4823
        %v4825 = vrot.slane %v4581, %v4824
        %v4826 = vlaneseq
        %v4827 = vshrl.u32 %v4826, 7
        %v4828 = vsub.s32 6, %v4827
        %v4829 = vrot.slane %v4582, %v4828
        %v4830 = vlaneseq
        %v4831 = vshrl.u32 %v4830, 7
        %v4832 = vsub.s32 6, %v4831
        %v4833 = vrot.slane %v4583, %v4832
        %v4834 = vlaneseq
        %v4835 = vshrl.u32 %v4834, 7
        %v4836 = vsub.s32 6, %v4835
        %v4837 = vrot.slane %v4584, %v4836
        %v4838 = vlaneseq
        %v4839 = vshrl.u32 %v4838, 7
        %v4840 = vsub.s32 6, %v4839
        %v4841 = vrot.slane %v4585, %v4840
        %v4842 = vmul.f32 %v3848, %v4813
        %v4843 = vmul.f32 %v3848, %v4817
        %v4844 = vmul.f32 %v3848, %v4821
        %v4845 = vmul.f32 %v3848, %v4825
        %v4846 = vmul.f32 %v3848, %v4829
        %v4847 = vmul.f32 %v3848, %v4833
        %v4848 = vmul.f32 %v3848, %v4837
        %v4849 = vmul.f32 %v3848, %v4841
        %v4850 = vmul.f32 %v3852, %v4813
        %v4851 = vmul.f32 %v3852, %v4817
        %v4852 = vmul.f32 %v3852, %v4821
        %v4853 = vmul.f32 %v3852, %v4825
        %v4854 = vmul.f32 %v3852, %v4829
        %v4855 = vmul.f32 %v3852, %v4833
        %v4856 = vmul.f32 %v3852, %v4837
        %v4857 = vmul.f32 %v3852, %v4841
        %v4858 = vadd.f32 %v4794, %v4842
        %v4859 = vadd.f32 %v4795, %v4843
        %v4860 = vadd.f32 %v4796, %v4844
        %v4861 = vadd.f32 %v4797, %v4845
        %v4862 = vadd.f32 %v4798, %v4846
        %v4863 = vadd.f32 %v4799, %v4847
        %v4864 = vadd.f32 %v4800, %v4848
        %v4865 = vadd.f32 %v4801, %v4849
        %v4866 = vadd.f32 %v4802, %v4850
        %v4867 = vadd.f32 %v4803, %v4851
        %v4868 = vadd.f32 %v4804, %v4852
        %v4869 = vadd.f32 %v4805, %v4853
        %v4870 = vadd.f32 %v4806, %v4854
        %v4871 = vadd.f32 %v4807, %v4855
        %v4872 = vadd.f32 %v4808, %v4856
        %v4873 = vadd.f32 %v4809, %v4857
        %v4874 = vlaneseq
        %v4875 = vshrl.u32 %v4874, 7
        %v4876 = vsub.s32 7, %v4875
        %v4877 = vrot.slane %v4578, %v4876
        %v4878 = vlaneseq
        %v4879 = vshrl.u32 %v4878, 7
        %v4880 = vsub.s32 7, %v4879
        %v4881 = vrot.slane %v4579, %v4880
        %v4882 = vlaneseq
        %v4883 = vshrl.u32 %v4882, 7
        %v4884 = vsub.s32 7, %v4883
        %v4885 = vrot.slane %v4580, %v4884
        %v4886 = vlaneseq
        %v4887 = vshrl.u32 %v4886, 7
        %v4888 = vsub.s32 7, %v4887
        %v4889 = vrot.slane %v4581, %v4888
        %v4890 = vlaneseq
        %v4891 = vshrl.u32 %v4890, 7
        %v4892 = vsub.s32 7, %v4891
        %v4893 = vrot.slane %v4582, %v4892
        %v4894 = vlaneseq
        %v4895 = vshrl.u32 %v4894, 7
        %v4896 = vsub.s32 7, %v4895
        %v4897 = vrot.slane %v4583, %v4896
        %v4898 = vlaneseq
        %v4899 = vshrl.u32 %v4898, 7
        %v4900 = vsub.s32 7, %v4899
        %v4901 = vrot.slane %v4584, %v4900
        %v4902 = vlaneseq
        %v4903 = vshrl.u32 %v4902, 7
        %v4904 = vsub.s32 7, %v4903
        %v4905 = vrot.slane %v4585, %v4904
        %v4906 = vmul.f32 %v3874, %v4877
        %v4907 = vmul.f32 %v3874, %v4881
        %v4908 = vmul.f32 %v3874, %v4885
        %v4909 = vmul.f32 %v3874, %v4889
        %v4910 = vmul.f32 %v3874, %v4893
        %v4911 = vmul.f32 %v3874, %v4897
        %v4912 = vmul.f32 %v3874, %v4901
        %v4913 = vmul.f32 %v3874, %v4905
        %v4914 = vmul.f32 %v3878, %v4877
        %v4915 = vmul.f32 %v3878, %v4881
        %v4916 = vmul.f32 %v3878, %v4885
        %v4917 = vmul.f32 %v3878, %v4889
        %v4918 = vmul.f32 %v3878, %v4893
        %v4919 = vmul.f32 %v3878, %v4897
        %v4920 = vmul.f32 %v3878, %v4901
        %v4921 = vmul.f32 %v3878, %v4905
        %v4922 = vadd.f32 %v4858, %v4906
        %v4923 = vadd.f32 %v4859, %v4907
        %v4924 = vadd.f32 %v4860, %v4908
        %v4925 = vadd.f32 %v4861, %v4909
        %v4926 = vadd.f32 %v4862, %v4910
        %v4927 = vadd.f32 %v4863, %v4911
        %v4928 = vadd.f32 %v4864, %v4912
        %v4929 = vadd.f32 %v4865, %v4913
        %v4930 = vadd.f32 %v4866, %v4914
        %v4931 = vadd.f32 %v4867, %v4915
        %v4932 = vadd.f32 %v4868, %v4916
        %v4933 = vadd.f32 %v4869, %v4917
        %v4934 = vadd.f32 %v4870, %v4918
        %v4935 = vadd.f32 %v4871, %v4919
        %v4936 = vadd.f32 %v4872, %v4920
        %v4937 = vadd.f32 %v4873, %v4921
        %v4938 = vxor.u32 %v4922, 2147483648
        %v4939 = vxor.u32 %v4923, 2147483648
        %v4940 = vxor.u32 %v4924, 2147483648
        %v4941 = vxor.u32 %v4925, 2147483648
        %v4942 = vxor.u32 %v4926, 2147483648
        %v4943 = vxor.u32 %v4927, 2147483648
        %v4944 = vxor.u32 %v4928, 2147483648
        %v4945 = vxor.u32 %v4929, 2147483648
        %v4946 = vmul.f32 %v4938, 1.442695
        %v4947 = vpow.pop %v4946
        %v4948 = vmul.f32 %v4939, 1.442695
        %v4949 = vpow.pop %v4948
        %v4950 = vmul.f32 %v4940, 1.442695
        %v4951 = vpow.pop %v4950
        %v4952 = vmul.f32 %v4941, 1.442695
        %v4953 = vpow.pop %v4952
        %v4954 = vmul.f32 %v4942, 1.442695
        %v4955 = vpow.pop %v4954
        %v4956 = vmul.f32 %v4943, 1.442695
        %v4957 = vpow.pop %v4956
        %v4958 = vmul.f32 %v4944, 1.442695
        %v4959 = vpow.pop %v4958
        %v4960 = vmul.f32 %v4945, 1.442695
        %v4961 = vpow.pop %v4960
        %v4962 = vadd.f32 %v4947, 1.0
        %v4963 = vadd.f32 %v4949, 1.0
        %v4964 = vadd.f32 %v4951, 1.0
        %v4965 = vadd.f32 %v4953, 1.0
        %v4966 = vadd.f32 %v4955, 1.0
        %v4967 = vadd.f32 %v4957, 1.0
        %v4968 = vadd.f32 %v4959, 1.0
        %v4969 = vadd.f32 %v4961, 1.0
        %v4970 = vrcp.pop %v4962
        %v4971 = vmul.f32 1.0, %v4970
        %v4972 = vrcp.pop %v4963
        %v4973 = vmul.f32 1.0, %v4972
        %v4974 = vrcp.pop %v4964
        %v4975 = vmul.f32 1.0, %v4974
        %v4976 = vrcp.pop %v4965
        %v4977 = vmul.f32 1.0, %v4976
        %v4978 = vrcp.pop %v4966
        %v4979 = vmul.f32 1.0, %v4978
        %v4980 = vrcp.pop %v4967
        %v4981 = vmul.f32 1.0, %v4980
        %v4982 = vrcp.pop %v4968
        %v4983 = vmul.f32 1.0, %v4982
        %v4984 = vrcp.pop %v4969
        %v4985 = vmul.f32 1.0, %v4984
        %v4986 = vtanh.pop %v4930
        %v4987 = vtanh.pop %v4931
        %v4988 = vtanh.pop %v4932
        %v4989 = vtanh.pop %v4933
        %v4990 = vtanh.pop %v4934
        %v4991 = vtanh.pop %v4935
        %v4992 = vtanh.pop %v4936
        %v4993 = vtanh.pop %v4937
        %v4994 = vxor.u32 %v4930, 2147483648
        %v4995 = vxor.u32 %v4931, 2147483648
        %v4996 = vxor.u32 %v4932, 2147483648
        %v4997 = vxor.u32 %v4933, 2147483648
        %v4998 = vxor.u32 %v4934, 2147483648
        %v4999 = vxor.u32 %v4935, 2147483648
        %v5000 = vxor.u32 %v4936, 2147483648
        %v5001 = vxor.u32 %v4937, 2147483648
        %v5002 = vmul.f32 %v4994, 1.442695
        %v5003 = vpow.pop %v5002
        %v5004 = vmul.f32 %v4995, 1.442695
        %v5005 = vpow.pop %v5004
        %v5006 = vmul.f32 %v4996, 1.442695
        %v5007 = vpow.pop %v5006
        %v5008 = vmul.f32 %v4997, 1.442695
        %v5009 = vpow.pop %v5008
        %v5010 = vmul.f32 %v4998, 1.442695
        %v5011 = vpow.pop %v5010
        %v5012 = vmul.f32 %v4999, 1.442695
        %v5013 = vpow.pop %v5012
        %v5014 = vmul.f32 %v5000, 1.442695
        %v5015 = vpow.pop %v5014
        %v5016 = vmul.f32 %v5001, 1.442695
        %v5017 = vpow.pop %v5016
        %v5018 = vadd.f32 %v5003, 1.0
        %v5019 = vadd.f32 %v5005, 1.0
        %v5020 = vadd.f32 %v5007, 1.0
        %v5021 = vadd.f32 %v5009, 1.0
        %v5022 = vadd.f32 %v5011, 1.0
        %v5023 = vadd.f32 %v5013, 1.0
        %v5024 = vadd.f32 %v5015, 1.0
        %v5025 = vadd.f32 %v5017, 1.0
        %v5026 = vrcp.pop %v5018
        %v5027 = vmul.f32 1.0, %v5026
        %v5028 = vrcp.pop %v5019
        %v5029 = vmul.f32 1.0, %v5028
        %v5030 = vrcp.pop %v5020
        %v5031 = vmul.f32 1.0, %v5030
        %v5032 = vrcp.pop %v5021
        %v5033 = vmul.f32 1.0, %v5032
        %v5034 = vrcp.pop %v5022
        %v5035 = vmul.f32 1.0, %v5034
        %v5036 = vrcp.pop %v5023
        %v5037 = vmul.f32 1.0, %v5036
        %v5038 = vrcp.pop %v5024
        %v5039 = vmul.f32 1.0, %v5038
        %v5040 = vrcp.pop %v5025
        %v5041 = vmul.f32 1.0, %v5040
        %v5042 = vmul.f32 %v4971, %v4562
        %v5043 = vmul.f32 %v4973, %v4563
        %v5044 = vmul.f32 %v4975, %v4564
        %v5045 = vmul.f32 %v4977, %v4565
        %v5046 = vmul.f32 %v4979, %v4566
        %v5047 = vmul.f32 %v4981, %v4567
        %v5048 = vmul.f32 %v4983, %v4568
        %v5049 = vmul.f32 %v4985, %v4569
        %v5050 = vmul.f32 %v4971, %v4986
        %v5051 = vmul.f32 %v4973, %v4987
        %v5052 = vmul.f32 %v4975, %v4988
        %v5053 = vmul.f32 %v4977, %v4989
        %v5054 = vmul.f32 %v4979, %v4990
        %v5055 = vmul.f32 %v4981, %v4991
        %v5056 = vmul.f32 %v4983, %v4992
        %v5057 = vmul.f32 %v4985, %v4993
        %v5066 = vrot.slane %v5050, 4
        %v5067 = vrot.slane %v5051, 4
        %v5068 = vrot.slane %v5052, 4
        %v5069 = vrot.slane %v5053, 4
        %v5070 = vrot.slane %v5054, 4
        %v5071 = vrot.slane %v5055, 4
        %v5072 = vrot.slane %v5056, 4
        %v5073 = vrot.slane %v5057, 4
        %v5082 = vadd.f32 %v5042, %v5066
        %v5083 = vadd.f32 %v5043, %v5067
        %v5084 = vadd.f32 %v5044, %v5068
        %v5085 = vadd.f32 %v5045, %v5069
        %v5086 = vadd.f32 %v5046, %v5070
        %v5087 = vadd.f32 %v5047, %v5071
        %v5088 = vadd.f32 %v5048, %v5072
        %v5089 = vadd.f32 %v5049, %v5073
        %v5090 = vtanh.pop %v5082
        %v5091 = vtanh.pop %v5083
        %v5092 = vtanh.pop %v5084
        %v5093 = vtanh.pop %v5085
        %v5094 = vtanh.pop %v5086
        %v5095 = vtanh.pop %v5087
        %v5096 = vtanh.pop %v5088
        %v5097 = vtanh.pop %v5089
        %v5098 = vmul.f32 %v5027, %v5090
        %v5099 = vmul.f32 %v5029, %v5091
        %v5100 = vmul.f32 %v5031, %v5092
        %v5101 = vmul.f32 %v5033, %v5093
        %v5102 = vmul.f32 %v5035, %v5094
        %v5103 = vmul.f32 %v5037, %v5095
        %v5104 = vmul.f32 %v5039, %v5096
        %v5105 = vmul.f32 %v5041, %v5097
        %v5114 = vrot.slane %v5098, 4
        %v5115 = vrot.slane %v5099, 4
        %v5116 = vrot.slane %v5100, 4
        %v5117 = vrot.slane %v5101, 4
        %v5118 = vrot.slane %v5102, 4
        %v5119 = vrot.slane %v5103, 4
        %v5120 = vrot.slane %v5104, 4
        %v5121 = vrot.slane %v5105, 4
        %v5130 = vsel %vm2122, %v5114, 0.0
        %v5131 = vrot.slane %v5130, 4
        %v5132 = vadd.f32 %v5130, %v5131
        %v5133 = vrot.slane %v5132, 2
        %v5134 = vadd.f32 %v5132, %v5133
        %v5135 = vrot.slane %v5134, 1
        %v5136 = vadd.f32 %v5134, %v5135
        %v5137 = vsel %vm2122, %v5115, 0.0
        %v5138 = vrot.slane %v5137, 4
        %v5139 = vadd.f32 %v5137, %v5138
        %v5140 = vrot.slane %v5139, 2
        %v5141 = vadd.f32 %v5139, %v5140
        %v5142 = vrot.slane %v5141, 1
        %v5143 = vadd.f32 %v5141, %v5142
        %v5144 = vsel %vm2122, %v5116, 0.0
        %v5145 = vrot.slane %v5144, 4
        %v5146 = vadd.f32 %v5144, %v5145
        %v5147 = vrot.slane %v5146, 2
        %v5148 = vadd.f32 %v5146, %v5147
        %v5149 = vrot.slane %v5148, 1
        %v5150 = vadd.f32 %v5148, %v5149
        %v5151 = vsel %vm2122, %v5117, 0.0
        %v5152 = vrot.slane %v5151, 4
        %v5153 = vadd.f32 %v5151, %v5152
        %v5154 = vrot.slane %v5153, 2
        %v5155 = vadd.f32 %v5153, %v5154
        %v5156 = vrot.slane %v5155, 1
        %v5157 = vadd.f32 %v5155, %v5156
        %v5158 = vsel %vm2122, %v5118, 0.0
        %v5159 = vrot.slane %v5158, 4
        %v5160 = vadd.f32 %v5158, %v5159
        %v5161 = vrot.slane %v5160, 2
        %v5162 = vadd.f32 %v5160, %v5161
        %v5163 = vrot.slane %v5162, 1
        %v5164 = vadd.f32 %v5162, %v5163
        %v5165 = vsel %vm2122, %v5119, 0.0
        %v5166 = vrot.slane %v5165, 4
        %v5167 = vadd.f32 %v5165, %v5166
        %v5168 = vrot.slane %v5167, 2
        %v5169 = vadd.f32 %v5167, %v5168
        %v5170 = vrot.slane %v5169, 1
        %v5171 = vadd.f32 %v5169, %v5170
        %v5172 = vsel %vm2122, %v5120, 0.0
        %v5173 = vrot.slane %v5172, 4
        %v5174 = vadd.f32 %v5172, %v5173
        %v5175 = vrot.slane %v5174, 2
        %v5176 = vadd.f32 %v5174, %v5175
        %v5177 = vrot.slane %v5176, 1
        %v5178 = vadd.f32 %v5176, %v5177
        %v5179 = vsel %vm2122, %v5121, 0.0
        %v5180 = vrot.slane %v5179, 4
        %v5181 = vadd.f32 %v5179, %v5180
        %v5182 = vrot.slane %v5181, 2
        %v5183 = vadd.f32 %v5181, %v5182
        %v5184 = vrot.slane %v5183, 1
        %v5185 = vadd.f32 %v5183, %v5184
        %v5186 = vadd.f32 %v354, %v3769
        %v5187 = vadd.f32 %v356, %v3769
        %v5188 = vadd.f32 %v443, %v3769
        %v5189 = vadd.f32 %v445, %v3769
        %v5190 = vadd.f32 %v532, %v3769
        %v5191 = vadd.f32 %v534, %v3769
        %v5192 = vadd.f32 %v621, %v3769
        %v5193 = vadd.f32 %v623, %v3769
        %v5194 = vadd.f32 %v360, %v3774
        %v5195 = vadd.f32 %v362, %v3774
        %v5196 = vadd.f32 %v449, %v3774
        %v5197 = vadd.f32 %v451, %v3774
        %v5198 = vadd.f32 %v538, %v3774
        %v5199 = vadd.f32 %v540, %v3774
        %v5200 = vadd.f32 %v627, %v3774
        %v5201 = vadd.f32 %v629, %v3774
        %v5202 = vlaneseq
        %v5203 = vshrl.u32 %v5202, 7
        %v5204 = vsub.s32 4, %v5203
        %v5205 = vrot.slane %v5098, %v5204
        %v5206 = vlaneseq
        %v5207 = vshrl.u32 %v5206, 7
        %v5208 = vsub.s32 4, %v5207
        %v5209 = vrot.slane %v5099, %v5208
        %v5210 = vlaneseq
        %v5211 = vshrl.u32 %v5210, 7
        %v5212 = vsub.s32 4, %v5211
        %v5213 = vrot.slane %v5100, %v5212
        %v5214 = vlaneseq
        %v5215 = vshrl.u32 %v5214, 7
        %v5216 = vsub.s32 4, %v5215
        %v5217 = vrot.slane %v5101, %v5216
        %v5218 = vlaneseq
        %v5219 = vshrl.u32 %v5218, 7
        %v5220 = vsub.s32 4, %v5219
        %v5221 = vrot.slane %v5102, %v5220
        %v5222 = vlaneseq
        %v5223 = vshrl.u32 %v5222, 7
        %v5224 = vsub.s32 4, %v5223
        %v5225 = vrot.slane %v5103, %v5224
        %v5226 = vlaneseq
        %v5227 = vshrl.u32 %v5226, 7
        %v5228 = vsub.s32 4, %v5227
        %v5229 = vrot.slane %v5104, %v5228
        %v5230 = vlaneseq
        %v5231 = vshrl.u32 %v5230, 7
        %v5232 = vsub.s32 4, %v5231
        %v5233 = vrot.slane %v5105, %v5232
        %v5234 = vmul.f32 %v3795, %v5205
        %v5235 = vmul.f32 %v3795, %v5209
        %v5236 = vmul.f32 %v3795, %v5213
        %v5237 = vmul.f32 %v3795, %v5217
        %v5238 = vmul.f32 %v3795, %v5221
        %v5239 = vmul.f32 %v3795, %v5225
        %v5240 = vmul.f32 %v3795, %v5229
        %v5241 = vmul.f32 %v3795, %v5233
        %v5242 = vmul.f32 %v3800, %v5205
        %v5243 = vmul.f32 %v3800, %v5209
        %v5244 = vmul.f32 %v3800, %v5213
        %v5245 = vmul.f32 %v3800, %v5217
        %v5246 = vmul.f32 %v3800, %v5221
        %v5247 = vmul.f32 %v3800, %v5225
        %v5248 = vmul.f32 %v3800, %v5229
        %v5249 = vmul.f32 %v3800, %v5233
        %v5250 = vadd.f32 %v5186, %v5234
        %v5251 = vadd.f32 %v5187, %v5235
        %v5252 = vadd.f32 %v5188, %v5236
        %v5253 = vadd.f32 %v5189, %v5237
        %v5254 = vadd.f32 %v5190, %v5238
        %v5255 = vadd.f32 %v5191, %v5239
        %v5256 = vadd.f32 %v5192, %v5240
        %v5257 = vadd.f32 %v5193, %v5241
        %v5258 = vadd.f32 %v5194, %v5242
        %v5259 = vadd.f32 %v5195, %v5243
        %v5260 = vadd.f32 %v5196, %v5244
        %v5261 = vadd.f32 %v5197, %v5245
        %v5262 = vadd.f32 %v5198, %v5246
        %v5263 = vadd.f32 %v5199, %v5247
        %v5264 = vadd.f32 %v5200, %v5248
        %v5265 = vadd.f32 %v5201, %v5249
        %v5266 = vlaneseq
        %v5267 = vshrl.u32 %v5266, 7
        %v5268 = vsub.s32 5, %v5267
        %v5269 = vrot.slane %v5098, %v5268
        %v5270 = vlaneseq
        %v5271 = vshrl.u32 %v5270, 7
        %v5272 = vsub.s32 5, %v5271
        %v5273 = vrot.slane %v5099, %v5272
        %v5274 = vlaneseq
        %v5275 = vshrl.u32 %v5274, 7
        %v5276 = vsub.s32 5, %v5275
        %v5277 = vrot.slane %v5100, %v5276
        %v5278 = vlaneseq
        %v5279 = vshrl.u32 %v5278, 7
        %v5280 = vsub.s32 5, %v5279
        %v5281 = vrot.slane %v5101, %v5280
        %v5282 = vlaneseq
        %v5283 = vshrl.u32 %v5282, 7
        %v5284 = vsub.s32 5, %v5283
        %v5285 = vrot.slane %v5102, %v5284
        %v5286 = vlaneseq
        %v5287 = vshrl.u32 %v5286, 7
        %v5288 = vsub.s32 5, %v5287
        %v5289 = vrot.slane %v5103, %v5288
        %v5290 = vlaneseq
        %v5291 = vshrl.u32 %v5290, 7
        %v5292 = vsub.s32 5, %v5291
        %v5293 = vrot.slane %v5104, %v5292
        %v5294 = vlaneseq
        %v5295 = vshrl.u32 %v5294, 7
        %v5296 = vsub.s32 5, %v5295
        %v5297 = vrot.slane %v5105, %v5296
        %v5298 = vmul.f32 %v3822, %v5269
        %v5299 = vmul.f32 %v3822, %v5273
        %v5300 = vmul.f32 %v3822, %v5277
        %v5301 = vmul.f32 %v3822, %v5281
        %v5302 = vmul.f32 %v3822, %v5285
        %v5303 = vmul.f32 %v3822, %v5289
        %v5304 = vmul.f32 %v3822, %v5293
        %v5305 = vmul.f32 %v3822, %v5297
        %v5306 = vmul.f32 %v3826, %v5269
        %v5307 = vmul.f32 %v3826, %v5273
        %v5308 = vmul.f32 %v3826, %v5277
        %v5309 = vmul.f32 %v3826, %v5281
        %v5310 = vmul.f32 %v3826, %v5285
        %v5311 = vmul.f32 %v3826, %v5289
        %v5312 = vmul.f32 %v3826, %v5293
        %v5313 = vmul.f32 %v3826, %v5297
        %v5314 = vadd.f32 %v5250, %v5298
        %v5315 = vadd.f32 %v5251, %v5299
        %v5316 = vadd.f32 %v5252, %v5300
        %v5317 = vadd.f32 %v5253, %v5301
        %v5318 = vadd.f32 %v5254, %v5302
        %v5319 = vadd.f32 %v5255, %v5303
        %v5320 = vadd.f32 %v5256, %v5304
        %v5321 = vadd.f32 %v5257, %v5305
        %v5322 = vadd.f32 %v5258, %v5306
        %v5323 = vadd.f32 %v5259, %v5307
        %v5324 = vadd.f32 %v5260, %v5308
        %v5325 = vadd.f32 %v5261, %v5309
        %v5326 = vadd.f32 %v5262, %v5310
        %v5327 = vadd.f32 %v5263, %v5311
        %v5328 = vadd.f32 %v5264, %v5312
        %v5329 = vadd.f32 %v5265, %v5313
        %v5330 = vlaneseq
        %v5331 = vshrl.u32 %v5330, 7
        %v5332 = vsub.s32 6, %v5331
        %v5333 = vrot.slane %v5098, %v5332
        %v5334 = vlaneseq
        %v5335 = vshrl.u32 %v5334, 7
        %v5336 = vsub.s32 6, %v5335
        %v5337 = vrot.slane %v5099, %v5336
        %v5338 = vlaneseq
        %v5339 = vshrl.u32 %v5338, 7
        %v5340 = vsub.s32 6, %v5339
        %v5341 = vrot.slane %v5100, %v5340
        %v5342 = vlaneseq
        %v5343 = vshrl.u32 %v5342, 7
        %v5344 = vsub.s32 6, %v5343
        %v5345 = vrot.slane %v5101, %v5344
        %v5346 = vlaneseq
        %v5347 = vshrl.u32 %v5346, 7
        %v5348 = vsub.s32 6, %v5347
        %v5349 = vrot.slane %v5102, %v5348
        %v5350 = vlaneseq
        %v5351 = vshrl.u32 %v5350, 7
        %v5352 = vsub.s32 6, %v5351
        %v5353 = vrot.slane %v5103, %v5352
        %v5354 = vlaneseq
        %v5355 = vshrl.u32 %v5354, 7
        %v5356 = vsub.s32 6, %v5355
        %v5357 = vrot.slane %v5104, %v5356
        %v5358 = vlaneseq
        %v5359 = vshrl.u32 %v5358, 7
        %v5360 = vsub.s32 6, %v5359
        %v5361 = vrot.slane %v5105, %v5360
        %v5362 = vmul.f32 %v3848, %v5333
        %v5363 = vmul.f32 %v3848, %v5337
        %v5364 = vmul.f32 %v3848, %v5341
        %v5365 = vmul.f32 %v3848, %v5345
        %v5366 = vmul.f32 %v3848, %v5349
        %v5367 = vmul.f32 %v3848, %v5353
        %v5368 = vmul.f32 %v3848, %v5357
        %v5369 = vmul.f32 %v3848, %v5361
        %v5370 = vmul.f32 %v3852, %v5333
        %v5371 = vmul.f32 %v3852, %v5337
        %v5372 = vmul.f32 %v3852, %v5341
        %v5373 = vmul.f32 %v3852, %v5345
        %v5374 = vmul.f32 %v3852, %v5349
        %v5375 = vmul.f32 %v3852, %v5353
        %v5376 = vmul.f32 %v3852, %v5357
        %v5377 = vmul.f32 %v3852, %v5361
        %v5378 = vadd.f32 %v5314, %v5362
        %v5379 = vadd.f32 %v5315, %v5363
        %v5380 = vadd.f32 %v5316, %v5364
        %v5381 = vadd.f32 %v5317, %v5365
        %v5382 = vadd.f32 %v5318, %v5366
        %v5383 = vadd.f32 %v5319, %v5367
        %v5384 = vadd.f32 %v5320, %v5368
        %v5385 = vadd.f32 %v5321, %v5369
        %v5386 = vadd.f32 %v5322, %v5370
        %v5387 = vadd.f32 %v5323, %v5371
        %v5388 = vadd.f32 %v5324, %v5372
        %v5389 = vadd.f32 %v5325, %v5373
        %v5390 = vadd.f32 %v5326, %v5374
        %v5391 = vadd.f32 %v5327, %v5375
        %v5392 = vadd.f32 %v5328, %v5376
        %v5393 = vadd.f32 %v5329, %v5377
        %v5394 = vlaneseq
        %v5395 = vshrl.u32 %v5394, 7
        %v5396 = vsub.s32 7, %v5395
        %v5397 = vrot.slane %v5098, %v5396
        %v5398 = vlaneseq
        %v5399 = vshrl.u32 %v5398, 7
        %v5400 = vsub.s32 7, %v5399
        %v5401 = vrot.slane %v5099, %v5400
        %v5402 = vlaneseq
        %v5403 = vshrl.u32 %v5402, 7
        %v5404 = vsub.s32 7, %v5403
        %v5405 = vrot.slane %v5100, %v5404
        %v5406 = vlaneseq
        %v5407 = vshrl.u32 %v5406, 7
        %v5408 = vsub.s32 7, %v5407
        %v5409 = vrot.slane %v5101, %v5408
        %v5410 = vlaneseq
        %v5411 = vshrl.u32 %v5410, 7
        %v5412 = vsub.s32 7, %v5411
        %v5413 = vrot.slane %v5102, %v5412
        %v5414 = vlaneseq
        %v5415 = vshrl.u32 %v5414, 7
        %v5416 = vsub.s32 7, %v5415
        %v5417 = vrot.slane %v5103, %v5416
        %v5418 = vlaneseq
        %v5419 = vshrl.u32 %v5418, 7
        %v5420 = vsub.s32 7, %v5419
        %v5421 = vrot.slane %v5104, %v5420
        %v5422 = vlaneseq
        %v5423 = vshrl.u32 %v5422, 7
        %v5424 = vsub.s32 7, %v5423
        %v5425 = vrot.slane %v5105, %v5424
        %v5426 = vmul.f32 %v3874, %v5397
        %v5427 = vmul.f32 %v3874, %v5401
        %v5428 = vmul.f32 %v3874, %v5405
        %v5429 = vmul.f32 %v3874, %v5409
        %v5430 = vmul.f32 %v3874, %v5413
        %v5431 = vmul.f32 %v3874, %v5417
        %v5432 = vmul.f32 %v3874, %v5421
        %v5433 = vmul.f32 %v3874, %v5425
        %v5434 = vmul.f32 %v3878, %v5397
        %v5435 = vmul.f32 %v3878, %v5401
        %v5436 = vmul.f32 %v3878, %v5405
        %v5437 = vmul.f32 %v3878, %v5409
        %v5438 = vmul.f32 %v3878, %v5413
        %v5439 = vmul.f32 %v3878, %v5417
        %v5440 = vmul.f32 %v3878, %v5421
        %v5441 = vmul.f32 %v3878, %v5425
        %v5442 = vadd.f32 %v5378, %v5426
        %v5443 = vadd.f32 %v5379, %v5427
        %v5444 = vadd.f32 %v5380, %v5428
        %v5445 = vadd.f32 %v5381, %v5429
        %v5446 = vadd.f32 %v5382, %v5430
        %v5447 = vadd.f32 %v5383, %v5431
        %v5448 = vadd.f32 %v5384, %v5432
        %v5449 = vadd.f32 %v5385, %v5433
        %v5450 = vadd.f32 %v5386, %v5434
        %v5451 = vadd.f32 %v5387, %v5435
        %v5452 = vadd.f32 %v5388, %v5436
        %v5453 = vadd.f32 %v5389, %v5437
        %v5454 = vadd.f32 %v5390, %v5438
        %v5455 = vadd.f32 %v5391, %v5439
        %v5456 = vadd.f32 %v5392, %v5440
        %v5457 = vadd.f32 %v5393, %v5441
        %v5458 = vxor.u32 %v5442, 2147483648
        %v5459 = vxor.u32 %v5443, 2147483648
        %v5460 = vxor.u32 %v5444, 2147483648
        %v5461 = vxor.u32 %v5445, 2147483648
        %v5462 = vxor.u32 %v5446, 2147483648
        %v5463 = vxor.u32 %v5447, 2147483648
        %v5464 = vxor.u32 %v5448, 2147483648
        %v5465 = vxor.u32 %v5449, 2147483648
        %v5466 = vmul.f32 %v5458, 1.442695
        %v5467 = vpow.pop %v5466
        %v5468 = vmul.f32 %v5459, 1.442695
        %v5469 = vpow.pop %v5468
        %v5470 = vmul.f32 %v5460, 1.442695
        %v5471 = vpow.pop %v5470
        %v5472 = vmul.f32 %v5461, 1.442695
        %v5473 = vpow.pop %v5472
        %v5474 = vmul.f32 %v5462, 1.442695
        %v5475 = vpow.pop %v5474
        %v5476 = vmul.f32 %v5463, 1.442695
        %v5477 = vpow.pop %v5476
        %v5478 = vmul.f32 %v5464, 1.442695
        %v5479 = vpow.pop %v5478
        %v5480 = vmul.f32 %v5465, 1.442695
        %v5481 = vpow.pop %v5480
        %v5482 = vadd.f32 %v5467, 1.0
        %v5483 = vadd.f32 %v5469, 1.0
        %v5484 = vadd.f32 %v5471, 1.0
        %v5485 = vadd.f32 %v5473, 1.0
        %v5486 = vadd.f32 %v5475, 1.0
        %v5487 = vadd.f32 %v5477, 1.0
        %v5488 = vadd.f32 %v5479, 1.0
        %v5489 = vadd.f32 %v5481, 1.0
        %v5490 = vrcp.pop %v5482
        %v5491 = vmul.f32 1.0, %v5490
        %v5492 = vrcp.pop %v5483
        %v5493 = vmul.f32 1.0, %v5492
        %v5494 = vrcp.pop %v5484
        %v5495 = vmul.f32 1.0, %v5494
        %v5496 = vrcp.pop %v5485
        %v5497 = vmul.f32 1.0, %v5496
        %v5498 = vrcp.pop %v5486
        %v5499 = vmul.f32 1.0, %v5498
        %v5500 = vrcp.pop %v5487
        %v5501 = vmul.f32 1.0, %v5500
        %v5502 = vrcp.pop %v5488
        %v5503 = vmul.f32 1.0, %v5502
        %v5504 = vrcp.pop %v5489
        %v5505 = vmul.f32 1.0, %v5504
        %v5506 = vtanh.pop %v5450
        %v5507 = vtanh.pop %v5451
        %v5508 = vtanh.pop %v5452
        %v5509 = vtanh.pop %v5453
        %v5510 = vtanh.pop %v5454
        %v5511 = vtanh.pop %v5455
        %v5512 = vtanh.pop %v5456
        %v5513 = vtanh.pop %v5457
        %v5514 = vxor.u32 %v5450, 2147483648
        %v5515 = vxor.u32 %v5451, 2147483648
        %v5516 = vxor.u32 %v5452, 2147483648
        %v5517 = vxor.u32 %v5453, 2147483648
        %v5518 = vxor.u32 %v5454, 2147483648
        %v5519 = vxor.u32 %v5455, 2147483648
        %v5520 = vxor.u32 %v5456, 2147483648
        %v5521 = vxor.u32 %v5457, 2147483648
        %v5522 = vmul.f32 %v5514, 1.442695
        %v5523 = vpow.pop %v5522
        %v5524 = vmul.f32 %v5515, 1.442695
        %v5525 = vpow.pop %v5524
        %v5526 = vmul.f32 %v5516, 1.442695
        %v5527 = vpow.pop %v5526
        %v5528 = vmul.f32 %v5517, 1.442695
        %v5529 = vpow.pop %v5528
        %v5530 = vmul.f32 %v5518, 1.442695
        %v5531 = vpow.pop %v5530
        %v5532 = vmul.f32 %v5519, 1.442695
        %v5533 = vpow.pop %v5532
        %v5534 = vmul.f32 %v5520, 1.442695
        %v5535 = vpow.pop %v5534
        %v5536 = vmul.f32 %v5521, 1.442695
        %v5537 = vpow.pop %v5536
        %v5538 = vadd.f32 %v5523, 1.0
        %v5539 = vadd.f32 %v5525, 1.0
        %v5540 = vadd.f32 %v5527, 1.0
        %v5541 = vadd.f32 %v5529, 1.0
        %v5542 = vadd.f32 %v5531, 1.0
        %v5543 = vadd.f32 %v5533, 1.0
        %v5544 = vadd.f32 %v5535, 1.0
        %v5545 = vadd.f32 %v5537, 1.0
        %v5546 = vrcp.pop %v5538
        %v5547 = vmul.f32 1.0, %v5546
        %v5548 = vrcp.pop %v5539
        %v5549 = vmul.f32 1.0, %v5548
        %v5550 = vrcp.pop %v5540
        %v5551 = vmul.f32 1.0, %v5550
        %v5552 = vrcp.pop %v5541
        %v5553 = vmul.f32 1.0, %v5552
        %v5554 = vrcp.pop %v5542
        %v5555 = vmul.f32 1.0, %v5554
        %v5556 = vrcp.pop %v5543
        %v5557 = vmul.f32 1.0, %v5556
        %v5558 = vrcp.pop %v5544
        %v5559 = vmul.f32 1.0, %v5558
        %v5560 = vrcp.pop %v5545
        %v5561 = vmul.f32 1.0, %v5560
        %v5562 = vmul.f32 %v5491, %v5082
        %v5563 = vmul.f32 %v5493, %v5083
        %v5564 = vmul.f32 %v5495, %v5084
        %v5565 = vmul.f32 %v5497, %v5085
        %v5566 = vmul.f32 %v5499, %v5086
        %v5567 = vmul.f32 %v5501, %v5087
        %v5568 = vmul.f32 %v5503, %v5088
        %v5569 = vmul.f32 %v5505, %v5089
        %v5570 = vmul.f32 %v5491, %v5506
        %v5571 = vmul.f32 %v5493, %v5507
        %v5572 = vmul.f32 %v5495, %v5508
        %v5573 = vmul.f32 %v5497, %v5509
        %v5574 = vmul.f32 %v5499, %v5510
        %v5575 = vmul.f32 %v5501, %v5511
        %v5576 = vmul.f32 %v5503, %v5512
        %v5577 = vmul.f32 %v5505, %v5513
        %v5586 = vrot.slane %v5570, 4
        %v5587 = vrot.slane %v5571, 4
        %v5588 = vrot.slane %v5572, 4
        %v5589 = vrot.slane %v5573, 4
        %v5590 = vrot.slane %v5574, 4
        %v5591 = vrot.slane %v5575, 4
        %v5592 = vrot.slane %v5576, 4
        %v5593 = vrot.slane %v5577, 4
        %v5602 = vadd.f32 %v5562, %v5586
        %v5603 = vadd.f32 %v5563, %v5587
        %v5604 = vadd.f32 %v5564, %v5588
        %v5605 = vadd.f32 %v5565, %v5589
        %v5606 = vadd.f32 %v5566, %v5590
        %v5607 = vadd.f32 %v5567, %v5591
        %v5608 = vadd.f32 %v5568, %v5592
        %v5609 = vadd.f32 %v5569, %v5593
        %v5610 = vtanh.pop %v5602
        %v5611 = vtanh.pop %v5603
        %v5612 = vtanh.pop %v5604
        %v5613 = vtanh.pop %v5605
        %v5614 = vtanh.pop %v5606
        %v5615 = vtanh.pop %v5607
        %v5616 = vtanh.pop %v5608
        %v5617 = vtanh.pop %v5609
        %v5618 = vmul.f32 %v5547, %v5610
        %v5619 = vmul.f32 %v5549, %v5611
        %v5620 = vmul.f32 %v5551, %v5612
        %v5621 = vmul.f32 %v5553, %v5613
        %v5622 = vmul.f32 %v5555, %v5614
        %v5623 = vmul.f32 %v5557, %v5615
        %v5624 = vmul.f32 %v5559, %v5616
        %v5625 = vmul.f32 %v5561, %v5617
        %v5634 = vrot.slane %v5618, 4
        %v5635 = vrot.slane %v5619, 4
        %v5636 = vrot.slane %v5620, 4
        %v5637 = vrot.slane %v5621, 4
        %v5638 = vrot.slane %v5622, 4
        %v5639 = vrot.slane %v5623, 4
        %v5640 = vrot.slane %v5624, 4
        %v5641 = vrot.slane %v5625, 4
        %v5650 = vsel %vm2122, %v5634, 0.0
        %v5651 = vrot.slane %v5650, 4
        %v5652 = vadd.f32 %v5650, %v5651
        %v5653 = vrot.slane %v5652, 2
        %v5654 = vadd.f32 %v5652, %v5653
        %v5655 = vrot.slane %v5654, 1
        %v5656 = vadd.f32 %v5654, %v5655
        %v5657 = vsel %vm2122, %v5635, 0.0
        %v5658 = vrot.slane %v5657, 4
        %v5659 = vadd.f32 %v5657, %v5658
        %v5660 = vrot.slane %v5659, 2
        %v5661 = vadd.f32 %v5659, %v5660
        %v5662 = vrot.slane %v5661, 1
        %v5663 = vadd.f32 %v5661, %v5662
        %v5664 = vsel %vm2122, %v5636, 0.0
        %v5665 = vrot.slane %v5664, 4
        %v5666 = vadd.f32 %v5664, %v5665
        %v5667 = vrot.slane %v5666, 2
        %v5668 = vadd.f32 %v5666, %v5667
        %v5669 = vrot.slane %v5668, 1
        %v5670 = vadd.f32 %v5668, %v5669
        %v5671 = vsel %vm2122, %v5637, 0.0
        %v5672 = vrot.slane %v5671, 4
        %v5673 = vadd.f32 %v5671, %v5672
        %v5674 = vrot.slane %v5673, 2
        %v5675 = vadd.f32 %v5673, %v5674
        %v5676 = vrot.slane %v5675, 1
        %v5677 = vadd.f32 %v5675, %v5676
        %v5678 = vsel %vm2122, %v5638, 0.0
        %v5679 = vrot.slane %v5678, 4
        %v5680 = vadd.f32 %v5678, %v5679
        %v5681 = vrot.slane %v5680, 2
        %v5682 = vadd.f32 %v5680, %v5681
        %v5683 = vrot.slane %v5682, 1
        %v5684 = vadd.f32 %v5682, %v5683
        %v5685 = vsel %vm2122, %v5639, 0.0
        %v5686 = vrot.slane %v5685, 4
        %v5687 = vadd.f32 %v5685, %v5686
        %v5688 = vrot.slane %v5687, 2
        %v5689 = vadd.f32 %v5687, %v5688
        %v5690 = vrot.slane %v5689, 1
        %v5691 = vadd.f32 %v5689, %v5690
        %v5692 = vsel %vm2122, %v5640, 0.0
        %v5693 = vrot.slane %v5692, 4
        %v5694 = vadd.f32 %v5692, %v5693
        %v5695 = vrot.slane %v5694, 2
        %v5696 = vadd.f32 %v5694, %v5695
        %v5697 = vrot.slane %v5696, 1
        %v5698 = vadd.f32 %v5696, %v5697
        %v5699 = vsel %vm2122, %v5641, 0.0
        %v5700 = vrot.slane %v5699, 4
        %v5701 = vadd.f32 %v5699, %v5700
        %v5702 = vrot.slane %v5701, 2
        %v5703 = vadd.f32 %v5701, %v5702
        %v5704 = vrot.slane %v5703, 1
        %v5705 = vadd.f32 %v5703, %v5704
        %v5706 = vsel %vm3739, %v5656, %v5136
        %v5707 = vsel %vm3739, %v5663, %v5143
        %v5708 = vsel %vm3739, %v5670, %v5150
        %v5709 = vsel %vm3739, %v5677, %v5157
        %v5710 = vsel %vm3739, %v5684, %v5164
        %v5711 = vsel %vm3739, %v5691, %v5171
        %v5712 = vsel %vm3739, %v5698, %v5178
        %v5713 = vsel %vm3739, %v5705, %v5185
        %v5714 = vsel %vm3748, %v5706, %v4616
        %v5715 = vsel %vm3748, %v5707, %v4623
        %v5716 = vsel %vm3748, %v5708, %v4630
        %v5717 = vsel %vm3748, %v5709, %v4637
        %v5718 = vsel %vm3748, %v5710, %v4644
        %v5719 = vsel %vm3748, %v5711, %v4651
        %v5720 = vsel %vm3748, %v5712, %v4658
        %v5721 = vsel %vm3748, %v5713, %v4665
        %v5722 = vsel %vm3757, %v5714, %v4096
        %v5723 = vsel %vm3757, %v5715, %v4103
        %v5724 = vsel %vm3757, %v5716, %v4110
        %v5725 = vsel %vm3757, %v5717, %v4117
        %v5726 = vsel %vm3757, %v5718, %v4124
        %v5727 = vsel %vm3757, %v5719, %v4131
        %v5728 = vsel %vm3757, %v5720, %v4138
        %v5729 = vsel %vm3757, %v5721, %v4145
        %v5730 = vadd.f32 %v3758, %v5722
        %v5731 = vadd.f32 %v3759, %v5723
        %v5732 = vadd.f32 %v3760, %v5724
        %v5733 = vadd.f32 %v3761, %v5725
        %v5734 = vadd.f32 %v3762, %v5726
        %v5735 = vadd.f32 %v3763, %v5727
        %v5736 = vadd.f32 %v3764, %v5728
        %v5737 = vadd.f32 %v3765, %v5729
        %v5738 = vsel %vm2122, %v5730, -inf
        %v5739 = vrot.slane %v5738, 4
        %v5740 = vmax.f32 %v5738, %v5739
        %v5741 = vrot.slane %v5740, 2
        %v5742 = vmax.f32 %v5740, %v5741
        %v5743 = vrot.slane %v5742, 1
        %v5744 = vmax.f32 %v5742, %v5743
        %v5745 = vsel %vm2122, %v5731, -inf
        %v5746 = vrot.slane %v5745, 4
        %v5747 = vmax.f32 %v5745, %v5746
        %v5748 = vrot.slane %v5747, 2
        %v5749 = vmax.f32 %v5747, %v5748
        %v5750 = vrot.slane %v5749, 1
        %v5751 = vmax.f32 %v5749, %v5750
        %v5752 = vsel %vm2122, %v5732, -inf
        %v5753 = vrot.slane %v5752, 4
        %v5754 = vmax.f32 %v5752, %v5753
        %v5755 = vrot.slane %v5754, 2
        %v5756 = vmax.f32 %v5754, %v5755
        %v5757 = vrot.slane %v5756, 1
        %v5758 = vmax.f32 %v5756, %v5757
        %v5759 = vsel %vm2122, %v5733, -inf
        %v5760 = vrot.slane %v5759, 4
        %v5761 = vmax.f32 %v5759, %v5760
        %v5762 = vrot.slane %v5761, 2
        %v5763 = vmax.f32 %v5761, %v5762
        %v5764 = vrot.slane %v5763, 1
        %v5765 = vmax.f32 %v5763, %v5764
        %v5766 = vsel %vm2122, %v5734, -inf
        %v5767 = vrot.slane %v5766, 4
        %v5768 = vmax.f32 %v5766, %v5767
        %v5769 = vrot.slane %v5768, 2
        %v5770 = vmax.f32 %v5768, %v5769
        %v5771 = vrot.slane %v5770, 1
        %v5772 = vmax.f32 %v5770, %v5771
        %v5773 = vsel %vm2122, %v5735, -inf
        %v5774 = vrot.slane %v5773, 4
        %v5775 = vmax.f32 %v5773, %v5774
        %v5776 = vrot.slane %v5775, 2
        %v5777 = vmax.f32 %v5775, %v5776
        %v5778 = vrot.slane %v5777, 1
        %v5779 = vmax.f32 %v5777, %v5778
        %v5780 = vsel %vm2122, %v5736, -inf
        %v5781 = vrot.slane %v5780, 4
        %v5782 = vmax.f32 %v5780, %v5781
        %v5783 = vrot.slane %v5782, 2
        %v5784 = vmax.f32 %v5782, %v5783
        %v5785 = vrot.slane %v5784, 1
        %v5786 = vmax.f32 %v5784, %v5785
        %v5787 = vsel %vm2122, %v5737, -inf
        %v5788 = vrot.slane %v5787, 4
        %v5789 = vmax.f32 %v5787, %v5788
        %v5790 = vrot.slane %v5789, 2
        %v5791 = vmax.f32 %v5789, %v5790
        %v5792 = vrot.slane %v5791, 1
        %v5793 = vmax.f32 %v5791, %v5792
        %v5794 = vsub.f32 %v5730, %v5744
        %v5795 = vsub.f32 %v5731, %v5751
        %v5796 = vsub.f32 %v5732, %v5758
        %v5797 = vsub.f32 %v5733, %v5765
        %v5798 = vsub.f32 %v5734, %v5772
        %v5799 = vsub.f32 %v5735, %v5779
        %v5800 = vsub.f32 %v5736, %v5786
        %v5801 = vsub.f32 %v5737, %v5793
        %v5802 = vmul.f32 %v5794, 1.442695
        %v5803 = vpow.pop %v5802
        %v5804 = vmul.f32 %v5795, 1.442695
        %v5805 = vpow.pop %v5804
        %v5806 = vmul.f32 %v5796, 1.442695
        %v5807 = vpow.pop %v5806
        %v5808 = vmul.f32 %v5797, 1.442695
        %v5809 = vpow.pop %v5808
        %v5810 = vmul.f32 %v5798, 1.442695
        %v5811 = vpow.pop %v5810
        %v5812 = vmul.f32 %v5799, 1.442695
        %v5813 = vpow.pop %v5812
        %v5814 = vmul.f32 %v5800, 1.442695
        %v5815 = vpow.pop %v5814
        %v5816 = vmul.f32 %v5801, 1.442695
        %v5817 = vpow.pop %v5816
        %v5818 = vsel %vm2122, %v5803, 0.0
        %v5819 = vrot.slane %v5818, 4
        %v5820 = vadd.f32 %v5818, %v5819
        %v5821 = vrot.slane %v5820, 2
        %v5822 = vadd.f32 %v5820, %v5821
        %v5823 = vrot.slane %v5822, 1
        %v5824 = vadd.f32 %v5822, %v5823
        %v5825 = vsel %vm2122, %v5805, 0.0
        %v5826 = vrot.slane %v5825, 4
        %v5827 = vadd.f32 %v5825, %v5826
        %v5828 = vrot.slane %v5827, 2
        %v5829 = vadd.f32 %v5827, %v5828
        %v5830 = vrot.slane %v5829, 1
        %v5831 = vadd.f32 %v5829, %v5830
        %v5832 = vsel %vm2122, %v5807, 0.0
        %v5833 = vrot.slane %v5832, 4
        %v5834 = vadd.f32 %v5832, %v5833
        %v5835 = vrot.slane %v5834, 2
        %v5836 = vadd.f32 %v5834, %v5835
        %v5837 = vrot.slane %v5836, 1
        %v5838 = vadd.f32 %v5836, %v5837
        %v5839 = vsel %vm2122, %v5809, 0.0
        %v5840 = vrot.slane %v5839, 4
        %v5841 = vadd.f32 %v5839, %v5840
        %v5842 = vrot.slane %v5841, 2
        %v5843 = vadd.f32 %v5841, %v5842
        %v5844 = vrot.slane %v5843, 1
        %v5845 = vadd.f32 %v5843, %v5844
        %v5846 = vsel %vm2122, %v5811, 0.0
        %v5847 = vrot.slane %v5846, 4
        %v5848 = vadd.f32 %v5846, %v5847
        %v5849 = vrot.slane %v5848, 2
        %v5850 = vadd.f32 %v5848, %v5849
        %v5851 = vrot.slane %v5850, 1
        %v5852 = vadd.f32 %v5850, %v5851
        %v5853 = vsel %vm2122, %v5813, 0.0
        %v5854 = vrot.slane %v5853, 4
        %v5855 = vadd.f32 %v5853, %v5854
        %v5856 = vrot.slane %v5855, 2
        %v5857 = vadd.f32 %v5855, %v5856
        %v5858 = vrot.slane %v5857, 1
        %v5859 = vadd.f32 %v5857, %v5858
        %v5860 = vsel %vm2122, %v5815, 0.0
        %v5861 = vrot.slane %v5860, 4
        %v5862 = vadd.f32 %v5860, %v5861
        %v5863 = vrot.slane %v5862, 2
        %v5864 = vadd.f32 %v5862, %v5863
        %v5865 = vrot.slane %v5864, 1
        %v5866 = vadd.f32 %v5864, %v5865
        %v5867 = vsel %vm2122, %v5817, 0.0
        %v5868 = vrot.slane %v5867, 4
        %v5869 = vadd.f32 %v5867, %v5868
        %v5870 = vrot.slane %v5869, 2
        %v5871 = vadd.f32 %v5869, %v5870
        %v5872 = vrot.slane %v5871, 1
        %v5873 = vadd.f32 %v5871, %v5872
        %v5874 = vrcp.pop %v5824
        %v5875 = vrcp.pop %v5831
        %v5876 = vrcp.pop %v5838
        %v5877 = vrcp.pop %v5845
        %v5878 = vrcp.pop %v5852
        %v5879 = vrcp.pop %v5859
        %v5880 = vrcp.pop %v5866
        %v5881 = vrcp.pop %v5873
        %v5882 = vmul.f32 %v5824, %v5874
        %v5883 = vmul.f32 %v5831, %v5875
        %v5884 = vmul.f32 %v5838, %v5876
        %v5885 = vmul.f32 %v5845, %v5877
        %v5886 = vmul.f32 %v5852, %v5878
        %v5887 = vmul.f32 %v5859, %v5879
        %v5888 = vmul.f32 %v5866, %v5880
        %v5889 = vmul.f32 %v5873, %v5881
        %v5890 = vsub.f32 2.0, %v5882
        %v5891 = vsub.f32 2.0, %v5883
        %v5892 = vsub.f32 2.0, %v5884
        %v5893 = vsub.f32 2.0, %v5885
        %v5894 = vsub.f32 2.0, %v5886
        %v5895 = vsub.f32 2.0, %v5887
        %v5896 = vsub.f32 2.0, %v5888
        %v5897 = vsub.f32 2.0, %v5889
        %v5898 = vmul.f32 %v5874, %v5890
        %v5899 = vmul.f32 %v5875, %v5891
        %v5900 = vmul.f32 %v5876, %v5892
        %v5901 = vmul.f32 %v5877, %v5893
        %v5902 = vmul.f32 %v5878, %v5894
        %v5903 = vmul.f32 %v5879, %v5895
        %v5904 = vmul.f32 %v5880, %v5896
        %v5905 = vmul.f32 %v5881, %v5897
        %v5906 = vmul.f32 %v5803, %v5898
        %v5907 = vmul.f32 %v5805, %v5899
        %v5908 = vmul.f32 %v5807, %v5900
        %v5909 = vmul.f32 %v5809, %v5901
        %v5910 = vmul.f32 %v5811, %v5902
        %v5911 = vmul.f32 %v5813, %v5903
        %v5912 = vmul.f32 %v5815, %v5904
        %v5913 = vmul.f32 %v5817, %v5905
        %v5914 = vlaneseq
        %v5915 = vshrl.u32 %v5914, 7
        %v5916 = vsub.s32 0, %v5915
        %v5917 = vrot.slane %v5906, %v5916
        %v5918 = vlaneseq
        %v5919 = vshrl.u32 %v5918, 7
        %v5920 = vsub.s32 0, %v5919
        %v5921 = vrot.slane %v5907, %v5920
        %v5922 = vlaneseq
        %v5923 = vshrl.u32 %v5922, 7
        %v5924 = vsub.s32 0, %v5923
        %v5925 = vrot.slane %v5908, %v5924
        %v5926 = vlaneseq
        %v5927 = vshrl.u32 %v5926, 7
        %v5928 = vsub.s32 0, %v5927
        %v5929 = vrot.slane %v5909, %v5928
        %v5930 = vlaneseq
        %v5931 = vshrl.u32 %v5930, 7
        %v5932 = vsub.s32 0, %v5931
        %v5933 = vrot.slane %v5910, %v5932
        %v5934 = vlaneseq
        %v5935 = vshrl.u32 %v5934, 7
        %v5936 = vsub.s32 0, %v5935
        %v5937 = vrot.slane %v5911, %v5936
        %v5938 = vlaneseq
        %v5939 = vshrl.u32 %v5938, 7
        %v5940 = vsub.s32 0, %v5939
        %v5941 = vrot.slane %v5912, %v5940
        %v5942 = vlaneseq
        %v5943 = vshrl.u32 %v5942, 7
        %v5944 = vsub.s32 0, %v5943
        %v5945 = vrot.slane %v5913, %v5944
        %v5946 = vmul.f32 %v230, %v5917
        %v5947 = vmul.f32 %v231, %v5921
        %v5948 = vmul.f32 %v232, %v5925
        %v5949 = vmul.f32 %v233, %v5929
        %v5950 = vmul.f32 %v234, %v5933
        %v5951 = vmul.f32 %v235, %v5937
        %v5952 = vmul.f32 %v236, %v5941
        %v5953 = vmul.f32 %v237, %v5945
        %v5954 = vmul.f32 %v238, %v5917
        %v5955 = vmul.f32 %v239, %v5921
        %v5956 = vmul.f32 %v240, %v5925
        %v5957 = vmul.f32 %v241, %v5929
        %v5958 = vmul.f32 %v242, %v5933
        %v5959 = vmul.f32 %v243, %v5937
        %v5960 = vmul.f32 %v244, %v5941
        %v5961 = vmul.f32 %v245, %v5945
        %v5962 = vmul.f32 %v246, %v5917
        %v5963 = vmul.f32 %v247, %v5921
        %v5964 = vmul.f32 %v248, %v5925
        %v5965 = vmul.f32 %v249, %v5929
        %v5966 = vmul.f32 %v250, %v5933
        %v5967 = vmul.f32 %v251, %v5937
        %v5968 = vmul.f32 %v252, %v5941
        %v5969 = vmul.f32 %v253, %v5945
        %v5970 = vmul.f32 %v254, %v5917
        %v5971 = vmul.f32 %v255, %v5921
        %v5972 = vmul.f32 %v256, %v5925
        %v5973 = vmul.f32 %v257, %v5929
        %v5974 = vmul.f32 %v258, %v5933
        %v5975 = vmul.f32 %v259, %v5937
        %v5976 = vmul.f32 %v260, %v5941
        %v5977 = vmul.f32 %v261, %v5945
        %v5978 = vlaneseq
        %v5979 = vshrl.u32 %v5978, 7
        %v5980 = vsub.s32 1, %v5979
        %v5981 = vrot.slane %v5906, %v5980
        %v5982 = vlaneseq
        %v5983 = vshrl.u32 %v5982, 7
        %v5984 = vsub.s32 1, %v5983
        %v5985 = vrot.slane %v5907, %v5984
        %v5986 = vlaneseq
        %v5987 = vshrl.u32 %v5986, 7
        %v5988 = vsub.s32 1, %v5987
        %v5989 = vrot.slane %v5908, %v5988
        %v5990 = vlaneseq
        %v5991 = vshrl.u32 %v5990, 7
        %v5992 = vsub.s32 1, %v5991
        %v5993 = vrot.slane %v5909, %v5992
        %v5994 = vlaneseq
        %v5995 = vshrl.u32 %v5994, 7
        %v5996 = vsub.s32 1, %v5995
        %v5997 = vrot.slane %v5910, %v5996
        %v5998 = vlaneseq
        %v5999 = vshrl.u32 %v5998, 7
        %v6000 = vsub.s32 1, %v5999
        %v6001 = vrot.slane %v5911, %v6000
        %v6002 = vlaneseq
        %v6003 = vshrl.u32 %v6002, 7
        %v6004 = vsub.s32 1, %v6003
        %v6005 = vrot.slane %v5912, %v6004
        %v6006 = vlaneseq
        %v6007 = vshrl.u32 %v6006, 7
        %v6008 = vsub.s32 1, %v6007
        %v6009 = vrot.slane %v5913, %v6008
        %v6010 = vmul.f32 %v632, %v5981
        %v6011 = vmul.f32 %v633, %v5985
        %v6012 = vmul.f32 %v634, %v5989
        %v6013 = vmul.f32 %v635, %v5993
        %v6014 = vmul.f32 %v636, %v5997
        %v6015 = vmul.f32 %v637, %v6001
        %v6016 = vmul.f32 %v638, %v6005
        %v6017 = vmul.f32 %v639, %v6009
        %v6018 = vmul.f32 %v640, %v5981
        %v6019 = vmul.f32 %v641, %v5985
        %v6020 = vmul.f32 %v642, %v5989
        %v6021 = vmul.f32 %v643, %v5993
        %v6022 = vmul.f32 %v644, %v5997
        %v6023 = vmul.f32 %v645, %v6001
        %v6024 = vmul.f32 %v646, %v6005
        %v6025 = vmul.f32 %v647, %v6009
        %v6026 = vmul.f32 %v648, %v5981
        %v6027 = vmul.f32 %v649, %v5985
        %v6028 = vmul.f32 %v650, %v5989
        %v6029 = vmul.f32 %v651, %v5993
        %v6030 = vmul.f32 %v652, %v5997
        %v6031 = vmul.f32 %v653, %v6001
        %v6032 = vmul.f32 %v654, %v6005
        %v6033 = vmul.f32 %v655, %v6009
        %v6034 = vmul.f32 %v656, %v5981
        %v6035 = vmul.f32 %v657, %v5985
        %v6036 = vmul.f32 %v658, %v5989
        %v6037 = vmul.f32 %v659, %v5993
        %v6038 = vmul.f32 %v660, %v5997
        %v6039 = vmul.f32 %v661, %v6001
        %v6040 = vmul.f32 %v662, %v6005
        %v6041 = vmul.f32 %v663, %v6009
        %v6042 = vadd.f32 %v5946, %v6010
        %v6043 = vadd.f32 %v5947, %v6011
        %v6044 = vadd.f32 %v5948, %v6012
        %v6045 = vadd.f32 %v5949, %v6013
        %v6046 = vadd.f32 %v5950, %v6014
        %v6047 = vadd.f32 %v5951, %v6015
        %v6048 = vadd.f32 %v5952, %v6016
        %v6049 = vadd.f32 %v5953, %v6017
        %v6050 = vadd.f32 %v5954, %v6018
        %v6051 = vadd.f32 %v5955, %v6019
        %v6052 = vadd.f32 %v5956, %v6020
        %v6053 = vadd.f32 %v5957, %v6021
        %v6054 = vadd.f32 %v5958, %v6022
        %v6055 = vadd.f32 %v5959, %v6023
        %v6056 = vadd.f32 %v5960, %v6024
        %v6057 = vadd.f32 %v5961, %v6025
        %v6058 = vadd.f32 %v5962, %v6026
        %v6059 = vadd.f32 %v5963, %v6027
        %v6060 = vadd.f32 %v5964, %v6028
        %v6061 = vadd.f32 %v5965, %v6029
        %v6062 = vadd.f32 %v5966, %v6030
        %v6063 = vadd.f32 %v5967, %v6031
        %v6064 = vadd.f32 %v5968, %v6032
        %v6065 = vadd.f32 %v5969, %v6033
        %v6066 = vadd.f32 %v5970, %v6034
        %v6067 = vadd.f32 %v5971, %v6035
        %v6068 = vadd.f32 %v5972, %v6036
        %v6069 = vadd.f32 %v5973, %v6037
        %v6070 = vadd.f32 %v5974, %v6038
        %v6071 = vadd.f32 %v5975, %v6039
        %v6072 = vadd.f32 %v5976, %v6040
        %v6073 = vadd.f32 %v5977, %v6041
        %v6074 = vlaneseq
        %v6075 = vshrl.u32 %v6074, 7
        %v6076 = vsub.s32 2, %v6075
        %v6077 = vrot.slane %v5906, %v6076
        %v6078 = vlaneseq
        %v6079 = vshrl.u32 %v6078, 7
        %v6080 = vsub.s32 2, %v6079
        %v6081 = vrot.slane %v5907, %v6080
        %v6082 = vlaneseq
        %v6083 = vshrl.u32 %v6082, 7
        %v6084 = vsub.s32 2, %v6083
        %v6085 = vrot.slane %v5908, %v6084
        %v6086 = vlaneseq
        %v6087 = vshrl.u32 %v6086, 7
        %v6088 = vsub.s32 2, %v6087
        %v6089 = vrot.slane %v5909, %v6088
        %v6090 = vlaneseq
        %v6091 = vshrl.u32 %v6090, 7
        %v6092 = vsub.s32 2, %v6091
        %v6093 = vrot.slane %v5910, %v6092
        %v6094 = vlaneseq
        %v6095 = vshrl.u32 %v6094, 7
        %v6096 = vsub.s32 2, %v6095
        %v6097 = vrot.slane %v5911, %v6096
        %v6098 = vlaneseq
        %v6099 = vshrl.u32 %v6098, 7
        %v6100 = vsub.s32 2, %v6099
        %v6101 = vrot.slane %v5912, %v6100
        %v6102 = vlaneseq
        %v6103 = vshrl.u32 %v6102, 7
        %v6104 = vsub.s32 2, %v6103
        %v6105 = vrot.slane %v5913, %v6104
        %v6106 = vmul.f32 %v1021, %v6077
        %v6107 = vmul.f32 %v1022, %v6081
        %v6108 = vmul.f32 %v1023, %v6085
        %v6109 = vmul.f32 %v1024, %v6089
        %v6110 = vmul.f32 %v1025, %v6093
        %v6111 = vmul.f32 %v1026, %v6097
        %v6112 = vmul.f32 %v1027, %v6101
        %v6113 = vmul.f32 %v1028, %v6105
        %v6114 = vmul.f32 %v1029, %v6077
        %v6115 = vmul.f32 %v1030, %v6081
        %v6116 = vmul.f32 %v1031, %v6085
        %v6117 = vmul.f32 %v1032, %v6089
        %v6118 = vmul.f32 %v1033, %v6093
        %v6119 = vmul.f32 %v1034, %v6097
        %v6120 = vmul.f32 %v1035, %v6101
        %v6121 = vmul.f32 %v1036, %v6105
        %v6122 = vmul.f32 %v1037, %v6077
        %v6123 = vmul.f32 %v1038, %v6081
        %v6124 = vmul.f32 %v1039, %v6085
        %v6125 = vmul.f32 %v1040, %v6089
        %v6126 = vmul.f32 %v1041, %v6093
        %v6127 = vmul.f32 %v1042, %v6097
        %v6128 = vmul.f32 %v1043, %v6101
        %v6129 = vmul.f32 %v1044, %v6105
        %v6130 = vmul.f32 %v1045, %v6077
        %v6131 = vmul.f32 %v1046, %v6081
        %v6132 = vmul.f32 %v1047, %v6085
        %v6133 = vmul.f32 %v1048, %v6089
        %v6134 = vmul.f32 %v1049, %v6093
        %v6135 = vmul.f32 %v1050, %v6097
        %v6136 = vmul.f32 %v1051, %v6101
        %v6137 = vmul.f32 %v1052, %v6105
        %v6138 = vadd.f32 %v6042, %v6106
        %v6139 = vadd.f32 %v6043, %v6107
        %v6140 = vadd.f32 %v6044, %v6108
        %v6141 = vadd.f32 %v6045, %v6109
        %v6142 = vadd.f32 %v6046, %v6110
        %v6143 = vadd.f32 %v6047, %v6111
        %v6144 = vadd.f32 %v6048, %v6112
        %v6145 = vadd.f32 %v6049, %v6113
        %v6146 = vadd.f32 %v6050, %v6114
        %v6147 = vadd.f32 %v6051, %v6115
        %v6148 = vadd.f32 %v6052, %v6116
        %v6149 = vadd.f32 %v6053, %v6117
        %v6150 = vadd.f32 %v6054, %v6118
        %v6151 = vadd.f32 %v6055, %v6119
        %v6152 = vadd.f32 %v6056, %v6120
        %v6153 = vadd.f32 %v6057, %v6121
        %v6154 = vadd.f32 %v6058, %v6122
        %v6155 = vadd.f32 %v6059, %v6123
        %v6156 = vadd.f32 %v6060, %v6124
        %v6157 = vadd.f32 %v6061, %v6125
        %v6158 = vadd.f32 %v6062, %v6126
        %v6159 = vadd.f32 %v6063, %v6127
        %v6160 = vadd.f32 %v6064, %v6128
        %v6161 = vadd.f32 %v6065, %v6129
        %v6162 = vadd.f32 %v6066, %v6130
        %v6163 = vadd.f32 %v6067, %v6131
        %v6164 = vadd.f32 %v6068, %v6132
        %v6165 = vadd.f32 %v6069, %v6133
        %v6166 = vadd.f32 %v6070, %v6134
        %v6167 = vadd.f32 %v6071, %v6135
        %v6168 = vadd.f32 %v6072, %v6136
        %v6169 = vadd.f32 %v6073, %v6137
        %v6170 = vlaneseq
        %v6171 = vshrl.u32 %v6170, 7
        %v6172 = vsub.s32 3, %v6171
        %v6173 = vrot.slane %v5906, %v6172
        %v6174 = vlaneseq
        %v6175 = vshrl.u32 %v6174, 7
        %v6176 = vsub.s32 3, %v6175
        %v6177 = vrot.slane %v5907, %v6176
        %v6178 = vlaneseq
        %v6179 = vshrl.u32 %v6178, 7
        %v6180 = vsub.s32 3, %v6179
        %v6181 = vrot.slane %v5908, %v6180
        %v6182 = vlaneseq
        %v6183 = vshrl.u32 %v6182, 7
        %v6184 = vsub.s32 3, %v6183
        %v6185 = vrot.slane %v5909, %v6184
        %v6186 = vlaneseq
        %v6187 = vshrl.u32 %v6186, 7
        %v6188 = vsub.s32 3, %v6187
        %v6189 = vrot.slane %v5910, %v6188
        %v6190 = vlaneseq
        %v6191 = vshrl.u32 %v6190, 7
        %v6192 = vsub.s32 3, %v6191
        %v6193 = vrot.slane %v5911, %v6192
        %v6194 = vlaneseq
        %v6195 = vshrl.u32 %v6194, 7
        %v6196 = vsub.s32 3, %v6195
        %v6197 = vrot.slane %v5912, %v6196
        %v6198 = vlaneseq
        %v6199 = vshrl.u32 %v6198, 7
        %v6200 = vsub.s32 3, %v6199
        %v6201 = vrot.slane %v5913, %v6200
        %v6202 = vmul.f32 %v1410, %v6173
        %v6203 = vmul.f32 %v1411, %v6177
        %v6204 = vmul.f32 %v1412, %v6181
        %v6205 = vmul.f32 %v1413, %v6185
        %v6206 = vmul.f32 %v1414, %v6189
        %v6207 = vmul.f32 %v1415, %v6193
        %v6208 = vmul.f32 %v1416, %v6197
        %v6209 = vmul.f32 %v1417, %v6201
        %v6210 = vmul.f32 %v1418, %v6173
        %v6211 = vmul.f32 %v1419, %v6177
        %v6212 = vmul.f32 %v1420, %v6181
        %v6213 = vmul.f32 %v1421, %v6185
        %v6214 = vmul.f32 %v1422, %v6189
        %v6215 = vmul.f32 %v1423, %v6193
        %v6216 = vmul.f32 %v1424, %v6197
        %v6217 = vmul.f32 %v1425, %v6201
        %v6218 = vmul.f32 %v1426, %v6173
        %v6219 = vmul.f32 %v1427, %v6177
        %v6220 = vmul.f32 %v1428, %v6181
        %v6221 = vmul.f32 %v1429, %v6185
        %v6222 = vmul.f32 %v1430, %v6189
        %v6223 = vmul.f32 %v1431, %v6193
        %v6224 = vmul.f32 %v1432, %v6197
        %v6225 = vmul.f32 %v1433, %v6201
        %v6226 = vmul.f32 %v1434, %v6173
        %v6227 = vmul.f32 %v1435, %v6177
        %v6228 = vmul.f32 %v1436, %v6181
        %v6229 = vmul.f32 %v1437, %v6185
        %v6230 = vmul.f32 %v1438, %v6189
        %v6231 = vmul.f32 %v1439, %v6193
        %v6232 = vmul.f32 %v1440, %v6197
        %v6233 = vmul.f32 %v1441, %v6201
        %v6234 = vadd.f32 %v6138, %v6202
        %v6235 = vadd.f32 %v6139, %v6203
        %v6236 = vadd.f32 %v6140, %v6204
        %v6237 = vadd.f32 %v6141, %v6205
        %v6238 = vadd.f32 %v6142, %v6206
        %v6239 = vadd.f32 %v6143, %v6207
        %v6240 = vadd.f32 %v6144, %v6208
        %v6241 = vadd.f32 %v6145, %v6209
        %v6242 = vadd.f32 %v6146, %v6210
        %v6243 = vadd.f32 %v6147, %v6211
        %v6244 = vadd.f32 %v6148, %v6212
        %v6245 = vadd.f32 %v6149, %v6213
        %v6246 = vadd.f32 %v6150, %v6214
        %v6247 = vadd.f32 %v6151, %v6215
        %v6248 = vadd.f32 %v6152, %v6216
        %v6249 = vadd.f32 %v6153, %v6217
        %v6250 = vadd.f32 %v6154, %v6218
        %v6251 = vadd.f32 %v6155, %v6219
        %v6252 = vadd.f32 %v6156, %v6220
        %v6253 = vadd.f32 %v6157, %v6221
        %v6254 = vadd.f32 %v6158, %v6222
        %v6255 = vadd.f32 %v6159, %v6223
        %v6256 = vadd.f32 %v6160, %v6224
        %v6257 = vadd.f32 %v6161, %v6225
        %v6258 = vadd.f32 %v6162, %v6226
        %v6259 = vadd.f32 %v6163, %v6227
        %v6260 = vadd.f32 %v6164, %v6228
        %v6261 = vadd.f32 %v6165, %v6229
        %v6262 = vadd.f32 %v6166, %v6230
        %v6263 = vadd.f32 %v6167, %v6231
        %v6264 = vadd.f32 %v6168, %v6232
        %v6265 = vadd.f32 %v6169, %v6233
        %6266 = vst [vmem:[%s215] sm:$0xff] %v6234
        %6267 = vst [vmem:[%s215 + $0x8] sm:$0xff] %v6235
        %6268 = vst [vmem:[%s215 + $0x10] sm:$0xff] %v6236
        %6269 = vst [vmem:[%s215 + $0x18] sm:$0xff] %v6237
        %6270 = vst [vmem:[%s215 + $0x20] sm:$0xff] %v6238
        %6271 = vst [vmem:[%s215 + $0x28] sm:$0xff] %v6239
        %6272 = vst [vmem:[%s215 + $0x30] sm:$0xff] %v6240
        %6273 = vst [vmem:[%s215 + $0x38] sm:$0xff] %v6241
        %6274 = vst [vmem:[%s215 + $0x40] sm:$0xff] %v6242
        %6275 = vst [vmem:[%s215 + $0x48] sm:$0xff] %v6243
        %6276 = vst [vmem:[%s215 + $0x50] sm:$0xff] %v6244
        %6277 = vst [vmem:[%s215 + $0x58] sm:$0xff] %v6245
        %6278 = vst [vmem:[%s215 + $0x60] sm:$0xff] %v6246
        %6279 = vst [vmem:[%s215 + $0x68] sm:$0xff] %v6247
        %6280 = vst [vmem:[%s215 + $0x70] sm:$0xff] %v6248
        %6281 = vst [vmem:[%s215 + $0x78] sm:$0xff] %v6249
        %6282 = vst [vmem:[%s215 + $0x80] sm:$0xff] %v6250
        %6283 = vst [vmem:[%s215 + $0x88] sm:$0xff] %v6251
        %6284 = vst [vmem:[%s215 + $0x90] sm:$0xff] %v6252
        %6285 = vst [vmem:[%s215 + $0x98] sm:$0xff] %v6253
        %6286 = vst [vmem:[%s215 + $0xa0] sm:$0xff] %v6254
        %6287 = vst [vmem:[%s215 + $0xa8] sm:$0xff] %v6255
        %6288 = vst [vmem:[%s215 + $0xb0] sm:$0xff] %v6256
        %6289 = vst [vmem:[%s215 + $0xb8] sm:$0xff] %v6257
        %6290 = vst [vmem:[%s215 + $0xc0] sm:$0xff] %v6258
        %6291 = vst [vmem:[%s215 + $0xc8] sm:$0xff] %v6259
        %6292 = vst [vmem:[%s215 + $0xd0] sm:$0xff] %v6260
        %6293 = vst [vmem:[%s215 + $0xd8] sm:$0xff] %v6261
        %6294 = vst [vmem:[%s215 + $0xe0] sm:$0xff] %v6262
        %6295 = vst [vmem:[%s215 + $0xe8] sm:$0xff] %v6263
        %6296 = vst [vmem:[%s215 + $0xf0] sm:$0xff] %v6264
        %6297 = vst [vmem:[%s215 + $0xf8] sm:$0xff] %v6265
        %s6298 = sand.u32 %s118, 1
        %s6299 = scalar_lea.sflag [#allocation4], %s6298
        %s6300 = sand.u32 %s118, 1
        %s6301 = smul.addr %s6300, 256
        %s6302 = scalar_lea.vmem [#allocation5], %s6301
        // Predicated region
        $region41: #{tpu_custom_call.1} parent=35 // pred_check
          %p6303 = pneg %p128
        $region42: #{tpu_custom_call.1} parent=35 // pred_check_branch
          %6305 = sbr.rel (%p6303) target = $region44
        $region43: #{tpu_custom_call.1} parent=35 // pred_region
          %s6306 = smul.u32 8, %s21
          %s6308 = ssub.s32 4096, 4096
          %6309 = vsyncadd %s6299, %s6308
          %s6310 = smul.addr %s6306, 128
          %s6311 = scalar_lea.hbm %s4, %s6310
          %s6312 = sshll.u32 %s6302, 4
          %s6313 = int_to_ptr.vmem [resolvable:$true] %s6312
          %6318 = dma.vmem_to_hbm [thread:$0]  %s6313, 4096, %s6311, %s6299, 1024, 2048, 64
        $region44: #{tpu_custom_call.1} parent=35 // pred_fallthru
          _
      $region36: #{tpu_custom_call.1} parent=5 // pred_fallthru
        _
      %p6319 = scmp.le.s32.totalorder 2, %s16
      // Predicated region
      $region45: #{tpu_custom_call.1} parent=5 // pred_check
        %p6320 = pneg %p6319
      $region46: #{tpu_custom_call.1} parent=5 // pred_check_branch
        %6322 = sbr.rel (%p6320) target = $region48
      $region47: #{tpu_custom_call.1} parent=5 // pred_region
        %s6323 = ssub.s32 %s16, 2
        // Predicated region
        $region49: #{tpu_custom_call.1} parent=47 // pred_check
          %p6324 = pneg %p134
        $region50: #{tpu_custom_call.1} parent=47 // pred_check_branch
          %6326 = sbr.rel (%p6324) target = $region52
        $region51: #{tpu_custom_call.1} parent=47 // pred_region
          %s6327 = sand.u32 %s119, 1
          %s6328 = scalar_lea.sflag [#allocation4], %s6327
          %s6329 = sand.u32 %s119, 1
          %s6330 = smul.addr %s6329, 256
          %s6331 = scalar_lea.vmem [#allocation5], %s6330
          %6332 = dma.done %s6328, 4096
        $region52: #{tpu_custom_call.1} parent=47 // pred_fallthru
          _
      $region48: #{tpu_custom_call.1} parent=5 // pred_fallthru
        _
    $region6: #{tpu_custom_call.1} parent=1 // loop_footer
      %s20 = sadd.s32 1, %s16
    $region7: #{tpu_custom_call.1} parent=1 // loop_footer_branch
      %15 = sbr.rel target = $region3
    $region8: #{tpu_custom_call.1} parent=1 // loop_exit
      _
    %6333 = vsyncpa [#allocation3], 1
    %s6334 = scalar_lea.sflag [#allocation3], 1
    %6335 = vsyncpa %s6334, 1
    %6336 = vsyncpa [#allocation4], 1
    %s6337 = scalar_lea.sflag [#allocation4], 1
    %6338 = vsyncpa %s6337, 1

</llo_original>
